<compile_context>
chip_gen: v5e
topology: v5e:2x2
jax: 0.10.0
libtpu: 0.0.40
codegen_flags: <defaults>
</compile_context>

<pallas_src>
import functools

import jax
import jax.numpy as jnp
import numpy as np
from jax.experimental import pallas as pl
from jax.experimental.pallas import tpu as pltpu

FRAME_STACK = 4          # frame_stack_amount
NUM_OUTPUTS = 5          # self.num_outputs
MID = 64                 # scaled-down self.mid_size
NEG_SLOPE = 0.01         # nn.LeakyReLU default negative_slope
OUT_LANES = 128          # lane-dense output slab width [mu | value | zeros]
SQRT2 = float(np.sqrt(2.0))

# Scaled-down but structurally identical to Agent.__init__:
# (C_in, C_out, kernel, stride) matching (8,2),(8,2),(4,2),(2,2),(2,1)
CONV_CFG = [
    (FRAME_STACK, 8, 8, 2),
    (8, 16, 8, 2),
    (16, 32, 4, 2),
    (32, 64, 2, 2),
    (64, 128, 2, 1),
]
FLAT_DIM = 128           # final conv is 1x1 spatial at the chosen 58x58 input
MLP_CFG = [(FLAT_DIM, 256), (256, 128), (128, MID)]
CRITIC_CFG = [(MID, 32, SQRT2), (32, 1, 1.0)]
ACTOR_CFG = [(MID, 32, SQRT2), (32, 32, SQRT2), (32, NUM_OUTPUTS, SQRT2)]

N_TAIL_REFS = 13


# ---------------------------------------------------------------------------
# Static conv plan
# ---------------------------------------------------------------------------
def _conv_plan(height, width):
    plan = []
    h, w = height, width
    for (cin, cout, k, s) in CONV_CFG:
        ho = (h - k) // s + 1
        wo = (w - k) // s + 1
        assert ho >= 1 and wo >= 1
        plan.append((k, s, h, w, cin, ho, wo, cout))
        h, w = ho, wo
    assert h == 1 and w == 1, "conv stack must end at 1x1 for the hard-coded flatten"
    return tuple(plan)


# ---------------------------------------------------------------------------
# The single fused kernel: whole Agent.forward, everything VMEM-resident.
# Activation layout between conv layers: 2-D (B*H, W*C) bf16, rows=(b, h),
# lanes=(w, c).  Each conv is  acc = sum_i Sel_i @ X @ W2_i  (+ bias, LeakyReLU)
# where Sel_i is a constant 0/1 row-selection matrix (rows h = s*ho + i) and
# W2_i is the weight tap folded over (column tap j, C_in) -> (wo, C_out).
# ---------------------------------------------------------------------------
def _agent_fused_kernel(plan, *refs):
    n_conv = len(plan)
    x_ref = refs[0]                       # (B*C0*H, W) f32  (NCHW, metadata reshape only)
    l_ref = refs[1]                       # (C0, B*H, B*C0*H) bf16  row-select per channel
    r_ref = refs[2]                       # (C0, W, W*C0)     bf16  lane-scatter per channel
    conv_refs = [(refs[3 + 3 * li], refs[4 + 3 * li], refs[5 + 3 * li])
                 for li in range(n_conv)]
    pos = 3 + 3 * n_conv
    (w0_ref, b0_ref, w1_ref, b1_ref, w2_ref, b2_ref,
     wh_ref, bh_ref, wa1_ref, ba1_ref,
     wv_ref, wmu_ref, ob_ref) = refs[pos:pos + N_TAIL_REFS]
    out_ref = refs[pos + N_TAIL_REFS]

    def mxu(a, b_val):
        return jnp.dot(a.astype(jnp.bfloat16), b_val,
                       preferred_element_type=jnp.float32)

    def leaky(z):
        return jnp.where(z >= 0, z, NEG_SLOPE * z)

    # ---- NCHW -> (b*h, w*c) layout fold + f32->bf16 cast (in-kernel) ----
    x0 = x_ref[...].astype(jnp.bfloat16)
    c0 = l_ref.shape[0]
    acc = jnp.zeros((l_ref.shape[1], r_ref.shape[2]), jnp.float32)
    for c in range(c0):
        rows = mxu(l_ref[c], x0)                 # pick channel-c image rows -> (B*H, W)
        acc = acc + mxu(rows, r_ref[c])          # scatter W into (w, c) lane blocks
    x = acc.astype(jnp.bfloat16)                 # (B*H, W*C0)

    # ---- 5 convolutions, all VMEM/register resident ----
    for li, ((k, s, hi, wi, ci, ho, wo, co),
             (w2s_ref, bt_ref, sel_ref)) in enumerate(zip(plan, conv_refs)):
        acc = jnp.zeros((sel_ref.shape[1], w2s_ref.shape[2]), jnp.float32)  # (B*Ho, Wo*Co)
        for i in range(k):
            rows = mxu(sel_ref[i], x)            # gather rows h = s*ho + i
            acc = acc + mxu(rows, w2s_ref[i])    # folded (j, ci) -> (wo, co) weights
        acc = acc + bt_ref[...]
        if li < n_conv - 1:                      # no LeakyReLU after the final conv
            acc = leaky(acc)
        x = acc.astype(jnp.bfloat16)             # next layer input; last iter = flat features

    # ---- fused tail: MLP + merged critic/actor heads, one lane-dense store ----
    h = leaky(mxu(x, w0_ref[...]) + b0_ref[...])
    h = leaky(mxu(h, w1_ref[...]) + b1_ref[...])
    h = leaky(mxu(h, w2_ref[...]) + b2_ref[...])
    t = jnp.tanh(mxu(h, wh_ref[...]) + bh_ref[...])    # [critic hidden | actor hidden]
    a2 = jnp.tanh(mxu(t, wa1_ref[...]) + ba1_ref[...])
    # mu in lanes [0,5), value in lane 5, zeros elsewhere -> single full-width store
    out_ref[...] = mxu(t, wv_ref[...]) + mxu(a2, wmu_ref[...]) + ob_ref[...]


def _full_spec(arr):
    nd = arr.ndim
    return pl.BlockSpec(arr.shape, lambda i, _nd=nd: (0,) * _nd)


def agent_forward(kparams, x_nchw):
    """Agent.forward: NCHW frames -> (mu, std, value); one fused pallas_call."""
    batch, c_in, height, width = x_nchw.shape
    plan = _conv_plan(height, width)
    x0 = x_nchw.reshape(batch * c_in * height, width)   # metadata-only reshape

    inputs = [x0, kparams["lconv"], kparams["rconv"]]
    for (w2s, bias_t, sel) in kparams["conv"]:
        inputs += [w2s, bias_t, sel]
    tail = kparams["tail"]
    inputs += list(tail)

    # advisory cost estimate
    flops = 2 * c_in * kparams["lconv"].shape[1] * kparams["lconv"].shape[2] * width
    flops += 2 * c_in * kparams["lconv"].shape[1] * width * kparams["rconv"].shape[2]
    for (kk, ss, hi, wi, ci, ho, wo, co), (w2s, bias_t, sel) in zip(plan, kparams["conv"]):
        flops += 2 * kk * sel.shape[1] * sel.shape[2] * (wi * ci)
        flops += 2 * kk * sel.shape[1] * (wi * ci) * w2s.shape[2]
    for w_arr in (tail[0], tail[2], tail[4], tail[6], tail[8], tail[10], tail[11]):
        flops += 2 * batch * w_arr.shape[0] * w_arr.shape[1]
    trans = batch * (tail[6].shape[1] + tail[8].shape[1])
    bytes_acc = sum(int(a.size) * a.dtype.itemsize for a in inputs) + batch * OUT_LANES * 4

    out = pl.pallas_call(
        functools.partial(_agent_fused_kernel, plan),
        out_shape=jax.ShapeDtypeStruct((batch, OUT_LANES), jnp.float32),
        grid=(1,),
        in_specs=[_full_spec(a) for a in inputs],
        out_specs=pl.BlockSpec((batch, OUT_LANES), lambda i: (0, 0)),
        compiler_params=pltpu.CompilerParams(dimension_semantics=("arbitrary",)),
        cost_estimate=pl.CostEstimate(flops=flops, transcendentals=trans,
                                      bytes_accessed=bytes_acc),
    )(*inputs)

    mu = out[:, :NUM_OUTPUTS]
    value = out[:, NUM_OUTPUTS:NUM_OUTPUTS + 1]
    std = jnp.broadcast_to(jnp.exp(kparams["actor_log_std"]), mu.shape)
    return mu, std, value


# ---------------------------------------------------------------------------
# Parameter init (deterministic, orthogonal like layer_init, bias = 0).
# Weights bf16 (shared by kernel and reference paths); biases f32.
# ---------------------------------------------------------------------------
def _orthogonal(key, rows, cols, std):
    n = max(rows, cols)
    a = jax.random.normal(key, (n, n), dtype=jnp.float32)
    q, _ = jnp.linalg.qr(a)
    return (std * q[:rows, :cols]).astype(jnp.float32)


def init_params(key):
    keys = iter(jax.random.split(key, 16))
    params = {}
    params["conv"] = [
        (_orthogonal(next(keys), k * k * cin, cout, SQRT2).astype(jnp.bfloat16),
         jnp.zeros((cout,), jnp.float32))
        for (cin, cout, k, s) in CONV_CFG
    ]
    params["mlp"] = [
        (_orthogonal(next(keys), din, dout, SQRT2).astype(jnp.bfloat16),
         jnp.zeros((dout,), jnp.float32))
        for (din, dout) in MLP_CFG
    ]
    params["critic"] = [
        (_orthogonal(next(keys), din, dout, std).astype(jnp.bfloat16),
         jnp.zeros((dout,), jnp.float32))
        for (din, dout, std) in CRITIC_CFG
    ]
    params["actor"] = [
        (_orthogonal(next(keys), din, dout, std).astype(jnp.bfloat16),
         jnp.zeros((dout,), jnp.float32))
        for (din, dout, std) in ACTOR_CFG
    ]
    # actor_log_std = ones(1, num_outputs) * self.std  with self.std = 0.0
    params["actor_log_std"] = jnp.zeros((1, NUM_OUTPUTS), jnp.float32)
    return params


# ---------------------------------------------------------------------------
# One-time packing of raw parameters into the fused-kernel form
# (folded conv weights, row-selection matrices, merged/padded heads).
# Note: the selection matrices bake in the batch size and input H/W.
# ---------------------------------------------------------------------------
def _build_layout_convert(batch, c0, height, width):
    l_mat = np.zeros((c0, batch * height, batch * c0 * height), np.float32)
    r_mat = np.zeros((c0, width, width * c0), np.float32)
    for c in range(c0):
        for b in range(batch):
            for h in range(height):
                l_mat[c, b * height + h, b * c0 * height + c * height + h] = 1.0
        for w in range(width):
            r_mat[c, w, w * c0 + c] = 1.0
    return jnp.asarray(l_mat, jnp.bfloat16), jnp.asarray(r_mat, jnp.bfloat16)


def _build_row_select(batch, hi, ho, k, s):
    sel = np.zeros((k, batch * ho, batch * hi), np.float32)
    for i in range(k):
        for b in range(batch):
            for r in range(ho):
                sel[i, b * ho + r, b * hi + s * r + i] = 1.0
    return jnp.asarray(sel, jnp.bfloat16)


def _fold_conv_weight(w_flat, k, ci, co, wi, wo, s):
    # w_flat rows are in (i, j, ci) patch order (matches the reference im2col).
    w4 = np.asarray(jnp.asarray(w_flat, jnp.float32)).reshape(k, k, ci, co)
    w2 = np.zeros((k, wi * ci, wo * co), np.float32)
    for i in range(k):
        for wcol in range(wo):
            for j in range(k):
                w = s * wcol + j
                w2[i, w * ci:(w + 1) * ci, wcol * co:(wcol + 1) * co] = w4[i, j]
    return jnp.asarray(w2, jnp.bfloat16)


def prepare_kernel_params(params, batch, height, width):
    plan = _conv_plan(height, width)
    c0 = CONV_CFG[0][0]
    lconv, rconv = _build_layout_convert(batch, c0, height, width)

    conv = []
    for (w_flat, b), (k, s, hi, wi, ci, ho, wo, co) in zip(params["conv"], plan):
        w2s = _fold_conv_weight(w_flat, k, ci, co, wi, wo, s)
        bias_t = jnp.tile(jnp.asarray(b, jnp.float32), wo).reshape(1, wo * co)
        sel = _build_row_select(batch, hi, ho, k, s)
        conv.append((w2s, bias_t, sel))

    (w0, b0), (w1, b1), (w2, b2) = params["mlp"]
    (wc0, bc0), (wc1, bc1) = params["critic"]
    (wa0, ba0), (wa1, ba1), (wa2, ba2) = params["actor"]
    nc, na = wc0.shape[1], wa0.shape[1]
    wh = jnp.concatenate([wc0, wa0], axis=1)                       # merged heads L1 (MID, 64)
    bh = jnp.concatenate([bc0, ba0]).reshape(1, nc + na)
    wv = jnp.zeros((nc + na, OUT_LANES), jnp.float32)
    wv = wv.at[:nc, NUM_OUTPUTS].set(jnp.asarray(wc1, jnp.float32)[:, 0]).astype(jnp.bfloat16)
    wa1_ext = jnp.zeros((nc + na, wa1.shape[1]), jnp.float32)
    wa1_ext = wa1_ext.at[nc:, :].set(jnp.asarray(wa1, jnp.float32)).astype(jnp.bfloat16)
    wmu = jnp.zeros((wa1.shape[1], OUT_LANES), jnp.float32)
    wmu = wmu.at[:, :NUM_OUTPUTS].set(jnp.asarray(wa2, jnp.float32)).astype(jnp.bfloat16)
    ob = jnp.zeros((1, OUT_LANES), jnp.float32)
    ob = ob.at[0, :NUM_OUTPUTS].set(ba2).at[0, NUM_OUTPUTS].set(bc1[0])

    tail = (w0, b0.reshape(1, -1), w1, b1.reshape(1, -1), w2, b2.reshape(1, -1),
            wh, bh, wa1_ext, ba1.reshape(1, -1), wv, wmu, ob)
    return {"lconv": lconv, "rconv": rconv, "conv": conv, "tail": tail,
            "actor_log_std": params["actor_log_std"]}


# ---------------------------------------------------------------------------
# Plain-JAX reference with raw (unfolded, unmerged) weights, same bf16/f32 flow.
# ---------------------------------------------------------------------------
def _im2col(x, k, stride):
    b, h, w, c = x.shape
    ho = (h - k) // stride + 1
    wo = (w - k) // stride + 1
    cols = []
    for i in range(k):
        for j in range(k):
            cols.append(x[:, i:i + stride * (ho - 1) + 1:stride,
                            j:j + stride * (wo - 1) + 1:stride, :])
    cols = jnp.concatenate(cols, axis=-1)
    return cols.reshape(b * ho * wo, k * k * c), (b, ho, wo)


def _dense_ref(h, w, b, act="none"):
    acc = jnp.dot(h.astype(w.dtype), w, preferred_element_type=jnp.float32) + b
    if act == "leaky_relu":
        return jnp.where(acc >= 0, acc, NEG_SLOPE * acc)
    if act == "tanh":
        return jnp.tanh(acc)
    return acc


def agent_forward_ref(params, x_nchw):
    x = jnp.transpose(x_nchw, (0, 2, 3, 1)).astype(jnp.bfloat16)   # NCHW -> NHWC
    n_conv = len(CONV_CFG)
    for li, ((w_flat, b), (cin, cout, k, s)) in enumerate(zip(params["conv"], CONV_CFG)):
        cols, (bsz, ho, wo) = _im2col(x, k, s)
        act = "leaky_relu" if li < n_conv - 1 else "none"
        x = _dense_ref(cols, w_flat, b, act).astype(jnp.bfloat16).reshape(bsz, ho, wo, cout)
    batch = x.shape[0]
    h = x.reshape(batch, -1)                                       # nn.Flatten
    for (w, b) in params["mlp"]:
        h = _dense_ref(h, w, b, "leaky_relu").astype(jnp.bfloat16)
    (wc0, bc0), (wc1, bc1) = params["critic"]
    value = _dense_ref(_dense_ref(h, wc0, bc0, "tanh").astype(jnp.bfloat16), wc1, bc1)
    (wa0, ba0), (wa1, ba1), (wa2, ba2) = params["actor"]
    a = _dense_ref(h, wa0, ba0, "tanh").astype(jnp.bfloat16)
    a = _dense_ref(a, wa1, ba1, "tanh").astype(jnp.bfloat16)
    mu = _dense_ref(a, wa2, ba2)
    std = jnp.broadcast_to(jnp.exp(params["actor_log_std"]), mu.shape)
    return mu, std, value


if __name__ == "__main__":
    key = jax.random.PRNGKey(0)
    pkey, xkey = jax.random.split(key)
    params = init_params(pkey)

    # input: (batch=2, frame_stack=4, H=58, W=58) NCHW like the PyTorch module
    # (58 is the smallest width for which the 5-conv chain is valid and ends 1x1)
    x = jax.random.normal(xkey, (2, FRAME_STACK, 58, 58), dtype=jnp.float32)
    kparams = prepare_kernel_params(params, batch=x.shape[0],
                                    height=x.shape[2], width=x.shape[3])

    fwd = jax.jit(agent_forward)
    mu, std, value = fwd(kparams, x)
    jax.block_until_ready((mu, std, value))

    # sanity: fused Pallas path matches the plain-JAX bf16 reference
    mu_r, std_r, value_r = jax.jit(agent_forward_ref)(params, x)
    jax.block_until_ready((mu_r, std_r, value_r))

    assert mu.shape == (2, NUM_OUTPUTS) and std.shape == (2, NUM_OUTPUTS)
    assert value.shape == (2, 1)
    assert np.allclose(np.asarray(mu), np.asarray(mu_r), atol=5e-2, rtol=5e-2)
    assert np.allclose(np.asarray(value), np.asarray(value_r), atol=5e-2, rtol=5e-2)
    assert np.allclose(np.asarray(std), np.asarray(std_r), atol=1e-6)

    print("KERNEL_OK")
</pallas_src>

<mosaic_0001>
module attributes {stable_mosaic.version = 11 : i64} {
  func.func @_agent_fused_kernel(%arg0: i32, %arg1: memref<464x58xf32, #tpu.memory_space<vmem>>, %arg2: memref<4x116x464xbf16, #tpu.memory_space<vmem>>, %arg3: memref<4x58x232xbf16, #tpu.memory_space<vmem>>, %arg4: memref<8x232x208xbf16, #tpu.memory_space<vmem>>, %arg5: memref<1x208xf32, #tpu.memory_space<vmem>>, %arg6: memref<8x52x116xbf16, #tpu.memory_space<vmem>>, %arg7: memref<8x208x160xbf16, #tpu.memory_space<vmem>>, %arg8: memref<1x160xf32, #tpu.memory_space<vmem>>, %arg9: memref<8x20x52xbf16, #tpu.memory_space<vmem>>, %arg10: memref<4x160x128xbf16, #tpu.memory_space<vmem>>, %arg11: memref<1x128xf32, #tpu.memory_space<vmem>>, %arg12: memref<4x8x20xbf16, #tpu.memory_space<vmem>>, %arg13: memref<2x128x128xbf16, #tpu.memory_space<vmem>>, %arg14: memref<1x128xf32, #tpu.memory_space<vmem>>, %arg15: memref<2x4x8xbf16, #tpu.memory_space<vmem>>, %arg16: memref<2x128x128xbf16, #tpu.memory_space<vmem>>, %arg17: memref<1x128xf32, #tpu.memory_space<vmem>>, %arg18: memref<2x2x4xbf16, #tpu.memory_space<vmem>>, %arg19: memref<128x256xbf16, #tpu.memory_space<vmem>>, %arg20: memref<1x256xf32, #tpu.memory_space<vmem>>, %arg21: memref<256x128xbf16, #tpu.memory_space<vmem>>, %arg22: memref<1x128xf32, #tpu.memory_space<vmem>>, %arg23: memref<128x64xbf16, #tpu.memory_space<vmem>>, %arg24: memref<1x64xf32, #tpu.memory_space<vmem>>, %arg25: memref<64x64xbf16, #tpu.memory_space<vmem>>, %arg26: memref<1x64xf32, #tpu.memory_space<vmem>>, %arg27: memref<64x32xbf16, #tpu.memory_space<vmem>>, %arg28: memref<1x32xf32, #tpu.memory_space<vmem>>, %arg29: memref<64x128xbf16, #tpu.memory_space<vmem>>, %arg30: memref<32x128xbf16, #tpu.memory_space<vmem>>, %arg31: memref<1x128xf32, #tpu.memory_space<vmem>>, %arg32: memref<2x128xf32, #tpu.memory_space<vmem>>) attributes {dimension_semantics = [#tpu.dimension_semantics<arbitrary>], iteration_bounds = array<i64: 1>, scalar_prefetch = 0 : i64, scratch_operands = 0 : i64, tpu.core_type = #tpu.core_type<tc>, window_params = [{pipeline_mode = #tpu.pipeline_mode<synchronous>, transform_indices = @transform_0, window_bounds = array<i64: 464, 58>}, {pipeline_mode = #tpu.pipeline_mode<synchronous>, transform_indices = @transform_1, window_bounds = array<i64: 4, 116, 464>}, {pipeline_mode = #tpu.pipeline_mode<synchronous>, transform_indices = @transform_2, window_bounds = array<i64: 4, 58, 232>}, {pipeline_mode = #tpu.pipeline_mode<synchronous>, transform_indices = @transform_3, window_bounds = array<i64: 8, 232, 208>}, {pipeline_mode = #tpu.pipeline_mode<synchronous>, transform_indices = @transform_4, window_bounds = array<i64: 1, 208>}, {pipeline_mode = #tpu.pipeline_mode<synchronous>, transform_indices = @transform_5, window_bounds = array<i64: 8, 52, 116>}, {pipeline_mode = #tpu.pipeline_mode<synchronous>, transform_indices = @transform_6, window_bounds = array<i64: 8, 208, 160>}, {pipeline_mode = #tpu.pipeline_mode<synchronous>, transform_indices = @transform_7, window_bounds = array<i64: 1, 160>}, {pipeline_mode = #tpu.pipeline_mode<synchronous>, transform_indices = @transform_8, window_bounds = array<i64: 8, 20, 52>}, {pipeline_mode = #tpu.pipeline_mode<synchronous>, transform_indices = @transform_9, window_bounds = array<i64: 4, 160, 128>}, {pipeline_mode = #tpu.pipeline_mode<synchronous>, transform_indices = @transform_10, window_bounds = array<i64: 1, 128>}, {pipeline_mode = #tpu.pipeline_mode<synchronous>, transform_indices = @transform_11, window_bounds = array<i64: 4, 8, 20>}, {pipeline_mode = #tpu.pipeline_mode<synchronous>, transform_indices = @transform_12, window_bounds = array<i64: 2, 128, 128>}, {pipeline_mode = #tpu.pipeline_mode<synchronous>, transform_indices = @transform_13, window_bounds = array<i64: 1, 128>}, {pipeline_mode = #tpu.pipeline_mode<synchronous>, transform_indices = @transform_14, window_bounds = array<i64: 2, 4, 8>}, {pipeline_mode = #tpu.pipeline_mode<synchronous>, transform_indices = @transform_15, window_bounds = array<i64: 2, 128, 128>}, {pipeline_mode = #tpu.pipeline_mode<synchronous>, transform_indices = @transform_16, window_bounds = array<i64: 1, 128>}, {pipeline_mode = #tpu.pipeline_mode<synchronous>, transform_indices = @transform_17, window_bounds = array<i64: 2, 2, 4>}, {pipeline_mode = #tpu.pipeline_mode<synchronous>, transform_indices = @transform_18, window_bounds = array<i64: 128, 256>}, {pipeline_mode = #tpu.pipeline_mode<synchronous>, transform_indices = @transform_19, window_bounds = array<i64: 1, 256>}, {pipeline_mode = #tpu.pipeline_mode<synchronous>, transform_indices = @transform_20, window_bounds = array<i64: 256, 128>}, {pipeline_mode = #tpu.pipeline_mode<synchronous>, transform_indices = @transform_21, window_bounds = array<i64: 1, 128>}, {pipeline_mode = #tpu.pipeline_mode<synchronous>, transform_indices = @transform_22, window_bounds = array<i64: 128, 64>}, {pipeline_mode = #tpu.pipeline_mode<synchronous>, transform_indices = @transform_23, window_bounds = array<i64: 1, 64>}, {pipeline_mode = #tpu.pipeline_mode<synchronous>, transform_indices = @transform_24, window_bounds = array<i64: 64, 64>}, {pipeline_mode = #tpu.pipeline_mode<synchronous>, transform_indices = @transform_25, window_bounds = array<i64: 1, 64>}, {pipeline_mode = #tpu.pipeline_mode<synchronous>, transform_indices = @transform_26, window_bounds = array<i64: 64, 32>}, {pipeline_mode = #tpu.pipeline_mode<synchronous>, transform_indices = @transform_27, window_bounds = array<i64: 1, 32>}, {pipeline_mode = #tpu.pipeline_mode<synchronous>, transform_indices = @transform_28, window_bounds = array<i64: 64, 128>}, {pipeline_mode = #tpu.pipeline_mode<synchronous>, transform_indices = @transform_29, window_bounds = array<i64: 32, 128>}, {pipeline_mode = #tpu.pipeline_mode<synchronous>, transform_indices = @transform_30, window_bounds = array<i64: 1, 128>}, {pipeline_mode = #tpu.pipeline_mode<synchronous>, transform_indices = @transform_31, window_bounds = array<i64: 2, 128>}]} {
    %c0 = arith.constant 0 : index
    %c0_0 = arith.constant 0 : index
    %0 = vector.load %arg1[%c0, %c0_0] : memref<464x58xf32, #tpu.memory_space<vmem>>, vector<464x58xf32>
    %1 = arith.truncf %0 : vector<464x58xf32> to vector<464x58xbf16>
    %cst = arith.constant 0.000000e+00 : f32
    %2 = vector.broadcast %cst : f32 to vector<116x232xf32>
    %c0_1 = arith.constant 0 : index
    %c0_2 = arith.constant 0 : index
    %c0_3 = arith.constant 0 : index
    %3 = vector.load %arg2[%c0_1, %c0_2, %c0_3] : memref<4x116x464xbf16, #tpu.memory_space<vmem>>, vector<1x116x464xbf16>
    %4 = vector.shape_cast %3 : vector<1x116x464xbf16> to vector<116x464xbf16>
    %cst_4 = arith.constant dense<0.000000e+00> : vector<116x58xf32>
    %5 = tpu.matmul %4, %1, %cst_4 {dimension_numbers = #tpu.dot_dimension_numbers<[1], [0], [0], [1], [0, 0, 1, 1], [], []>} : vector<116x464xbf16>, vector<464x58xbf16>, vector<116x58xf32> -> vector<116x58xf32>
    %c0_5 = arith.constant 0 : index
    %c0_6 = arith.constant 0 : index
    %c0_7 = arith.constant 0 : index
    %6 = vector.load %arg3[%c0_5, %c0_6, %c0_7] : memref<4x58x232xbf16, #tpu.memory_space<vmem>>, vector<1x58x232xbf16>
    %7 = vector.shape_cast %6 : vector<1x58x232xbf16> to vector<58x232xbf16>
    %8 = arith.truncf %5 : vector<116x58xf32> to vector<116x58xbf16>
    %cst_8 = arith.constant dense<0.000000e+00> : vector<116x232xf32>
    %9 = tpu.matmul %8, %7, %cst_8 {dimension_numbers = #tpu.dot_dimension_numbers<[1], [0], [0], [1], [0, 0, 1, 1], [], []>} : vector<116x58xbf16>, vector<58x232xbf16>, vector<116x232xf32> -> vector<116x232xf32>
    %10 = arith.addf %2, %9 : vector<116x232xf32>
    %c1 = arith.constant 1 : index
    %c0_9 = arith.constant 0 : index
    %c0_10 = arith.constant 0 : index
    %11 = vector.load %arg2[%c1, %c0_9, %c0_10] : memref<4x116x464xbf16, #tpu.memory_space<vmem>>, vector<1x116x464xbf16>
    %12 = vector.shape_cast %11 : vector<1x116x464xbf16> to vector<116x464xbf16>
    %cst_11 = arith.constant dense<0.000000e+00> : vector<116x58xf32>
    %13 = tpu.matmul %12, %1, %cst_11 {dimension_numbers = #tpu.dot_dimension_numbers<[1], [0], [0], [1], [0, 0, 1, 1], [], []>} : vector<116x464xbf16>, vector<464x58xbf16>, vector<116x58xf32> -> vector<116x58xf32>
    %c1_12 = arith.constant 1 : index
    %c0_13 = arith.constant 0 : index
    %c0_14 = arith.constant 0 : index
    %14 = vector.load %arg3[%c1_12, %c0_13, %c0_14] : memref<4x58x232xbf16, #tpu.memory_space<vmem>>, vector<1x58x232xbf16>
    %15 = vector.shape_cast %14 : vector<1x58x232xbf16> to vector<58x232xbf16>
    %16 = arith.truncf %13 : vector<116x58xf32> to vector<116x58xbf16>
    %cst_15 = arith.constant dense<0.000000e+00> : vector<116x232xf32>
    %17 = tpu.matmul %16, %15, %cst_15 {dimension_numbers = #tpu.dot_dimension_numbers<[1], [0], [0], [1], [0, 0, 1, 1], [], []>} : vector<116x58xbf16>, vector<58x232xbf16>, vector<116x232xf32> -> vector<116x232xf32>
    %18 = arith.addf %10, %17 : vector<116x232xf32>
    %c2 = arith.constant 2 : index
    %c0_16 = arith.constant 0 : index
    %c0_17 = arith.constant 0 : index
    %19 = vector.load %arg2[%c2, %c0_16, %c0_17] : memref<4x116x464xbf16, #tpu.memory_space<vmem>>, vector<1x116x464xbf16>
    %20 = vector.shape_cast %19 : vector<1x116x464xbf16> to vector<116x464xbf16>
    %cst_18 = arith.constant dense<0.000000e+00> : vector<116x58xf32>
    %21 = tpu.matmul %20, %1, %cst_18 {dimension_numbers = #tpu.dot_dimension_numbers<[1], [0], [0], [1], [0, 0, 1, 1], [], []>} : vector<116x464xbf16>, vector<464x58xbf16>, vector<116x58xf32> -> vector<116x58xf32>
    %c2_19 = arith.constant 2 : index
    %c0_20 = arith.constant 0 : index
    %c0_21 = arith.constant 0 : index
    %22 = vector.load %arg3[%c2_19, %c0_20, %c0_21] : memref<4x58x232xbf16, #tpu.memory_space<vmem>>, vector<1x58x232xbf16>
    %23 = vector.shape_cast %22 : vector<1x58x232xbf16> to vector<58x232xbf16>
    %24 = arith.truncf %21 : vector<116x58xf32> to vector<116x58xbf16>
    %cst_22 = arith.constant dense<0.000000e+00> : vector<116x232xf32>
    %25 = tpu.matmul %24, %23, %cst_22 {dimension_numbers = #tpu.dot_dimension_numbers<[1], [0], [0], [1], [0, 0, 1, 1], [], []>} : vector<116x58xbf16>, vector<58x232xbf16>, vector<116x232xf32> -> vector<116x232xf32>
    %26 = arith.addf %18, %25 : vector<116x232xf32>
    %c3 = arith.constant 3 : index
    %c0_23 = arith.constant 0 : index
    %c0_24 = arith.constant 0 : index
    %27 = vector.load %arg2[%c3, %c0_23, %c0_24] : memref<4x116x464xbf16, #tpu.memory_space<vmem>>, vector<1x116x464xbf16>
    %28 = vector.shape_cast %27 : vector<1x116x464xbf16> to vector<116x464xbf16>
    %cst_25 = arith.constant dense<0.000000e+00> : vector<116x58xf32>
    %29 = tpu.matmul %28, %1, %cst_25 {dimension_numbers = #tpu.dot_dimension_numbers<[1], [0], [0], [1], [0, 0, 1, 1], [], []>} : vector<116x464xbf16>, vector<464x58xbf16>, vector<116x58xf32> -> vector<116x58xf32>
    %c3_26 = arith.constant 3 : index
    %c0_27 = arith.constant 0 : index
    %c0_28 = arith.constant 0 : index
    %30 = vector.load %arg3[%c3_26, %c0_27, %c0_28] : memref<4x58x232xbf16, #tpu.memory_space<vmem>>, vector<1x58x232xbf16>
    %31 = vector.shape_cast %30 : vector<1x58x232xbf16> to vector<58x232xbf16>
    %32 = arith.truncf %29 : vector<116x58xf32> to vector<116x58xbf16>
    %cst_29 = arith.constant dense<0.000000e+00> : vector<116x232xf32>
    %33 = tpu.matmul %32, %31, %cst_29 {dimension_numbers = #tpu.dot_dimension_numbers<[1], [0], [0], [1], [0, 0, 1, 1], [], []>} : vector<116x58xbf16>, vector<58x232xbf16>, vector<116x232xf32> -> vector<116x232xf32>
    %34 = arith.addf %26, %33 : vector<116x232xf32>
    %35 = arith.truncf %34 : vector<116x232xf32> to vector<116x232xbf16>
    %cst_30 = arith.constant 0.000000e+00 : f32
    %36 = vector.broadcast %cst_30 : f32 to vector<52x208xf32>
    %c0_31 = arith.constant 0 : index
    %c0_32 = arith.constant 0 : index
    %c0_33 = arith.constant 0 : index
    %37 = vector.load %arg6[%c0_31, %c0_32, %c0_33] : memref<8x52x116xbf16, #tpu.memory_space<vmem>>, vector<1x52x116xbf16>
    %38 = vector.shape_cast %37 : vector<1x52x116xbf16> to vector<52x116xbf16>
    %cst_34 = arith.constant dense<0.000000e+00> : vector<52x232xf32>
    %39 = tpu.matmul %38, %35, %cst_34 {dimension_numbers = #tpu.dot_dimension_numbers<[1], [0], [0], [1], [0, 0, 1, 1], [], []>} : vector<52x116xbf16>, vector<116x232xbf16>, vector<52x232xf32> -> vector<52x232xf32>
    %c0_35 = arith.constant 0 : index
    %c0_36 = arith.constant 0 : index
    %c0_37 = arith.constant 0 : index
    %40 = vector.load %arg4[%c0_35, %c0_36, %c0_37] : memref<8x232x208xbf16, #tpu.memory_space<vmem>>, vector<1x232x208xbf16>
    %41 = vector.shape_cast %40 : vector<1x232x208xbf16> to vector<232x208xbf16>
    %42 = arith.truncf %39 : vector<52x232xf32> to vector<52x232xbf16>
    %cst_38 = arith.constant dense<0.000000e+00> : vector<52x208xf32>
    %43 = tpu.matmul %42, %41, %cst_38 {dimension_numbers = #tpu.dot_dimension_numbers<[1], [0], [0], [1], [0, 0, 1, 1], [], []>} : vector<52x232xbf16>, vector<232x208xbf16>, vector<52x208xf32> -> vector<52x208xf32>
    %44 = arith.addf %36, %43 : vector<52x208xf32>
    %c1_39 = arith.constant 1 : index
    %c0_40 = arith.constant 0 : index
    %c0_41 = arith.constant 0 : index
    %45 = vector.load %arg6[%c1_39, %c0_40, %c0_41] : memref<8x52x116xbf16, #tpu.memory_space<vmem>>, vector<1x52x116xbf16>
    %46 = vector.shape_cast %45 : vector<1x52x116xbf16> to vector<52x116xbf16>
    %cst_42 = arith.constant dense<0.000000e+00> : vector<52x232xf32>
    %47 = tpu.matmul %46, %35, %cst_42 {dimension_numbers = #tpu.dot_dimension_numbers<[1], [0], [0], [1], [0, 0, 1, 1], [], []>} : vector<52x116xbf16>, vector<116x232xbf16>, vector<52x232xf32> -> vector<52x232xf32>
    %c1_43 = arith.constant 1 : index
    %c0_44 = arith.constant 0 : index
    %c0_45 = arith.constant 0 : index
    %48 = vector.load %arg4[%c1_43, %c0_44, %c0_45] : memref<8x232x208xbf16, #tpu.memory_space<vmem>>, vector<1x232x208xbf16>
    %49 = vector.shape_cast %48 : vector<1x232x208xbf16> to vector<232x208xbf16>
    %50 = arith.truncf %47 : vector<52x232xf32> to vector<52x232xbf16>
    %cst_46 = arith.constant dense<0.000000e+00> : vector<52x208xf32>
    %51 = tpu.matmul %50, %49, %cst_46 {dimension_numbers = #tpu.dot_dimension_numbers<[1], [0], [0], [1], [0, 0, 1, 1], [], []>} : vector<52x232xbf16>, vector<232x208xbf16>, vector<52x208xf32> -> vector<52x208xf32>
    %52 = arith.addf %44, %51 : vector<52x208xf32>
    %c2_47 = arith.constant 2 : index
    %c0_48 = arith.constant 0 : index
    %c0_49 = arith.constant 0 : index
    %53 = vector.load %arg6[%c2_47, %c0_48, %c0_49] : memref<8x52x116xbf16, #tpu.memory_space<vmem>>, vector<1x52x116xbf16>
    %54 = vector.shape_cast %53 : vector<1x52x116xbf16> to vector<52x116xbf16>
    %cst_50 = arith.constant dense<0.000000e+00> : vector<52x232xf32>
    %55 = tpu.matmul %54, %35, %cst_50 {dimension_numbers = #tpu.dot_dimension_numbers<[1], [0], [0], [1], [0, 0, 1, 1], [], []>} : vector<52x116xbf16>, vector<116x232xbf16>, vector<52x232xf32> -> vector<52x232xf32>
    %c2_51 = arith.constant 2 : index
    %c0_52 = arith.constant 0 : index
    %c0_53 = arith.constant 0 : index
    %56 = vector.load %arg4[%c2_51, %c0_52, %c0_53] : memref<8x232x208xbf16, #tpu.memory_space<vmem>>, vector<1x232x208xbf16>
    %57 = vector.shape_cast %56 : vector<1x232x208xbf16> to vector<232x208xbf16>
    %58 = arith.truncf %55 : vector<52x232xf32> to vector<52x232xbf16>
    %cst_54 = arith.constant dense<0.000000e+00> : vector<52x208xf32>
    %59 = tpu.matmul %58, %57, %cst_54 {dimension_numbers = #tpu.dot_dimension_numbers<[1], [0], [0], [1], [0, 0, 1, 1], [], []>} : vector<52x232xbf16>, vector<232x208xbf16>, vector<52x208xf32> -> vector<52x208xf32>
    %60 = arith.addf %52, %59 : vector<52x208xf32>
    %c3_55 = arith.constant 3 : index
    %c0_56 = arith.constant 0 : index
    %c0_57 = arith.constant 0 : index
    %61 = vector.load %arg6[%c3_55, %c0_56, %c0_57] : memref<8x52x116xbf16, #tpu.memory_space<vmem>>, vector<1x52x116xbf16>
    %62 = vector.shape_cast %61 : vector<1x52x116xbf16> to vector<52x116xbf16>
    %cst_58 = arith.constant dense<0.000000e+00> : vector<52x232xf32>
    %63 = tpu.matmul %62, %35, %cst_58 {dimension_numbers = #tpu.dot_dimension_numbers<[1], [0], [0], [1], [0, 0, 1, 1], [], []>} : vector<52x116xbf16>, vector<116x232xbf16>, vector<52x232xf32> -> vector<52x232xf32>
    %c3_59 = arith.constant 3 : index
    %c0_60 = arith.constant 0 : index
    %c0_61 = arith.constant 0 : index
    %64 = vector.load %arg4[%c3_59, %c0_60, %c0_61] : memref<8x232x208xbf16, #tpu.memory_space<vmem>>, vector<1x232x208xbf16>
    %65 = vector.shape_cast %64 : vector<1x232x208xbf16> to vector<232x208xbf16>
    %66 = arith.truncf %63 : vector<52x232xf32> to vector<52x232xbf16>
    %cst_62 = arith.constant dense<0.000000e+00> : vector<52x208xf32>
    %67 = tpu.matmul %66, %65, %cst_62 {dimension_numbers = #tpu.dot_dimension_numbers<[1], [0], [0], [1], [0, 0, 1, 1], [], []>} : vector<52x232xbf16>, vector<232x208xbf16>, vector<52x208xf32> -> vector<52x208xf32>
    %68 = arith.addf %60, %67 : vector<52x208xf32>
    %c4 = arith.constant 4 : index
    %c0_63 = arith.constant 0 : index
    %c0_64 = arith.constant 0 : index
    %69 = vector.load %arg6[%c4, %c0_63, %c0_64] : memref<8x52x116xbf16, #tpu.memory_space<vmem>>, vector<1x52x116xbf16>
    %70 = vector.shape_cast %69 : vector<1x52x116xbf16> to vector<52x116xbf16>
    %cst_65 = arith.constant dense<0.000000e+00> : vector<52x232xf32>
    %71 = tpu.matmul %70, %35, %cst_65 {dimension_numbers = #tpu.dot_dimension_numbers<[1], [0], [0], [1], [0, 0, 1, 1], [], []>} : vector<52x116xbf16>, vector<116x232xbf16>, vector<52x232xf32> -> vector<52x232xf32>
    %c4_66 = arith.constant 4 : index
    %c0_67 = arith.constant 0 : index
    %c0_68 = arith.constant 0 : index
    %72 = vector.load %arg4[%c4_66, %c0_67, %c0_68] : memref<8x232x208xbf16, #tpu.memory_space<vmem>>, vector<1x232x208xbf16>
    %73 = vector.shape_cast %72 : vector<1x232x208xbf16> to vector<232x208xbf16>
    %74 = arith.truncf %71 : vector<52x232xf32> to vector<52x232xbf16>
    %cst_69 = arith.constant dense<0.000000e+00> : vector<52x208xf32>
    %75 = tpu.matmul %74, %73, %cst_69 {dimension_numbers = #tpu.dot_dimension_numbers<[1], [0], [0], [1], [0, 0, 1, 1], [], []>} : vector<52x232xbf16>, vector<232x208xbf16>, vector<52x208xf32> -> vector<52x208xf32>
    %76 = arith.addf %68, %75 : vector<52x208xf32>
    %c5 = arith.constant 5 : index
    %c0_70 = arith.constant 0 : index
    %c0_71 = arith.constant 0 : index
    %77 = vector.load %arg6[%c5, %c0_70, %c0_71] : memref<8x52x116xbf16, #tpu.memory_space<vmem>>, vector<1x52x116xbf16>
    %78 = vector.shape_cast %77 : vector<1x52x116xbf16> to vector<52x116xbf16>
    %cst_72 = arith.constant dense<0.000000e+00> : vector<52x232xf32>
    %79 = tpu.matmul %78, %35, %cst_72 {dimension_numbers = #tpu.dot_dimension_numbers<[1], [0], [0], [1], [0, 0, 1, 1], [], []>} : vector<52x116xbf16>, vector<116x232xbf16>, vector<52x232xf32> -> vector<52x232xf32>
    %c5_73 = arith.constant 5 : index
    %c0_74 = arith.constant 0 : index
    %c0_75 = arith.constant 0 : index
    %80 = vector.load %arg4[%c5_73, %c0_74, %c0_75] : memref<8x232x208xbf16, #tpu.memory_space<vmem>>, vector<1x232x208xbf16>
    %81 = vector.shape_cast %80 : vector<1x232x208xbf16> to vector<232x208xbf16>
    %82 = arith.truncf %79 : vector<52x232xf32> to vector<52x232xbf16>
    %cst_76 = arith.constant dense<0.000000e+00> : vector<52x208xf32>
    %83 = tpu.matmul %82, %81, %cst_76 {dimension_numbers = #tpu.dot_dimension_numbers<[1], [0], [0], [1], [0, 0, 1, 1], [], []>} : vector<52x232xbf16>, vector<232x208xbf16>, vector<52x208xf32> -> vector<52x208xf32>
    %84 = arith.addf %76, %83 : vector<52x208xf32>
    %c6 = arith.constant 6 : index
    %c0_77 = arith.constant 0 : index
    %c0_78 = arith.constant 0 : index
    %85 = vector.load %arg6[%c6, %c0_77, %c0_78] : memref<8x52x116xbf16, #tpu.memory_space<vmem>>, vector<1x52x116xbf16>
    %86 = vector.shape_cast %85 : vector<1x52x116xbf16> to vector<52x116xbf16>
    %cst_79 = arith.constant dense<0.000000e+00> : vector<52x232xf32>
    %87 = tpu.matmul %86, %35, %cst_79 {dimension_numbers = #tpu.dot_dimension_numbers<[1], [0], [0], [1], [0, 0, 1, 1], [], []>} : vector<52x116xbf16>, vector<116x232xbf16>, vector<52x232xf32> -> vector<52x232xf32>
    %c6_80 = arith.constant 6 : index
    %c0_81 = arith.constant 0 : index
    %c0_82 = arith.constant 0 : index
    %88 = vector.load %arg4[%c6_80, %c0_81, %c0_82] : memref<8x232x208xbf16, #tpu.memory_space<vmem>>, vector<1x232x208xbf16>
    %89 = vector.shape_cast %88 : vector<1x232x208xbf16> to vector<232x208xbf16>
    %90 = arith.truncf %87 : vector<52x232xf32> to vector<52x232xbf16>
    %cst_83 = arith.constant dense<0.000000e+00> : vector<52x208xf32>
    %91 = tpu.matmul %90, %89, %cst_83 {dimension_numbers = #tpu.dot_dimension_numbers<[1], [0], [0], [1], [0, 0, 1, 1], [], []>} : vector<52x232xbf16>, vector<232x208xbf16>, vector<52x208xf32> -> vector<52x208xf32>
    %92 = arith.addf %84, %91 : vector<52x208xf32>
    %c7 = arith.constant 7 : index
    %c0_84 = arith.constant 0 : index
    %c0_85 = arith.constant 0 : index
    %93 = vector.load %arg6[%c7, %c0_84, %c0_85] : memref<8x52x116xbf16, #tpu.memory_space<vmem>>, vector<1x52x116xbf16>
    %94 = vector.shape_cast %93 : vector<1x52x116xbf16> to vector<52x116xbf16>
    %cst_86 = arith.constant dense<0.000000e+00> : vector<52x232xf32>
    %95 = tpu.matmul %94, %35, %cst_86 {dimension_numbers = #tpu.dot_dimension_numbers<[1], [0], [0], [1], [0, 0, 1, 1], [], []>} : vector<52x116xbf16>, vector<116x232xbf16>, vector<52x232xf32> -> vector<52x232xf32>
    %c7_87 = arith.constant 7 : index
    %c0_88 = arith.constant 0 : index
    %c0_89 = arith.constant 0 : index
    %96 = vector.load %arg4[%c7_87, %c0_88, %c0_89] : memref<8x232x208xbf16, #tpu.memory_space<vmem>>, vector<1x232x208xbf16>
    %97 = vector.shape_cast %96 : vector<1x232x208xbf16> to vector<232x208xbf16>
    %98 = arith.truncf %95 : vector<52x232xf32> to vector<52x232xbf16>
    %cst_90 = arith.constant dense<0.000000e+00> : vector<52x208xf32>
    %99 = tpu.matmul %98, %97, %cst_90 {dimension_numbers = #tpu.dot_dimension_numbers<[1], [0], [0], [1], [0, 0, 1, 1], [], []>} : vector<52x232xbf16>, vector<232x208xbf16>, vector<52x208xf32> -> vector<52x208xf32>
    %100 = arith.addf %92, %99 : vector<52x208xf32>
    %c0_91 = arith.constant 0 : index
    %c0_92 = arith.constant 0 : index
    %101 = vector.load %arg5[%c0_91, %c0_92] : memref<1x208xf32, #tpu.memory_space<vmem>>, vector<1x208xf32>
    %102 = vector.broadcast %101 : vector<1x208xf32> to vector<52x208xf32>
    %103 = arith.addf %100, %102 : vector<52x208xf32>
    %cst_93 = arith.constant 0.000000e+00 : f32
    %104 = vector.broadcast %cst_93 : f32 to vector<52x208xf32>
    %105 = arith.cmpf oge, %103, %104 : vector<52x208xf32>
    %cst_94 = arith.constant 0.00999999977 : f32
    %106 = vector.broadcast %cst_94 : f32 to vector<52x208xf32>
    %107 = arith.mulf %106, %103 : vector<52x208xf32>
    %108 = arith.select %105, %103, %107 : vector<52x208xi1>, vector<52x208xf32>
    %109 = arith.truncf %108 : vector<52x208xf32> to vector<52x208xbf16>
    %cst_95 = arith.constant 0.000000e+00 : f32
    %110 = vector.broadcast %cst_95 : f32 to vector<20x160xf32>
    %c0_96 = arith.constant 0 : index
    %c0_97 = arith.constant 0 : index
    %c0_98 = arith.constant 0 : index
    %111 = vector.load %arg9[%c0_96, %c0_97, %c0_98] : memref<8x20x52xbf16, #tpu.memory_space<vmem>>, vector<1x20x52xbf16>
    %112 = vector.shape_cast %111 : vector<1x20x52xbf16> to vector<20x52xbf16>
    %cst_99 = arith.constant dense<0.000000e+00> : vector<20x208xf32>
    %113 = tpu.matmul %112, %109, %cst_99 {dimension_numbers = #tpu.dot_dimension_numbers<[1], [0], [0], [1], [0, 0, 1, 1], [], []>} : vector<20x52xbf16>, vector<52x208xbf16>, vector<20x208xf32> -> vector<20x208xf32>
    %c0_100 = arith.constant 0 : index
    %c0_101 = arith.constant 0 : index
    %c0_102 = arith.constant 0 : index
    %114 = vector.load %arg7[%c0_100, %c0_101, %c0_102] : memref<8x208x160xbf16, #tpu.memory_space<vmem>>, vector<1x208x160xbf16>
    %115 = vector.shape_cast %114 : vector<1x208x160xbf16> to vector<208x160xbf16>
    %116 = arith.truncf %113 : vector<20x208xf32> to vector<20x208xbf16>
    %cst_103 = arith.constant dense<0.000000e+00> : vector<20x160xf32>
    %117 = tpu.matmul %116, %115, %cst_103 {dimension_numbers = #tpu.dot_dimension_numbers<[1], [0], [0], [1], [0, 0, 1, 1], [], []>} : vector<20x208xbf16>, vector<208x160xbf16>, vector<20x160xf32> -> vector<20x160xf32>
    %118 = arith.addf %110, %117 : vector<20x160xf32>
    %c1_104 = arith.constant 1 : index
    %c0_105 = arith.constant 0 : index
    %c0_106 = arith.constant 0 : index
    %119 = vector.load %arg9[%c1_104, %c0_105, %c0_106] : memref<8x20x52xbf16, #tpu.memory_space<vmem>>, vector<1x20x52xbf16>
    %120 = vector.shape_cast %119 : vector<1x20x52xbf16> to vector<20x52xbf16>
    %cst_107 = arith.constant dense<0.000000e+00> : vector<20x208xf32>
    %121 = tpu.matmul %120, %109, %cst_107 {dimension_numbers = #tpu.dot_dimension_numbers<[1], [0], [0], [1], [0, 0, 1, 1], [], []>} : vector<20x52xbf16>, vector<52x208xbf16>, vector<20x208xf32> -> vector<20x208xf32>
    %c1_108 = arith.constant 1 : index
    %c0_109 = arith.constant 0 : index
    %c0_110 = arith.constant 0 : index
    %122 = vector.load %arg7[%c1_108, %c0_109, %c0_110] : memref<8x208x160xbf16, #tpu.memory_space<vmem>>, vector<1x208x160xbf16>
    %123 = vector.shape_cast %122 : vector<1x208x160xbf16> to vector<208x160xbf16>
    %124 = arith.truncf %121 : vector<20x208xf32> to vector<20x208xbf16>
    %cst_111 = arith.constant dense<0.000000e+00> : vector<20x160xf32>
    %125 = tpu.matmul %124, %123, %cst_111 {dimension_numbers = #tpu.dot_dimension_numbers<[1], [0], [0], [1], [0, 0, 1, 1], [], []>} : vector<20x208xbf16>, vector<208x160xbf16>, vector<20x160xf32> -> vector<20x160xf32>
    %126 = arith.addf %118, %125 : vector<20x160xf32>
    %c2_112 = arith.constant 2 : index
    %c0_113 = arith.constant 0 : index
    %c0_114 = arith.constant 0 : index
    %127 = vector.load %arg9[%c2_112, %c0_113, %c0_114] : memref<8x20x52xbf16, #tpu.memory_space<vmem>>, vector<1x20x52xbf16>
    %128 = vector.shape_cast %127 : vector<1x20x52xbf16> to vector<20x52xbf16>
    %cst_115 = arith.constant dense<0.000000e+00> : vector<20x208xf32>
    %129 = tpu.matmul %128, %109, %cst_115 {dimension_numbers = #tpu.dot_dimension_numbers<[1], [0], [0], [1], [0, 0, 1, 1], [], []>} : vector<20x52xbf16>, vector<52x208xbf16>, vector<20x208xf32> -> vector<20x208xf32>
    %c2_116 = arith.constant 2 : index
    %c0_117 = arith.constant 0 : index
    %c0_118 = arith.constant 0 : index
    %130 = vector.load %arg7[%c2_116, %c0_117, %c0_118] : memref<8x208x160xbf16, #tpu.memory_space<vmem>>, vector<1x208x160xbf16>
    %131 = vector.shape_cast %130 : vector<1x208x160xbf16> to vector<208x160xbf16>
    %132 = arith.truncf %129 : vector<20x208xf32> to vector<20x208xbf16>
    %cst_119 = arith.constant dense<0.000000e+00> : vector<20x160xf32>
    %133 = tpu.matmul %132, %131, %cst_119 {dimension_numbers = #tpu.dot_dimension_numbers<[1], [0], [0], [1], [0, 0, 1, 1], [], []>} : vector<20x208xbf16>, vector<208x160xbf16>, vector<20x160xf32> -> vector<20x160xf32>
    %134 = arith.addf %126, %133 : vector<20x160xf32>
    %c3_120 = arith.constant 3 : index
    %c0_121 = arith.constant 0 : index
    %c0_122 = arith.constant 0 : index
    %135 = vector.load %arg9[%c3_120, %c0_121, %c0_122] : memref<8x20x52xbf16, #tpu.memory_space<vmem>>, vector<1x20x52xbf16>
    %136 = vector.shape_cast %135 : vector<1x20x52xbf16> to vector<20x52xbf16>
    %cst_123 = arith.constant dense<0.000000e+00> : vector<20x208xf32>
    %137 = tpu.matmul %136, %109, %cst_123 {dimension_numbers = #tpu.dot_dimension_numbers<[1], [0], [0], [1], [0, 0, 1, 1], [], []>} : vector<20x52xbf16>, vector<52x208xbf16>, vector<20x208xf32> -> vector<20x208xf32>
    %c3_124 = arith.constant 3 : index
    %c0_125 = arith.constant 0 : index
    %c0_126 = arith.constant 0 : index
    %138 = vector.load %arg7[%c3_124, %c0_125, %c0_126] : memref<8x208x160xbf16, #tpu.memory_space<vmem>>, vector<1x208x160xbf16>
    %139 = vector.shape_cast %138 : vector<1x208x160xbf16> to vector<208x160xbf16>
    %140 = arith.truncf %137 : vector<20x208xf32> to vector<20x208xbf16>
    %cst_127 = arith.constant dense<0.000000e+00> : vector<20x160xf32>
    %141 = tpu.matmul %140, %139, %cst_127 {dimension_numbers = #tpu.dot_dimension_numbers<[1], [0], [0], [1], [0, 0, 1, 1], [], []>} : vector<20x208xbf16>, vector<208x160xbf16>, vector<20x160xf32> -> vector<20x160xf32>
    %142 = arith.addf %134, %141 : vector<20x160xf32>
    %c4_128 = arith.constant 4 : index
    %c0_129 = arith.constant 0 : index
    %c0_130 = arith.constant 0 : index
    %143 = vector.load %arg9[%c4_128, %c0_129, %c0_130] : memref<8x20x52xbf16, #tpu.memory_space<vmem>>, vector<1x20x52xbf16>
    %144 = vector.shape_cast %143 : vector<1x20x52xbf16> to vector<20x52xbf16>
    %cst_131 = arith.constant dense<0.000000e+00> : vector<20x208xf32>
    %145 = tpu.matmul %144, %109, %cst_131 {dimension_numbers = #tpu.dot_dimension_numbers<[1], [0], [0], [1], [0, 0, 1, 1], [], []>} : vector<20x52xbf16>, vector<52x208xbf16>, vector<20x208xf32> -> vector<20x208xf32>
    %c4_132 = arith.constant 4 : index
    %c0_133 = arith.constant 0 : index
    %c0_134 = arith.constant 0 : index
    %146 = vector.load %arg7[%c4_132, %c0_133, %c0_134] : memref<8x208x160xbf16, #tpu.memory_space<vmem>>, vector<1x208x160xbf16>
    %147 = vector.shape_cast %146 : vector<1x208x160xbf16> to vector<208x160xbf16>
    %148 = arith.truncf %145 : vector<20x208xf32> to vector<20x208xbf16>
    %cst_135 = arith.constant dense<0.000000e+00> : vector<20x160xf32>
    %149 = tpu.matmul %148, %147, %cst_135 {dimension_numbers = #tpu.dot_dimension_numbers<[1], [0], [0], [1], [0, 0, 1, 1], [], []>} : vector<20x208xbf16>, vector<208x160xbf16>, vector<20x160xf32> -> vector<20x160xf32>
    %150 = arith.addf %142, %149 : vector<20x160xf32>
    %c5_136 = arith.constant 5 : index
    %c0_137 = arith.constant 0 : index
    %c0_138 = arith.constant 0 : index
    %151 = vector.load %arg9[%c5_136, %c0_137, %c0_138] : memref<8x20x52xbf16, #tpu.memory_space<vmem>>, vector<1x20x52xbf16>
    %152 = vector.shape_cast %151 : vector<1x20x52xbf16> to vector<20x52xbf16>
    %cst_139 = arith.constant dense<0.000000e+00> : vector<20x208xf32>
    %153 = tpu.matmul %152, %109, %cst_139 {dimension_numbers = #tpu.dot_dimension_numbers<[1], [0], [0], [1], [0, 0, 1, 1], [], []>} : vector<20x52xbf16>, vector<52x208xbf16>, vector<20x208xf32> -> vector<20x208xf32>
    %c5_140 = arith.constant 5 : index
    %c0_141 = arith.constant 0 : index
    %c0_142 = arith.constant 0 : index
    %154 = vector.load %arg7[%c5_140, %c0_141, %c0_142] : memref<8x208x160xbf16, #tpu.memory_space<vmem>>, vector<1x208x160xbf16>
    %155 = vector.shape_cast %154 : vector<1x208x160xbf16> to vector<208x160xbf16>
    %156 = arith.truncf %153 : vector<20x208xf32> to vector<20x208xbf16>
    %cst_143 = arith.constant dense<0.000000e+00> : vector<20x160xf32>
    %157 = tpu.matmul %156, %155, %cst_143 {dimension_numbers = #tpu.dot_dimension_numbers<[1], [0], [0], [1], [0, 0, 1, 1], [], []>} : vector<20x208xbf16>, vector<208x160xbf16>, vector<20x160xf32> -> vector<20x160xf32>
    %158 = arith.addf %150, %157 : vector<20x160xf32>
    %c6_144 = arith.constant 6 : index
    %c0_145 = arith.constant 0 : index
    %c0_146 = arith.constant 0 : index
    %159 = vector.load %arg9[%c6_144, %c0_145, %c0_146] : memref<8x20x52xbf16, #tpu.memory_space<vmem>>, vector<1x20x52xbf16>
    %160 = vector.shape_cast %159 : vector<1x20x52xbf16> to vector<20x52xbf16>
    %cst_147 = arith.constant dense<0.000000e+00> : vector<20x208xf32>
    %161 = tpu.matmul %160, %109, %cst_147 {dimension_numbers = #tpu.dot_dimension_numbers<[1], [0], [0], [1], [0, 0, 1, 1], [], []>} : vector<20x52xbf16>, vector<52x208xbf16>, vector<20x208xf32> -> vector<20x208xf32>
    %c6_148 = arith.constant 6 : index
    %c0_149 = arith.constant 0 : index
    %c0_150 = arith.constant 0 : index
    %162 = vector.load %arg7[%c6_148, %c0_149, %c0_150] : memref<8x208x160xbf16, #tpu.memory_space<vmem>>, vector<1x208x160xbf16>
    %163 = vector.shape_cast %162 : vector<1x208x160xbf16> to vector<208x160xbf16>
    %164 = arith.truncf %161 : vector<20x208xf32> to vector<20x208xbf16>
    %cst_151 = arith.constant dense<0.000000e+00> : vector<20x160xf32>
    %165 = tpu.matmul %164, %163, %cst_151 {dimension_numbers = #tpu.dot_dimension_numbers<[1], [0], [0], [1], [0, 0, 1, 1], [], []>} : vector<20x208xbf16>, vector<208x160xbf16>, vector<20x160xf32> -> vector<20x160xf32>
    %166 = arith.addf %158, %165 : vector<20x160xf32>
    %c7_152 = arith.constant 7 : index
    %c0_153 = arith.constant 0 : index
    %c0_154 = arith.constant 0 : index
    %167 = vector.load %arg9[%c7_152, %c0_153, %c0_154] : memref<8x20x52xbf16, #tpu.memory_space<vmem>>, vector<1x20x52xbf16>
    %168 = vector.shape_cast %167 : vector<1x20x52xbf16> to vector<20x52xbf16>
    %cst_155 = arith.constant dense<0.000000e+00> : vector<20x208xf32>
    %169 = tpu.matmul %168, %109, %cst_155 {dimension_numbers = #tpu.dot_dimension_numbers<[1], [0], [0], [1], [0, 0, 1, 1], [], []>} : vector<20x52xbf16>, vector<52x208xbf16>, vector<20x208xf32> -> vector<20x208xf32>
    %c7_156 = arith.constant 7 : index
    %c0_157 = arith.constant 0 : index
    %c0_158 = arith.constant 0 : index
    %170 = vector.load %arg7[%c7_156, %c0_157, %c0_158] : memref<8x208x160xbf16, #tpu.memory_space<vmem>>, vector<1x208x160xbf16>
    %171 = vector.shape_cast %170 : vector<1x208x160xbf16> to vector<208x160xbf16>
    %172 = arith.truncf %169 : vector<20x208xf32> to vector<20x208xbf16>
    %cst_159 = arith.constant dense<0.000000e+00> : vector<20x160xf32>
    %173 = tpu.matmul %172, %171, %cst_159 {dimension_numbers = #tpu.dot_dimension_numbers<[1], [0], [0], [1], [0, 0, 1, 1], [], []>} : vector<20x208xbf16>, vector<208x160xbf16>, vector<20x160xf32> -> vector<20x160xf32>
    %174 = arith.addf %166, %173 : vector<20x160xf32>
    %c0_160 = arith.constant 0 : index
    %c0_161 = arith.constant 0 : index
    %175 = vector.load %arg8[%c0_160, %c0_161] : memref<1x160xf32, #tpu.memory_space<vmem>>, vector<1x160xf32>
    %176 = vector.broadcast %175 : vector<1x160xf32> to vector<20x160xf32>
    %177 = arith.addf %174, %176 : vector<20x160xf32>
    %cst_162 = arith.constant 0.000000e+00 : f32
    %178 = vector.broadcast %cst_162 : f32 to vector<20x160xf32>
    %179 = arith.cmpf oge, %177, %178 : vector<20x160xf32>
    %cst_163 = arith.constant 0.00999999977 : f32
    %180 = vector.broadcast %cst_163 : f32 to vector<20x160xf32>
    %181 = arith.mulf %180, %177 : vector<20x160xf32>
    %182 = arith.select %179, %177, %181 : vector<20x160xi1>, vector<20x160xf32>
    %183 = arith.truncf %182 : vector<20x160xf32> to vector<20x160xbf16>
    %cst_164 = arith.constant 0.000000e+00 : f32
    %184 = vector.broadcast %cst_164 : f32 to vector<8x128xf32>
    %c0_165 = arith.constant 0 : index
    %c0_166 = arith.constant 0 : index
    %c0_167 = arith.constant 0 : index
    %185 = vector.load %arg12[%c0_165, %c0_166, %c0_167] : memref<4x8x20xbf16, #tpu.memory_space<vmem>>, vector<1x8x20xbf16>
    %186 = vector.shape_cast %185 : vector<1x8x20xbf16> to vector<8x20xbf16>
    %cst_168 = arith.constant dense<0.000000e+00> : vector<8x160xf32>
    %187 = tpu.matmul %186, %183, %cst_168 {dimension_numbers = #tpu.dot_dimension_numbers<[1], [0], [0], [1], [0, 0, 1, 1], [], []>} : vector<8x20xbf16>, vector<20x160xbf16>, vector<8x160xf32> -> vector<8x160xf32>
    %c0_169 = arith.constant 0 : index
    %c0_170 = arith.constant 0 : index
    %c0_171 = arith.constant 0 : index
    %188 = vector.load %arg10[%c0_169, %c0_170, %c0_171] : memref<4x160x128xbf16, #tpu.memory_space<vmem>>, vector<1x160x128xbf16>
    %189 = vector.shape_cast %188 : vector<1x160x128xbf16> to vector<160x128xbf16>
    %190 = arith.truncf %187 : vector<8x160xf32> to vector<8x160xbf16>
    %cst_172 = arith.constant dense<0.000000e+00> : vector<8x128xf32>
    %191 = tpu.matmul %190, %189, %cst_172 {dimension_numbers = #tpu.dot_dimension_numbers<[1], [0], [0], [1], [0, 0, 1, 1], [], []>} : vector<8x160xbf16>, vector<160x128xbf16>, vector<8x128xf32> -> vector<8x128xf32>
    %192 = arith.addf %184, %191 : vector<8x128xf32>
    %c1_173 = arith.constant 1 : index
    %c0_174 = arith.constant 0 : index
    %c0_175 = arith.constant 0 : index
    %193 = vector.load %arg12[%c1_173, %c0_174, %c0_175] : memref<4x8x20xbf16, #tpu.memory_space<vmem>>, vector<1x8x20xbf16>
    %194 = vector.shape_cast %193 : vector<1x8x20xbf16> to vector<8x20xbf16>
    %cst_176 = arith.constant dense<0.000000e+00> : vector<8x160xf32>
    %195 = tpu.matmul %194, %183, %cst_176 {dimension_numbers = #tpu.dot_dimension_numbers<[1], [0], [0], [1], [0, 0, 1, 1], [], []>} : vector<8x20xbf16>, vector<20x160xbf16>, vector<8x160xf32> -> vector<8x160xf32>
    %c1_177 = arith.constant 1 : index
    %c0_178 = arith.constant 0 : index
    %c0_179 = arith.constant 0 : index
    %196 = vector.load %arg10[%c1_177, %c0_178, %c0_179] : memref<4x160x128xbf16, #tpu.memory_space<vmem>>, vector<1x160x128xbf16>
    %197 = vector.shape_cast %196 : vector<1x160x128xbf16> to vector<160x128xbf16>
    %198 = arith.truncf %195 : vector<8x160xf32> to vector<8x160xbf16>
    %cst_180 = arith.constant dense<0.000000e+00> : vector<8x128xf32>
    %199 = tpu.matmul %198, %197, %cst_180 {dimension_numbers = #tpu.dot_dimension_numbers<[1], [0], [0], [1], [0, 0, 1, 1], [], []>} : vector<8x160xbf16>, vector<160x128xbf16>, vector<8x128xf32> -> vector<8x128xf32>
    %200 = arith.addf %192, %199 : vector<8x128xf32>
    %c2_181 = arith.constant 2 : index
    %c0_182 = arith.constant 0 : index
    %c0_183 = arith.constant 0 : index
    %201 = vector.load %arg12[%c2_181, %c0_182, %c0_183] : memref<4x8x20xbf16, #tpu.memory_space<vmem>>, vector<1x8x20xbf16>
    %202 = vector.shape_cast %201 : vector<1x8x20xbf16> to vector<8x20xbf16>
    %cst_184 = arith.constant dense<0.000000e+00> : vector<8x160xf32>
    %203 = tpu.matmul %202, %183, %cst_184 {dimension_numbers = #tpu.dot_dimension_numbers<[1], [0], [0], [1], [0, 0, 1, 1], [], []>} : vector<8x20xbf16>, vector<20x160xbf16>, vector<8x160xf32> -> vector<8x160xf32>
    %c2_185 = arith.constant 2 : index
    %c0_186 = arith.constant 0 : index
    %c0_187 = arith.constant 0 : index
    %204 = vector.load %arg10[%c2_185, %c0_186, %c0_187] : memref<4x160x128xbf16, #tpu.memory_space<vmem>>, vector<1x160x128xbf16>
    %205 = vector.shape_cast %204 : vector<1x160x128xbf16> to vector<160x128xbf16>
    %206 = arith.truncf %203 : vector<8x160xf32> to vector<8x160xbf16>
    %cst_188 = arith.constant dense<0.000000e+00> : vector<8x128xf32>
    %207 = tpu.matmul %206, %205, %cst_188 {dimension_numbers = #tpu.dot_dimension_numbers<[1], [0], [0], [1], [0, 0, 1, 1], [], []>} : vector<8x160xbf16>, vector<160x128xbf16>, vector<8x128xf32> -> vector<8x128xf32>
    %208 = arith.addf %200, %207 : vector<8x128xf32>
    %c3_189 = arith.constant 3 : index
    %c0_190 = arith.constant 0 : index
    %c0_191 = arith.constant 0 : index
    %209 = vector.load %arg12[%c3_189, %c0_190, %c0_191] : memref<4x8x20xbf16, #tpu.memory_space<vmem>>, vector<1x8x20xbf16>
    %210 = vector.shape_cast %209 : vector<1x8x20xbf16> to vector<8x20xbf16>
    %cst_192 = arith.constant dense<0.000000e+00> : vector<8x160xf32>
    %211 = tpu.matmul %210, %183, %cst_192 {dimension_numbers = #tpu.dot_dimension_numbers<[1], [0], [0], [1], [0, 0, 1, 1], [], []>} : vector<8x20xbf16>, vector<20x160xbf16>, vector<8x160xf32> -> vector<8x160xf32>
    %c3_193 = arith.constant 3 : index
    %c0_194 = arith.constant 0 : index
    %c0_195 = arith.constant 0 : index
    %212 = vector.load %arg10[%c3_193, %c0_194, %c0_195] : memref<4x160x128xbf16, #tpu.memory_space<vmem>>, vector<1x160x128xbf16>
    %213 = vector.shape_cast %212 : vector<1x160x128xbf16> to vector<160x128xbf16>
    %214 = arith.truncf %211 : vector<8x160xf32> to vector<8x160xbf16>
    %cst_196 = arith.constant dense<0.000000e+00> : vector<8x128xf32>
    %215 = tpu.matmul %214, %213, %cst_196 {dimension_numbers = #tpu.dot_dimension_numbers<[1], [0], [0], [1], [0, 0, 1, 1], [], []>} : vector<8x160xbf16>, vector<160x128xbf16>, vector<8x128xf32> -> vector<8x128xf32>
    %216 = arith.addf %208, %215 : vector<8x128xf32>
    %c0_197 = arith.constant 0 : index
    %c0_198 = arith.constant 0 : index
    %217 = vector.load %arg11[%c0_197, %c0_198] : memref<1x128xf32, #tpu.memory_space<vmem>>, vector<1x128xf32>
    %218 = vector.broadcast %217 : vector<1x128xf32> to vector<8x128xf32>
    %219 = arith.addf %216, %218 : vector<8x128xf32>
    %cst_199 = arith.constant 0.000000e+00 : f32
    %220 = vector.broadcast %cst_199 : f32 to vector<8x128xf32>
    %221 = arith.cmpf oge, %219, %220 : vector<8x128xf32>
    %cst_200 = arith.constant 0.00999999977 : f32
    %222 = vector.broadcast %cst_200 : f32 to vector<8x128xf32>
    %223 = arith.mulf %222, %219 : vector<8x128xf32>
    %224 = arith.select %221, %219, %223 : vector<8x128xi1>, vector<8x128xf32>
    %225 = arith.truncf %224 : vector<8x128xf32> to vector<8x128xbf16>
    %cst_201 = arith.constant 0.000000e+00 : f32
    %226 = vector.broadcast %cst_201 : f32 to vector<4x128xf32>
    %c0_202 = arith.constant 0 : index
    %c0_203 = arith.constant 0 : index
    %c0_204 = arith.constant 0 : index
    %227 = vector.load %arg15[%c0_202, %c0_203, %c0_204] : memref<2x4x8xbf16, #tpu.memory_space<vmem>>, vector<1x4x8xbf16>
    %228 = vector.shape_cast %227 : vector<1x4x8xbf16> to vector<4x8xbf16>
    %cst_205 = arith.constant dense<0.000000e+00> : vector<4x128xf32>
    %229 = tpu.matmul %228, %225, %cst_205 {dimension_numbers = #tpu.dot_dimension_numbers<[1], [0], [0], [1], [0, 0, 1, 1], [], []>} : vector<4x8xbf16>, vector<8x128xbf16>, vector<4x128xf32> -> vector<4x128xf32>
    %c0_206 = arith.constant 0 : index
    %c0_207 = arith.constant 0 : index
    %c0_208 = arith.constant 0 : index
    %230 = vector.load %arg13[%c0_206, %c0_207, %c0_208] : memref<2x128x128xbf16, #tpu.memory_space<vmem>>, vector<1x128x128xbf16>
    %231 = vector.shape_cast %230 : vector<1x128x128xbf16> to vector<128x128xbf16>
    %232 = arith.truncf %229 : vector<4x128xf32> to vector<4x128xbf16>
    %cst_209 = arith.constant dense<0.000000e+00> : vector<4x128xf32>
    %233 = tpu.matmul %232, %231, %cst_209 {dimension_numbers = #tpu.dot_dimension_numbers<[1], [0], [0], [1], [0, 0, 1, 1], [], []>} : vector<4x128xbf16>, vector<128x128xbf16>, vector<4x128xf32> -> vector<4x128xf32>
    %234 = arith.addf %226, %233 : vector<4x128xf32>
    %c1_210 = arith.constant 1 : index
    %c0_211 = arith.constant 0 : index
    %c0_212 = arith.constant 0 : index
    %235 = vector.load %arg15[%c1_210, %c0_211, %c0_212] : memref<2x4x8xbf16, #tpu.memory_space<vmem>>, vector<1x4x8xbf16>
    %236 = vector.shape_cast %235 : vector<1x4x8xbf16> to vector<4x8xbf16>
    %cst_213 = arith.constant dense<0.000000e+00> : vector<4x128xf32>
    %237 = tpu.matmul %236, %225, %cst_213 {dimension_numbers = #tpu.dot_dimension_numbers<[1], [0], [0], [1], [0, 0, 1, 1], [], []>} : vector<4x8xbf16>, vector<8x128xbf16>, vector<4x128xf32> -> vector<4x128xf32>
    %c1_214 = arith.constant 1 : index
    %c0_215 = arith.constant 0 : index
    %c0_216 = arith.constant 0 : index
    %238 = vector.load %arg13[%c1_214, %c0_215, %c0_216] : memref<2x128x128xbf16, #tpu.memory_space<vmem>>, vector<1x128x128xbf16>
    %239 = vector.shape_cast %238 : vector<1x128x128xbf16> to vector<128x128xbf16>
    %240 = arith.truncf %237 : vector<4x128xf32> to vector<4x128xbf16>
    %cst_217 = arith.constant dense<0.000000e+00> : vector<4x128xf32>
    %241 = tpu.matmul %240, %239, %cst_217 {dimension_numbers = #tpu.dot_dimension_numbers<[1], [0], [0], [1], [0, 0, 1, 1], [], []>} : vector<4x128xbf16>, vector<128x128xbf16>, vector<4x128xf32> -> vector<4x128xf32>
    %242 = arith.addf %234, %241 : vector<4x128xf32>
    %c0_218 = arith.constant 0 : index
    %c0_219 = arith.constant 0 : index
    %243 = vector.load %arg14[%c0_218, %c0_219] : memref<1x128xf32, #tpu.memory_space<vmem>>, vector<1x128xf32>
    %244 = vector.broadcast %243 : vector<1x128xf32> to vector<4x128xf32>
    %245 = arith.addf %242, %244 : vector<4x128xf32>
    %cst_220 = arith.constant 0.000000e+00 : f32
    %246 = vector.broadcast %cst_220 : f32 to vector<4x128xf32>
    %247 = arith.cmpf oge, %245, %246 : vector<4x128xf32>
    %cst_221 = arith.constant 0.00999999977 : f32
    %248 = vector.broadcast %cst_221 : f32 to vector<4x128xf32>
    %249 = arith.mulf %248, %245 : vector<4x128xf32>
    %250 = arith.select %247, %245, %249 : vector<4x128xi1>, vector<4x128xf32>
    %251 = arith.truncf %250 : vector<4x128xf32> to vector<4x128xbf16>
    %cst_222 = arith.constant 0.000000e+00 : f32
    %252 = vector.broadcast %cst_222 : f32 to vector<2x128xf32>
    %c0_223 = arith.constant 0 : index
    %c0_224 = arith.constant 0 : index
    %c0_225 = arith.constant 0 : index
    %253 = vector.load %arg18[%c0_223, %c0_224, %c0_225] : memref<2x2x4xbf16, #tpu.memory_space<vmem>>, vector<1x2x4xbf16>
    %254 = vector.shape_cast %253 : vector<1x2x4xbf16> to vector<2x4xbf16>
    %cst_226 = arith.constant dense<0.000000e+00> : vector<2x128xf32>
    %255 = tpu.matmul %254, %251, %cst_226 {dimension_numbers = #tpu.dot_dimension_numbers<[1], [0], [0], [1], [0, 0, 1, 1], [], []>} : vector<2x4xbf16>, vector<4x128xbf16>, vector<2x128xf32> -> vector<2x128xf32>
    %c0_227 = arith.constant 0 : index
    %c0_228 = arith.constant 0 : index
    %c0_229 = arith.constant 0 : index
    %256 = vector.load %arg16[%c0_227, %c0_228, %c0_229] : memref<2x128x128xbf16, #tpu.memory_space<vmem>>, vector<1x128x128xbf16>
    %257 = vector.shape_cast %256 : vector<1x128x128xbf16> to vector<128x128xbf16>
    %258 = arith.truncf %255 : vector<2x128xf32> to vector<2x128xbf16>
    %cst_230 = arith.constant dense<0.000000e+00> : vector<2x128xf32>
    %259 = tpu.matmul %258, %257, %cst_230 {dimension_numbers = #tpu.dot_dimension_numbers<[1], [0], [0], [1], [0, 0, 1, 1], [], []>} : vector<2x128xbf16>, vector<128x128xbf16>, vector<2x128xf32> -> vector<2x128xf32>
    %260 = arith.addf %252, %259 : vector<2x128xf32>
    %c1_231 = arith.constant 1 : index
    %c0_232 = arith.constant 0 : index
    %c0_233 = arith.constant 0 : index
    %261 = vector.load %arg18[%c1_231, %c0_232, %c0_233] : memref<2x2x4xbf16, #tpu.memory_space<vmem>>, vector<1x2x4xbf16>
    %262 = vector.shape_cast %261 : vector<1x2x4xbf16> to vector<2x4xbf16>
    %cst_234 = arith.constant dense<0.000000e+00> : vector<2x128xf32>
    %263 = tpu.matmul %262, %251, %cst_234 {dimension_numbers = #tpu.dot_dimension_numbers<[1], [0], [0], [1], [0, 0, 1, 1], [], []>} : vector<2x4xbf16>, vector<4x128xbf16>, vector<2x128xf32> -> vector<2x128xf32>
    %c1_235 = arith.constant 1 : index
    %c0_236 = arith.constant 0 : index
    %c0_237 = arith.constant 0 : index
    %264 = vector.load %arg16[%c1_235, %c0_236, %c0_237] : memref<2x128x128xbf16, #tpu.memory_space<vmem>>, vector<1x128x128xbf16>
    %265 = vector.shape_cast %264 : vector<1x128x128xbf16> to vector<128x128xbf16>
    %266 = arith.truncf %263 : vector<2x128xf32> to vector<2x128xbf16>
    %cst_238 = arith.constant dense<0.000000e+00> : vector<2x128xf32>
    %267 = tpu.matmul %266, %265, %cst_238 {dimension_numbers = #tpu.dot_dimension_numbers<[1], [0], [0], [1], [0, 0, 1, 1], [], []>} : vector<2x128xbf16>, vector<128x128xbf16>, vector<2x128xf32> -> vector<2x128xf32>
    %268 = arith.addf %260, %267 : vector<2x128xf32>
    %c0_239 = arith.constant 0 : index
    %c0_240 = arith.constant 0 : index
    %269 = vector.load %arg17[%c0_239, %c0_240] : memref<1x128xf32, #tpu.memory_space<vmem>>, vector<1x128xf32>
    %270 = vector.broadcast %269 : vector<1x128xf32> to vector<2x128xf32>
    %271 = arith.addf %268, %270 : vector<2x128xf32>
    %272 = arith.truncf %271 : vector<2x128xf32> to vector<2x128xbf16>
    %c0_241 = arith.constant 0 : index
    %c0_242 = arith.constant 0 : index
    %273 = vector.load %arg19[%c0_241, %c0_242] : memref<128x256xbf16, #tpu.memory_space<vmem>>, vector<128x256xbf16>
    %cst_243 = arith.constant dense<0.000000e+00> : vector<2x256xf32>
    %274 = tpu.matmul %272, %273, %cst_243 {dimension_numbers = #tpu.dot_dimension_numbers<[1], [0], [0], [1], [0, 0, 1, 1], [], []>} : vector<2x128xbf16>, vector<128x256xbf16>, vector<2x256xf32> -> vector<2x256xf32>
    %c0_244 = arith.constant 0 : index
    %c0_245 = arith.constant 0 : index
    %275 = vector.load %arg20[%c0_244, %c0_245] : memref<1x256xf32, #tpu.memory_space<vmem>>, vector<1x256xf32>
    %276 = vector.broadcast %275 : vector<1x256xf32> to vector<2x256xf32>
    %277 = arith.addf %274, %276 : vector<2x256xf32>
    %cst_246 = arith.constant 0.000000e+00 : f32
    %278 = vector.broadcast %cst_246 : f32 to vector<2x256xf32>
    %279 = arith.cmpf oge, %277, %278 : vector<2x256xf32>
    %cst_247 = arith.constant 0.00999999977 : f32
    %280 = vector.broadcast %cst_247 : f32 to vector<2x256xf32>
    %281 = arith.mulf %280, %277 : vector<2x256xf32>
    %282 = arith.select %279, %277, %281 : vector<2x256xi1>, vector<2x256xf32>
    %c0_248 = arith.constant 0 : index
    %c0_249 = arith.constant 0 : index
    %283 = vector.load %arg21[%c0_248, %c0_249] : memref<256x128xbf16, #tpu.memory_space<vmem>>, vector<256x128xbf16>
    %284 = arith.truncf %282 : vector<2x256xf32> to vector<2x256xbf16>
    %cst_250 = arith.constant dense<0.000000e+00> : vector<2x128xf32>
    %285 = tpu.matmul %284, %283, %cst_250 {dimension_numbers = #tpu.dot_dimension_numbers<[1], [0], [0], [1], [0, 0, 1, 1], [], []>} : vector<2x256xbf16>, vector<256x128xbf16>, vector<2x128xf32> -> vector<2x128xf32>
    %c0_251 = arith.constant 0 : index
    %c0_252 = arith.constant 0 : index
    %286 = vector.load %arg22[%c0_251, %c0_252] : memref<1x128xf32, #tpu.memory_space<vmem>>, vector<1x128xf32>
    %287 = vector.broadcast %286 : vector<1x128xf32> to vector<2x128xf32>
    %288 = arith.addf %285, %287 : vector<2x128xf32>
    %cst_253 = arith.constant 0.000000e+00 : f32
    %289 = vector.broadcast %cst_253 : f32 to vector<2x128xf32>
    %290 = arith.cmpf oge, %288, %289 : vector<2x128xf32>
    %cst_254 = arith.constant 0.00999999977 : f32
    %291 = vector.broadcast %cst_254 : f32 to vector<2x128xf32>
    %292 = arith.mulf %291, %288 : vector<2x128xf32>
    %293 = arith.select %290, %288, %292 : vector<2x128xi1>, vector<2x128xf32>
    %c0_255 = arith.constant 0 : index
    %c0_256 = arith.constant 0 : index
    %294 = vector.load %arg23[%c0_255, %c0_256] : memref<128x64xbf16, #tpu.memory_space<vmem>>, vector<128x64xbf16>
    %295 = arith.truncf %293 : vector<2x128xf32> to vector<2x128xbf16>
    %cst_257 = arith.constant dense<0.000000e+00> : vector<2x64xf32>
    %296 = tpu.matmul %295, %294, %cst_257 {dimension_numbers = #tpu.dot_dimension_numbers<[1], [0], [0], [1], [0, 0, 1, 1], [], []>} : vector<2x128xbf16>, vector<128x64xbf16>, vector<2x64xf32> -> vector<2x64xf32>
    %c0_258 = arith.constant 0 : index
    %c0_259 = arith.constant 0 : index
    %297 = vector.load %arg24[%c0_258, %c0_259] : memref<1x64xf32, #tpu.memory_space<vmem>>, vector<1x64xf32>
    %298 = vector.broadcast %297 : vector<1x64xf32> to vector<2x64xf32>
    %299 = arith.addf %296, %298 : vector<2x64xf32>
    %cst_260 = arith.constant 0.000000e+00 : f32
    %300 = vector.broadcast %cst_260 : f32 to vector<2x64xf32>
    %301 = arith.cmpf oge, %299, %300 : vector<2x64xf32>
    %cst_261 = arith.constant 0.00999999977 : f32
    %302 = vector.broadcast %cst_261 : f32 to vector<2x64xf32>
    %303 = arith.mulf %302, %299 : vector<2x64xf32>
    %304 = arith.select %301, %299, %303 : vector<2x64xi1>, vector<2x64xf32>
    %c0_262 = arith.constant 0 : index
    %c0_263 = arith.constant 0 : index
    %305 = vector.load %arg25[%c0_262, %c0_263] : memref<64x64xbf16, #tpu.memory_space<vmem>>, vector<64x64xbf16>
    %306 = arith.truncf %304 : vector<2x64xf32> to vector<2x64xbf16>
    %cst_264 = arith.constant dense<0.000000e+00> : vector<2x64xf32>
    %307 = tpu.matmul %306, %305, %cst_264 {dimension_numbers = #tpu.dot_dimension_numbers<[1], [0], [0], [1], [0, 0, 1, 1], [], []>} : vector<2x64xbf16>, vector<64x64xbf16>, vector<2x64xf32> -> vector<2x64xf32>
    %c0_265 = arith.constant 0 : index
    %c0_266 = arith.constant 0 : index
    %308 = vector.load %arg26[%c0_265, %c0_266] : memref<1x64xf32, #tpu.memory_space<vmem>>, vector<1x64xf32>
    %309 = vector.broadcast %308 : vector<1x64xf32> to vector<2x64xf32>
    %310 = arith.addf %307, %309 : vector<2x64xf32>
    %311 = math.tanh %310 : vector<2x64xf32>
    %c0_267 = arith.constant 0 : index
    %c0_268 = arith.constant 0 : index
    %312 = vector.load %arg27[%c0_267, %c0_268] : memref<64x32xbf16, #tpu.memory_space<vmem>>, vector<64x32xbf16>
    %313 = arith.truncf %311 : vector<2x64xf32> to vector<2x64xbf16>
    %cst_269 = arith.constant dense<0.000000e+00> : vector<2x32xf32>
    %314 = tpu.matmul %313, %312, %cst_269 {dimension_numbers = #tpu.dot_dimension_numbers<[1], [0], [0], [1], [0, 0, 1, 1], [], []>} : vector<2x64xbf16>, vector<64x32xbf16>, vector<2x32xf32> -> vector<2x32xf32>
    %c0_270 = arith.constant 0 : index
    %c0_271 = arith.constant 0 : index
    %315 = vector.load %arg28[%c0_270, %c0_271] : memref<1x32xf32, #tpu.memory_space<vmem>>, vector<1x32xf32>
    %316 = vector.broadcast %315 : vector<1x32xf32> to vector<2x32xf32>
    %317 = arith.addf %314, %316 : vector<2x32xf32>
    %318 = math.tanh %317 : vector<2x32xf32>
    %c0_272 = arith.constant 0 : index
    %c0_273 = arith.constant 0 : index
    %319 = vector.load %arg29[%c0_272, %c0_273] : memref<64x128xbf16, #tpu.memory_space<vmem>>, vector<64x128xbf16>
    %320 = arith.truncf %311 : vector<2x64xf32> to vector<2x64xbf16>
    %cst_274 = arith.constant dense<0.000000e+00> : vector<2x128xf32>
    %321 = tpu.matmul %320, %319, %cst_274 {dimension_numbers = #tpu.dot_dimension_numbers<[1], [0], [0], [1], [0, 0, 1, 1], [], []>} : vector<2x64xbf16>, vector<64x128xbf16>, vector<2x128xf32> -> vector<2x128xf32>
    %c0_275 = arith.constant 0 : index
    %c0_276 = arith.constant 0 : index
    %322 = vector.load %arg30[%c0_275, %c0_276] : memref<32x128xbf16, #tpu.memory_space<vmem>>, vector<32x128xbf16>
    %323 = arith.truncf %318 : vector<2x32xf32> to vector<2x32xbf16>
    %cst_277 = arith.constant dense<0.000000e+00> : vector<2x128xf32>
    %324 = tpu.matmul %323, %322, %cst_277 {dimension_numbers = #tpu.dot_dimension_numbers<[1], [0], [0], [1], [0, 0, 1, 1], [], []>} : vector<2x32xbf16>, vector<32x128xbf16>, vector<2x128xf32> -> vector<2x128xf32>
    %325 = arith.addf %321, %324 : vector<2x128xf32>
    %c0_278 = arith.constant 0 : index
    %c0_279 = arith.constant 0 : index
    %326 = vector.load %arg31[%c0_278, %c0_279] : memref<1x128xf32, #tpu.memory_space<vmem>>, vector<1x128xf32>
    %327 = vector.broadcast %326 : vector<1x128xf32> to vector<2x128xf32>
    %328 = arith.addf %325, %327 : vector<2x128xf32>
    %c0_280 = arith.constant 0 : index
    %c0_281 = arith.constant 0 : index
    %329 = vector.load %arg32[%c0_280, %c0_281] : memref<2x128xf32, #tpu.memory_space<vmem>>, vector<2x128xf32>
    tpu.vector_store %arg32[%c0_280, %c0_281], %328 {strides = array<i32>} : memref<2x128xf32, #tpu.memory_space<vmem>>, vector<2x128xf32>,
    return
  }
  func.func @transform_0(%arg0: i32) -> (i32, i32) {
    %c0_i32 = arith.constant 0 : i32
    %c0_i32_0 = arith.constant 0 : i32
    %c0_i32_1 = arith.constant 0 : i32
    return %c0_i32, %c0_i32_0 : i32, i32
  }
  func.func @transform_1(%arg0: i32) -> (i32, i32, i32) {
    %c0_i32 = arith.constant 0 : i32
    %c0_i32_0 = arith.constant 0 : i32
    %c0_i32_1 = arith.constant 0 : i32
    %c0_i32_2 = arith.constant 0 : i32
    return %c0_i32, %c0_i32_0, %c0_i32_1 : i32, i32, i32
  }
  func.func @transform_2(%arg0: i32) -> (i32, i32, i32) {
    %c0_i32 = arith.constant 0 : i32
    %c0_i32_0 = arith.constant 0 : i32
    %c0_i32_1 = arith.constant 0 : i32
    %c0_i32_2 = arith.constant 0 : i32
    return %c0_i32, %c0_i32_0, %c0_i32_1 : i32, i32, i32
  }
  func.func @transform_3(%arg0: i32) -> (i32, i32, i32) {
    %c0_i32 = arith.constant 0 : i32
    %c0_i32_0 = arith.constant 0 : i32
    %c0_i32_1 = arith.constant 0 : i32
    %c0_i32_2 = arith.constant 0 : i32
    return %c0_i32, %c0_i32_0, %c0_i32_1 : i32, i32, i32
  }
  func.func @transform_4(%arg0: i32) -> (i32, i32) {
    %c0_i32 = arith.constant 0 : i32
    %c0_i32_0 = arith.constant 0 : i32
    %c0_i32_1 = arith.constant 0 : i32
    return %c0_i32, %c0_i32_0 : i32, i32
  }
  func.func @transform_5(%arg0: i32) -> (i32, i32, i32) {
    %c0_i32 = arith.constant 0 : i32
    %c0_i32_0 = arith.constant 0 : i32
    %c0_i32_1 = arith.constant 0 : i32
    %c0_i32_2 = arith.constant 0 : i32
    return %c0_i32, %c0_i32_0, %c0_i32_1 : i32, i32, i32
  }
  func.func @transform_6(%arg0: i32) -> (i32, i32, i32) {
    %c0_i32 = arith.constant 0 : i32
    %c0_i32_0 = arith.constant 0 : i32
    %c0_i32_1 = arith.constant 0 : i32
    %c0_i32_2 = arith.constant 0 : i32
    return %c0_i32, %c0_i32_0, %c0_i32_1 : i32, i32, i32
  }
  func.func @transform_7(%arg0: i32) -> (i32, i32) {
    %c0_i32 = arith.constant 0 : i32
    %c0_i32_0 = arith.constant 0 : i32
    %c0_i32_1 = arith.constant 0 : i32
    return %c0_i32, %c0_i32_0 : i32, i32
  }
  func.func @transform_8(%arg0: i32) -> (i32, i32, i32) {
    %c0_i32 = arith.constant 0 : i32
    %c0_i32_0 = arith.constant 0 : i32
    %c0_i32_1 = arith.constant 0 : i32
    %c0_i32_2 = arith.constant 0 : i32
    return %c0_i32, %c0_i32_0, %c0_i32_1 : i32, i32, i32
  }
  func.func @transform_9(%arg0: i32) -> (i32, i32, i32) {
    %c0_i32 = arith.constant 0 : i32
    %c0_i32_0 = arith.constant 0 : i32
    %c0_i32_1 = arith.constant 0 : i32
    %c0_i32_2 = arith.constant 0 : i32
    return %c0_i32, %c0_i32_0, %c0_i32_1 : i32, i32, i32
  }
  func.func @transform_10(%arg0: i32) -> (i32, i32) {
    %c0_i32 = arith.constant 0 : i32
    %c0_i32_0 = arith.constant 0 : i32
    %c0_i32_1 = arith.constant 0 : i32
    return %c0_i32, %c0_i32_0 : i32, i32
  }
  func.func @transform_11(%arg0: i32) -> (i32, i32, i32) {
    %c0_i32 = arith.constant 0 : i32
    %c0_i32_0 = arith.constant 0 : i32
    %c0_i32_1 = arith.constant 0 : i32
    %c0_i32_2 = arith.constant 0 : i32
    return %c0_i32, %c0_i32_0, %c0_i32_1 : i32, i32, i32
  }
  func.func @transform_12(%arg0: i32) -> (i32, i32, i32) {
    %c0_i32 = arith.constant 0 : i32
    %c0_i32_0 = arith.constant 0 : i32
    %c0_i32_1 = arith.constant 0 : i32
    %c0_i32_2 = arith.constant 0 : i32
    return %c0_i32, %c0_i32_0, %c0_i32_1 : i32, i32, i32
  }
  func.func @transform_13(%arg0: i32) -> (i32, i32) {
    %c0_i32 = arith.constant 0 : i32
    %c0_i32_0 = arith.constant 0 : i32
    %c0_i32_1 = arith.constant 0 : i32
    return %c0_i32, %c0_i32_0 : i32, i32
  }
  func.func @transform_14(%arg0: i32) -> (i32, i32, i32) {
    %c0_i32 = arith.constant 0 : i32
    %c0_i32_0 = arith.constant 0 : i32
    %c0_i32_1 = arith.constant 0 : i32
    %c0_i32_2 = arith.constant 0 : i32
    return %c0_i32, %c0_i32_0, %c0_i32_1 : i32, i32, i32
  }
  func.func @transform_15(%arg0: i32) -> (i32, i32, i32) {
    %c0_i32 = arith.constant 0 : i32
    %c0_i32_0 = arith.constant 0 : i32
    %c0_i32_1 = arith.constant 0 : i32
    %c0_i32_2 = arith.constant 0 : i32
    return %c0_i32, %c0_i32_0, %c0_i32_1 : i32, i32, i32
  }
  func.func @transform_16(%arg0: i32) -> (i32, i32) {
    %c0_i32 = arith.constant 0 : i32
    %c0_i32_0 = arith.constant 0 : i32
    %c0_i32_1 = arith.constant 0 : i32
    return %c0_i32, %c0_i32_0 : i32, i32
  }
  func.func @transform_17(%arg0: i32) -> (i32, i32, i32) {
    %c0_i32 = arith.constant 0 : i32
    %c0_i32_0 = arith.constant 0 : i32
    %c0_i32_1 = arith.constant 0 : i32
    %c0_i32_2 = arith.constant 0 : i32
    return %c0_i32, %c0_i32_0, %c0_i32_1 : i32, i32, i32
  }
  func.func @transform_18(%arg0: i32) -> (i32, i32) {
    %c0_i32 = arith.constant 0 : i32
    %c0_i32_0 = arith.constant 0 : i32
    %c0_i32_1 = arith.constant 0 : i32
    return %c0_i32, %c0_i32_0 : i32, i32
  }
  func.func @transform_19(%arg0: i32) -> (i32, i32) {
    %c0_i32 = arith.constant 0 : i32
    %c0_i32_0 = arith.constant 0 : i32
    %c0_i32_1 = arith.constant 0 : i32
    return %c0_i32, %c0_i32_0 : i32, i32
  }
  func.func @transform_20(%arg0: i32) -> (i32, i32) {
    %c0_i32 = arith.constant 0 : i32
    %c0_i32_0 = arith.constant 0 : i32
    %c0_i32_1 = arith.constant 0 : i32
    return %c0_i32, %c0_i32_0 : i32, i32
  }
  func.func @transform_21(%arg0: i32) -> (i32, i32) {
    %c0_i32 = arith.constant 0 : i32
    %c0_i32_0 = arith.constant 0 : i32
    %c0_i32_1 = arith.constant 0 : i32
    return %c0_i32, %c0_i32_0 : i32, i32
  }
  func.func @transform_22(%arg0: i32) -> (i32, i32) {
    %c0_i32 = arith.constant 0 : i32
    %c0_i32_0 = arith.constant 0 : i32
    %c0_i32_1 = arith.constant 0 : i32
    return %c0_i32, %c0_i32_0 : i32, i32
  }
  func.func @transform_23(%arg0: i32) -> (i32, i32) {
    %c0_i32 = arith.constant 0 : i32
    %c0_i32_0 = arith.constant 0 : i32
    %c0_i32_1 = arith.constant 0 : i32
    return %c0_i32, %c0_i32_0 : i32, i32
  }
  func.func @transform_24(%arg0: i32) -> (i32, i32) {
    %c0_i32 = arith.constant 0 : i32
    %c0_i32_0 = arith.constant 0 : i32
    %c0_i32_1 = arith.constant 0 : i32
    return %c0_i32, %c0_i32_0 : i32, i32
  }
  func.func @transform_25(%arg0: i32) -> (i32, i32) {
    %c0_i32 = arith.constant 0 : i32
    %c0_i32_0 = arith.constant 0 : i32
    %c0_i32_1 = arith.constant 0 : i32
    return %c0_i32, %c0_i32_0 : i32, i32
  }
  func.func @transform_26(%arg0: i32) -> (i32, i32) {
    %c0_i32 = arith.constant 0 : i32
    %c0_i32_0 = arith.constant 0 : i32
    %c0_i32_1 = arith.constant 0 : i32
    return %c0_i32, %c0_i32_0 : i32, i32
  }
  func.func @transform_27(%arg0: i32) -> (i32, i32) {
    %c0_i32 = arith.constant 0 : i32
    %c0_i32_0 = arith.constant 0 : i32
    %c0_i32_1 = arith.constant 0 : i32
    return %c0_i32, %c0_i32_0 : i32, i32
  }
  func.func @transform_28(%arg0: i32) -> (i32, i32) {
    %c0_i32 = arith.constant 0 : i32
    %c0_i32_0 = arith.constant 0 : i32
    %c0_i32_1 = arith.constant 0 : i32
    return %c0_i32, %c0_i32_0 : i32, i32
  }
  func.func @transform_29(%arg0: i32) -> (i32, i32) {
    %c0_i32 = arith.constant 0 : i32
    %c0_i32_0 = arith.constant 0 : i32
    %c0_i32_1 = arith.constant 0 : i32
    return %c0_i32, %c0_i32_0 : i32, i32
  }
  func.func @transform_30(%arg0: i32) -> (i32, i32) {
    %c0_i32 = arith.constant 0 : i32
    %c0_i32_0 = arith.constant 0 : i32
    %c0_i32_1 = arith.constant 0 : i32
    return %c0_i32, %c0_i32_0 : i32, i32
  }
  func.func @transform_31(%arg0: i32) -> (i32, i32) {
    %c0_i32 = arith.constant 0 : i32
    %c0_i32_0 = arith.constant 0 : i32
    %c0_i32_1 = arith.constant 0 : i32
    return %c0_i32, %c0_i32_0 : i32, i32
  }
}

</mosaic_0001>

<llo_original>
// kernel: agent_forward.1
$region0: #{agent_forward.1}
  #allocation0 [shape = 'u32[]', space=smem, size = 0x4, offset = 0x4, fixed_abs, tag = 'smem constant byte address 0x4 - core index']
  #allocation1 [shape = 'u32[72,128]{1,0:T(1,128)}', space=vmem, size = 0x9000, scoped, tag = 'internal scratch']
  %s0 = inlined_call_operand.smem [shape: u32[32], index: -1, kind: input, shape index: {}]
  %s1 = sld [smem:[%s0]]
  %s2 = scalar_lea.smem %s0, 1
  %s3 = sld [smem:[%s2]]
  %s4 = scalar_lea.smem %s0, 2
  %s5 = sld [smem:[%s4]]
  %s6 = scalar_lea.smem %s0, 3
  %s7 = sld [smem:[%s6]]
  %s8 = scalar_lea.smem %s0, 4
  %s9 = sld [smem:[%s8]]
  %s10 = scalar_lea.smem %s0, 5
  %s11 = sld [smem:[%s10]]
  %s12 = scalar_lea.smem %s0, 6
  %s13 = sld [smem:[%s12]]
  %s14 = scalar_lea.smem %s0, 7
  %s15 = sld [smem:[%s14]]
  %s16 = scalar_lea.smem %s0, 8
  %s17 = sld [smem:[%s16]]
  %s18 = scalar_lea.smem %s0, 9
  %s19 = sld [smem:[%s18]]
  %s20 = scalar_lea.smem %s0, 10
  %s21 = sld [smem:[%s20]]
  %s22 = scalar_lea.smem %s0, 11
  %s23 = sld [smem:[%s22]]
  %s24 = scalar_lea.smem %s0, 12
  %s25 = sld [smem:[%s24]]
  %s26 = scalar_lea.smem %s0, 13
  %s27 = sld [smem:[%s26]]
  %s28 = scalar_lea.smem %s0, 14
  %s29 = sld [smem:[%s28]]
  %s30 = scalar_lea.smem %s0, 15
  %s31 = sld [smem:[%s30]]
  %s32 = scalar_lea.smem %s0, 16
  %s33 = sld [smem:[%s32]]
  %s34 = scalar_lea.smem %s0, 17
  %s35 = sld [smem:[%s34]]
  %s36 = scalar_lea.smem %s0, 18
  %s37 = sld [smem:[%s36]]
  %s38 = scalar_lea.smem %s0, 19
  %s39 = sld [smem:[%s38]]
  %s40 = scalar_lea.smem %s0, 20
  %s41 = sld [smem:[%s40]]
  %s42 = scalar_lea.smem %s0, 21
  %s43 = sld [smem:[%s42]]
  %s44 = scalar_lea.smem %s0, 22
  %s45 = sld [smem:[%s44]]
  %s46 = scalar_lea.smem %s0, 23
  %s47 = sld [smem:[%s46]]
  %s48 = scalar_lea.smem %s0, 24
  %s49 = sld [smem:[%s48]]
  %s50 = scalar_lea.smem %s0, 25
  %s51 = sld [smem:[%s50]]
  %s52 = scalar_lea.smem %s0, 26
  %s53 = sld [smem:[%s52]]
  %s54 = scalar_lea.smem %s0, 27
  %s55 = sld [smem:[%s54]]
  %s56 = scalar_lea.smem %s0, 28
  %s57 = sld [smem:[%s56]]
  %s58 = scalar_lea.smem %s0, 29
  %s59 = sld [smem:[%s58]]
  %s60 = scalar_lea.smem %s0, 30
  %s61 = sld [smem:[%s60]]
  %s62 = scalar_lea.smem %s0, 31
  %s63 = sld [smem:[%s62]]
  %s64 = sld [smem:[#allocation0]]
  $region134: #{agent_forward.1} parent=0
    _
  %s66 = ssub.s32 1, %s64
  %s67 = scalar_select 0, %s66, %s64
  // Predicated region
  $region2: #{agent_forward.1} parent=0 // pred_check
    _
  $region3: #{agent_forward.1} parent=0 // pred_check_branch
    %69 = sbr.rel (0) target = $region5
  $region4: #{agent_forward.1} parent=0 // pred_region
    _
  $region5: #{agent_forward.1} parent=0 // pred_fallthru
    _
  // Predicated region
  $region6: #{agent_forward.1} parent=0 // pred_check
    _
  $region7: #{agent_forward.1} parent=0 // pred_check_branch
    %71 = sbr.rel (0) target = $region9
  $region8: #{agent_forward.1} parent=0 // pred_region
    _
  $region9: #{agent_forward.1} parent=0 // pred_fallthru
    _
  // Predicated region
  $region10: #{agent_forward.1} parent=0 // pred_check
    _
  $region11: #{agent_forward.1} parent=0 // pred_check_branch
    %73 = sbr.rel (0) target = $region13
  $region12: #{agent_forward.1} parent=0 // pred_region
    _
  $region13: #{agent_forward.1} parent=0 // pred_fallthru
    _
  // Predicated region
  $region14: #{agent_forward.1} parent=0 // pred_check
    _
  $region15: #{agent_forward.1} parent=0 // pred_check_branch
    %75 = sbr.rel (0) target = $region17
  $region16: #{agent_forward.1} parent=0 // pred_region
    _
  $region17: #{agent_forward.1} parent=0 // pred_fallthru
    _
  // Predicated region
  $region18: #{agent_forward.1} parent=0 // pred_check
    _
  $region19: #{agent_forward.1} parent=0 // pred_check_branch
    %77 = sbr.rel (0) target = $region21
  $region20: #{agent_forward.1} parent=0 // pred_region
    _
  $region21: #{agent_forward.1} parent=0 // pred_fallthru
    _
  // Predicated region
  $region22: #{agent_forward.1} parent=0 // pred_check
    _
  $region23: #{agent_forward.1} parent=0 // pred_check_branch
    %79 = sbr.rel (0) target = $region25
  $region24: #{agent_forward.1} parent=0 // pred_region
    _
  $region25: #{agent_forward.1} parent=0 // pred_fallthru
    _
  // Predicated region
  $region26: #{agent_forward.1} parent=0 // pred_check
    _
  $region27: #{agent_forward.1} parent=0 // pred_check_branch
    %81 = sbr.rel (0) target = $region29
  $region28: #{agent_forward.1} parent=0 // pred_region
    _
  $region29: #{agent_forward.1} parent=0 // pred_fallthru
    _
  // Predicated region
  $region30: #{agent_forward.1} parent=0 // pred_check
    _
  $region31: #{agent_forward.1} parent=0 // pred_check_branch
    %83 = sbr.rel (0) target = $region33
  $region32: #{agent_forward.1} parent=0 // pred_region
    _
  $region33: #{agent_forward.1} parent=0 // pred_fallthru
    _
  // Predicated region
  $region34: #{agent_forward.1} parent=0 // pred_check
    _
  $region35: #{agent_forward.1} parent=0 // pred_check_branch
    %85 = sbr.rel (0) target = $region37
  $region36: #{agent_forward.1} parent=0 // pred_region
    _
  $region37: #{agent_forward.1} parent=0 // pred_fallthru
    _
  // Predicated region
  $region38: #{agent_forward.1} parent=0 // pred_check
    _
  $region39: #{agent_forward.1} parent=0 // pred_check_branch
    %87 = sbr.rel (0) target = $region41
  $region40: #{agent_forward.1} parent=0 // pred_region
    _
  $region41: #{agent_forward.1} parent=0 // pred_fallthru
    _
  // Predicated region
  $region42: #{agent_forward.1} parent=0 // pred_check
    _
  $region43: #{agent_forward.1} parent=0 // pred_check_branch
    %89 = sbr.rel (0) target = $region45
  $region44: #{agent_forward.1} parent=0 // pred_region
    _
  $region45: #{agent_forward.1} parent=0 // pred_fallthru
    _
  // Predicated region
  $region46: #{agent_forward.1} parent=0 // pred_check
    _
  $region47: #{agent_forward.1} parent=0 // pred_check_branch
    %91 = sbr.rel (0) target = $region49
  $region48: #{agent_forward.1} parent=0 // pred_region
    _
  $region49: #{agent_forward.1} parent=0 // pred_fallthru
    _
  // Predicated region
  $region50: #{agent_forward.1} parent=0 // pred_check
    _
  $region51: #{agent_forward.1} parent=0 // pred_check_branch
    %93 = sbr.rel (0) target = $region53
  $region52: #{agent_forward.1} parent=0 // pred_region
    _
  $region53: #{agent_forward.1} parent=0 // pred_fallthru
    _
  // Predicated region
  $region54: #{agent_forward.1} parent=0 // pred_check
    _
  $region55: #{agent_forward.1} parent=0 // pred_check_branch
    %95 = sbr.rel (0) target = $region57
  $region56: #{agent_forward.1} parent=0 // pred_region
    _
  $region57: #{agent_forward.1} parent=0 // pred_fallthru
    _
  // Predicated region
  $region58: #{agent_forward.1} parent=0 // pred_check
    _
  $region59: #{agent_forward.1} parent=0 // pred_check_branch
    %97 = sbr.rel (0) target = $region61
  $region60: #{agent_forward.1} parent=0 // pred_region
    _
  $region61: #{agent_forward.1} parent=0 // pred_fallthru
    _
  // Predicated region
  $region62: #{agent_forward.1} parent=0 // pred_check
    _
  $region63: #{agent_forward.1} parent=0 // pred_check_branch
    %99 = sbr.rel (0) target = $region65
  $region64: #{agent_forward.1} parent=0 // pred_region
    _
  $region65: #{agent_forward.1} parent=0 // pred_fallthru
    _
  // Predicated region
  $region66: #{agent_forward.1} parent=0 // pred_check
    _
  $region67: #{agent_forward.1} parent=0 // pred_check_branch
    %101 = sbr.rel (0) target = $region69
  $region68: #{agent_forward.1} parent=0 // pred_region
    _
  $region69: #{agent_forward.1} parent=0 // pred_fallthru
    _
  // Predicated region
  $region70: #{agent_forward.1} parent=0 // pred_check
    _
  $region71: #{agent_forward.1} parent=0 // pred_check_branch
    %103 = sbr.rel (0) target = $region73
  $region72: #{agent_forward.1} parent=0 // pred_region
    _
  $region73: #{agent_forward.1} parent=0 // pred_fallthru
    _
  // Predicated region
  $region74: #{agent_forward.1} parent=0 // pred_check
    _
  $region75: #{agent_forward.1} parent=0 // pred_check_branch
    %105 = sbr.rel (0) target = $region77
  $region76: #{agent_forward.1} parent=0 // pred_region
    _
  $region77: #{agent_forward.1} parent=0 // pred_fallthru
    _
  // Predicated region
  $region78: #{agent_forward.1} parent=0 // pred_check
    _
  $region79: #{agent_forward.1} parent=0 // pred_check_branch
    %107 = sbr.rel (0) target = $region81
  $region80: #{agent_forward.1} parent=0 // pred_region
    _
  $region81: #{agent_forward.1} parent=0 // pred_fallthru
    _
  // Predicated region
  $region82: #{agent_forward.1} parent=0 // pred_check
    _
  $region83: #{agent_forward.1} parent=0 // pred_check_branch
    %109 = sbr.rel (0) target = $region85
  $region84: #{agent_forward.1} parent=0 // pred_region
    _
  $region85: #{agent_forward.1} parent=0 // pred_fallthru
    _
  // Predicated region
  $region86: #{agent_forward.1} parent=0 // pred_check
    _
  $region87: #{agent_forward.1} parent=0 // pred_check_branch
    %111 = sbr.rel (0) target = $region89
  $region88: #{agent_forward.1} parent=0 // pred_region
    _
  $region89: #{agent_forward.1} parent=0 // pred_fallthru
    _
  // Predicated region
  $region90: #{agent_forward.1} parent=0 // pred_check
    _
  $region91: #{agent_forward.1} parent=0 // pred_check_branch
    %113 = sbr.rel (0) target = $region93
  $region92: #{agent_forward.1} parent=0 // pred_region
    _
  $region93: #{agent_forward.1} parent=0 // pred_fallthru
    _
  // Predicated region
  $region94: #{agent_forward.1} parent=0 // pred_check
    _
  $region95: #{agent_forward.1} parent=0 // pred_check_branch
    %115 = sbr.rel (0) target = $region97
  $region96: #{agent_forward.1} parent=0 // pred_region
    _
  $region97: #{agent_forward.1} parent=0 // pred_fallthru
    _
  // Predicated region
  $region98: #{agent_forward.1} parent=0 // pred_check
    _
  $region99: #{agent_forward.1} parent=0 // pred_check_branch
    %117 = sbr.rel (0) target = $region101
  $region100: #{agent_forward.1} parent=0 // pred_region
    _
  $region101: #{agent_forward.1} parent=0 // pred_fallthru
    _
  // Predicated region
  $region102: #{agent_forward.1} parent=0 // pred_check
    _
  $region103: #{agent_forward.1} parent=0 // pred_check_branch
    %119 = sbr.rel (0) target = $region105
  $region104: #{agent_forward.1} parent=0 // pred_region
    _
  $region105: #{agent_forward.1} parent=0 // pred_fallthru
    _
  // Predicated region
  $region106: #{agent_forward.1} parent=0 // pred_check
    _
  $region107: #{agent_forward.1} parent=0 // pred_check_branch
    %121 = sbr.rel (0) target = $region109
  $region108: #{agent_forward.1} parent=0 // pred_region
    _
  $region109: #{agent_forward.1} parent=0 // pred_fallthru
    _
  // Predicated region
  $region110: #{agent_forward.1} parent=0 // pred_check
    _
  $region111: #{agent_forward.1} parent=0 // pred_check_branch
    %123 = sbr.rel (0) target = $region113
  $region112: #{agent_forward.1} parent=0 // pred_region
    _
  $region113: #{agent_forward.1} parent=0 // pred_fallthru
    _
  // Predicated region
  $region114: #{agent_forward.1} parent=0 // pred_check
    _
  $region115: #{agent_forward.1} parent=0 // pred_check_branch
    %125 = sbr.rel (0) target = $region117
  $region116: #{agent_forward.1} parent=0 // pred_region
    _
  $region117: #{agent_forward.1} parent=0 // pred_fallthru
    _
  // Predicated region
  $region118: #{agent_forward.1} parent=0 // pred_check
    _
  $region119: #{agent_forward.1} parent=0 // pred_check_branch
    %127 = sbr.rel (0) target = $region121
  $region120: #{agent_forward.1} parent=0 // pred_region
    _
  $region121: #{agent_forward.1} parent=0 // pred_fallthru
    _
  // Predicated region
  $region122: #{agent_forward.1} parent=0 // pred_check
    _
  $region123: #{agent_forward.1} parent=0 // pred_check_branch
    %129 = sbr.rel (0) target = $region125
  $region124: #{agent_forward.1} parent=0 // pred_region
    _
  $region125: #{agent_forward.1} parent=0 // pred_fallthru
    _
  %v131 = vld [vmem:[%s1] sm:$0xff]
  %v132 = vld [vmem:[%s1 + $0x8] sm:$0xff]
  %v133 = vld [vmem:[%s1 + $0x10] sm:$0xff]
  %v134 = vld [vmem:[%s1 + $0x18] sm:$0xff]
  %v135 = vld [vmem:[%s1 + $0x20] sm:$0xff]
  %v136 = vld [vmem:[%s1 + $0x28] sm:$0xff]
  %v137 = vld [vmem:[%s1 + $0x30] sm:$0xff]
  %v138 = vld [vmem:[%s1 + $0x38] sm:$0xff]
  %v139 = vld [vmem:[%s1 + $0x40] sm:$0xff]
  %v140 = vld [vmem:[%s1 + $0x48] sm:$0xff]
  %v141 = vld [vmem:[%s1 + $0x50] sm:$0xff]
  %v142 = vld [vmem:[%s1 + $0x58] sm:$0xff]
  %v143 = vld [vmem:[%s1 + $0x60] sm:$0xff]
  %v144 = vld [vmem:[%s1 + $0x68] sm:$0xff]
  %v145 = vld [vmem:[%s1 + $0x70] sm:$0xff]
  %v146 = vld [vmem:[%s1 + $0x78] sm:$0xff]
  %v147 = vld [vmem:[%s1 + $0x80] sm:$0xff]
  %v148 = vld [vmem:[%s1 + $0x88] sm:$0xff]
  %v149 = vld [vmem:[%s1 + $0x90] sm:$0xff]
  %v150 = vld [vmem:[%s1 + $0x98] sm:$0xff]
  %v151 = vld [vmem:[%s1 + $0xa0] sm:$0xff]
  %v152 = vld [vmem:[%s1 + $0xa8] sm:$0xff]
  %v153 = vld [vmem:[%s1 + $0xb0] sm:$0xff]
  %v154 = vld [vmem:[%s1 + $0xb8] sm:$0xff]
  %v155 = vld [vmem:[%s1 + $0xc0] sm:$0xff]
  %v156 = vld [vmem:[%s1 + $0xc8] sm:$0xff]
  %v157 = vld [vmem:[%s1 + $0xd0] sm:$0xff]
  %v158 = vld [vmem:[%s1 + $0xd8] sm:$0xff]
  %v159 = vld [vmem:[%s1 + $0xe0] sm:$0xff]
  %v160 = vld [vmem:[%s1 + $0xe8] sm:$0xff]
  %v161 = vld [vmem:[%s1 + $0xf0] sm:$0xff]
  %v162 = vld [vmem:[%s1 + $0xf8] sm:$0xff]
  %v163 = vld [vmem:[%s1 + $0x100] sm:$0xff]
  %v164 = vld [vmem:[%s1 + $0x108] sm:$0xff]
  %v165 = vld [vmem:[%s1 + $0x110] sm:$0xff]
  %v166 = vld [vmem:[%s1 + $0x118] sm:$0xff]
  %v167 = vld [vmem:[%s1 + $0x120] sm:$0xff]
  %v168 = vld [vmem:[%s1 + $0x128] sm:$0xff]
  %v169 = vld [vmem:[%s1 + $0x130] sm:$0xff]
  %v170 = vld [vmem:[%s1 + $0x138] sm:$0xff]
  %v171 = vld [vmem:[%s1 + $0x140] sm:$0xff]
  %v172 = vld [vmem:[%s1 + $0x148] sm:$0xff]
  %v173 = vld [vmem:[%s1 + $0x150] sm:$0xff]
  %v174 = vld [vmem:[%s1 + $0x158] sm:$0xff]
  %v175 = vld [vmem:[%s1 + $0x160] sm:$0xff]
  %v176 = vld [vmem:[%s1 + $0x168] sm:$0xff]
  %v177 = vld [vmem:[%s1 + $0x170] sm:$0xff]
  %v178 = vld [vmem:[%s1 + $0x178] sm:$0xff]
  %v179 = vld [vmem:[%s1 + $0x180] sm:$0xff]
  %v180 = vld [vmem:[%s1 + $0x188] sm:$0xff]
  %v181 = vld [vmem:[%s1 + $0x190] sm:$0xff]
  %v182 = vld [vmem:[%s1 + $0x198] sm:$0xff]
  %v183 = vld [vmem:[%s1 + $0x1a0] sm:$0xff]
  %v184 = vld [vmem:[%s1 + $0x1a8] sm:$0xff]
  %v185 = vld [vmem:[%s1 + $0x1b0] sm:$0xff]
  %v186 = vld [vmem:[%s1 + $0x1b8] sm:$0xff]
  %v187 = vld [vmem:[%s1 + $0x1c0] sm:$0xff]
  %v188 = vld [vmem:[%s1 + $0x1c8] sm:$0xff]
  %v189 = vpack.c.bf16 %v132, %v131
  %v190 = vpack.c.bf16 %v134, %v133
  %v191 = vpack.c.bf16 %v136, %v135
  %v192 = vpack.c.bf16 %v138, %v137
  %v193 = vpack.c.bf16 %v140, %v139
  %v194 = vpack.c.bf16 %v142, %v141
  %v195 = vpack.c.bf16 %v144, %v143
  %v196 = vpack.c.bf16 %v146, %v145
  %v197 = vpack.c.bf16 %v148, %v147
  %v198 = vpack.c.bf16 %v150, %v149
  %v199 = vpack.c.bf16 %v152, %v151
  %v200 = vpack.c.bf16 %v154, %v153
  %v201 = vpack.c.bf16 %v156, %v155
  %v202 = vpack.c.bf16 %v158, %v157
  %v203 = vpack.c.bf16 %v160, %v159
  %v204 = vpack.c.bf16 %v162, %v161
  %v205 = vpack.c.bf16 %v164, %v163
  %v206 = vpack.c.bf16 %v166, %v165
  %v207 = vpack.c.bf16 %v168, %v167
  %v208 = vpack.c.bf16 %v170, %v169
  %v209 = vpack.c.bf16 %v172, %v171
  %v210 = vpack.c.bf16 %v174, %v173
  %v211 = vpack.c.bf16 %v176, %v175
  %v212 = vpack.c.bf16 %v178, %v177
  %v213 = vpack.c.bf16 %v180, %v179
  %v214 = vpack.c.bf16 %v182, %v181
  %v215 = vpack.c.bf16 %v184, %v183
  %v216 = vpack.c.bf16 %v186, %v185
  %v217 = vpack.c.bf16 %v188, %v187
  %v218 = vld [vmem:[%s3] sm:$0xff]
  %v219 = vld [vmem:[%s3 + $0x8] sm:$0xff]
  %v220 = vld [vmem:[%s3 + $0x10] sm:$0xff]
  %v221 = vld [vmem:[%s3 + $0x18] sm:$0xff]
  %v222 = vld [vmem:[%s3 + $0x20] sm:$0xff]
  %v223 = vld [vmem:[%s3 + $0x28] sm:$0xff]
  %v224 = vld [vmem:[%s3 + $0x30] sm:$0xff]
  %v225 = vld [vmem:[%s3 + $0x38] sm:$0xff]
  %v226 = vld [vmem:[%s3 + $0x40] sm:$0xff]
  %v227 = vld [vmem:[%s3 + $0x48] sm:$0xff]
  %v228 = vld [vmem:[%s3 + $0x50] sm:$0xff]
  %v229 = vld [vmem:[%s3 + $0x58] sm:$0xff]
  %v230 = vld [vmem:[%s3 + $0x60] sm:$0xff]
  %v231 = vld [vmem:[%s3 + $0x68] sm:$0xff]
  %v232 = vld [vmem:[%s3 + $0x70] sm:$0xff]
  %v233 = vld [vmem:[%s3 + $0x78] sm:$0xff]
  %v234 = vld [vmem:[%s3 + $0x80] sm:$0xff]
  %v235 = vld [vmem:[%s3 + $0x88] sm:$0xff]
  %v236 = vld [vmem:[%s3 + $0x90] sm:$0xff]
  %v237 = vld [vmem:[%s3 + $0x98] sm:$0xff]
  %v238 = vld [vmem:[%s3 + $0xa0] sm:$0xff]
  %v239 = vld [vmem:[%s3 + $0xa8] sm:$0xff]
  %v240 = vld [vmem:[%s3 + $0xb0] sm:$0xff]
  %v241 = vld [vmem:[%s3 + $0xb8] sm:$0xff]
  %v242 = vld [vmem:[%s3 + $0xc0] sm:$0xff]
  %v243 = vld [vmem:[%s3 + $0xc8] sm:$0xff]
  %v244 = vld [vmem:[%s3 + $0xd0] sm:$0xff]
  %v245 = vld [vmem:[%s3 + $0xd8] sm:$0xff]
  %v246 = vld [vmem:[%s3 + $0xe0] sm:$0x33]
  %v247 = vld [vmem:[%s3 + $0xe8] sm:$0x33]
  %v278 = vunpack.c.l.b16 %v218
  %v279 = vunpack.c.h.b16 %v218
  %v280 = vunpack.c.l.b16 %v219
  %v281 = vunpack.c.h.b16 %v219
  %v282 = vunpack.c.l.b16 %v220
  %v283 = vunpack.c.h.b16 %v220
  %v284 = vunpack.c.l.b16 %v221
  %v285 = vunpack.c.h.b16 %v221
  %v286 = vunpack.c.l.b16 %v222
  %v287 = vunpack.c.h.b16 %v222
  %v288 = vunpack.c.l.b16 %v223
  %v289 = vunpack.c.h.b16 %v223
  %v290 = vunpack.c.l.b16 %v224
  %v291 = vunpack.c.h.b16 %v224
  %v292 = vunpack.c.l.b16 %v225
  %v293 = vunpack.c.h.b16 %v225
  %v294 = vunpack.c.l.b16 %v226
  %v295 = vunpack.c.h.b16 %v226
  %v296 = vunpack.c.l.b16 %v227
  %v297 = vunpack.c.h.b16 %v227
  %v298 = vunpack.c.l.b16 %v228
  %v299 = vunpack.c.h.b16 %v228
  %v300 = vunpack.c.l.b16 %v229
  %v301 = vunpack.c.h.b16 %v229
  %v302 = vunpack.c.l.b16 %v230
  %v303 = vunpack.c.h.b16 %v230
  %v304 = vunpack.c.l.b16 %v231
  %v305 = vunpack.c.h.b16 %v231
  %v306 = vunpack.c.l.b16 %v232
  %v307 = vunpack.c.h.b16 %v232
  %v308 = vunpack.c.l.b16 %v233
  %v309 = vunpack.c.h.b16 %v233
  %v310 = vunpack.c.l.b16 %v234
  %v311 = vunpack.c.h.b16 %v234
  %v312 = vunpack.c.l.b16 %v235
  %v313 = vunpack.c.h.b16 %v235
  %v314 = vunpack.c.l.b16 %v236
  %v315 = vunpack.c.h.b16 %v236
  %v316 = vunpack.c.l.b16 %v237
  %v317 = vunpack.c.h.b16 %v237
  %v318 = vunpack.c.l.b16 %v238
  %v319 = vunpack.c.h.b16 %v238
  %v320 = vunpack.c.l.b16 %v239
  %v321 = vunpack.c.h.b16 %v239
  %v322 = vunpack.c.l.b16 %v240
  %v323 = vunpack.c.h.b16 %v240
  %v324 = vunpack.c.l.b16 %v241
  %v325 = vunpack.c.h.b16 %v241
  %v326 = vunpack.c.l.b16 %v242
  %v327 = vunpack.c.h.b16 %v242
  %v328 = vunpack.c.l.b16 %v243
  %v329 = vunpack.c.h.b16 %v243
  %v330 = vunpack.c.l.b16 %v244
  %v331 = vunpack.c.h.b16 %v244
  %v332 = vunpack.c.l.b16 %v245
  %v333 = vunpack.c.h.b16 %v245
  %v334 = vunpack.c.l.b16 %v246
  %v335 = vunpack.c.h.b16 %v246
  %v336 = vunpack.c.l.b16 %v247
  %v337 = vunpack.c.h.b16 %v247
  %v338 = vpack.c.b16 %v282, %v278
  %v339 = vpack.c.b16 %v283, %v279
  %v340 = vpack.c.b16 %v284, %v280
  %v341 = vpack.c.b16 %v285, %v281
  %v342 = vpack.c.b16 %v290, %v286
  %v343 = vpack.c.b16 %v291, %v287
  %v344 = vpack.c.b16 %v292, %v288
  %v345 = vpack.c.b16 %v293, %v289
  %v346 = vpack.c.b16 %v298, %v294
  %v347 = vpack.c.b16 %v299, %v295
  %v348 = vpack.c.b16 %v300, %v296
  %v349 = vpack.c.b16 %v301, %v297
  %v350 = vpack.c.b16 %v306, %v302
  %v351 = vpack.c.b16 %v307, %v303
  %v352 = vpack.c.b16 %v308, %v304
  %v353 = vpack.c.b16 %v309, %v305
  %v354 = vpack.c.b16 %v314, %v310
  %v355 = vpack.c.b16 %v315, %v311
  %v356 = vpack.c.b16 %v316, %v312
  %v357 = vpack.c.b16 %v317, %v313
  %v358 = vpack.c.b16 %v322, %v318
  %v359 = vpack.c.b16 %v323, %v319
  %v360 = vpack.c.b16 %v324, %v320
  %v361 = vpack.c.b16 %v325, %v321
  %v362 = vpack.c.b16 %v330, %v326
  %v363 = vpack.c.b16 %v331, %v327
  %v364 = vpack.c.b16 %v332, %v328
  %v365 = vpack.c.b16 %v333, %v329
  %v366 = vpack.c.b16 %v334, %v334
  %v367 = vpack.c.b16 %v335, %v335
  %v368 = vpack.c.b16 %v336, %v336
  %v369 = vpack.c.b16 %v337, %v337
  %vm394 = vcmask 654336
  %v396 = vsel %vm394, %v341, 0
  %v399 = vsel %vm394, %v345, 0
  %v402 = vsel %vm394, %v349, 0
  %v405 = vsel %vm394, %v353, 0
  %v408 = vsel %vm394, %v357, 0
  %v411 = vsel %vm394, %v361, 0
  %v414 = vsel %vm394, %v365, 0
  %v417 = vsel %vm394, %v369, 0
  %419 = vmatpush.bf16.msra.mxu0 %v196
  %420 = vmatpush.bf16.msra.mxu0 %v195
  %421 = vmatpush.bf16.msra.mxu0 %v194
  %422 = vmatpush.bf16.msra.mxu0 %v193
  %423 = vmatpush.bf16.msra.mxu0 %v192
  %424 = vmatpush.bf16.msra.mxu0 %v191
  %425 = vmatpush.bf16.msra.mxu0 %v190
  %426 = vmatpush.bf16.msra.mxu0 %v189
  %427 = vmatmul.bf16.gmra.mxu0 %v338
  %v428 = vpop.f32.mrf.mxu0
  %v429 = vadd.f32 0.0, %v428
  %v430 = vpop.f32.mrf.mxu0
  %v431 = vadd.f32 0.0, %v430
  %432 = vmatmul.bf16.gmra.mxu0 %v342
  %v433 = vpop.f32.mrf.mxu0
  %v434 = vadd.f32 0.0, %v433
  %v435 = vpop.f32.mrf.mxu0
  %v436 = vadd.f32 0.0, %v435
  %437 = vmatmul.bf16.gmra.mxu0 %v346
  %v438 = vpop.f32.mrf.mxu0
  %v439 = vadd.f32 0.0, %v438
  %v440 = vpop.f32.mrf.mxu0
  %v441 = vadd.f32 0.0, %v440
  %442 = vmatmul.bf16.gmra.mxu0 %v350
  %v443 = vpop.f32.mrf.mxu0
  %v444 = vadd.f32 0.0, %v443
  %v445 = vpop.f32.mrf.mxu0
  %v446 = vadd.f32 0.0, %v445
  %447 = vmatmul.bf16.gmra.mxu0 %v354
  %v448 = vpop.f32.mrf.mxu0
  %v449 = vadd.f32 0.0, %v448
  %v450 = vpop.f32.mrf.mxu0
  %v451 = vadd.f32 0.0, %v450
  %452 = vmatmul.bf16.gmra.mxu0 %v358
  %v453 = vpop.f32.mrf.mxu0
  %v454 = vadd.f32 0.0, %v453
  %v455 = vpop.f32.mrf.mxu0
  %v456 = vadd.f32 0.0, %v455
  %457 = vmatmul.bf16.gmra.mxu0 %v362
  %v458 = vpop.f32.mrf.mxu0
  %v459 = vadd.f32 0.0, %v458
  %v460 = vpop.f32.mrf.mxu0
  %v461 = vadd.f32 0.0, %v460
  %462 = vmatmul.bf16.gmra.mxu0 %v366
  %v463 = vpop.f32.mrf.mxu0
  %v464 = vadd.f32 0.0, %v463
  %v465 = vpop.f32.mrf.mxu0
  %466 = vdwg.mxu0
  %467 = vmatpush.bf16.msra.mxu0 %v204
  %468 = vmatpush.bf16.msra.mxu0 %v203
  %469 = vmatpush.bf16.msra.mxu0 %v202
  %470 = vmatpush.bf16.msra.mxu0 %v201
  %471 = vmatpush.bf16.msra.mxu0 %v200
  %472 = vmatpush.bf16.msra.mxu0 %v199
  %473 = vmatpush.bf16.msra.mxu0 %v198
  %474 = vmatpush.bf16.msra.mxu0 %v197
  %475 = vmatmul.bf16.gmra.mxu0 %v339
  %v476 = vpop.f32.mrf.mxu0
  %v477 = vadd.f32 %v429, %v476
  %v478 = vpop.f32.mrf.mxu0
  %v479 = vadd.f32 %v431, %v478
  %480 = vmatmul.bf16.gmra.mxu0 %v343
  %v481 = vpop.f32.mrf.mxu0
  %v482 = vadd.f32 %v434, %v481
  %v483 = vpop.f32.mrf.mxu0
  %v484 = vadd.f32 %v436, %v483
  %485 = vmatmul.bf16.gmra.mxu0 %v347
  %v486 = vpop.f32.mrf.mxu0
  %v487 = vadd.f32 %v439, %v486
  %v488 = vpop.f32.mrf.mxu0
  %v489 = vadd.f32 %v441, %v488
  %490 = vmatmul.bf16.gmra.mxu0 %v351
  %v491 = vpop.f32.mrf.mxu0
  %v492 = vadd.f32 %v444, %v491
  %v493 = vpop.f32.mrf.mxu0
  %v494 = vadd.f32 %v446, %v493
  %495 = vmatmul.bf16.gmra.mxu0 %v355
  %v496 = vpop.f32.mrf.mxu0
  %v497 = vadd.f32 %v449, %v496
  %v498 = vpop.f32.mrf.mxu0
  %v499 = vadd.f32 %v451, %v498
  %500 = vmatmul.bf16.gmra.mxu0 %v359
  %v501 = vpop.f32.mrf.mxu0
  %v502 = vadd.f32 %v454, %v501
  %v503 = vpop.f32.mrf.mxu0
  %v504 = vadd.f32 %v456, %v503
  %505 = vmatmul.bf16.gmra.mxu0 %v363
  %v506 = vpop.f32.mrf.mxu0
  %v507 = vadd.f32 %v459, %v506
  %v508 = vpop.f32.mrf.mxu0
  %v509 = vadd.f32 %v461, %v508
  %510 = vmatmul.bf16.gmra.mxu0 %v367
  %v511 = vpop.f32.mrf.mxu0
  %v512 = vadd.f32 %v464, %v511
  %v513 = vpop.f32.mrf.mxu0
  %514 = vdwg.mxu0
  %515 = vmatpush.bf16.msra.mxu0 %v212
  %516 = vmatpush.bf16.msra.mxu0 %v211
  %517 = vmatpush.bf16.msra.mxu0 %v210
  %518 = vmatpush.bf16.msra.mxu0 %v209
  %519 = vmatpush.bf16.msra.mxu0 %v208
  %520 = vmatpush.bf16.msra.mxu0 %v207
  %521 = vmatpush.bf16.msra.mxu0 %v206
  %522 = vmatpush.bf16.msra.mxu0 %v205
  %523 = vmatmul.bf16.gmra.mxu0 %v340
  %v524 = vpop.f32.mrf.mxu0
  %v525 = vadd.f32 %v477, %v524
  %v526 = vpop.f32.mrf.mxu0
  %v527 = vadd.f32 %v479, %v526
  %528 = vmatmul.bf16.gmra.mxu0 %v344
  %v529 = vpop.f32.mrf.mxu0
  %v530 = vadd.f32 %v482, %v529
  %v531 = vpop.f32.mrf.mxu0
  %v532 = vadd.f32 %v484, %v531
  %533 = vmatmul.bf16.gmra.mxu0 %v348
  %v534 = vpop.f32.mrf.mxu0
  %v535 = vadd.f32 %v487, %v534
  %v536 = vpop.f32.mrf.mxu0
  %v537 = vadd.f32 %v489, %v536
  %538 = vmatmul.bf16.gmra.mxu0 %v352
  %v539 = vpop.f32.mrf.mxu0
  %v540 = vadd.f32 %v492, %v539
  %v541 = vpop.f32.mrf.mxu0
  %v542 = vadd.f32 %v494, %v541
  %543 = vmatmul.bf16.gmra.mxu0 %v356
  %v544 = vpop.f32.mrf.mxu0
  %v545 = vadd.f32 %v497, %v544
  %v546 = vpop.f32.mrf.mxu0
  %v547 = vadd.f32 %v499, %v546
  %548 = vmatmul.bf16.gmra.mxu0 %v360
  %v549 = vpop.f32.mrf.mxu0
  %v550 = vadd.f32 %v502, %v549
  %v551 = vpop.f32.mrf.mxu0
  %v552 = vadd.f32 %v504, %v551
  %553 = vmatmul.bf16.gmra.mxu0 %v364
  %v554 = vpop.f32.mrf.mxu0
  %v555 = vadd.f32 %v507, %v554
  %v556 = vpop.f32.mrf.mxu0
  %v557 = vadd.f32 %v509, %v556
  %558 = vmatmul.bf16.gmra.mxu0 %v368
  %v559 = vpop.f32.mrf.mxu0
  %v560 = vadd.f32 %v512, %v559
  %v561 = vpop.f32.mrf.mxu0
  %562 = vdwg.mxu0
  %563 = vmatpush.bf16.msra.mxu0 0
  %564 = vmatpush.bf16.msra.mxu0 0
  %565 = vmatpush.bf16.msra.mxu0 0
  %566 = vmatpush.bf16.msra.mxu0 %v217
  %567 = vmatpush.bf16.msra.mxu0 %v216
  %568 = vmatpush.bf16.msra.mxu0 %v215
  %569 = vmatpush.bf16.msra.mxu0 %v214
  %570 = vmatpush.bf16.msra.mxu0 %v213
  %571 = vmatmul.bf16.gmra.mxu0 %v396
  %v572 = vpop.f32.mrf.mxu0
  %v573 = vadd.f32 %v525, %v572
  %v574 = vpop.f32.mrf.mxu0
  %v575 = vadd.f32 %v527, %v574
  %576 = vmatmul.bf16.gmra.mxu0 %v399
  %v577 = vpop.f32.mrf.mxu0
  %v578 = vadd.f32 %v530, %v577
  %v579 = vpop.f32.mrf.mxu0
  %v580 = vadd.f32 %v532, %v579
  %581 = vmatmul.bf16.gmra.mxu0 %v402
  %v582 = vpop.f32.mrf.mxu0
  %v583 = vadd.f32 %v535, %v582
  %v584 = vpop.f32.mrf.mxu0
  %v585 = vadd.f32 %v537, %v584
  %586 = vmatmul.bf16.gmra.mxu0 %v405
  %v587 = vpop.f32.mrf.mxu0
  %v588 = vadd.f32 %v540, %v587
  %v589 = vpop.f32.mrf.mxu0
  %v590 = vadd.f32 %v542, %v589
  %591 = vmatmul.bf16.gmra.mxu0 %v408
  %v592 = vpop.f32.mrf.mxu0
  %v593 = vadd.f32 %v545, %v592
  %v594 = vpop.f32.mrf.mxu0
  %v595 = vadd.f32 %v547, %v594
  %596 = vmatmul.bf16.gmra.mxu0 %v411
  %v597 = vpop.f32.mrf.mxu0
  %v598 = vadd.f32 %v550, %v597
  %v599 = vpop.f32.mrf.mxu0
  %v600 = vadd.f32 %v552, %v599
  %601 = vmatmul.bf16.gmra.mxu0 %v414
  %v602 = vpop.f32.mrf.mxu0
  %v603 = vadd.f32 %v555, %v602
  %v604 = vpop.f32.mrf.mxu0
  %v605 = vadd.f32 %v557, %v604
  %606 = vmatmul.bf16.gmra.mxu0 %v417
  %v607 = vpop.f32.mrf.mxu0
  %v608 = vadd.f32 %v560, %v607
  %v609 = vpop.f32.mrf.mxu0
  %610 = vdwg.mxu0
  %v611 = vld [vmem:[%s5] sm:$0xff]
  %v612 = vld [vmem:[%s5 + $0x8] sm:$0xff]
  %v613 = vld [vmem:[%s5 + $0x10] sm:$0xff]
  %v614 = vld [vmem:[%s5 + $0x18] sm:$0xff]
  %v615 = vld [vmem:[%s5 + $0x20] sm:$0xff]
  %v616 = vld [vmem:[%s5 + $0x28] sm:$0xff]
  %v617 = vld [vmem:[%s5 + $0x30] sm:$0xff]
  %v618 = vld [vmem:[%s5 + $0x38] sm:$0x11]
  %v619 = vpack.c.bf16 %v575, %v573
  %v620 = vpack.c.bf16 %v580, %v578
  %v621 = vpack.c.bf16 %v585, %v583
  %v622 = vpack.c.bf16 %v590, %v588
  %v623 = vpack.c.bf16 %v595, %v593
  %v624 = vpack.c.bf16 %v600, %v598
  %v625 = vpack.c.bf16 %v605, %v603
  %v626 = vpack.c.bf16 %v608, %v608
  %s627 = scalar_lea.vmem %s3, 240
  %v628 = vld [vmem:[%s627] sm:$0xff]
  %v629 = vld [vmem:[%s627 + $0x8] sm:$0xff]
  %v630 = vld [vmem:[%s627 + $0x10] sm:$0xff]
  %v631 = vld [vmem:[%s627 + $0x18] sm:$0xff]
  %v632 = vld [vmem:[%s627 + $0x20] sm:$0xff]
  %v633 = vld [vmem:[%s627 + $0x28] sm:$0xff]
  %v634 = vld [vmem:[%s627 + $0x30] sm:$0xff]
  %v635 = vld [vmem:[%s627 + $0x38] sm:$0xff]
  %v636 = vld [vmem:[%s627 + $0x40] sm:$0xff]
  %v637 = vld [vmem:[%s627 + $0x48] sm:$0xff]
  %v638 = vld [vmem:[%s627 + $0x50] sm:$0xff]
  %v639 = vld [vmem:[%s627 + $0x58] sm:$0xff]
  %v640 = vld [vmem:[%s627 + $0x60] sm:$0xff]
  %v641 = vld [vmem:[%s627 + $0x68] sm:$0xff]
  %v642 = vld [vmem:[%s627 + $0x70] sm:$0xff]
  %v643 = vld [vmem:[%s627 + $0x78] sm:$0xff]
  %v644 = vld [vmem:[%s627 + $0x80] sm:$0xff]
  %v645 = vld [vmem:[%s627 + $0x88] sm:$0xff]
  %v646 = vld [vmem:[%s627 + $0x90] sm:$0xff]
  %v647 = vld [vmem:[%s627 + $0x98] sm:$0xff]
  %v648 = vld [vmem:[%s627 + $0xa0] sm:$0xff]
  %v649 = vld [vmem:[%s627 + $0xa8] sm:$0xff]
  %v650 = vld [vmem:[%s627 + $0xb0] sm:$0xff]
  %v651 = vld [vmem:[%s627 + $0xb8] sm:$0xff]
  %v652 = vld [vmem:[%s627 + $0xc0] sm:$0xff]
  %v653 = vld [vmem:[%s627 + $0xc8] sm:$0xff]
  %v654 = vld [vmem:[%s627 + $0xd0] sm:$0xff]
  %v655 = vld [vmem:[%s627 + $0xd8] sm:$0xff]
  %v656 = vld [vmem:[%s627 + $0xe0] sm:$0x33]
  %v657 = vld [vmem:[%s627 + $0xe8] sm:$0x33]
  %v688 = vunpack.c.l.b16 %v628
  %v689 = vunpack.c.h.b16 %v628
  %v690 = vunpack.c.l.b16 %v629
  %v691 = vunpack.c.h.b16 %v629
  %v692 = vunpack.c.l.b16 %v630
  %v693 = vunpack.c.h.b16 %v630
  %v694 = vunpack.c.l.b16 %v631
  %v695 = vunpack.c.h.b16 %v631
  %v696 = vunpack.c.l.b16 %v632
  %v697 = vunpack.c.h.b16 %v632
  %v698 = vunpack.c.l.b16 %v633
  %v699 = vunpack.c.h.b16 %v633
  %v700 = vunpack.c.l.b16 %v634
  %v701 = vunpack.c.h.b16 %v634
  %v702 = vunpack.c.l.b16 %v635
  %v703 = vunpack.c.h.b16 %v635
  %v704 = vunpack.c.l.b16 %v636
  %v705 = vunpack.c.h.b16 %v636
  %v706 = vunpack.c.l.b16 %v637
  %v707 = vunpack.c.h.b16 %v637
  %v708 = vunpack.c.l.b16 %v638
  %v709 = vunpack.c.h.b16 %v638
  %v710 = vunpack.c.l.b16 %v639
  %v711 = vunpack.c.h.b16 %v639
  %v712 = vunpack.c.l.b16 %v640
  %v713 = vunpack.c.h.b16 %v640
  %v714 = vunpack.c.l.b16 %v641
  %v715 = vunpack.c.h.b16 %v641
  %v716 = vunpack.c.l.b16 %v642
  %v717 = vunpack.c.h.b16 %v642
  %v718 = vunpack.c.l.b16 %v643
  %v719 = vunpack.c.h.b16 %v643
  %v720 = vunpack.c.l.b16 %v644
  %v721 = vunpack.c.h.b16 %v644
  %v722 = vunpack.c.l.b16 %v645
  %v723 = vunpack.c.h.b16 %v645
  %v724 = vunpack.c.l.b16 %v646
  %v725 = vunpack.c.h.b16 %v646
  %v726 = vunpack.c.l.b16 %v647
  %v727 = vunpack.c.h.b16 %v647
  %v728 = vunpack.c.l.b16 %v648
  %v729 = vunpack.c.h.b16 %v648
  %v730 = vunpack.c.l.b16 %v649
  %v731 = vunpack.c.h.b16 %v649
  %v732 = vunpack.c.l.b16 %v650
  %v733 = vunpack.c.h.b16 %v650
  %v734 = vunpack.c.l.b16 %v651
  %v735 = vunpack.c.h.b16 %v651
  %v736 = vunpack.c.l.b16 %v652
  %v737 = vunpack.c.h.b16 %v652
  %v738 = vunpack.c.l.b16 %v653
  %v739 = vunpack.c.h.b16 %v653
  %v740 = vunpack.c.l.b16 %v654
  %v741 = vunpack.c.h.b16 %v654
  %v742 = vunpack.c.l.b16 %v655
  %v743 = vunpack.c.h.b16 %v655
  %v744 = vunpack.c.l.b16 %v656
  %v745 = vunpack.c.h.b16 %v656
  %v746 = vunpack.c.l.b16 %v657
  %v747 = vunpack.c.h.b16 %v657
  %v748 = vpack.c.b16 %v692, %v688
  %v749 = vpack.c.b16 %v693, %v689
  %v750 = vpack.c.b16 %v694, %v690
  %v751 = vpack.c.b16 %v695, %v691
  %v752 = vpack.c.b16 %v700, %v696
  %v753 = vpack.c.b16 %v701, %v697
  %v754 = vpack.c.b16 %v702, %v698
  %v755 = vpack.c.b16 %v703, %v699
  %v756 = vpack.c.b16 %v708, %v704
  %v757 = vpack.c.b16 %v709, %v705
  %v758 = vpack.c.b16 %v710, %v706
  %v759 = vpack.c.b16 %v711, %v707
  %v760 = vpack.c.b16 %v716, %v712
  %v761 = vpack.c.b16 %v717, %v713
  %v762 = vpack.c.b16 %v718, %v714
  %v763 = vpack.c.b16 %v719, %v715
  %v764 = vpack.c.b16 %v724, %v720
  %v765 = vpack.c.b16 %v725, %v721
  %v766 = vpack.c.b16 %v726, %v722
  %v767 = vpack.c.b16 %v727, %v723
  %v768 = vpack.c.b16 %v732, %v728
  %v769 = vpack.c.b16 %v733, %v729
  %v770 = vpack.c.b16 %v734, %v730
  %v771 = vpack.c.b16 %v735, %v731
  %v772 = vpack.c.b16 %v740, %v736
  %v773 = vpack.c.b16 %v741, %v737
  %v774 = vpack.c.b16 %v742, %v738
  %v775 = vpack.c.b16 %v743, %v739
  %v776 = vpack.c.b16 %v744, %v744
  %v777 = vpack.c.b16 %v745, %v745
  %v778 = vpack.c.b16 %v746, %v746
  %v779 = vpack.c.b16 %v747, %v747
  %v805 = vsel %vm394, %v751, 0
  %v808 = vsel %vm394, %v755, 0
  %v811 = vsel %vm394, %v759, 0
  %v814 = vsel %vm394, %v763, 0
  %v817 = vsel %vm394, %v767, 0
  %v820 = vsel %vm394, %v771, 0
  %v823 = vsel %vm394, %v775, 0
  %v826 = vsel %vm394, %v779, 0
  %828 = vmatpush.bf16.msra.mxu0 %v196
  %829 = vmatpush.bf16.msra.mxu0 %v195
  %830 = vmatpush.bf16.msra.mxu0 %v194
  %831 = vmatpush.bf16.msra.mxu0 %v193
  %832 = vmatpush.bf16.msra.mxu0 %v192
  %833 = vmatpush.bf16.msra.mxu0 %v191
  %834 = vmatpush.bf16.msra.mxu0 %v190
  %835 = vmatpush.bf16.msra.mxu0 %v189
  %836 = vmatmul.bf16.gmra.mxu0 %v748
  %v837 = vpop.f32.mrf.mxu0
  %v838 = vadd.f32 0.0, %v837
  %v839 = vpop.f32.mrf.mxu0
  %v840 = vadd.f32 0.0, %v839
  %841 = vmatmul.bf16.gmra.mxu0 %v752
  %v842 = vpop.f32.mrf.mxu0
  %v843 = vadd.f32 0.0, %v842
  %v844 = vpop.f32.mrf.mxu0
  %v845 = vadd.f32 0.0, %v844
  %846 = vmatmul.bf16.gmra.mxu0 %v756
  %v847 = vpop.f32.mrf.mxu0
  %v848 = vadd.f32 0.0, %v847
  %v849 = vpop.f32.mrf.mxu0
  %v850 = vadd.f32 0.0, %v849
  %851 = vmatmul.bf16.gmra.mxu0 %v760
  %v852 = vpop.f32.mrf.mxu0
  %v853 = vadd.f32 0.0, %v852
  %v854 = vpop.f32.mrf.mxu0
  %v855 = vadd.f32 0.0, %v854
  %856 = vmatmul.bf16.gmra.mxu0 %v764
  %v857 = vpop.f32.mrf.mxu0
  %v858 = vadd.f32 0.0, %v857
  %v859 = vpop.f32.mrf.mxu0
  %v860 = vadd.f32 0.0, %v859
  %861 = vmatmul.bf16.gmra.mxu0 %v768
  %v862 = vpop.f32.mrf.mxu0
  %v863 = vadd.f32 0.0, %v862
  %v864 = vpop.f32.mrf.mxu0
  %v865 = vadd.f32 0.0, %v864
  %866 = vmatmul.bf16.gmra.mxu0 %v772
  %v867 = vpop.f32.mrf.mxu0
  %v868 = vadd.f32 0.0, %v867
  %v869 = vpop.f32.mrf.mxu0
  %v870 = vadd.f32 0.0, %v869
  %871 = vmatmul.bf16.gmra.mxu0 %v776
  %v872 = vpop.f32.mrf.mxu0
  %v873 = vadd.f32 0.0, %v872
  %v874 = vpop.f32.mrf.mxu0
  %875 = vdwg.mxu0
  %876 = vmatpush.bf16.msra.mxu0 %v204
  %877 = vmatpush.bf16.msra.mxu0 %v203
  %878 = vmatpush.bf16.msra.mxu0 %v202
  %879 = vmatpush.bf16.msra.mxu0 %v201
  %880 = vmatpush.bf16.msra.mxu0 %v200
  %881 = vmatpush.bf16.msra.mxu0 %v199
  %882 = vmatpush.bf16.msra.mxu0 %v198
  %883 = vmatpush.bf16.msra.mxu0 %v197
  %884 = vmatmul.bf16.gmra.mxu0 %v749
  %v885 = vpop.f32.mrf.mxu0
  %v886 = vadd.f32 %v838, %v885
  %v887 = vpop.f32.mrf.mxu0
  %v888 = vadd.f32 %v840, %v887
  %889 = vmatmul.bf16.gmra.mxu0 %v753
  %v890 = vpop.f32.mrf.mxu0
  %v891 = vadd.f32 %v843, %v890
  %v892 = vpop.f32.mrf.mxu0
  %v893 = vadd.f32 %v845, %v892
  %894 = vmatmul.bf16.gmra.mxu0 %v757
  %v895 = vpop.f32.mrf.mxu0
  %v896 = vadd.f32 %v848, %v895
  %v897 = vpop.f32.mrf.mxu0
  %v898 = vadd.f32 %v850, %v897
  %899 = vmatmul.bf16.gmra.mxu0 %v761
  %v900 = vpop.f32.mrf.mxu0
  %v901 = vadd.f32 %v853, %v900
  %v902 = vpop.f32.mrf.mxu0
  %v903 = vadd.f32 %v855, %v902
  %904 = vmatmul.bf16.gmra.mxu0 %v765
  %v905 = vpop.f32.mrf.mxu0
  %v906 = vadd.f32 %v858, %v905
  %v907 = vpop.f32.mrf.mxu0
  %v908 = vadd.f32 %v860, %v907
  %909 = vmatmul.bf16.gmra.mxu0 %v769
  %v910 = vpop.f32.mrf.mxu0
  %v911 = vadd.f32 %v863, %v910
  %v912 = vpop.f32.mrf.mxu0
  %v913 = vadd.f32 %v865, %v912
  %914 = vmatmul.bf16.gmra.mxu0 %v773
  %v915 = vpop.f32.mrf.mxu0
  %v916 = vadd.f32 %v868, %v915
  %v917 = vpop.f32.mrf.mxu0
  %v918 = vadd.f32 %v870, %v917
  %919 = vmatmul.bf16.gmra.mxu0 %v777
  %v920 = vpop.f32.mrf.mxu0
  %v921 = vadd.f32 %v873, %v920
  %v922 = vpop.f32.mrf.mxu0
  %923 = vdwg.mxu0
  %924 = vmatpush.bf16.msra.mxu0 %v212
  %925 = vmatpush.bf16.msra.mxu0 %v211
  %926 = vmatpush.bf16.msra.mxu0 %v210
  %927 = vmatpush.bf16.msra.mxu0 %v209
  %928 = vmatpush.bf16.msra.mxu0 %v208
  %929 = vmatpush.bf16.msra.mxu0 %v207
  %930 = vmatpush.bf16.msra.mxu0 %v206
  %931 = vmatpush.bf16.msra.mxu0 %v205
  %932 = vmatmul.bf16.gmra.mxu0 %v750
  %v933 = vpop.f32.mrf.mxu0
  %v934 = vadd.f32 %v886, %v933
  %v935 = vpop.f32.mrf.mxu0
  %v936 = vadd.f32 %v888, %v935
  %937 = vmatmul.bf16.gmra.mxu0 %v754
  %v938 = vpop.f32.mrf.mxu0
  %v939 = vadd.f32 %v891, %v938
  %v940 = vpop.f32.mrf.mxu0
  %v941 = vadd.f32 %v893, %v940
  %942 = vmatmul.bf16.gmra.mxu0 %v758
  %v943 = vpop.f32.mrf.mxu0
  %v944 = vadd.f32 %v896, %v943
  %v945 = vpop.f32.mrf.mxu0
  %v946 = vadd.f32 %v898, %v945
  %947 = vmatmul.bf16.gmra.mxu0 %v762
  %v948 = vpop.f32.mrf.mxu0
  %v949 = vadd.f32 %v901, %v948
  %v950 = vpop.f32.mrf.mxu0
  %v951 = vadd.f32 %v903, %v950
  %952 = vmatmul.bf16.gmra.mxu0 %v766
  %v953 = vpop.f32.mrf.mxu0
  %v954 = vadd.f32 %v906, %v953
  %v955 = vpop.f32.mrf.mxu0
  %v956 = vadd.f32 %v908, %v955
  %957 = vmatmul.bf16.gmra.mxu0 %v770
  %v958 = vpop.f32.mrf.mxu0
  %v959 = vadd.f32 %v911, %v958
  %v960 = vpop.f32.mrf.mxu0
  %v961 = vadd.f32 %v913, %v960
  %962 = vmatmul.bf16.gmra.mxu0 %v774
  %v963 = vpop.f32.mrf.mxu0
  %v964 = vadd.f32 %v916, %v963
  %v965 = vpop.f32.mrf.mxu0
  %v966 = vadd.f32 %v918, %v965
  %967 = vmatmul.bf16.gmra.mxu0 %v778
  %v968 = vpop.f32.mrf.mxu0
  %v969 = vadd.f32 %v921, %v968
  %v970 = vpop.f32.mrf.mxu0
  %971 = vdwg.mxu0
  %972 = vmatpush.bf16.msra.mxu0 0
  %973 = vmatpush.bf16.msra.mxu0 0
  %974 = vmatpush.bf16.msra.mxu0 0
  %975 = vmatpush.bf16.msra.mxu0 %v217
  %976 = vmatpush.bf16.msra.mxu0 %v216
  %977 = vmatpush.bf16.msra.mxu0 %v215
  %978 = vmatpush.bf16.msra.mxu0 %v214
  %979 = vmatpush.bf16.msra.mxu0 %v213
  %980 = vmatmul.bf16.gmra.mxu0 %v805
  %v981 = vpop.f32.mrf.mxu0
  %v982 = vadd.f32 %v934, %v981
  %v983 = vpop.f32.mrf.mxu0
  %v984 = vadd.f32 %v936, %v983
  %985 = vmatmul.bf16.gmra.mxu0 %v808
  %v986 = vpop.f32.mrf.mxu0
  %v987 = vadd.f32 %v939, %v986
  %v988 = vpop.f32.mrf.mxu0
  %v989 = vadd.f32 %v941, %v988
  %990 = vmatmul.bf16.gmra.mxu0 %v811
  %v991 = vpop.f32.mrf.mxu0
  %v992 = vadd.f32 %v944, %v991
  %v993 = vpop.f32.mrf.mxu0
  %v994 = vadd.f32 %v946, %v993
  %995 = vmatmul.bf16.gmra.mxu0 %v814
  %v996 = vpop.f32.mrf.mxu0
  %v997 = vadd.f32 %v949, %v996
  %v998 = vpop.f32.mrf.mxu0
  %v999 = vadd.f32 %v951, %v998
  %1000 = vmatmul.bf16.gmra.mxu0 %v817
  %v1001 = vpop.f32.mrf.mxu0
  %v1002 = vadd.f32 %v954, %v1001
  %v1003 = vpop.f32.mrf.mxu0
  %v1004 = vadd.f32 %v956, %v1003
  %1005 = vmatmul.bf16.gmra.mxu0 %v820
  %v1006 = vpop.f32.mrf.mxu0
  %v1007 = vadd.f32 %v959, %v1006
  %v1008 = vpop.f32.mrf.mxu0
  %v1009 = vadd.f32 %v961, %v1008
  %1010 = vmatmul.bf16.gmra.mxu0 %v823
  %v1011 = vpop.f32.mrf.mxu0
  %v1012 = vadd.f32 %v964, %v1011
  %v1013 = vpop.f32.mrf.mxu0
  %v1014 = vadd.f32 %v966, %v1013
  %1015 = vmatmul.bf16.gmra.mxu0 %v826
  %v1016 = vpop.f32.mrf.mxu0
  %v1017 = vadd.f32 %v969, %v1016
  %v1018 = vpop.f32.mrf.mxu0
  %1019 = vdwg.mxu0
  %s1020 = scalar_lea.vmem %s5, 64
  %v1021 = vld [vmem:[%s1020] sm:$0xff]
  %v1022 = vld [vmem:[%s1020 + $0x8] sm:$0xff]
  %v1023 = vld [vmem:[%s1020 + $0x10] sm:$0xff]
  %v1024 = vld [vmem:[%s1020 + $0x18] sm:$0xff]
  %v1025 = vld [vmem:[%s1020 + $0x20] sm:$0xff]
  %v1026 = vld [vmem:[%s1020 + $0x28] sm:$0xff]
  %v1027 = vld [vmem:[%s1020 + $0x30] sm:$0xff]
  %v1028 = vld [vmem:[%s1020 + $0x38] sm:$0x11]
  %v1029 = vpack.c.bf16 %v984, %v982
  %v1030 = vpack.c.bf16 %v989, %v987
  %v1031 = vpack.c.bf16 %v994, %v992
  %v1032 = vpack.c.bf16 %v999, %v997
  %v1033 = vpack.c.bf16 %v1004, %v1002
  %v1034 = vpack.c.bf16 %v1009, %v1007
  %v1035 = vpack.c.bf16 %v1014, %v1012
  %v1036 = vpack.c.bf16 %v1017, %v1017
  %v1045 = vunpack.c.l.b16 %v1021
  %v1046 = vunpack.c.h.b16 %v1021
  %v1047 = vunpack.c.l.b16 %v1022
  %v1048 = vunpack.c.h.b16 %v1022
  %v1049 = vunpack.c.l.b16 %v1023
  %v1050 = vunpack.c.h.b16 %v1023
  %v1051 = vunpack.c.l.b16 %v1024
  %v1052 = vunpack.c.h.b16 %v1024
  %v1053 = vunpack.c.l.b16 %v1025
  %v1054 = vunpack.c.h.b16 %v1025
  %v1055 = vunpack.c.l.b16 %v1026
  %v1056 = vunpack.c.h.b16 %v1026
  %v1057 = vunpack.c.l.b16 %v1027
  %v1058 = vunpack.c.h.b16 %v1027
  %v1059 = vunpack.c.l.b16 %v1028
  %v1060 = vunpack.c.h.b16 %v1028
  %v1061 = vpack.c.b16 %v1047, %v1045
  %v1062 = vpack.c.b16 %v1048, %v1046
  %v1063 = vpack.c.b16 %v1051, %v1049
  %v1064 = vpack.c.b16 %v1052, %v1050
  %v1065 = vpack.c.b16 %v1055, %v1053
  %v1066 = vpack.c.b16 %v1056, %v1054
  %v1067 = vpack.c.b16 %v1059, %v1057
  %v1068 = vpack.c.b16 %v1060, %v1058
  %vm1075 = vcmask 474112
  %v1077 = vsel %vm1075, %v1029, 0
  %v1080 = vsel %vm1075, %v1030, 0
  %v1083 = vsel %vm1075, %v1031, 0
  %v1086 = vsel %vm1075, %v1032, 0
  %v1089 = vsel %vm1075, %v1033, 0
  %v1092 = vsel %vm1075, %v1034, 0
  %v1095 = vsel %vm1075, %v1035, 0
  %v1098 = vsel %vm1075, %v1036, 0
  %vm1100 = vcmask 1044480
  %v1102 = vsel %vm1100, %v1067, 0
  %v1105 = vsel %vm1100, %v1068, 0
  %1107 = vmatpush.bf16.msra.mxu0 0
  %1108 = vmatpush.bf16.msra.mxu0 0
  %1109 = vmatpush.bf16.msra.mxu0 0
  %1110 = vmatpush.bf16.msra.mxu0 0
  %1111 = vmatpush.bf16.msra.mxu0 %v1102
  %1112 = vmatpush.bf16.msra.mxu0 %v1065
  %1113 = vmatpush.bf16.msra.mxu0 %v1063
  %1114 = vmatpush.bf16.msra.mxu0 %v1061
  %1115 = vmatmul.bf16.gmra.mxu0 %v1077
  %v1116 = vpop.f32.mrf.mxu0
  %v1117 = vadd.f32 0.0, %v1116
  %v1118 = vpop.f32.mrf.mxu0
  %v1119 = vadd.f32 0.0, %v1118
  %1120 = vmatmul.bf16.gmra.mxu0 %v1080
  %v1121 = vpop.f32.mrf.mxu0
  %v1122 = vadd.f32 0.0, %v1121
  %v1123 = vpop.f32.mrf.mxu0
  %v1124 = vadd.f32 0.0, %v1123
  %1125 = vmatmul.bf16.gmra.mxu0 %v1083
  %v1126 = vpop.f32.mrf.mxu0
  %v1127 = vadd.f32 0.0, %v1126
  %v1128 = vpop.f32.mrf.mxu0
  %v1129 = vadd.f32 0.0, %v1128
  %1130 = vmatmul.bf16.gmra.mxu0 %v1086
  %v1131 = vpop.f32.mrf.mxu0
  %v1132 = vadd.f32 0.0, %v1131
  %v1133 = vpop.f32.mrf.mxu0
  %v1134 = vadd.f32 0.0, %v1133
  %1135 = vmatmul.bf16.gmra.mxu0 %v1089
  %v1136 = vpop.f32.mrf.mxu0
  %v1137 = vadd.f32 0.0, %v1136
  %v1138 = vpop.f32.mrf.mxu0
  %v1139 = vadd.f32 0.0, %v1138
  %1140 = vmatmul.bf16.gmra.mxu0 %v1092
  %v1141 = vpop.f32.mrf.mxu0
  %v1142 = vadd.f32 0.0, %v1141
  %v1143 = vpop.f32.mrf.mxu0
  %v1144 = vadd.f32 0.0, %v1143
  %1145 = vmatmul.bf16.gmra.mxu0 %v1095
  %v1146 = vpop.f32.mrf.mxu0
  %v1147 = vadd.f32 0.0, %v1146
  %v1148 = vpop.f32.mrf.mxu0
  %v1149 = vadd.f32 0.0, %v1148
  %1150 = vmatmul.bf16.gmra.mxu0 %v1098
  %v1151 = vpop.f32.mrf.mxu0
  %v1152 = vadd.f32 0.0, %v1151
  %v1153 = vpop.f32.mrf.mxu0
  %1154 = vdwg.mxu0
  %1155 = vmatpush.bf16.msra.mxu0 0
  %1156 = vmatpush.bf16.msra.mxu0 0
  %1157 = vmatpush.bf16.msra.mxu0 0
  %1158 = vmatpush.bf16.msra.mxu0 0
  %1159 = vmatpush.bf16.msra.mxu0 %v1105
  %1160 = vmatpush.bf16.msra.mxu0 %v1066
  %1161 = vmatpush.bf16.msra.mxu0 %v1064
  %1162 = vmatpush.bf16.msra.mxu0 %v1062
  %1163 = vmatmul.bf16.gmra.mxu0 %v1077
  %v1164 = vpop.f32.mrf.mxu0
  %v1165 = vadd.f32 0.0, %v1164
  %v1166 = vpop.f32.mrf.mxu0
  %v1167 = vadd.f32 0.0, %v1166
  %1168 = vmatmul.bf16.gmra.mxu0 %v1080
  %v1169 = vpop.f32.mrf.mxu0
  %v1170 = vadd.f32 0.0, %v1169
  %v1171 = vpop.f32.mrf.mxu0
  %v1172 = vadd.f32 0.0, %v1171
  %1173 = vmatmul.bf16.gmra.mxu0 %v1083
  %v1174 = vpop.f32.mrf.mxu0
  %v1175 = vadd.f32 0.0, %v1174
  %v1176 = vpop.f32.mrf.mxu0
  %v1177 = vadd.f32 0.0, %v1176
  %1178 = vmatmul.bf16.gmra.mxu0 %v1086
  %v1179 = vpop.f32.mrf.mxu0
  %v1180 = vadd.f32 0.0, %v1179
  %v1181 = vpop.f32.mrf.mxu0
  %v1182 = vadd.f32 0.0, %v1181
  %1183 = vmatmul.bf16.gmra.mxu0 %v1089
  %v1184 = vpop.f32.mrf.mxu0
  %v1185 = vadd.f32 0.0, %v1184
  %v1186 = vpop.f32.mrf.mxu0
  %v1187 = vadd.f32 0.0, %v1186
  %1188 = vmatmul.bf16.gmra.mxu0 %v1092
  %v1189 = vpop.f32.mrf.mxu0
  %v1190 = vadd.f32 0.0, %v1189
  %v1191 = vpop.f32.mrf.mxu0
  %v1192 = vadd.f32 0.0, %v1191
  %1193 = vmatmul.bf16.gmra.mxu0 %v1095
  %v1194 = vpop.f32.mrf.mxu0
  %v1195 = vadd.f32 0.0, %v1194
  %v1196 = vpop.f32.mrf.mxu0
  %v1197 = vadd.f32 0.0, %v1196
  %1198 = vmatmul.bf16.gmra.mxu0 %v1098
  %v1199 = vpop.f32.mrf.mxu0
  %v1200 = vadd.f32 0.0, %v1199
  %v1201 = vpop.f32.mrf.mxu0
  %1202 = vdwg.mxu0
  %v1211 = vunpack.c.l.b16 %v611
  %v1212 = vunpack.c.h.b16 %v611
  %v1213 = vunpack.c.l.b16 %v612
  %v1214 = vunpack.c.h.b16 %v612
  %v1215 = vunpack.c.l.b16 %v613
  %v1216 = vunpack.c.h.b16 %v613
  %v1217 = vunpack.c.l.b16 %v614
  %v1218 = vunpack.c.h.b16 %v614
  %v1219 = vunpack.c.l.b16 %v615
  %v1220 = vunpack.c.h.b16 %v615
  %v1221 = vunpack.c.l.b16 %v616
  %v1222 = vunpack.c.h.b16 %v616
  %v1223 = vunpack.c.l.b16 %v617
  %v1224 = vunpack.c.h.b16 %v617
  %v1225 = vunpack.c.l.b16 %v618
  %v1226 = vunpack.c.h.b16 %v618
  %v1227 = vpack.c.b16 %v1213, %v1211
  %v1228 = vpack.c.b16 %v1214, %v1212
  %v1229 = vpack.c.b16 %v1217, %v1215
  %v1230 = vpack.c.b16 %v1218, %v1216
  %v1231 = vpack.c.b16 %v1221, %v1219
  %v1232 = vpack.c.b16 %v1222, %v1220
  %v1233 = vpack.c.b16 %v1225, %v1223
  %v1234 = vpack.c.b16 %v1226, %v1224
  %v1242 = vsel %vm1075, %v619, 0
  %v1245 = vsel %vm1075, %v620, 0
  %v1248 = vsel %vm1075, %v621, 0
  %v1251 = vsel %vm1075, %v622, 0
  %v1254 = vsel %vm1075, %v623, 0
  %v1257 = vsel %vm1075, %v624, 0
  %v1260 = vsel %vm1075, %v625, 0
  %v1263 = vsel %vm1075, %v626, 0
  %v1266 = vsel %vm1100, %v1233, 0
  %v1269 = vsel %vm1100, %v1234, 0
  %1271 = vmatpush.bf16.msra.mxu0 0
  %1272 = vmatpush.bf16.msra.mxu0 0
  %1273 = vmatpush.bf16.msra.mxu0 0
  %1274 = vmatpush.bf16.msra.mxu0 0
  %1275 = vmatpush.bf16.msra.mxu0 %v1266
  %1276 = vmatpush.bf16.msra.mxu0 %v1231
  %1277 = vmatpush.bf16.msra.mxu0 %v1229
  %1278 = vmatpush.bf16.msra.mxu0 %v1227
  %1279 = vmatmul.bf16.gmra.mxu0 %v1242
  %v1280 = vpop.f32.mrf.mxu0
  %v1281 = vadd.f32 %v1117, %v1280
  %v1282 = vpop.f32.mrf.mxu0
  %v1283 = vadd.f32 %v1119, %v1282
  %1284 = vmatmul.bf16.gmra.mxu0 %v1245
  %v1285 = vpop.f32.mrf.mxu0
  %v1286 = vadd.f32 %v1122, %v1285
  %v1287 = vpop.f32.mrf.mxu0
  %v1288 = vadd.f32 %v1124, %v1287
  %1289 = vmatmul.bf16.gmra.mxu0 %v1248
  %v1290 = vpop.f32.mrf.mxu0
  %v1291 = vadd.f32 %v1127, %v1290
  %v1292 = vpop.f32.mrf.mxu0
  %v1293 = vadd.f32 %v1129, %v1292
  %1294 = vmatmul.bf16.gmra.mxu0 %v1251
  %v1295 = vpop.f32.mrf.mxu0
  %v1296 = vadd.f32 %v1132, %v1295
  %v1297 = vpop.f32.mrf.mxu0
  %v1298 = vadd.f32 %v1134, %v1297
  %1299 = vmatmul.bf16.gmra.mxu0 %v1254
  %v1300 = vpop.f32.mrf.mxu0
  %v1301 = vadd.f32 %v1137, %v1300
  %v1302 = vpop.f32.mrf.mxu0
  %v1303 = vadd.f32 %v1139, %v1302
  %1304 = vmatmul.bf16.gmra.mxu0 %v1257
  %v1305 = vpop.f32.mrf.mxu0
  %v1306 = vadd.f32 %v1142, %v1305
  %v1307 = vpop.f32.mrf.mxu0
  %v1308 = vadd.f32 %v1144, %v1307
  %1309 = vmatmul.bf16.gmra.mxu0 %v1260
  %v1310 = vpop.f32.mrf.mxu0
  %v1311 = vadd.f32 %v1147, %v1310
  %v1312 = vpop.f32.mrf.mxu0
  %v1313 = vadd.f32 %v1149, %v1312
  %1314 = vmatmul.bf16.gmra.mxu0 %v1263
  %v1315 = vpop.f32.mrf.mxu0
  %v1316 = vadd.f32 %v1152, %v1315
  %v1317 = vpop.f32.mrf.mxu0
  %1318 = vdwg.mxu0
  %1319 = vmatpush.bf16.msra.mxu0 0
  %1320 = vmatpush.bf16.msra.mxu0 0
  %1321 = vmatpush.bf16.msra.mxu0 0
  %1322 = vmatpush.bf16.msra.mxu0 0
  %1323 = vmatpush.bf16.msra.mxu0 %v1269
  %1324 = vmatpush.bf16.msra.mxu0 %v1232
  %1325 = vmatpush.bf16.msra.mxu0 %v1230
  %1326 = vmatpush.bf16.msra.mxu0 %v1228
  %1327 = vmatmul.bf16.gmra.mxu0 %v1242
  %v1328 = vpop.f32.mrf.mxu0
  %v1329 = vadd.f32 %v1165, %v1328
  %v1330 = vpop.f32.mrf.mxu0
  %v1331 = vadd.f32 %v1167, %v1330
  %1332 = vmatmul.bf16.gmra.mxu0 %v1245
  %v1333 = vpop.f32.mrf.mxu0
  %v1334 = vadd.f32 %v1170, %v1333
  %v1335 = vpop.f32.mrf.mxu0
  %v1336 = vadd.f32 %v1172, %v1335
  %1337 = vmatmul.bf16.gmra.mxu0 %v1248
  %v1338 = vpop.f32.mrf.mxu0
  %v1339 = vadd.f32 %v1175, %v1338
  %v1340 = vpop.f32.mrf.mxu0
  %v1341 = vadd.f32 %v1177, %v1340
  %1342 = vmatmul.bf16.gmra.mxu0 %v1251
  %v1343 = vpop.f32.mrf.mxu0
  %v1344 = vadd.f32 %v1180, %v1343
  %v1345 = vpop.f32.mrf.mxu0
  %v1346 = vadd.f32 %v1182, %v1345
  %1347 = vmatmul.bf16.gmra.mxu0 %v1254
  %v1348 = vpop.f32.mrf.mxu0
  %v1349 = vadd.f32 %v1185, %v1348
  %v1350 = vpop.f32.mrf.mxu0
  %v1351 = vadd.f32 %v1187, %v1350
  %1352 = vmatmul.bf16.gmra.mxu0 %v1257
  %v1353 = vpop.f32.mrf.mxu0
  %v1354 = vadd.f32 %v1190, %v1353
  %v1355 = vpop.f32.mrf.mxu0
  %v1356 = vadd.f32 %v1192, %v1355
  %1357 = vmatmul.bf16.gmra.mxu0 %v1260
  %v1358 = vpop.f32.mrf.mxu0
  %v1359 = vadd.f32 %v1195, %v1358
  %v1360 = vpop.f32.mrf.mxu0
  %v1361 = vadd.f32 %v1197, %v1360
  %1362 = vmatmul.bf16.gmra.mxu0 %v1263
  %v1363 = vpop.f32.mrf.mxu0
  %v1364 = vadd.f32 %v1200, %v1363
  %v1365 = vpop.f32.mrf.mxu0
  %1366 = vdwg.mxu0
  %s1367 = scalar_lea.vmem %s3, 480
  %v1368 = vld [vmem:[%s1367] sm:$0xff]
  %v1369 = vld [vmem:[%s1367 + $0x8] sm:$0xff]
  %v1370 = vld [vmem:[%s1367 + $0x10] sm:$0xff]
  %v1371 = vld [vmem:[%s1367 + $0x18] sm:$0xff]
  %v1372 = vld [vmem:[%s1367 + $0x20] sm:$0xff]
  %v1373 = vld [vmem:[%s1367 + $0x28] sm:$0xff]
  %v1374 = vld [vmem:[%s1367 + $0x30] sm:$0xff]
  %v1375 = vld [vmem:[%s1367 + $0x38] sm:$0xff]
  %v1376 = vld [vmem:[%s1367 + $0x40] sm:$0xff]
  %v1377 = vld [vmem:[%s1367 + $0x48] sm:$0xff]
  %v1378 = vld [vmem:[%s1367 + $0x50] sm:$0xff]
  %v1379 = vld [vmem:[%s1367 + $0x58] sm:$0xff]
  %v1380 = vld [vmem:[%s1367 + $0x60] sm:$0xff]
  %v1381 = vld [vmem:[%s1367 + $0x68] sm:$0xff]
  %v1382 = vld [vmem:[%s1367 + $0x70] sm:$0xff]
  %v1383 = vld [vmem:[%s1367 + $0x78] sm:$0xff]
  %v1384 = vld [vmem:[%s1367 + $0x80] sm:$0xff]
  %v1385 = vld [vmem:[%s1367 + $0x88] sm:$0xff]
  %v1386 = vld [vmem:[%s1367 + $0x90] sm:$0xff]
  %v1387 = vld [vmem:[%s1367 + $0x98] sm:$0xff]
  %v1388 = vld [vmem:[%s1367 + $0xa0] sm:$0xff]
  %v1389 = vld [vmem:[%s1367 + $0xa8] sm:$0xff]
  %v1390 = vld [vmem:[%s1367 + $0xb0] sm:$0xff]
  %v1391 = vld [vmem:[%s1367 + $0xb8] sm:$0xff]
  %v1392 = vld [vmem:[%s1367 + $0xc0] sm:$0xff]
  %v1393 = vld [vmem:[%s1367 + $0xc8] sm:$0xff]
  %v1394 = vld [vmem:[%s1367 + $0xd0] sm:$0xff]
  %v1395 = vld [vmem:[%s1367 + $0xd8] sm:$0xff]
  %v1396 = vld [vmem:[%s1367 + $0xe0] sm:$0x33]
  %v1397 = vld [vmem:[%s1367 + $0xe8] sm:$0x33]
  %v1428 = vunpack.c.l.b16 %v1368
  %v1429 = vunpack.c.h.b16 %v1368
  %v1430 = vunpack.c.l.b16 %v1369
  %v1431 = vunpack.c.h.b16 %v1369
  %v1432 = vunpack.c.l.b16 %v1370
  %v1433 = vunpack.c.h.b16 %v1370
  %v1434 = vunpack.c.l.b16 %v1371
  %v1435 = vunpack.c.h.b16 %v1371
  %v1436 = vunpack.c.l.b16 %v1372
  %v1437 = vunpack.c.h.b16 %v1372
  %v1438 = vunpack.c.l.b16 %v1373
  %v1439 = vunpack.c.h.b16 %v1373
  %v1440 = vunpack.c.l.b16 %v1374
  %v1441 = vunpack.c.h.b16 %v1374
  %v1442 = vunpack.c.l.b16 %v1375
  %v1443 = vunpack.c.h.b16 %v1375
  %v1444 = vunpack.c.l.b16 %v1376
  %v1445 = vunpack.c.h.b16 %v1376
  %v1446 = vunpack.c.l.b16 %v1377
  %v1447 = vunpack.c.h.b16 %v1377
  %v1448 = vunpack.c.l.b16 %v1378
  %v1449 = vunpack.c.h.b16 %v1378
  %v1450 = vunpack.c.l.b16 %v1379
  %v1451 = vunpack.c.h.b16 %v1379
  %v1452 = vunpack.c.l.b16 %v1380
  %v1453 = vunpack.c.h.b16 %v1380
  %v1454 = vunpack.c.l.b16 %v1381
  %v1455 = vunpack.c.h.b16 %v1381
  %v1456 = vunpack.c.l.b16 %v1382
  %v1457 = vunpack.c.h.b16 %v1382
  %v1458 = vunpack.c.l.b16 %v1383
  %v1459 = vunpack.c.h.b16 %v1383
  %v1460 = vunpack.c.l.b16 %v1384
  %v1461 = vunpack.c.h.b16 %v1384
  %v1462 = vunpack.c.l.b16 %v1385
  %v1463 = vunpack.c.h.b16 %v1385
  %v1464 = vunpack.c.l.b16 %v1386
  %v1465 = vunpack.c.h.b16 %v1386
  %v1466 = vunpack.c.l.b16 %v1387
  %v1467 = vunpack.c.h.b16 %v1387
  %v1468 = vunpack.c.l.b16 %v1388
  %v1469 = vunpack.c.h.b16 %v1388
  %v1470 = vunpack.c.l.b16 %v1389
  %v1471 = vunpack.c.h.b16 %v1389
  %v1472 = vunpack.c.l.b16 %v1390
  %v1473 = vunpack.c.h.b16 %v1390
  %v1474 = vunpack.c.l.b16 %v1391
  %v1475 = vunpack.c.h.b16 %v1391
  %v1476 = vunpack.c.l.b16 %v1392
  %v1477 = vunpack.c.h.b16 %v1392
  %v1478 = vunpack.c.l.b16 %v1393
  %v1479 = vunpack.c.h.b16 %v1393
  %v1480 = vunpack.c.l.b16 %v1394
  %v1481 = vunpack.c.h.b16 %v1394
  %v1482 = vunpack.c.l.b16 %v1395
  %v1483 = vunpack.c.h.b16 %v1395
  %v1484 = vunpack.c.l.b16 %v1396
  %v1485 = vunpack.c.h.b16 %v1396
  %v1486 = vunpack.c.l.b16 %v1397
  %v1487 = vunpack.c.h.b16 %v1397
  %v1488 = vpack.c.b16 %v1432, %v1428
  %v1489 = vpack.c.b16 %v1433, %v1429
  %v1490 = vpack.c.b16 %v1434, %v1430
  %v1491 = vpack.c.b16 %v1435, %v1431
  %v1492 = vpack.c.b16 %v1440, %v1436
  %v1493 = vpack.c.b16 %v1441, %v1437
  %v1494 = vpack.c.b16 %v1442, %v1438
  %v1495 = vpack.c.b16 %v1443, %v1439
  %v1496 = vpack.c.b16 %v1448, %v1444
  %v1497 = vpack.c.b16 %v1449, %v1445
  %v1498 = vpack.c.b16 %v1450, %v1446
  %v1499 = vpack.c.b16 %v1451, %v1447
  %v1500 = vpack.c.b16 %v1456, %v1452
  %v1501 = vpack.c.b16 %v1457, %v1453
  %v1502 = vpack.c.b16 %v1458, %v1454
  %v1503 = vpack.c.b16 %v1459, %v1455
  %v1504 = vpack.c.b16 %v1464, %v1460
  %v1505 = vpack.c.b16 %v1465, %v1461
  %v1506 = vpack.c.b16 %v1466, %v1462
  %v1507 = vpack.c.b16 %v1467, %v1463
  %v1508 = vpack.c.b16 %v1472, %v1468
  %v1509 = vpack.c.b16 %v1473, %v1469
  %v1510 = vpack.c.b16 %v1474, %v1470
  %v1511 = vpack.c.b16 %v1475, %v1471
  %v1512 = vpack.c.b16 %v1480, %v1476
  %v1513 = vpack.c.b16 %v1481, %v1477
  %v1514 = vpack.c.b16 %v1482, %v1478
  %v1515 = vpack.c.b16 %v1483, %v1479
  %v1516 = vpack.c.b16 %v1484, %v1484
  %v1517 = vpack.c.b16 %v1485, %v1485
  %v1518 = vpack.c.b16 %v1486, %v1486
  %v1519 = vpack.c.b16 %v1487, %v1487
  %v1545 = vsel %vm394, %v1491, 0
  %v1548 = vsel %vm394, %v1495, 0
  %v1551 = vsel %vm394, %v1499, 0
  %v1554 = vsel %vm394, %v1503, 0
  %v1557 = vsel %vm394, %v1507, 0
  %v1560 = vsel %vm394, %v1511, 0
  %v1563 = vsel %vm394, %v1515, 0
  %v1566 = vsel %vm394, %v1519, 0
  %1568 = vmatpush.bf16.msra.mxu0 %v196
  %1569 = vmatpush.bf16.msra.mxu0 %v195
  %1570 = vmatpush.bf16.msra.mxu0 %v194
  %1571 = vmatpush.bf16.msra.mxu0 %v193
  %1572 = vmatpush.bf16.msra.mxu0 %v192
  %1573 = vmatpush.bf16.msra.mxu0 %v191
  %1574 = vmatpush.bf16.msra.mxu0 %v190
  %1575 = vmatpush.bf16.msra.mxu0 %v189
  %1576 = vmatmul.bf16.gmra.mxu0 %v1488
  %v1577 = vpop.f32.mrf.mxu0
  %v1578 = vadd.f32 0.0, %v1577
  %v1579 = vpop.f32.mrf.mxu0
  %v1580 = vadd.f32 0.0, %v1579
  %1581 = vmatmul.bf16.gmra.mxu0 %v1492
  %v1582 = vpop.f32.mrf.mxu0
  %v1583 = vadd.f32 0.0, %v1582
  %v1584 = vpop.f32.mrf.mxu0
  %v1585 = vadd.f32 0.0, %v1584
  %1586 = vmatmul.bf16.gmra.mxu0 %v1496
  %v1587 = vpop.f32.mrf.mxu0
  %v1588 = vadd.f32 0.0, %v1587
  %v1589 = vpop.f32.mrf.mxu0
  %v1590 = vadd.f32 0.0, %v1589
  %1591 = vmatmul.bf16.gmra.mxu0 %v1500
  %v1592 = vpop.f32.mrf.mxu0
  %v1593 = vadd.f32 0.0, %v1592
  %v1594 = vpop.f32.mrf.mxu0
  %v1595 = vadd.f32 0.0, %v1594
  %1596 = vmatmul.bf16.gmra.mxu0 %v1504
  %v1597 = vpop.f32.mrf.mxu0
  %v1598 = vadd.f32 0.0, %v1597
  %v1599 = vpop.f32.mrf.mxu0
  %v1600 = vadd.f32 0.0, %v1599
  %1601 = vmatmul.bf16.gmra.mxu0 %v1508
  %v1602 = vpop.f32.mrf.mxu0
  %v1603 = vadd.f32 0.0, %v1602
  %v1604 = vpop.f32.mrf.mxu0
  %v1605 = vadd.f32 0.0, %v1604
  %1606 = vmatmul.bf16.gmra.mxu0 %v1512
  %v1607 = vpop.f32.mrf.mxu0
  %v1608 = vadd.f32 0.0, %v1607
  %v1609 = vpop.f32.mrf.mxu0
  %v1610 = vadd.f32 0.0, %v1609
  %1611 = vmatmul.bf16.gmra.mxu0 %v1516
  %v1612 = vpop.f32.mrf.mxu0
  %v1613 = vadd.f32 0.0, %v1612
  %v1614 = vpop.f32.mrf.mxu0
  %1615 = vdwg.mxu0
  %1616 = vmatpush.bf16.msra.mxu0 %v204
  %1617 = vmatpush.bf16.msra.mxu0 %v203
  %1618 = vmatpush.bf16.msra.mxu0 %v202
  %1619 = vmatpush.bf16.msra.mxu0 %v201
  %1620 = vmatpush.bf16.msra.mxu0 %v200
  %1621 = vmatpush.bf16.msra.mxu0 %v199
  %1622 = vmatpush.bf16.msra.mxu0 %v198
  %1623 = vmatpush.bf16.msra.mxu0 %v197
  %1624 = vmatmul.bf16.gmra.mxu0 %v1489
  %v1625 = vpop.f32.mrf.mxu0
  %v1626 = vadd.f32 %v1578, %v1625
  %v1627 = vpop.f32.mrf.mxu0
  %v1628 = vadd.f32 %v1580, %v1627
  %1629 = vmatmul.bf16.gmra.mxu0 %v1493
  %v1630 = vpop.f32.mrf.mxu0
  %v1631 = vadd.f32 %v1583, %v1630
  %v1632 = vpop.f32.mrf.mxu0
  %v1633 = vadd.f32 %v1585, %v1632
  %1634 = vmatmul.bf16.gmra.mxu0 %v1497
  %v1635 = vpop.f32.mrf.mxu0
  %v1636 = vadd.f32 %v1588, %v1635
  %v1637 = vpop.f32.mrf.mxu0
  %v1638 = vadd.f32 %v1590, %v1637
  %1639 = vmatmul.bf16.gmra.mxu0 %v1501
  %v1640 = vpop.f32.mrf.mxu0
  %v1641 = vadd.f32 %v1593, %v1640
  %v1642 = vpop.f32.mrf.mxu0
  %v1643 = vadd.f32 %v1595, %v1642
  %1644 = vmatmul.bf16.gmra.mxu0 %v1505
  %v1645 = vpop.f32.mrf.mxu0
  %v1646 = vadd.f32 %v1598, %v1645
  %v1647 = vpop.f32.mrf.mxu0
  %v1648 = vadd.f32 %v1600, %v1647
  %1649 = vmatmul.bf16.gmra.mxu0 %v1509
  %v1650 = vpop.f32.mrf.mxu0
  %v1651 = vadd.f32 %v1603, %v1650
  %v1652 = vpop.f32.mrf.mxu0
  %v1653 = vadd.f32 %v1605, %v1652
  %1654 = vmatmul.bf16.gmra.mxu0 %v1513
  %v1655 = vpop.f32.mrf.mxu0
  %v1656 = vadd.f32 %v1608, %v1655
  %v1657 = vpop.f32.mrf.mxu0
  %v1658 = vadd.f32 %v1610, %v1657
  %1659 = vmatmul.bf16.gmra.mxu0 %v1517
  %v1660 = vpop.f32.mrf.mxu0
  %v1661 = vadd.f32 %v1613, %v1660
  %v1662 = vpop.f32.mrf.mxu0
  %1663 = vdwg.mxu0
  %1664 = vmatpush.bf16.msra.mxu0 %v212
  %1665 = vmatpush.bf16.msra.mxu0 %v211
  %1666 = vmatpush.bf16.msra.mxu0 %v210
  %1667 = vmatpush.bf16.msra.mxu0 %v209
  %1668 = vmatpush.bf16.msra.mxu0 %v208
  %1669 = vmatpush.bf16.msra.mxu0 %v207
  %1670 = vmatpush.bf16.msra.mxu0 %v206
  %1671 = vmatpush.bf16.msra.mxu0 %v205
  %1672 = vmatmul.bf16.gmra.mxu0 %v1490
  %v1673 = vpop.f32.mrf.mxu0
  %v1674 = vadd.f32 %v1626, %v1673
  %v1675 = vpop.f32.mrf.mxu0
  %v1676 = vadd.f32 %v1628, %v1675
  %1677 = vmatmul.bf16.gmra.mxu0 %v1494
  %v1678 = vpop.f32.mrf.mxu0
  %v1679 = vadd.f32 %v1631, %v1678
  %v1680 = vpop.f32.mrf.mxu0
  %v1681 = vadd.f32 %v1633, %v1680
  %1682 = vmatmul.bf16.gmra.mxu0 %v1498
  %v1683 = vpop.f32.mrf.mxu0
  %v1684 = vadd.f32 %v1636, %v1683
  %v1685 = vpop.f32.mrf.mxu0
  %v1686 = vadd.f32 %v1638, %v1685
  %1687 = vmatmul.bf16.gmra.mxu0 %v1502
  %v1688 = vpop.f32.mrf.mxu0
  %v1689 = vadd.f32 %v1641, %v1688
  %v1690 = vpop.f32.mrf.mxu0
  %v1691 = vadd.f32 %v1643, %v1690
  %1692 = vmatmul.bf16.gmra.mxu0 %v1506
  %v1693 = vpop.f32.mrf.mxu0
  %v1694 = vadd.f32 %v1646, %v1693
  %v1695 = vpop.f32.mrf.mxu0
  %v1696 = vadd.f32 %v1648, %v1695
  %1697 = vmatmul.bf16.gmra.mxu0 %v1510
  %v1698 = vpop.f32.mrf.mxu0
  %v1699 = vadd.f32 %v1651, %v1698
  %v1700 = vpop.f32.mrf.mxu0
  %v1701 = vadd.f32 %v1653, %v1700
  %1702 = vmatmul.bf16.gmra.mxu0 %v1514
  %v1703 = vpop.f32.mrf.mxu0
  %v1704 = vadd.f32 %v1656, %v1703
  %v1705 = vpop.f32.mrf.mxu0
  %v1706 = vadd.f32 %v1658, %v1705
  %1707 = vmatmul.bf16.gmra.mxu0 %v1518
  %v1708 = vpop.f32.mrf.mxu0
  %v1709 = vadd.f32 %v1661, %v1708
  %v1710 = vpop.f32.mrf.mxu0
  %1711 = vdwg.mxu0
  %1712 = vmatpush.bf16.msra.mxu0 0
  %1713 = vmatpush.bf16.msra.mxu0 0
  %1714 = vmatpush.bf16.msra.mxu0 0
  %1715 = vmatpush.bf16.msra.mxu0 %v217
  %1716 = vmatpush.bf16.msra.mxu0 %v216
  %1717 = vmatpush.bf16.msra.mxu0 %v215
  %1718 = vmatpush.bf16.msra.mxu0 %v214
  %1719 = vmatpush.bf16.msra.mxu0 %v213
  %1720 = vmatmul.bf16.gmra.mxu0 %v1545
  %v1721 = vpop.f32.mrf.mxu0
  %v1722 = vadd.f32 %v1674, %v1721
  %v1723 = vpop.f32.mrf.mxu0
  %v1724 = vadd.f32 %v1676, %v1723
  %1725 = vmatmul.bf16.gmra.mxu0 %v1548
  %v1726 = vpop.f32.mrf.mxu0
  %v1727 = vadd.f32 %v1679, %v1726
  %v1728 = vpop.f32.mrf.mxu0
  %v1729 = vadd.f32 %v1681, %v1728
  %1730 = vmatmul.bf16.gmra.mxu0 %v1551
  %v1731 = vpop.f32.mrf.mxu0
  %v1732 = vadd.f32 %v1684, %v1731
  %v1733 = vpop.f32.mrf.mxu0
  %v1734 = vadd.f32 %v1686, %v1733
  %1735 = vmatmul.bf16.gmra.mxu0 %v1554
  %v1736 = vpop.f32.mrf.mxu0
  %v1737 = vadd.f32 %v1689, %v1736
  %v1738 = vpop.f32.mrf.mxu0
  %v1739 = vadd.f32 %v1691, %v1738
  %1740 = vmatmul.bf16.gmra.mxu0 %v1557
  %v1741 = vpop.f32.mrf.mxu0
  %v1742 = vadd.f32 %v1694, %v1741
  %v1743 = vpop.f32.mrf.mxu0
  %v1744 = vadd.f32 %v1696, %v1743
  %1745 = vmatmul.bf16.gmra.mxu0 %v1560
  %v1746 = vpop.f32.mrf.mxu0
  %v1747 = vadd.f32 %v1699, %v1746
  %v1748 = vpop.f32.mrf.mxu0
  %v1749 = vadd.f32 %v1701, %v1748
  %1750 = vmatmul.bf16.gmra.mxu0 %v1563
  %v1751 = vpop.f32.mrf.mxu0
  %v1752 = vadd.f32 %v1704, %v1751
  %v1753 = vpop.f32.mrf.mxu0
  %v1754 = vadd.f32 %v1706, %v1753
  %1755 = vmatmul.bf16.gmra.mxu0 %v1566
  %v1756 = vpop.f32.mrf.mxu0
  %v1757 = vadd.f32 %v1709, %v1756
  %v1758 = vpop.f32.mrf.mxu0
  %1759 = vdwg.mxu0
  %s1760 = scalar_lea.vmem %s5, 128
  %v1761 = vld [vmem:[%s1760] sm:$0xff]
  %v1762 = vld [vmem:[%s1760 + $0x8] sm:$0xff]
  %v1763 = vld [vmem:[%s1760 + $0x10] sm:$0xff]
  %v1764 = vld [vmem:[%s1760 + $0x18] sm:$0xff]
  %v1765 = vld [vmem:[%s1760 + $0x20] sm:$0xff]
  %v1766 = vld [vmem:[%s1760 + $0x28] sm:$0xff]
  %v1767 = vld [vmem:[%s1760 + $0x30] sm:$0xff]
  %v1768 = vld [vmem:[%s1760 + $0x38] sm:$0x11]
  %v1769 = vpack.c.bf16 %v1724, %v1722
  %v1770 = vpack.c.bf16 %v1729, %v1727
  %v1771 = vpack.c.bf16 %v1734, %v1732
  %v1772 = vpack.c.bf16 %v1739, %v1737
  %v1773 = vpack.c.bf16 %v1744, %v1742
  %v1774 = vpack.c.bf16 %v1749, %v1747
  %v1775 = vpack.c.bf16 %v1754, %v1752
  %v1776 = vpack.c.bf16 %v1757, %v1757
  %v1785 = vunpack.c.l.b16 %v1761
  %v1786 = vunpack.c.h.b16 %v1761
  %v1787 = vunpack.c.l.b16 %v1762
  %v1788 = vunpack.c.h.b16 %v1762
  %v1789 = vunpack.c.l.b16 %v1763
  %v1790 = vunpack.c.h.b16 %v1763
  %v1791 = vunpack.c.l.b16 %v1764
  %v1792 = vunpack.c.h.b16 %v1764
  %v1793 = vunpack.c.l.b16 %v1765
  %v1794 = vunpack.c.h.b16 %v1765
  %v1795 = vunpack.c.l.b16 %v1766
  %v1796 = vunpack.c.h.b16 %v1766
  %v1797 = vunpack.c.l.b16 %v1767
  %v1798 = vunpack.c.h.b16 %v1767
  %v1799 = vunpack.c.l.b16 %v1768
  %v1800 = vunpack.c.h.b16 %v1768
  %v1801 = vpack.c.b16 %v1787, %v1785
  %v1802 = vpack.c.b16 %v1788, %v1786
  %v1803 = vpack.c.b16 %v1791, %v1789
  %v1804 = vpack.c.b16 %v1792, %v1790
  %v1805 = vpack.c.b16 %v1795, %v1793
  %v1806 = vpack.c.b16 %v1796, %v1794
  %v1807 = vpack.c.b16 %v1799, %v1797
  %v1808 = vpack.c.b16 %v1800, %v1798
  %v1816 = vsel %vm1075, %v1769, 0
  %v1819 = vsel %vm1075, %v1770, 0
  %v1822 = vsel %vm1075, %v1771, 0
  %v1825 = vsel %vm1075, %v1772, 0
  %v1828 = vsel %vm1075, %v1773, 0
  %v1831 = vsel %vm1075, %v1774, 0
  %v1834 = vsel %vm1075, %v1775, 0
  %v1837 = vsel %vm1075, %v1776, 0
  %v1840 = vsel %vm1100, %v1807, 0
  %v1843 = vsel %vm1100, %v1808, 0
  %1845 = vmatpush.bf16.msra.mxu0 0
  %1846 = vmatpush.bf16.msra.mxu0 0
  %1847 = vmatpush.bf16.msra.mxu0 0
  %1848 = vmatpush.bf16.msra.mxu0 0
  %1849 = vmatpush.bf16.msra.mxu0 %v1840
  %1850 = vmatpush.bf16.msra.mxu0 %v1805
  %1851 = vmatpush.bf16.msra.mxu0 %v1803
  %1852 = vmatpush.bf16.msra.mxu0 %v1801
  %1853 = vmatmul.bf16.gmra.mxu0 %v1816
  %v1854 = vpop.f32.mrf.mxu0
  %v1855 = vadd.f32 0.0, %v1854
  %v1856 = vpop.f32.mrf.mxu0
  %v1857 = vadd.f32 0.0, %v1856
  %1858 = vmatmul.bf16.gmra.mxu0 %v1819
  %v1859 = vpop.f32.mrf.mxu0
  %v1860 = vadd.f32 0.0, %v1859
  %v1861 = vpop.f32.mrf.mxu0
  %v1862 = vadd.f32 0.0, %v1861
  %1863 = vmatmul.bf16.gmra.mxu0 %v1822
  %v1864 = vpop.f32.mrf.mxu0
  %v1865 = vadd.f32 0.0, %v1864
  %v1866 = vpop.f32.mrf.mxu0
  %v1867 = vadd.f32 0.0, %v1866
  %1868 = vmatmul.bf16.gmra.mxu0 %v1825
  %v1869 = vpop.f32.mrf.mxu0
  %v1870 = vadd.f32 0.0, %v1869
  %v1871 = vpop.f32.mrf.mxu0
  %v1872 = vadd.f32 0.0, %v1871
  %1873 = vmatmul.bf16.gmra.mxu0 %v1828
  %v1874 = vpop.f32.mrf.mxu0
  %v1875 = vadd.f32 0.0, %v1874
  %v1876 = vpop.f32.mrf.mxu0
  %v1877 = vadd.f32 0.0, %v1876
  %1878 = vmatmul.bf16.gmra.mxu0 %v1831
  %v1879 = vpop.f32.mrf.mxu0
  %v1880 = vadd.f32 0.0, %v1879
  %v1881 = vpop.f32.mrf.mxu0
  %v1882 = vadd.f32 0.0, %v1881
  %1883 = vmatmul.bf16.gmra.mxu0 %v1834
  %v1884 = vpop.f32.mrf.mxu0
  %v1885 = vadd.f32 0.0, %v1884
  %v1886 = vpop.f32.mrf.mxu0
  %v1887 = vadd.f32 0.0, %v1886
  %1888 = vmatmul.bf16.gmra.mxu0 %v1837
  %v1889 = vpop.f32.mrf.mxu0
  %v1890 = vadd.f32 0.0, %v1889
  %v1891 = vpop.f32.mrf.mxu0
  %1892 = vdwg.mxu0
  %1893 = vmatpush.bf16.msra.mxu0 0
  %1894 = vmatpush.bf16.msra.mxu0 0
  %1895 = vmatpush.bf16.msra.mxu0 0
  %1896 = vmatpush.bf16.msra.mxu0 0
  %1897 = vmatpush.bf16.msra.mxu0 %v1843
  %1898 = vmatpush.bf16.msra.mxu0 %v1806
  %1899 = vmatpush.bf16.msra.mxu0 %v1804
  %1900 = vmatpush.bf16.msra.mxu0 %v1802
  %1901 = vmatmul.bf16.gmra.mxu0 %v1816
  %v1902 = vpop.f32.mrf.mxu0
  %v1903 = vadd.f32 0.0, %v1902
  %v1904 = vpop.f32.mrf.mxu0
  %v1905 = vadd.f32 0.0, %v1904
  %1906 = vmatmul.bf16.gmra.mxu0 %v1819
  %v1907 = vpop.f32.mrf.mxu0
  %v1908 = vadd.f32 0.0, %v1907
  %v1909 = vpop.f32.mrf.mxu0
  %v1910 = vadd.f32 0.0, %v1909
  %1911 = vmatmul.bf16.gmra.mxu0 %v1822
  %v1912 = vpop.f32.mrf.mxu0
  %v1913 = vadd.f32 0.0, %v1912
  %v1914 = vpop.f32.mrf.mxu0
  %v1915 = vadd.f32 0.0, %v1914
  %1916 = vmatmul.bf16.gmra.mxu0 %v1825
  %v1917 = vpop.f32.mrf.mxu0
  %v1918 = vadd.f32 0.0, %v1917
  %v1919 = vpop.f32.mrf.mxu0
  %v1920 = vadd.f32 0.0, %v1919
  %1921 = vmatmul.bf16.gmra.mxu0 %v1828
  %v1922 = vpop.f32.mrf.mxu0
  %v1923 = vadd.f32 0.0, %v1922
  %v1924 = vpop.f32.mrf.mxu0
  %v1925 = vadd.f32 0.0, %v1924
  %1926 = vmatmul.bf16.gmra.mxu0 %v1831
  %v1927 = vpop.f32.mrf.mxu0
  %v1928 = vadd.f32 0.0, %v1927
  %v1929 = vpop.f32.mrf.mxu0
  %v1930 = vadd.f32 0.0, %v1929
  %1931 = vmatmul.bf16.gmra.mxu0 %v1834
  %v1932 = vpop.f32.mrf.mxu0
  %v1933 = vadd.f32 0.0, %v1932
  %v1934 = vpop.f32.mrf.mxu0
  %v1935 = vadd.f32 0.0, %v1934
  %1936 = vmatmul.bf16.gmra.mxu0 %v1837
  %v1937 = vpop.f32.mrf.mxu0
  %v1938 = vadd.f32 0.0, %v1937
  %v1939 = vpop.f32.mrf.mxu0
  %1940 = vdwg.mxu0
  %v1941 = vadd.f32 %v1281, %v1855
  %v1942 = vadd.f32 %v1329, %v1903
  %v1943 = vadd.f32 %v1283, %v1857
  %v1944 = vadd.f32 %v1331, %v1905
  %v1945 = vadd.f32 %v1286, %v1860
  %v1946 = vadd.f32 %v1334, %v1908
  %v1947 = vadd.f32 %v1288, %v1862
  %v1948 = vadd.f32 %v1336, %v1910
  %v1949 = vadd.f32 %v1291, %v1865
  %v1950 = vadd.f32 %v1339, %v1913
  %v1951 = vadd.f32 %v1293, %v1867
  %v1952 = vadd.f32 %v1341, %v1915
  %v1953 = vadd.f32 %v1296, %v1870
  %v1954 = vadd.f32 %v1344, %v1918
  %v1955 = vadd.f32 %v1298, %v1872
  %v1956 = vadd.f32 %v1346, %v1920
  %v1957 = vadd.f32 %v1301, %v1875
  %v1958 = vadd.f32 %v1349, %v1923
  %v1959 = vadd.f32 %v1303, %v1877
  %v1960 = vadd.f32 %v1351, %v1925
  %v1961 = vadd.f32 %v1306, %v1880
  %v1962 = vadd.f32 %v1354, %v1928
  %v1963 = vadd.f32 %v1308, %v1882
  %v1964 = vadd.f32 %v1356, %v1930
  %v1965 = vadd.f32 %v1311, %v1885
  %v1966 = vadd.f32 %v1359, %v1933
  %v1967 = vadd.f32 %v1313, %v1887
  %v1968 = vadd.f32 %v1361, %v1935
  %v1969 = vadd.f32 %v1316, %v1890
  %v1970 = vadd.f32 %v1364, %v1938
  %s1971 = scalar_lea.vmem %s3, 720
  %v1972 = vld [vmem:[%s1971] sm:$0xff]
  %v1973 = vld [vmem:[%s1971 + $0x8] sm:$0xff]
  %v1974 = vld [vmem:[%s1971 + $0x10] sm:$0xff]
  %v1975 = vld [vmem:[%s1971 + $0x18] sm:$0xff]
  %v1976 = vld [vmem:[%s1971 + $0x20] sm:$0xff]
  %v1977 = vld [vmem:[%s1971 + $0x28] sm:$0xff]
  %v1978 = vld [vmem:[%s1971 + $0x30] sm:$0xff]
  %v1979 = vld [vmem:[%s1971 + $0x38] sm:$0xff]
  %v1980 = vld [vmem:[%s1971 + $0x40] sm:$0xff]
  %v1981 = vld [vmem:[%s1971 + $0x48] sm:$0xff]
  %v1982 = vld [vmem:[%s1971 + $0x50] sm:$0xff]
  %v1983 = vld [vmem:[%s1971 + $0x58] sm:$0xff]
  %v1984 = vld [vmem:[%s1971 + $0x60] sm:$0xff]
  %v1985 = vld [vmem:[%s1971 + $0x68] sm:$0xff]
  %v1986 = vld [vmem:[%s1971 + $0x70] sm:$0xff]
  %v1987 = vld [vmem:[%s1971 + $0x78] sm:$0xff]
  %v1988 = vld [vmem:[%s1971 + $0x80] sm:$0xff]
  %v1989 = vld [vmem:[%s1971 + $0x88] sm:$0xff]
  %v1990 = vld [vmem:[%s1971 + $0x90] sm:$0xff]
  %v1991 = vld [vmem:[%s1971 + $0x98] sm:$0xff]
  %v1992 = vld [vmem:[%s1971 + $0xa0] sm:$0xff]
  %v1993 = vld [vmem:[%s1971 + $0xa8] sm:$0xff]
  %v1994 = vld [vmem:[%s1971 + $0xb0] sm:$0xff]
  %v1995 = vld [vmem:[%s1971 + $0xb8] sm:$0xff]
  %v1996 = vld [vmem:[%s1971 + $0xc0] sm:$0xff]
  %v1997 = vld [vmem:[%s1971 + $0xc8] sm:$0xff]
  %v1998 = vld [vmem:[%s1971 + $0xd0] sm:$0xff]
  %v1999 = vld [vmem:[%s1971 + $0xd8] sm:$0xff]
  %v2000 = vld [vmem:[%s1971 + $0xe0] sm:$0x33]
  %v2001 = vld [vmem:[%s1971 + $0xe8] sm:$0x33]
  %v2032 = vunpack.c.l.b16 %v1972
  %v2033 = vunpack.c.h.b16 %v1972
  %v2034 = vunpack.c.l.b16 %v1973
  %v2035 = vunpack.c.h.b16 %v1973
  %v2036 = vunpack.c.l.b16 %v1974
  %v2037 = vunpack.c.h.b16 %v1974
  %v2038 = vunpack.c.l.b16 %v1975
  %v2039 = vunpack.c.h.b16 %v1975
  %v2040 = vunpack.c.l.b16 %v1976
  %v2041 = vunpack.c.h.b16 %v1976
  %v2042 = vunpack.c.l.b16 %v1977
  %v2043 = vunpack.c.h.b16 %v1977
  %v2044 = vunpack.c.l.b16 %v1978
  %v2045 = vunpack.c.h.b16 %v1978
  %v2046 = vunpack.c.l.b16 %v1979
  %v2047 = vunpack.c.h.b16 %v1979
  %v2048 = vunpack.c.l.b16 %v1980
  %v2049 = vunpack.c.h.b16 %v1980
  %v2050 = vunpack.c.l.b16 %v1981
  %v2051 = vunpack.c.h.b16 %v1981
  %v2052 = vunpack.c.l.b16 %v1982
  %v2053 = vunpack.c.h.b16 %v1982
  %v2054 = vunpack.c.l.b16 %v1983
  %v2055 = vunpack.c.h.b16 %v1983
  %v2056 = vunpack.c.l.b16 %v1984
  %v2057 = vunpack.c.h.b16 %v1984
  %v2058 = vunpack.c.l.b16 %v1985
  %v2059 = vunpack.c.h.b16 %v1985
  %v2060 = vunpack.c.l.b16 %v1986
  %v2061 = vunpack.c.h.b16 %v1986
  %v2062 = vunpack.c.l.b16 %v1987
  %v2063 = vunpack.c.h.b16 %v1987
  %v2064 = vunpack.c.l.b16 %v1988
  %v2065 = vunpack.c.h.b16 %v1988
  %v2066 = vunpack.c.l.b16 %v1989
  %v2067 = vunpack.c.h.b16 %v1989
  %v2068 = vunpack.c.l.b16 %v1990
  %v2069 = vunpack.c.h.b16 %v1990
  %v2070 = vunpack.c.l.b16 %v1991
  %v2071 = vunpack.c.h.b16 %v1991
  %v2072 = vunpack.c.l.b16 %v1992
  %v2073 = vunpack.c.h.b16 %v1992
  %v2074 = vunpack.c.l.b16 %v1993
  %v2075 = vunpack.c.h.b16 %v1993
  %v2076 = vunpack.c.l.b16 %v1994
  %v2077 = vunpack.c.h.b16 %v1994
  %v2078 = vunpack.c.l.b16 %v1995
  %v2079 = vunpack.c.h.b16 %v1995
  %v2080 = vunpack.c.l.b16 %v1996
  %v2081 = vunpack.c.h.b16 %v1996
  %v2082 = vunpack.c.l.b16 %v1997
  %v2083 = vunpack.c.h.b16 %v1997
  %v2084 = vunpack.c.l.b16 %v1998
  %v2085 = vunpack.c.h.b16 %v1998
  %v2086 = vunpack.c.l.b16 %v1999
  %v2087 = vunpack.c.h.b16 %v1999
  %v2088 = vunpack.c.l.b16 %v2000
  %v2089 = vunpack.c.h.b16 %v2000
  %v2090 = vunpack.c.l.b16 %v2001
  %v2091 = vunpack.c.h.b16 %v2001
  %v2092 = vpack.c.b16 %v2036, %v2032
  %v2093 = vpack.c.b16 %v2037, %v2033
  %v2094 = vpack.c.b16 %v2038, %v2034
  %v2095 = vpack.c.b16 %v2039, %v2035
  %v2096 = vpack.c.b16 %v2044, %v2040
  %v2097 = vpack.c.b16 %v2045, %v2041
  %v2098 = vpack.c.b16 %v2046, %v2042
  %v2099 = vpack.c.b16 %v2047, %v2043
  %v2100 = vpack.c.b16 %v2052, %v2048
  %v2101 = vpack.c.b16 %v2053, %v2049
  %v2102 = vpack.c.b16 %v2054, %v2050
  %v2103 = vpack.c.b16 %v2055, %v2051
  %v2104 = vpack.c.b16 %v2060, %v2056
  %v2105 = vpack.c.b16 %v2061, %v2057
  %v2106 = vpack.c.b16 %v2062, %v2058
  %v2107 = vpack.c.b16 %v2063, %v2059
  %v2108 = vpack.c.b16 %v2068, %v2064
  %v2109 = vpack.c.b16 %v2069, %v2065
  %v2110 = vpack.c.b16 %v2070, %v2066
  %v2111 = vpack.c.b16 %v2071, %v2067
  %v2112 = vpack.c.b16 %v2076, %v2072
  %v2113 = vpack.c.b16 %v2077, %v2073
  %v2114 = vpack.c.b16 %v2078, %v2074
  %v2115 = vpack.c.b16 %v2079, %v2075
  %v2116 = vpack.c.b16 %v2084, %v2080
  %v2117 = vpack.c.b16 %v2085, %v2081
  %v2118 = vpack.c.b16 %v2086, %v2082
  %v2119 = vpack.c.b16 %v2087, %v2083
  %v2120 = vpack.c.b16 %v2088, %v2088
  %v2121 = vpack.c.b16 %v2089, %v2089
  %v2122 = vpack.c.b16 %v2090, %v2090
  %v2123 = vpack.c.b16 %v2091, %v2091
  %v2149 = vsel %vm394, %v2095, 0
  %v2152 = vsel %vm394, %v2099, 0
  %v2155 = vsel %vm394, %v2103, 0
  %v2158 = vsel %vm394, %v2107, 0
  %v2161 = vsel %vm394, %v2111, 0
  %v2164 = vsel %vm394, %v2115, 0
  %v2167 = vsel %vm394, %v2119, 0
  %v2170 = vsel %vm394, %v2123, 0
  %2172 = vmatpush.bf16.msra.mxu0 %v196
  %2173 = vmatpush.bf16.msra.mxu0 %v195
  %2174 = vmatpush.bf16.msra.mxu0 %v194
  %2175 = vmatpush.bf16.msra.mxu0 %v193
  %2176 = vmatpush.bf16.msra.mxu0 %v192
  %2177 = vmatpush.bf16.msra.mxu0 %v191
  %2178 = vmatpush.bf16.msra.mxu0 %v190
  %2179 = vmatpush.bf16.msra.mxu0 %v189
  %2180 = vmatmul.bf16.gmra.mxu0 %v2092
  %v2181 = vpop.f32.mrf.mxu0
  %v2182 = vadd.f32 0.0, %v2181
  %v2183 = vpop.f32.mrf.mxu0
  %v2184 = vadd.f32 0.0, %v2183
  %2185 = vmatmul.bf16.gmra.mxu0 %v2096
  %v2186 = vpop.f32.mrf.mxu0
  %v2187 = vadd.f32 0.0, %v2186
  %v2188 = vpop.f32.mrf.mxu0
  %v2189 = vadd.f32 0.0, %v2188
  %2190 = vmatmul.bf16.gmra.mxu0 %v2100
  %v2191 = vpop.f32.mrf.mxu0
  %v2192 = vadd.f32 0.0, %v2191
  %v2193 = vpop.f32.mrf.mxu0
  %v2194 = vadd.f32 0.0, %v2193
  %2195 = vmatmul.bf16.gmra.mxu0 %v2104
  %v2196 = vpop.f32.mrf.mxu0
  %v2197 = vadd.f32 0.0, %v2196
  %v2198 = vpop.f32.mrf.mxu0
  %v2199 = vadd.f32 0.0, %v2198
  %2200 = vmatmul.bf16.gmra.mxu0 %v2108
  %v2201 = vpop.f32.mrf.mxu0
  %v2202 = vadd.f32 0.0, %v2201
  %v2203 = vpop.f32.mrf.mxu0
  %v2204 = vadd.f32 0.0, %v2203
  %2205 = vmatmul.bf16.gmra.mxu0 %v2112
  %v2206 = vpop.f32.mrf.mxu0
  %v2207 = vadd.f32 0.0, %v2206
  %v2208 = vpop.f32.mrf.mxu0
  %v2209 = vadd.f32 0.0, %v2208
  %2210 = vmatmul.bf16.gmra.mxu0 %v2116
  %v2211 = vpop.f32.mrf.mxu0
  %v2212 = vadd.f32 0.0, %v2211
  %v2213 = vpop.f32.mrf.mxu0
  %v2214 = vadd.f32 0.0, %v2213
  %2215 = vmatmul.bf16.gmra.mxu0 %v2120
  %v2216 = vpop.f32.mrf.mxu0
  %v2217 = vadd.f32 0.0, %v2216
  %v2218 = vpop.f32.mrf.mxu0
  %2219 = vdwg.mxu0
  %2220 = vmatpush.bf16.msra.mxu0 %v204
  %2221 = vmatpush.bf16.msra.mxu0 %v203
  %2222 = vmatpush.bf16.msra.mxu0 %v202
  %2223 = vmatpush.bf16.msra.mxu0 %v201
  %2224 = vmatpush.bf16.msra.mxu0 %v200
  %2225 = vmatpush.bf16.msra.mxu0 %v199
  %2226 = vmatpush.bf16.msra.mxu0 %v198
  %2227 = vmatpush.bf16.msra.mxu0 %v197
  %2228 = vmatmul.bf16.gmra.mxu0 %v2093
  %v2229 = vpop.f32.mrf.mxu0
  %v2230 = vadd.f32 %v2182, %v2229
  %v2231 = vpop.f32.mrf.mxu0
  %v2232 = vadd.f32 %v2184, %v2231
  %2233 = vmatmul.bf16.gmra.mxu0 %v2097
  %v2234 = vpop.f32.mrf.mxu0
  %v2235 = vadd.f32 %v2187, %v2234
  %v2236 = vpop.f32.mrf.mxu0
  %v2237 = vadd.f32 %v2189, %v2236
  %2238 = vmatmul.bf16.gmra.mxu0 %v2101
  %v2239 = vpop.f32.mrf.mxu0
  %v2240 = vadd.f32 %v2192, %v2239
  %v2241 = vpop.f32.mrf.mxu0
  %v2242 = vadd.f32 %v2194, %v2241
  %2243 = vmatmul.bf16.gmra.mxu0 %v2105
  %v2244 = vpop.f32.mrf.mxu0
  %v2245 = vadd.f32 %v2197, %v2244
  %v2246 = vpop.f32.mrf.mxu0
  %v2247 = vadd.f32 %v2199, %v2246
  %2248 = vmatmul.bf16.gmra.mxu0 %v2109
  %v2249 = vpop.f32.mrf.mxu0
  %v2250 = vadd.f32 %v2202, %v2249
  %v2251 = vpop.f32.mrf.mxu0
  %v2252 = vadd.f32 %v2204, %v2251
  %2253 = vmatmul.bf16.gmra.mxu0 %v2113
  %v2254 = vpop.f32.mrf.mxu0
  %v2255 = vadd.f32 %v2207, %v2254
  %v2256 = vpop.f32.mrf.mxu0
  %v2257 = vadd.f32 %v2209, %v2256
  %2258 = vmatmul.bf16.gmra.mxu0 %v2117
  %v2259 = vpop.f32.mrf.mxu0
  %v2260 = vadd.f32 %v2212, %v2259
  %v2261 = vpop.f32.mrf.mxu0
  %v2262 = vadd.f32 %v2214, %v2261
  %2263 = vmatmul.bf16.gmra.mxu0 %v2121
  %v2264 = vpop.f32.mrf.mxu0
  %v2265 = vadd.f32 %v2217, %v2264
  %v2266 = vpop.f32.mrf.mxu0
  %2267 = vdwg.mxu0
  %2268 = vmatpush.bf16.msra.mxu0 %v212
  %2269 = vmatpush.bf16.msra.mxu0 %v211
  %2270 = vmatpush.bf16.msra.mxu0 %v210
  %2271 = vmatpush.bf16.msra.mxu0 %v209
  %2272 = vmatpush.bf16.msra.mxu0 %v208
  %2273 = vmatpush.bf16.msra.mxu0 %v207
  %2274 = vmatpush.bf16.msra.mxu0 %v206
  %2275 = vmatpush.bf16.msra.mxu0 %v205
  %2276 = vmatmul.bf16.gmra.mxu0 %v2094
  %v2277 = vpop.f32.mrf.mxu0
  %v2278 = vadd.f32 %v2230, %v2277
  %v2279 = vpop.f32.mrf.mxu0
  %v2280 = vadd.f32 %v2232, %v2279
  %2281 = vmatmul.bf16.gmra.mxu0 %v2098
  %v2282 = vpop.f32.mrf.mxu0
  %v2283 = vadd.f32 %v2235, %v2282
  %v2284 = vpop.f32.mrf.mxu0
  %v2285 = vadd.f32 %v2237, %v2284
  %2286 = vmatmul.bf16.gmra.mxu0 %v2102
  %v2287 = vpop.f32.mrf.mxu0
  %v2288 = vadd.f32 %v2240, %v2287
  %v2289 = vpop.f32.mrf.mxu0
  %v2290 = vadd.f32 %v2242, %v2289
  %2291 = vmatmul.bf16.gmra.mxu0 %v2106
  %v2292 = vpop.f32.mrf.mxu0
  %v2293 = vadd.f32 %v2245, %v2292
  %v2294 = vpop.f32.mrf.mxu0
  %v2295 = vadd.f32 %v2247, %v2294
  %2296 = vmatmul.bf16.gmra.mxu0 %v2110
  %v2297 = vpop.f32.mrf.mxu0
  %v2298 = vadd.f32 %v2250, %v2297
  %v2299 = vpop.f32.mrf.mxu0
  %v2300 = vadd.f32 %v2252, %v2299
  %2301 = vmatmul.bf16.gmra.mxu0 %v2114
  %v2302 = vpop.f32.mrf.mxu0
  %v2303 = vadd.f32 %v2255, %v2302
  %v2304 = vpop.f32.mrf.mxu0
  %v2305 = vadd.f32 %v2257, %v2304
  %2306 = vmatmul.bf16.gmra.mxu0 %v2118
  %v2307 = vpop.f32.mrf.mxu0
  %v2308 = vadd.f32 %v2260, %v2307
  %v2309 = vpop.f32.mrf.mxu0
  %v2310 = vadd.f32 %v2262, %v2309
  %2311 = vmatmul.bf16.gmra.mxu0 %v2122
  %v2312 = vpop.f32.mrf.mxu0
  %v2313 = vadd.f32 %v2265, %v2312
  %v2314 = vpop.f32.mrf.mxu0
  %2315 = vdwg.mxu0
  %2316 = vmatpush.bf16.msra.mxu0 0
  %2317 = vmatpush.bf16.msra.mxu0 0
  %2318 = vmatpush.bf16.msra.mxu0 0
  %2319 = vmatpush.bf16.msra.mxu0 %v217
  %2320 = vmatpush.bf16.msra.mxu0 %v216
  %2321 = vmatpush.bf16.msra.mxu0 %v215
  %2322 = vmatpush.bf16.msra.mxu0 %v214
  %2323 = vmatpush.bf16.msra.mxu0 %v213
  %2324 = vmatmul.bf16.gmra.mxu0 %v2149
  %v2325 = vpop.f32.mrf.mxu0
  %v2326 = vadd.f32 %v2278, %v2325
  %v2327 = vpop.f32.mrf.mxu0
  %v2328 = vadd.f32 %v2280, %v2327
  %2329 = vmatmul.bf16.gmra.mxu0 %v2152
  %v2330 = vpop.f32.mrf.mxu0
  %v2331 = vadd.f32 %v2283, %v2330
  %v2332 = vpop.f32.mrf.mxu0
  %v2333 = vadd.f32 %v2285, %v2332
  %2334 = vmatmul.bf16.gmra.mxu0 %v2155
  %v2335 = vpop.f32.mrf.mxu0
  %v2336 = vadd.f32 %v2288, %v2335
  %v2337 = vpop.f32.mrf.mxu0
  %v2338 = vadd.f32 %v2290, %v2337
  %2339 = vmatmul.bf16.gmra.mxu0 %v2158
  %v2340 = vpop.f32.mrf.mxu0
  %v2341 = vadd.f32 %v2293, %v2340
  %v2342 = vpop.f32.mrf.mxu0
  %v2343 = vadd.f32 %v2295, %v2342
  %2344 = vmatmul.bf16.gmra.mxu0 %v2161
  %v2345 = vpop.f32.mrf.mxu0
  %v2346 = vadd.f32 %v2298, %v2345
  %v2347 = vpop.f32.mrf.mxu0
  %v2348 = vadd.f32 %v2300, %v2347
  %2349 = vmatmul.bf16.gmra.mxu0 %v2164
  %v2350 = vpop.f32.mrf.mxu0
  %v2351 = vadd.f32 %v2303, %v2350
  %v2352 = vpop.f32.mrf.mxu0
  %v2353 = vadd.f32 %v2305, %v2352
  %2354 = vmatmul.bf16.gmra.mxu0 %v2167
  %v2355 = vpop.f32.mrf.mxu0
  %v2356 = vadd.f32 %v2308, %v2355
  %v2357 = vpop.f32.mrf.mxu0
  %v2358 = vadd.f32 %v2310, %v2357
  %2359 = vmatmul.bf16.gmra.mxu0 %v2170
  %v2360 = vpop.f32.mrf.mxu0
  %v2361 = vadd.f32 %v2313, %v2360
  %v2362 = vpop.f32.mrf.mxu0
  %2363 = vdwg.mxu0
  %s2364 = scalar_lea.vmem %s5, 192
  %v2365 = vld [vmem:[%s2364] sm:$0xff]
  %v2366 = vld [vmem:[%s2364 + $0x8] sm:$0xff]
  %v2367 = vld [vmem:[%s2364 + $0x10] sm:$0xff]
  %v2368 = vld [vmem:[%s2364 + $0x18] sm:$0xff]
  %v2369 = vld [vmem:[%s2364 + $0x20] sm:$0xff]
  %v2370 = vld [vmem:[%s2364 + $0x28] sm:$0xff]
  %v2371 = vld [vmem:[%s2364 + $0x30] sm:$0xff]
  %v2372 = vld [vmem:[%s2364 + $0x38] sm:$0x11]
  %v2373 = vpack.c.bf16 %v2328, %v2326
  %v2374 = vpack.c.bf16 %v2333, %v2331
  %v2375 = vpack.c.bf16 %v2338, %v2336
  %v2376 = vpack.c.bf16 %v2343, %v2341
  %v2377 = vpack.c.bf16 %v2348, %v2346
  %v2378 = vpack.c.bf16 %v2353, %v2351
  %v2379 = vpack.c.bf16 %v2358, %v2356
  %v2380 = vpack.c.bf16 %v2361, %v2361
  %v2389 = vunpack.c.l.b16 %v2365
  %v2390 = vunpack.c.h.b16 %v2365
  %v2391 = vunpack.c.l.b16 %v2366
  %v2392 = vunpack.c.h.b16 %v2366
  %v2393 = vunpack.c.l.b16 %v2367
  %v2394 = vunpack.c.h.b16 %v2367
  %v2395 = vunpack.c.l.b16 %v2368
  %v2396 = vunpack.c.h.b16 %v2368
  %v2397 = vunpack.c.l.b16 %v2369
  %v2398 = vunpack.c.h.b16 %v2369
  %v2399 = vunpack.c.l.b16 %v2370
  %v2400 = vunpack.c.h.b16 %v2370
  %v2401 = vunpack.c.l.b16 %v2371
  %v2402 = vunpack.c.h.b16 %v2371
  %v2403 = vunpack.c.l.b16 %v2372
  %v2404 = vunpack.c.h.b16 %v2372
  %v2405 = vpack.c.b16 %v2391, %v2389
  %v2406 = vpack.c.b16 %v2392, %v2390
  %v2407 = vpack.c.b16 %v2395, %v2393
  %v2408 = vpack.c.b16 %v2396, %v2394
  %v2409 = vpack.c.b16 %v2399, %v2397
  %v2410 = vpack.c.b16 %v2400, %v2398
  %v2411 = vpack.c.b16 %v2403, %v2401
  %v2412 = vpack.c.b16 %v2404, %v2402
  %v2420 = vsel %vm1075, %v2373, 0
  %v2423 = vsel %vm1075, %v2374, 0
  %v2426 = vsel %vm1075, %v2375, 0
  %v2429 = vsel %vm1075, %v2376, 0
  %v2432 = vsel %vm1075, %v2377, 0
  %v2435 = vsel %vm1075, %v2378, 0
  %v2438 = vsel %vm1075, %v2379, 0
  %v2441 = vsel %vm1075, %v2380, 0
  %v2444 = vsel %vm1100, %v2411, 0
  %v2447 = vsel %vm1100, %v2412, 0
  %2449 = vmatpush.bf16.msra.mxu0 0
  %2450 = vmatpush.bf16.msra.mxu0 0
  %2451 = vmatpush.bf16.msra.mxu0 0
  %2452 = vmatpush.bf16.msra.mxu0 0
  %2453 = vmatpush.bf16.msra.mxu0 %v2444
  %2454 = vmatpush.bf16.msra.mxu0 %v2409
  %2455 = vmatpush.bf16.msra.mxu0 %v2407
  %2456 = vmatpush.bf16.msra.mxu0 %v2405
  %2457 = vmatmul.bf16.gmra.mxu0 %v2420
  %v2458 = vpop.f32.mrf.mxu0
  %v2459 = vadd.f32 0.0, %v2458
  %v2460 = vpop.f32.mrf.mxu0
  %v2461 = vadd.f32 0.0, %v2460
  %2462 = vmatmul.bf16.gmra.mxu0 %v2423
  %v2463 = vpop.f32.mrf.mxu0
  %v2464 = vadd.f32 0.0, %v2463
  %v2465 = vpop.f32.mrf.mxu0
  %v2466 = vadd.f32 0.0, %v2465
  %2467 = vmatmul.bf16.gmra.mxu0 %v2426
  %v2468 = vpop.f32.mrf.mxu0
  %v2469 = vadd.f32 0.0, %v2468
  %v2470 = vpop.f32.mrf.mxu0
  %v2471 = vadd.f32 0.0, %v2470
  %2472 = vmatmul.bf16.gmra.mxu0 %v2429
  %v2473 = vpop.f32.mrf.mxu0
  %v2474 = vadd.f32 0.0, %v2473
  %v2475 = vpop.f32.mrf.mxu0
  %v2476 = vadd.f32 0.0, %v2475
  %2477 = vmatmul.bf16.gmra.mxu0 %v2432
  %v2478 = vpop.f32.mrf.mxu0
  %v2479 = vadd.f32 0.0, %v2478
  %v2480 = vpop.f32.mrf.mxu0
  %v2481 = vadd.f32 0.0, %v2480
  %2482 = vmatmul.bf16.gmra.mxu0 %v2435
  %v2483 = vpop.f32.mrf.mxu0
  %v2484 = vadd.f32 0.0, %v2483
  %v2485 = vpop.f32.mrf.mxu0
  %v2486 = vadd.f32 0.0, %v2485
  %2487 = vmatmul.bf16.gmra.mxu0 %v2438
  %v2488 = vpop.f32.mrf.mxu0
  %v2489 = vadd.f32 0.0, %v2488
  %v2490 = vpop.f32.mrf.mxu0
  %v2491 = vadd.f32 0.0, %v2490
  %2492 = vmatmul.bf16.gmra.mxu0 %v2441
  %v2493 = vpop.f32.mrf.mxu0
  %v2494 = vadd.f32 0.0, %v2493
  %v2495 = vpop.f32.mrf.mxu0
  %2496 = vdwg.mxu0
  %2497 = vmatpush.bf16.msra.mxu0 0
  %2498 = vmatpush.bf16.msra.mxu0 0
  %2499 = vmatpush.bf16.msra.mxu0 0
  %2500 = vmatpush.bf16.msra.mxu0 0
  %2501 = vmatpush.bf16.msra.mxu0 %v2447
  %2502 = vmatpush.bf16.msra.mxu0 %v2410
  %2503 = vmatpush.bf16.msra.mxu0 %v2408
  %2504 = vmatpush.bf16.msra.mxu0 %v2406
  %2505 = vmatmul.bf16.gmra.mxu0 %v2420
  %v2506 = vpop.f32.mrf.mxu0
  %v2507 = vadd.f32 0.0, %v2506
  %v2508 = vpop.f32.mrf.mxu0
  %v2509 = vadd.f32 0.0, %v2508
  %2510 = vmatmul.bf16.gmra.mxu0 %v2423
  %v2511 = vpop.f32.mrf.mxu0
  %v2512 = vadd.f32 0.0, %v2511
  %v2513 = vpop.f32.mrf.mxu0
  %v2514 = vadd.f32 0.0, %v2513
  %2515 = vmatmul.bf16.gmra.mxu0 %v2426
  %v2516 = vpop.f32.mrf.mxu0
  %v2517 = vadd.f32 0.0, %v2516
  %v2518 = vpop.f32.mrf.mxu0
  %v2519 = vadd.f32 0.0, %v2518
  %2520 = vmatmul.bf16.gmra.mxu0 %v2429
  %v2521 = vpop.f32.mrf.mxu0
  %v2522 = vadd.f32 0.0, %v2521
  %v2523 = vpop.f32.mrf.mxu0
  %v2524 = vadd.f32 0.0, %v2523
  %2525 = vmatmul.bf16.gmra.mxu0 %v2432
  %v2526 = vpop.f32.mrf.mxu0
  %v2527 = vadd.f32 0.0, %v2526
  %v2528 = vpop.f32.mrf.mxu0
  %v2529 = vadd.f32 0.0, %v2528
  %2530 = vmatmul.bf16.gmra.mxu0 %v2435
  %v2531 = vpop.f32.mrf.mxu0
  %v2532 = vadd.f32 0.0, %v2531
  %v2533 = vpop.f32.mrf.mxu0
  %v2534 = vadd.f32 0.0, %v2533
  %2535 = vmatmul.bf16.gmra.mxu0 %v2438
  %v2536 = vpop.f32.mrf.mxu0
  %v2537 = vadd.f32 0.0, %v2536
  %v2538 = vpop.f32.mrf.mxu0
  %v2539 = vadd.f32 0.0, %v2538
  %2540 = vmatmul.bf16.gmra.mxu0 %v2441
  %v2541 = vpop.f32.mrf.mxu0
  %v2542 = vadd.f32 0.0, %v2541
  %v2543 = vpop.f32.mrf.mxu0
  %2544 = vdwg.mxu0
  %v2545 = vadd.f32 %v1941, %v2459
  %v2546 = vadd.f32 %v1942, %v2507
  %v2547 = vadd.f32 %v1943, %v2461
  %v2548 = vadd.f32 %v1944, %v2509
  %v2549 = vadd.f32 %v1945, %v2464
  %v2550 = vadd.f32 %v1946, %v2512
  %v2551 = vadd.f32 %v1947, %v2466
  %v2552 = vadd.f32 %v1948, %v2514
  %v2553 = vadd.f32 %v1949, %v2469
  %v2554 = vadd.f32 %v1950, %v2517
  %v2555 = vadd.f32 %v1951, %v2471
  %v2556 = vadd.f32 %v1952, %v2519
  %v2557 = vadd.f32 %v1953, %v2474
  %v2558 = vadd.f32 %v1954, %v2522
  %v2559 = vadd.f32 %v1955, %v2476
  %v2560 = vadd.f32 %v1956, %v2524
  %v2561 = vadd.f32 %v1957, %v2479
  %v2562 = vadd.f32 %v1958, %v2527
  %v2563 = vadd.f32 %v1959, %v2481
  %v2564 = vadd.f32 %v1960, %v2529
  %v2565 = vadd.f32 %v1961, %v2484
  %v2566 = vadd.f32 %v1962, %v2532
  %v2567 = vadd.f32 %v1963, %v2486
  %v2568 = vadd.f32 %v1964, %v2534
  %v2569 = vadd.f32 %v1965, %v2489
  %v2570 = vadd.f32 %v1966, %v2537
  %v2571 = vadd.f32 %v1967, %v2491
  %v2572 = vadd.f32 %v1968, %v2539
  %v2573 = vadd.f32 %v1969, %v2494
  %v2574 = vadd.f32 %v1970, %v2542
  %v2575 = vpack.c.bf16 %v2547, %v2545
  %v2576 = vpack.c.bf16 %v2548, %v2546
  %v2577 = vpack.c.bf16 %v2551, %v2549
  %v2578 = vpack.c.bf16 %v2552, %v2550
  %v2579 = vpack.c.bf16 %v2555, %v2553
  %v2580 = vpack.c.bf16 %v2556, %v2554
  %v2581 = vpack.c.bf16 %v2559, %v2557
  %v2582 = vpack.c.bf16 %v2560, %v2558
  %v2583 = vpack.c.bf16 %v2563, %v2561
  %v2584 = vpack.c.bf16 %v2564, %v2562
  %v2585 = vpack.c.bf16 %v2567, %v2565
  %v2586 = vpack.c.bf16 %v2568, %v2566
  %v2587 = vpack.c.bf16 %v2571, %v2569
  %v2588 = vpack.c.bf16 %v2572, %v2570
  %v2589 = vpack.c.bf16 %v2573, %v2573
  %v2590 = vpack.c.bf16 %v2574, %v2574
  %v2591 = vld [vmem:[%s11] sm:$0xf]
  %v2592 = vld [vmem:[%s11 + $0x4] sm:$0xf]
  %v2593 = vld [vmem:[%s11 + $0x8] sm:$0xf]
  %v2594 = vld [vmem:[%s11 + $0xc] sm:$0xf]
  %v2595 = vld [vmem:[%s11 + $0x10] sm:$0xf]
  %v2596 = vld [vmem:[%s11 + $0x14] sm:$0xf]
  %v2597 = vld [vmem:[%s11 + $0x18] sm:$0x3]
  %v2605 = vunpack.c.l.b16 %v2591
  %v2606 = vunpack.c.l.b16 %v2592
  %v2607 = vunpack.c.l.b16 %v2593
  %v2608 = vunpack.c.l.b16 %v2594
  %v2609 = vunpack.c.l.b16 %v2595
  %v2610 = vunpack.c.l.b16 %v2596
  %v2611 = vunpack.c.l.b16 %v2597
  %v2612 = vpack.c.b16 %v2606, %v2605
  %v2613 = vpack.c.b16 %v2608, %v2607
  %v2614 = vpack.c.b16 %v2610, %v2609
  %v2615 = vpack.c.b16 %v2611, %v2611
  %vm2616 = vcmask 949248
  %v2618 = vsel %vm2616, %v2612, 0
  %v2621 = vsel %vm2616, %v2613, 0
  %v2624 = vsel %vm2616, %v2614, 0
  %v2627 = vsel %vm2616, %v2615, 0
  %vm2629 = vcmask 1041408
  %v2631 = vsel %vm2629, %v2589, 0
  %v2634 = vsel %vm2629, %v2590, 0
  %2636 = vmatpush.bf16.msra.mxu0 %v2631
  %2637 = vmatpush.bf16.msra.mxu0 %v2587
  %2638 = vmatpush.bf16.msra.mxu0 %v2585
  %2639 = vmatpush.bf16.msra.mxu0 %v2583
  %2640 = vmatpush.bf16.msra.mxu0 %v2581
  %2641 = vmatpush.bf16.msra.mxu0 %v2579
  %2642 = vmatpush.bf16.msra.mxu0 %v2577
  %2643 = vmatpush.bf16.msra.mxu0 %v2575
  %2644 = vmatmul.bf16.gmra.mxu0 %v2618
  %v2645 = vpop.f32.mrf.mxu0
  %v2646 = vadd.f32 0.0, %v2645
  %v2647 = vpop.f32.mrf.mxu0
  %v2648 = vadd.f32 0.0, %v2647
  %2649 = vmatmul.bf16.gmra.mxu0 %v2621
  %v2650 = vpop.f32.mrf.mxu0
  %v2651 = vadd.f32 0.0, %v2650
  %v2652 = vpop.f32.mrf.mxu0
  %v2653 = vadd.f32 0.0, %v2652
  %2654 = vmatmul.bf16.gmra.mxu0 %v2624
  %v2655 = vpop.f32.mrf.mxu0
  %v2656 = vadd.f32 0.0, %v2655
  %v2657 = vpop.f32.mrf.mxu0
  %v2658 = vadd.f32 0.0, %v2657
  %2659 = vmatmul.bf16.gmra.mxu0 %v2627
  %v2660 = vpop.f32.mrf.mxu0
  %v2661 = vadd.f32 0.0, %v2660
  %v2662 = vpop.f32.mrf.mxu0
  %2663 = vdwg.mxu0
  %2664 = vmatpush.bf16.msra.mxu0 %v2634
  %2665 = vmatpush.bf16.msra.mxu0 %v2588
  %2666 = vmatpush.bf16.msra.mxu0 %v2586
  %2667 = vmatpush.bf16.msra.mxu0 %v2584
  %2668 = vmatpush.bf16.msra.mxu0 %v2582
  %2669 = vmatpush.bf16.msra.mxu0 %v2580
  %2670 = vmatpush.bf16.msra.mxu0 %v2578
  %2671 = vmatpush.bf16.msra.mxu0 %v2576
  %2672 = vmatmul.bf16.gmra.mxu0 %v2618
  %v2673 = vpop.f32.mrf.mxu0
  %v2674 = vadd.f32 0.0, %v2673
  %v2675 = vpop.f32.mrf.mxu0
  %v2676 = vadd.f32 0.0, %v2675
  %2677 = vmatmul.bf16.gmra.mxu0 %v2621
  %v2678 = vpop.f32.mrf.mxu0
  %v2679 = vadd.f32 0.0, %v2678
  %v2680 = vpop.f32.mrf.mxu0
  %v2681 = vadd.f32 0.0, %v2680
  %2682 = vmatmul.bf16.gmra.mxu0 %v2624
  %v2683 = vpop.f32.mrf.mxu0
  %v2684 = vadd.f32 0.0, %v2683
  %v2685 = vpop.f32.mrf.mxu0
  %v2686 = vadd.f32 0.0, %v2685
  %2687 = vmatmul.bf16.gmra.mxu0 %v2627
  %v2688 = vpop.f32.mrf.mxu0
  %v2689 = vadd.f32 0.0, %v2688
  %v2690 = vpop.f32.mrf.mxu0
  %2691 = vdwg.mxu0
  %v2692 = vld [vmem:[%s7] sm:$0xff]
  %v2693 = vld [vmem:[%s7 + $0x8] sm:$0xff]
  %v2694 = vld [vmem:[%s7 + $0x10] sm:$0xff]
  %v2695 = vld [vmem:[%s7 + $0x18] sm:$0xff]
  %v2696 = vld [vmem:[%s7 + $0x20] sm:$0xff]
  %v2697 = vld [vmem:[%s7 + $0x28] sm:$0xff]
  %v2698 = vld [vmem:[%s7 + $0x30] sm:$0xff]
  %v2699 = vld [vmem:[%s7 + $0x38] sm:$0xff]
  %v2700 = vld [vmem:[%s7 + $0x40] sm:$0xff]
  %v2701 = vld [vmem:[%s7 + $0x48] sm:$0xff]
  %v2702 = vld [vmem:[%s7 + $0x50] sm:$0xff]
  %v2703 = vld [vmem:[%s7 + $0x58] sm:$0xff]
  %v2704 = vld [vmem:[%s7 + $0x60] sm:$0xff]
  %v2705 = vld [vmem:[%s7 + $0x68] sm:$0xff]
  %v2706 = vld [vmem:[%s7 + $0x70] sm:$0xff]
  %v2707 = vld [vmem:[%s7 + $0x78] sm:$0xff]
  %v2708 = vld [vmem:[%s7 + $0x80] sm:$0xff]
  %v2709 = vld [vmem:[%s7 + $0x88] sm:$0xff]
  %v2710 = vld [vmem:[%s7 + $0x90] sm:$0xff]
  %v2711 = vld [vmem:[%s7 + $0x98] sm:$0xff]
  %v2712 = vld [vmem:[%s7 + $0xa0] sm:$0xff]
  %v2713 = vld [vmem:[%s7 + $0xa8] sm:$0xff]
  %v2714 = vld [vmem:[%s7 + $0xb0] sm:$0xff]
  %v2715 = vld [vmem:[%s7 + $0xb8] sm:$0xff]
  %v2716 = vld [vmem:[%s7 + $0xc0] sm:$0xff]
  %v2717 = vld [vmem:[%s7 + $0xc8] sm:$0xff]
  %v2718 = vld [vmem:[%s7 + $0xd0] sm:$0xff]
  %v2719 = vld [vmem:[%s7 + $0xd8] sm:$0xff]
  %v2720 = vld [vmem:[%s7 + $0xe0] sm:$0xff]
  %v2721 = vpack.c.bf16 %v2648, %v2646
  %v2722 = vpack.c.bf16 %v2676, %v2674
  %v2723 = vpack.c.bf16 %v2653, %v2651
  %v2724 = vpack.c.bf16 %v2681, %v2679
  %v2725 = vpack.c.bf16 %v2658, %v2656
  %v2726 = vpack.c.bf16 %v2686, %v2684
  %v2727 = vpack.c.bf16 %v2661, %v2661
  %v2728 = vpack.c.bf16 %v2689, %v2689
  %s2729 = scalar_lea.vmem %s11, 28
  %v2730 = vld [vmem:[%s2729] sm:$0xf]
  %v2731 = vld [vmem:[%s2729 + $0x4] sm:$0xf]
  %v2732 = vld [vmem:[%s2729 + $0x8] sm:$0xf]
  %v2733 = vld [vmem:[%s2729 + $0xc] sm:$0xf]
  %v2734 = vld [vmem:[%s2729 + $0x10] sm:$0xf]
  %v2735 = vld [vmem:[%s2729 + $0x14] sm:$0xf]
  %v2736 = vld [vmem:[%s2729 + $0x18] sm:$0x3]
  %v2744 = vunpack.c.l.b16 %v2730
  %v2745 = vunpack.c.l.b16 %v2731
  %v2746 = vunpack.c.l.b16 %v2732
  %v2747 = vunpack.c.l.b16 %v2733
  %v2748 = vunpack.c.l.b16 %v2734
  %v2749 = vunpack.c.l.b16 %v2735
  %v2750 = vunpack.c.l.b16 %v2736
  %v2751 = vpack.c.b16 %v2745, %v2744
  %v2752 = vpack.c.b16 %v2747, %v2746
  %v2753 = vpack.c.b16 %v2749, %v2748
  %v2754 = vpack.c.b16 %v2750, %v2750
  %v2756 = vsel %vm2616, %v2751, 0
  %v2759 = vsel %vm2616, %v2752, 0
  %v2762 = vsel %vm2616, %v2753, 0
  %v2765 = vsel %vm2616, %v2754, 0
  %2767 = vmatpush.bf16.msra.mxu0 %v2631
  %2768 = vmatpush.bf16.msra.mxu0 %v2587
  %2769 = vmatpush.bf16.msra.mxu0 %v2585
  %2770 = vmatpush.bf16.msra.mxu0 %v2583
  %2771 = vmatpush.bf16.msra.mxu0 %v2581
  %2772 = vmatpush.bf16.msra.mxu0 %v2579
  %2773 = vmatpush.bf16.msra.mxu0 %v2577
  %2774 = vmatpush.bf16.msra.mxu0 %v2575
  %2775 = vmatmul.bf16.gmra.mxu0 %v2756
  %v2776 = vpop.f32.mrf.mxu0
  %v2777 = vadd.f32 0.0, %v2776
  %v2778 = vpop.f32.mrf.mxu0
  %v2779 = vadd.f32 0.0, %v2778
  %2780 = vmatmul.bf16.gmra.mxu0 %v2759
  %v2781 = vpop.f32.mrf.mxu0
  %v2782 = vadd.f32 0.0, %v2781
  %v2783 = vpop.f32.mrf.mxu0
  %v2784 = vadd.f32 0.0, %v2783
  %2785 = vmatmul.bf16.gmra.mxu0 %v2762
  %v2786 = vpop.f32.mrf.mxu0
  %v2787 = vadd.f32 0.0, %v2786
  %v2788 = vpop.f32.mrf.mxu0
  %v2789 = vadd.f32 0.0, %v2788
  %2790 = vmatmul.bf16.gmra.mxu0 %v2765
  %v2791 = vpop.f32.mrf.mxu0
  %v2792 = vadd.f32 0.0, %v2791
  %v2793 = vpop.f32.mrf.mxu0
  %2794 = vdwg.mxu0
  %2795 = vmatpush.bf16.msra.mxu0 %v2634
  %2796 = vmatpush.bf16.msra.mxu0 %v2588
  %2797 = vmatpush.bf16.msra.mxu0 %v2586
  %2798 = vmatpush.bf16.msra.mxu0 %v2584
  %2799 = vmatpush.bf16.msra.mxu0 %v2582
  %2800 = vmatpush.bf16.msra.mxu0 %v2580
  %2801 = vmatpush.bf16.msra.mxu0 %v2578
  %2802 = vmatpush.bf16.msra.mxu0 %v2576
  %2803 = vmatmul.bf16.gmra.mxu0 %v2756
  %v2804 = vpop.f32.mrf.mxu0
  %v2805 = vadd.f32 0.0, %v2804
  %v2806 = vpop.f32.mrf.mxu0
  %v2807 = vadd.f32 0.0, %v2806
  %2808 = vmatmul.bf16.gmra.mxu0 %v2759
  %v2809 = vpop.f32.mrf.mxu0
  %v2810 = vadd.f32 0.0, %v2809
  %v2811 = vpop.f32.mrf.mxu0
  %v2812 = vadd.f32 0.0, %v2811
  %2813 = vmatmul.bf16.gmra.mxu0 %v2762
  %v2814 = vpop.f32.mrf.mxu0
  %v2815 = vadd.f32 0.0, %v2814
  %v2816 = vpop.f32.mrf.mxu0
  %v2817 = vadd.f32 0.0, %v2816
  %2818 = vmatmul.bf16.gmra.mxu0 %v2765
  %v2819 = vpop.f32.mrf.mxu0
  %v2820 = vadd.f32 0.0, %v2819
  %v2821 = vpop.f32.mrf.mxu0
  %2822 = vdwg.mxu0
  %s2823 = scalar_lea.vmem %s7, 232
  %v2824 = vld [vmem:[%s2823] sm:$0xff]
  %v2825 = vld [vmem:[%s2823 + $0x8] sm:$0xff]
  %v2826 = vld [vmem:[%s2823 + $0x10] sm:$0xff]
  %v2827 = vld [vmem:[%s2823 + $0x18] sm:$0xff]
  %v2828 = vld [vmem:[%s2823 + $0x20] sm:$0xff]
  %v2829 = vld [vmem:[%s2823 + $0x28] sm:$0xff]
  %v2830 = vld [vmem:[%s2823 + $0x30] sm:$0xff]
  %v2831 = vld [vmem:[%s2823 + $0x38] sm:$0xff]
  %v2832 = vld [vmem:[%s2823 + $0x40] sm:$0xff]
  %v2833 = vld [vmem:[%s2823 + $0x48] sm:$0xff]
  %v2834 = vld [vmem:[%s2823 + $0x50] sm:$0xff]
  %v2835 = vld [vmem:[%s2823 + $0x58] sm:$0xff]
  %v2836 = vld [vmem:[%s2823 + $0x60] sm:$0xff]
  %v2837 = vld [vmem:[%s2823 + $0x68] sm:$0xff]
  %v2838 = vld [vmem:[%s2823 + $0x70] sm:$0xff]
  %v2839 = vld [vmem:[%s2823 + $0x78] sm:$0xff]
  %v2840 = vld [vmem:[%s2823 + $0x80] sm:$0xff]
  %v2841 = vld [vmem:[%s2823 + $0x88] sm:$0xff]
  %v2842 = vld [vmem:[%s2823 + $0x90] sm:$0xff]
  %v2843 = vld [vmem:[%s2823 + $0x98] sm:$0xff]
  %v2844 = vld [vmem:[%s2823 + $0xa0] sm:$0xff]
  %v2845 = vld [vmem:[%s2823 + $0xa8] sm:$0xff]
  %v2846 = vld [vmem:[%s2823 + $0xb0] sm:$0xff]
  %v2847 = vld [vmem:[%s2823 + $0xb8] sm:$0xff]
  %v2848 = vld [vmem:[%s2823 + $0xc0] sm:$0xff]
  %v2849 = vld [vmem:[%s2823 + $0xc8] sm:$0xff]
  %v2850 = vld [vmem:[%s2823 + $0xd0] sm:$0xff]
  %v2851 = vld [vmem:[%s2823 + $0xd8] sm:$0xff]
  %v2852 = vld [vmem:[%s2823 + $0xe0] sm:$0xff]
  %v2853 = vpack.c.bf16 %v2779, %v2777
  %v2854 = vpack.c.bf16 %v2807, %v2805
  %v2855 = vpack.c.bf16 %v2784, %v2782
  %v2856 = vpack.c.bf16 %v2812, %v2810
  %v2857 = vpack.c.bf16 %v2789, %v2787
  %v2858 = vpack.c.bf16 %v2817, %v2815
  %v2859 = vpack.c.bf16 %v2792, %v2792
  %v2860 = vpack.c.bf16 %v2820, %v2820
  %v2890 = vunpack.c.l.b16 %v2824
  %v2891 = vunpack.c.h.b16 %v2824
  %v2892 = vunpack.c.l.b16 %v2825
  %v2893 = vunpack.c.h.b16 %v2825
  %v2894 = vunpack.c.l.b16 %v2826
  %v2895 = vunpack.c.h.b16 %v2826
  %v2896 = vunpack.c.l.b16 %v2827
  %v2897 = vunpack.c.h.b16 %v2827
  %v2898 = vunpack.c.l.b16 %v2828
  %v2899 = vunpack.c.h.b16 %v2828
  %v2900 = vunpack.c.l.b16 %v2829
  %v2901 = vunpack.c.h.b16 %v2829
  %v2902 = vunpack.c.l.b16 %v2830
  %v2903 = vunpack.c.h.b16 %v2830
  %v2904 = vunpack.c.l.b16 %v2831
  %v2905 = vunpack.c.h.b16 %v2831
  %v2906 = vunpack.c.l.b16 %v2832
  %v2907 = vunpack.c.h.b16 %v2832
  %v2908 = vunpack.c.l.b16 %v2833
  %v2909 = vunpack.c.h.b16 %v2833
  %v2910 = vunpack.c.l.b16 %v2834
  %v2911 = vunpack.c.h.b16 %v2834
  %v2912 = vunpack.c.l.b16 %v2835
  %v2913 = vunpack.c.h.b16 %v2835
  %v2914 = vunpack.c.l.b16 %v2836
  %v2915 = vunpack.c.h.b16 %v2836
  %v2916 = vunpack.c.l.b16 %v2837
  %v2917 = vunpack.c.h.b16 %v2837
  %v2918 = vunpack.c.l.b16 %v2838
  %v2919 = vunpack.c.h.b16 %v2838
  %v2920 = vunpack.c.l.b16 %v2839
  %v2921 = vunpack.c.h.b16 %v2839
  %v2922 = vunpack.c.l.b16 %v2840
  %v2923 = vunpack.c.h.b16 %v2840
  %v2924 = vunpack.c.l.b16 %v2841
  %v2925 = vunpack.c.h.b16 %v2841
  %v2926 = vunpack.c.l.b16 %v2842
  %v2927 = vunpack.c.h.b16 %v2842
  %v2928 = vunpack.c.l.b16 %v2843
  %v2929 = vunpack.c.h.b16 %v2843
  %v2930 = vunpack.c.l.b16 %v2844
  %v2931 = vunpack.c.h.b16 %v2844
  %v2932 = vunpack.c.l.b16 %v2845
  %v2933 = vunpack.c.h.b16 %v2845
  %v2934 = vunpack.c.l.b16 %v2846
  %v2935 = vunpack.c.h.b16 %v2846
  %v2936 = vunpack.c.l.b16 %v2847
  %v2937 = vunpack.c.h.b16 %v2847
  %v2938 = vunpack.c.l.b16 %v2848
  %v2939 = vunpack.c.h.b16 %v2848
  %v2940 = vunpack.c.l.b16 %v2849
  %v2941 = vunpack.c.h.b16 %v2849
  %v2942 = vunpack.c.l.b16 %v2850
  %v2943 = vunpack.c.h.b16 %v2850
  %v2944 = vunpack.c.l.b16 %v2851
  %v2945 = vunpack.c.h.b16 %v2851
  %v2946 = vunpack.c.l.b16 %v2852
  %v2947 = vunpack.c.h.b16 %v2852
  %v2948 = vpack.c.b16 %v2892, %v2890
  %v2949 = vpack.c.b16 %v2893, %v2891
  %v2950 = vpack.c.b16 %v2896, %v2894
  %v2951 = vpack.c.b16 %v2897, %v2895
  %v2952 = vpack.c.b16 %v2900, %v2898
  %v2953 = vpack.c.b16 %v2901, %v2899
  %v2954 = vpack.c.b16 %v2904, %v2902
  %v2955 = vpack.c.b16 %v2905, %v2903
  %v2956 = vpack.c.b16 %v2908, %v2906
  %v2957 = vpack.c.b16 %v2909, %v2907
  %v2958 = vpack.c.b16 %v2912, %v2910
  %v2959 = vpack.c.b16 %v2913, %v2911
  %v2960 = vpack.c.b16 %v2916, %v2914
  %v2961 = vpack.c.b16 %v2917, %v2915
  %v2962 = vpack.c.b16 %v2920, %v2918
  %v2963 = vpack.c.b16 %v2921, %v2919
  %v2964 = vpack.c.b16 %v2924, %v2922
  %v2965 = vpack.c.b16 %v2925, %v2923
  %v2966 = vpack.c.b16 %v2928, %v2926
  %v2967 = vpack.c.b16 %v2929, %v2927
  %v2968 = vpack.c.b16 %v2932, %v2930
  %v2969 = vpack.c.b16 %v2933, %v2931
  %v2970 = vpack.c.b16 %v2936, %v2934
  %v2971 = vpack.c.b16 %v2937, %v2935
  %v2972 = vpack.c.b16 %v2940, %v2938
  %v2973 = vpack.c.b16 %v2941, %v2939
  %v2974 = vpack.c.b16 %v2944, %v2942
  %v2975 = vpack.c.b16 %v2945, %v2943
  %v2976 = vpack.c.b16 %v2946, %v2946
  %v2977 = vpack.c.b16 %v2947, %v2947
  %vm3006 = vcmask 850944
  %v3008 = vsel %vm3006, %v2854, 0
  %v3011 = vsel %vm3006, %v2856, 0
  %v3014 = vsel %vm3006, %v2858, 0
  %v3017 = vsel %vm3006, %v2860, 0
  %vm3019 = vcmask 1043456
  %v3021 = vsel %vm3019, %v2976, 0
  %v3024 = vsel %vm3019, %v2977, 0
  %3026 = vmatpush.bf16.msra.mxu0 %v2962
  %3027 = vmatpush.bf16.msra.mxu0 %v2960
  %3028 = vmatpush.bf16.msra.mxu0 %v2958
  %3029 = vmatpush.bf16.msra.mxu0 %v2956
  %3030 = vmatpush.bf16.msra.mxu0 %v2954
  %3031 = vmatpush.bf16.msra.mxu0 %v2952
  %3032 = vmatpush.bf16.msra.mxu0 %v2950
  %3033 = vmatpush.bf16.msra.mxu0 %v2948
  %3034 = vmatmul.bf16.gmra.mxu0 %v2853
  %v3035 = vpop.f32.mrf.mxu0
  %v3036 = vadd.f32 0.0, %v3035
  %v3037 = vpop.f32.mrf.mxu0
  %v3038 = vadd.f32 0.0, %v3037
  %3039 = vmatmul.bf16.gmra.mxu0 %v2855
  %v3040 = vpop.f32.mrf.mxu0
  %v3041 = vadd.f32 0.0, %v3040
  %v3042 = vpop.f32.mrf.mxu0
  %v3043 = vadd.f32 0.0, %v3042
  %3044 = vmatmul.bf16.gmra.mxu0 %v2857
  %v3045 = vpop.f32.mrf.mxu0
  %v3046 = vadd.f32 0.0, %v3045
  %v3047 = vpop.f32.mrf.mxu0
  %v3048 = vadd.f32 0.0, %v3047
  %3049 = vmatmul.bf16.gmra.mxu0 %v2859
  %v3050 = vpop.f32.mrf.mxu0
  %v3051 = vadd.f32 0.0, %v3050
  %v3052 = vpop.f32.mrf.mxu0
  %3053 = vdwg.mxu0
  %3054 = vmatpush.bf16.msra.mxu0 0
  %3055 = vmatpush.bf16.msra.mxu0 %v3021
  %3056 = vmatpush.bf16.msra.mxu0 %v2974
  %3057 = vmatpush.bf16.msra.mxu0 %v2972
  %3058 = vmatpush.bf16.msra.mxu0 %v2970
  %3059 = vmatpush.bf16.msra.mxu0 %v2968
  %3060 = vmatpush.bf16.msra.mxu0 %v2966
  %3061 = vmatpush.bf16.msra.mxu0 %v2964
  %3062 = vmatmul.bf16.gmra.mxu0 %v3008
  %v3063 = vpop.f32.mrf.mxu0
  %v3064 = vadd.f32 %v3036, %v3063
  %v3065 = vpop.f32.mrf.mxu0
  %v3066 = vadd.f32 %v3038, %v3065
  %3067 = vmatmul.bf16.gmra.mxu0 %v3011
  %v3068 = vpop.f32.mrf.mxu0
  %v3069 = vadd.f32 %v3041, %v3068
  %v3070 = vpop.f32.mrf.mxu0
  %v3071 = vadd.f32 %v3043, %v3070
  %3072 = vmatmul.bf16.gmra.mxu0 %v3014
  %v3073 = vpop.f32.mrf.mxu0
  %v3074 = vadd.f32 %v3046, %v3073
  %v3075 = vpop.f32.mrf.mxu0
  %v3076 = vadd.f32 %v3048, %v3075
  %3077 = vmatmul.bf16.gmra.mxu0 %v3017
  %v3078 = vpop.f32.mrf.mxu0
  %v3079 = vadd.f32 %v3051, %v3078
  %v3080 = vpop.f32.mrf.mxu0
  %3081 = vdwg.mxu0
  %3082 = vmatpush.bf16.msra.mxu0 %v2963
  %3083 = vmatpush.bf16.msra.mxu0 %v2961
  %3084 = vmatpush.bf16.msra.mxu0 %v2959
  %3085 = vmatpush.bf16.msra.mxu0 %v2957
  %3086 = vmatpush.bf16.msra.mxu0 %v2955
  %3087 = vmatpush.bf16.msra.mxu0 %v2953
  %3088 = vmatpush.bf16.msra.mxu0 %v2951
  %3089 = vmatpush.bf16.msra.mxu0 %v2949
  %3090 = vmatmul.bf16.gmra.mxu0 %v2853
  %v3091 = vpop.f32.mrf.mxu0
  %v3092 = vadd.f32 0.0, %v3091
  %v3093 = vpop.f32.mrf.mxu0
  %v3094 = vadd.f32 0.0, %v3093
  %3095 = vmatmul.bf16.gmra.mxu0 %v2855
  %v3096 = vpop.f32.mrf.mxu0
  %v3097 = vadd.f32 0.0, %v3096
  %v3098 = vpop.f32.mrf.mxu0
  %v3099 = vadd.f32 0.0, %v3098
  %3100 = vmatmul.bf16.gmra.mxu0 %v2857
  %v3101 = vpop.f32.mrf.mxu0
  %v3102 = vadd.f32 0.0, %v3101
  %v3103 = vpop.f32.mrf.mxu0
  %v3104 = vadd.f32 0.0, %v3103
  %3105 = vmatmul.bf16.gmra.mxu0 %v2859
  %v3106 = vpop.f32.mrf.mxu0
  %v3107 = vadd.f32 0.0, %v3106
  %v3108 = vpop.f32.mrf.mxu0
  %3109 = vdwg.mxu0
  %3110 = vmatpush.bf16.msra.mxu0 0
  %3111 = vmatpush.bf16.msra.mxu0 %v3024
  %3112 = vmatpush.bf16.msra.mxu0 %v2975
  %3113 = vmatpush.bf16.msra.mxu0 %v2973
  %3114 = vmatpush.bf16.msra.mxu0 %v2971
  %3115 = vmatpush.bf16.msra.mxu0 %v2969
  %3116 = vmatpush.bf16.msra.mxu0 %v2967
  %3117 = vmatpush.bf16.msra.mxu0 %v2965
  %3118 = vmatmul.bf16.gmra.mxu0 %v3008
  %v3119 = vpop.f32.mrf.mxu0
  %v3120 = vadd.f32 %v3092, %v3119
  %v3121 = vpop.f32.mrf.mxu0
  %v3122 = vadd.f32 %v3094, %v3121
  %3123 = vmatmul.bf16.gmra.mxu0 %v3011
  %v3124 = vpop.f32.mrf.mxu0
  %v3125 = vadd.f32 %v3097, %v3124
  %v3126 = vpop.f32.mrf.mxu0
  %v3127 = vadd.f32 %v3099, %v3126
  %3128 = vmatmul.bf16.gmra.mxu0 %v3014
  %v3129 = vpop.f32.mrf.mxu0
  %v3130 = vadd.f32 %v3102, %v3129
  %v3131 = vpop.f32.mrf.mxu0
  %v3132 = vadd.f32 %v3104, %v3131
  %3133 = vmatmul.bf16.gmra.mxu0 %v3017
  %v3134 = vpop.f32.mrf.mxu0
  %v3135 = vadd.f32 %v3107, %v3134
  %v3136 = vpop.f32.mrf.mxu0
  %3137 = vdwg.mxu0
  %v3167 = vunpack.c.l.b16 %v2692
  %v3168 = vunpack.c.h.b16 %v2692
  %v3169 = vunpack.c.l.b16 %v2693
  %v3170 = vunpack.c.h.b16 %v2693
  %v3171 = vunpack.c.l.b16 %v2694
  %v3172 = vunpack.c.h.b16 %v2694
  %v3173 = vunpack.c.l.b16 %v2695
  %v3174 = vunpack.c.h.b16 %v2695
  %v3175 = vunpack.c.l.b16 %v2696
  %v3176 = vunpack.c.h.b16 %v2696
  %v3177 = vunpack.c.l.b16 %v2697
  %v3178 = vunpack.c.h.b16 %v2697
  %v3179 = vunpack.c.l.b16 %v2698
  %v3180 = vunpack.c.h.b16 %v2698
  %v3181 = vunpack.c.l.b16 %v2699
  %v3182 = vunpack.c.h.b16 %v2699
  %v3183 = vunpack.c.l.b16 %v2700
  %v3184 = vunpack.c.h.b16 %v2700
  %v3185 = vunpack.c.l.b16 %v2701
  %v3186 = vunpack.c.h.b16 %v2701
  %v3187 = vunpack.c.l.b16 %v2702
  %v3188 = vunpack.c.h.b16 %v2702
  %v3189 = vunpack.c.l.b16 %v2703
  %v3190 = vunpack.c.h.b16 %v2703
  %v3191 = vunpack.c.l.b16 %v2704
  %v3192 = vunpack.c.h.b16 %v2704
  %v3193 = vunpack.c.l.b16 %v2705
  %v3194 = vunpack.c.h.b16 %v2705
  %v3195 = vunpack.c.l.b16 %v2706
  %v3196 = vunpack.c.h.b16 %v2706
  %v3197 = vunpack.c.l.b16 %v2707
  %v3198 = vunpack.c.h.b16 %v2707
  %v3199 = vunpack.c.l.b16 %v2708
  %v3200 = vunpack.c.h.b16 %v2708
  %v3201 = vunpack.c.l.b16 %v2709
  %v3202 = vunpack.c.h.b16 %v2709
  %v3203 = vunpack.c.l.b16 %v2710
  %v3204 = vunpack.c.h.b16 %v2710
  %v3205 = vunpack.c.l.b16 %v2711
  %v3206 = vunpack.c.h.b16 %v2711
  %v3207 = vunpack.c.l.b16 %v2712
  %v3208 = vunpack.c.h.b16 %v2712
  %v3209 = vunpack.c.l.b16 %v2713
  %v3210 = vunpack.c.h.b16 %v2713
  %v3211 = vunpack.c.l.b16 %v2714
  %v3212 = vunpack.c.h.b16 %v2714
  %v3213 = vunpack.c.l.b16 %v2715
  %v3214 = vunpack.c.h.b16 %v2715
  %v3215 = vunpack.c.l.b16 %v2716
  %v3216 = vunpack.c.h.b16 %v2716
  %v3217 = vunpack.c.l.b16 %v2717
  %v3218 = vunpack.c.h.b16 %v2717
  %v3219 = vunpack.c.l.b16 %v2718
  %v3220 = vunpack.c.h.b16 %v2718
  %v3221 = vunpack.c.l.b16 %v2719
  %v3222 = vunpack.c.h.b16 %v2719
  %v3223 = vunpack.c.l.b16 %v2720
  %v3224 = vunpack.c.h.b16 %v2720
  %v3225 = vpack.c.b16 %v3169, %v3167
  %v3226 = vpack.c.b16 %v3170, %v3168
  %v3227 = vpack.c.b16 %v3173, %v3171
  %v3228 = vpack.c.b16 %v3174, %v3172
  %v3229 = vpack.c.b16 %v3177, %v3175
  %v3230 = vpack.c.b16 %v3178, %v3176
  %v3231 = vpack.c.b16 %v3181, %v3179
  %v3232 = vpack.c.b16 %v3182, %v3180
  %v3233 = vpack.c.b16 %v3185, %v3183
  %v3234 = vpack.c.b16 %v3186, %v3184
  %v3235 = vpack.c.b16 %v3189, %v3187
  %v3236 = vpack.c.b16 %v3190, %v3188
  %v3237 = vpack.c.b16 %v3193, %v3191
  %v3238 = vpack.c.b16 %v3194, %v3192
  %v3239 = vpack.c.b16 %v3197, %v3195
  %v3240 = vpack.c.b16 %v3198, %v3196
  %v3241 = vpack.c.b16 %v3201, %v3199
  %v3242 = vpack.c.b16 %v3202, %v3200
  %v3243 = vpack.c.b16 %v3205, %v3203
  %v3244 = vpack.c.b16 %v3206, %v3204
  %v3245 = vpack.c.b16 %v3209, %v3207
  %v3246 = vpack.c.b16 %v3210, %v3208
  %v3247 = vpack.c.b16 %v3213, %v3211
  %v3248 = vpack.c.b16 %v3214, %v3212
  %v3249 = vpack.c.b16 %v3217, %v3215
  %v3250 = vpack.c.b16 %v3218, %v3216
  %v3251 = vpack.c.b16 %v3221, %v3219
  %v3252 = vpack.c.b16 %v3222, %v3220
  %v3253 = vpack.c.b16 %v3223, %v3223
  %v3254 = vpack.c.b16 %v3224, %v3224
  %v3284 = vsel %vm3006, %v2722, 0
  %v3287 = vsel %vm3006, %v2724, 0
  %v3290 = vsel %vm3006, %v2726, 0
  %v3293 = vsel %vm3006, %v2728, 0
  %v3296 = vsel %vm3019, %v3253, 0
  %v3299 = vsel %vm3019, %v3254, 0
  %3301 = vmatpush.bf16.msra.mxu0 %v3239
  %3302 = vmatpush.bf16.msra.mxu0 %v3237
  %3303 = vmatpush.bf16.msra.mxu0 %v3235
  %3304 = vmatpush.bf16.msra.mxu0 %v3233
  %3305 = vmatpush.bf16.msra.mxu0 %v3231
  %3306 = vmatpush.bf16.msra.mxu0 %v3229
  %3307 = vmatpush.bf16.msra.mxu0 %v3227
  %3308 = vmatpush.bf16.msra.mxu0 %v3225
  %3309 = vmatmul.bf16.gmra.mxu0 %v2721
  %v3310 = vpop.f32.mrf.mxu0
  %v3311 = vadd.f32 %v3064, %v3310
  %v3312 = vpop.f32.mrf.mxu0
  %v3313 = vadd.f32 %v3066, %v3312
  %3314 = vmatmul.bf16.gmra.mxu0 %v2723
  %v3315 = vpop.f32.mrf.mxu0
  %v3316 = vadd.f32 %v3069, %v3315
  %v3317 = vpop.f32.mrf.mxu0
  %v3318 = vadd.f32 %v3071, %v3317
  %3319 = vmatmul.bf16.gmra.mxu0 %v2725
  %v3320 = vpop.f32.mrf.mxu0
  %v3321 = vadd.f32 %v3074, %v3320
  %v3322 = vpop.f32.mrf.mxu0
  %v3323 = vadd.f32 %v3076, %v3322
  %3324 = vmatmul.bf16.gmra.mxu0 %v2727
  %v3325 = vpop.f32.mrf.mxu0
  %v3326 = vadd.f32 %v3079, %v3325
  %v3327 = vpop.f32.mrf.mxu0
  %3328 = vdwg.mxu0
  %3329 = vmatpush.bf16.msra.mxu0 0
  %3330 = vmatpush.bf16.msra.mxu0 %v3296
  %3331 = vmatpush.bf16.msra.mxu0 %v3251
  %3332 = vmatpush.bf16.msra.mxu0 %v3249
  %3333 = vmatpush.bf16.msra.mxu0 %v3247
  %3334 = vmatpush.bf16.msra.mxu0 %v3245
  %3335 = vmatpush.bf16.msra.mxu0 %v3243
  %3336 = vmatpush.bf16.msra.mxu0 %v3241
  %3337 = vmatmul.bf16.gmra.mxu0 %v3284
  %v3338 = vpop.f32.mrf.mxu0
  %v3339 = vadd.f32 %v3311, %v3338
  %v3340 = vpop.f32.mrf.mxu0
  %v3341 = vadd.f32 %v3313, %v3340
  %3342 = vmatmul.bf16.gmra.mxu0 %v3287
  %v3343 = vpop.f32.mrf.mxu0
  %v3344 = vadd.f32 %v3316, %v3343
  %v3345 = vpop.f32.mrf.mxu0
  %v3346 = vadd.f32 %v3318, %v3345
  %3347 = vmatmul.bf16.gmra.mxu0 %v3290
  %v3348 = vpop.f32.mrf.mxu0
  %v3349 = vadd.f32 %v3321, %v3348
  %v3350 = vpop.f32.mrf.mxu0
  %v3351 = vadd.f32 %v3323, %v3350
  %3352 = vmatmul.bf16.gmra.mxu0 %v3293
  %v3353 = vpop.f32.mrf.mxu0
  %v3354 = vadd.f32 %v3326, %v3353
  %v3355 = vpop.f32.mrf.mxu0
  %3356 = vdwg.mxu0
  %3357 = vmatpush.bf16.msra.mxu0 %v3240
  %3358 = vmatpush.bf16.msra.mxu0 %v3238
  %3359 = vmatpush.bf16.msra.mxu0 %v3236
  %3360 = vmatpush.bf16.msra.mxu0 %v3234
  %3361 = vmatpush.bf16.msra.mxu0 %v3232
  %3362 = vmatpush.bf16.msra.mxu0 %v3230
  %3363 = vmatpush.bf16.msra.mxu0 %v3228
  %3364 = vmatpush.bf16.msra.mxu0 %v3226
  %3365 = vmatmul.bf16.gmra.mxu0 %v2721
  %v3366 = vpop.f32.mrf.mxu0
  %v3367 = vadd.f32 %v3120, %v3366
  %v3368 = vpop.f32.mrf.mxu0
  %v3369 = vadd.f32 %v3122, %v3368
  %3370 = vmatmul.bf16.gmra.mxu0 %v2723
  %v3371 = vpop.f32.mrf.mxu0
  %v3372 = vadd.f32 %v3125, %v3371
  %v3373 = vpop.f32.mrf.mxu0
  %v3374 = vadd.f32 %v3127, %v3373
  %3375 = vmatmul.bf16.gmra.mxu0 %v2725
  %v3376 = vpop.f32.mrf.mxu0
  %v3377 = vadd.f32 %v3130, %v3376
  %v3378 = vpop.f32.mrf.mxu0
  %v3379 = vadd.f32 %v3132, %v3378
  %3380 = vmatmul.bf16.gmra.mxu0 %v2727
  %v3381 = vpop.f32.mrf.mxu0
  %v3382 = vadd.f32 %v3135, %v3381
  %v3383 = vpop.f32.mrf.mxu0
  %3384 = vdwg.mxu0
  %3385 = vmatpush.bf16.msra.mxu0 0
  %3386 = vmatpush.bf16.msra.mxu0 %v3299
  %3387 = vmatpush.bf16.msra.mxu0 %v3252
  %3388 = vmatpush.bf16.msra.mxu0 %v3250
  %3389 = vmatpush.bf16.msra.mxu0 %v3248
  %3390 = vmatpush.bf16.msra.mxu0 %v3246
  %3391 = vmatpush.bf16.msra.mxu0 %v3244
  %3392 = vmatpush.bf16.msra.mxu0 %v3242
  %3393 = vmatmul.bf16.gmra.mxu0 %v3284
  %v3394 = vpop.f32.mrf.mxu0
  %v3395 = vadd.f32 %v3367, %v3394
  %v3396 = vpop.f32.mrf.mxu0
  %v3397 = vadd.f32 %v3369, %v3396
  %3398 = vmatmul.bf16.gmra.mxu0 %v3287
  %v3399 = vpop.f32.mrf.mxu0
  %v3400 = vadd.f32 %v3372, %v3399
  %v3401 = vpop.f32.mrf.mxu0
  %v3402 = vadd.f32 %v3374, %v3401
  %3403 = vmatmul.bf16.gmra.mxu0 %v3290
  %v3404 = vpop.f32.mrf.mxu0
  %v3405 = vadd.f32 %v3377, %v3404
  %v3406 = vpop.f32.mrf.mxu0
  %v3407 = vadd.f32 %v3379, %v3406
  %3408 = vmatmul.bf16.gmra.mxu0 %v3293
  %v3409 = vpop.f32.mrf.mxu0
  %v3410 = vadd.f32 %v3382, %v3409
  %v3411 = vpop.f32.mrf.mxu0
  %3412 = vdwg.mxu0
  %s3413 = scalar_lea.vmem %s11, 56
  %v3414 = vld [vmem:[%s3413] sm:$0xf]
  %v3415 = vld [vmem:[%s3413 + $0x4] sm:$0xf]
  %v3416 = vld [vmem:[%s3413 + $0x8] sm:$0xf]
  %v3417 = vld [vmem:[%s3413 + $0xc] sm:$0xf]
  %v3418 = vld [vmem:[%s3413 + $0x10] sm:$0xf]
  %v3419 = vld [vmem:[%s3413 + $0x14] sm:$0xf]
  %v3420 = vld [vmem:[%s3413 + $0x18] sm:$0x3]
  %v3428 = vunpack.c.l.b16 %v3414
  %v3429 = vunpack.c.l.b16 %v3415
  %v3430 = vunpack.c.l.b16 %v3416
  %v3431 = vunpack.c.l.b16 %v3417
  %v3432 = vunpack.c.l.b16 %v3418
  %v3433 = vunpack.c.l.b16 %v3419
  %v3434 = vunpack.c.l.b16 %v3420
  %v3435 = vpack.c.b16 %v3429, %v3428
  %v3436 = vpack.c.b16 %v3431, %v3430
  %v3437 = vpack.c.b16 %v3433, %v3432
  %v3438 = vpack.c.b16 %v3434, %v3434
  %v3440 = vsel %vm2616, %v3435, 0
  %v3443 = vsel %vm2616, %v3436, 0
  %v3446 = vsel %vm2616, %v3437, 0
  %v3449 = vsel %vm2616, %v3438, 0
  %3451 = vmatpush.bf16.msra.mxu0 %v2631
  %3452 = vmatpush.bf16.msra.mxu0 %v2587
  %3453 = vmatpush.bf16.msra.mxu0 %v2585
  %3454 = vmatpush.bf16.msra.mxu0 %v2583
  %3455 = vmatpush.bf16.msra.mxu0 %v2581
  %3456 = vmatpush.bf16.msra.mxu0 %v2579
  %3457 = vmatpush.bf16.msra.mxu0 %v2577
  %3458 = vmatpush.bf16.msra.mxu0 %v2575
  %3459 = vmatmul.bf16.gmra.mxu0 %v3440
  %v3460 = vpop.f32.mrf.mxu0
  %v3461 = vadd.f32 0.0, %v3460
  %v3462 = vpop.f32.mrf.mxu0
  %v3463 = vadd.f32 0.0, %v3462
  %3464 = vmatmul.bf16.gmra.mxu0 %v3443
  %v3465 = vpop.f32.mrf.mxu0
  %v3466 = vadd.f32 0.0, %v3465
  %v3467 = vpop.f32.mrf.mxu0
  %v3468 = vadd.f32 0.0, %v3467
  %3469 = vmatmul.bf16.gmra.mxu0 %v3446
  %v3470 = vpop.f32.mrf.mxu0
  %v3471 = vadd.f32 0.0, %v3470
  %v3472 = vpop.f32.mrf.mxu0
  %v3473 = vadd.f32 0.0, %v3472
  %3474 = vmatmul.bf16.gmra.mxu0 %v3449
  %v3475 = vpop.f32.mrf.mxu0
  %v3476 = vadd.f32 0.0, %v3475
  %v3477 = vpop.f32.mrf.mxu0
  %3478 = vdwg.mxu0
  %3479 = vmatpush.bf16.msra.mxu0 %v2634
  %3480 = vmatpush.bf16.msra.mxu0 %v2588
  %3481 = vmatpush.bf16.msra.mxu0 %v2586
  %3482 = vmatpush.bf16.msra.mxu0 %v2584
  %3483 = vmatpush.bf16.msra.mxu0 %v2582
  %3484 = vmatpush.bf16.msra.mxu0 %v2580
  %3485 = vmatpush.bf16.msra.mxu0 %v2578
  %3486 = vmatpush.bf16.msra.mxu0 %v2576
  %3487 = vmatmul.bf16.gmra.mxu0 %v3440
  %v3488 = vpop.f32.mrf.mxu0
  %v3489 = vadd.f32 0.0, %v3488
  %v3490 = vpop.f32.mrf.mxu0
  %v3491 = vadd.f32 0.0, %v3490
  %3492 = vmatmul.bf16.gmra.mxu0 %v3443
  %v3493 = vpop.f32.mrf.mxu0
  %v3494 = vadd.f32 0.0, %v3493
  %v3495 = vpop.f32.mrf.mxu0
  %v3496 = vadd.f32 0.0, %v3495
  %3497 = vmatmul.bf16.gmra.mxu0 %v3446
  %v3498 = vpop.f32.mrf.mxu0
  %v3499 = vadd.f32 0.0, %v3498
  %v3500 = vpop.f32.mrf.mxu0
  %v3501 = vadd.f32 0.0, %v3500
  %3502 = vmatmul.bf16.gmra.mxu0 %v3449
  %v3503 = vpop.f32.mrf.mxu0
  %v3504 = vadd.f32 0.0, %v3503
  %v3505 = vpop.f32.mrf.mxu0
  %3506 = vdwg.mxu0
  %s3507 = scalar_lea.vmem %s7, 464
  %v3508 = vld [vmem:[%s3507] sm:$0xff]
  %v3509 = vld [vmem:[%s3507 + $0x8] sm:$0xff]
  %v3510 = vld [vmem:[%s3507 + $0x10] sm:$0xff]
  %v3511 = vld [vmem:[%s3507 + $0x18] sm:$0xff]
  %v3512 = vld [vmem:[%s3507 + $0x20] sm:$0xff]
  %v3513 = vld [vmem:[%s3507 + $0x28] sm:$0xff]
  %v3514 = vld [vmem:[%s3507 + $0x30] sm:$0xff]
  %v3515 = vld [vmem:[%s3507 + $0x38] sm:$0xff]
  %v3516 = vld [vmem:[%s3507 + $0x40] sm:$0xff]
  %v3517 = vld [vmem:[%s3507 + $0x48] sm:$0xff]
  %v3518 = vld [vmem:[%s3507 + $0x50] sm:$0xff]
  %v3519 = vld [vmem:[%s3507 + $0x58] sm:$0xff]
  %v3520 = vld [vmem:[%s3507 + $0x60] sm:$0xff]
  %v3521 = vld [vmem:[%s3507 + $0x68] sm:$0xff]
  %v3522 = vld [vmem:[%s3507 + $0x70] sm:$0xff]
  %v3523 = vld [vmem:[%s3507 + $0x78] sm:$0xff]
  %v3524 = vld [vmem:[%s3507 + $0x80] sm:$0xff]
  %v3525 = vld [vmem:[%s3507 + $0x88] sm:$0xff]
  %v3526 = vld [vmem:[%s3507 + $0x90] sm:$0xff]
  %v3527 = vld [vmem:[%s3507 + $0x98] sm:$0xff]
  %v3528 = vld [vmem:[%s3507 + $0xa0] sm:$0xff]
  %v3529 = vld [vmem:[%s3507 + $0xa8] sm:$0xff]
  %v3530 = vld [vmem:[%s3507 + $0xb0] sm:$0xff]
  %v3531 = vld [vmem:[%s3507 + $0xb8] sm:$0xff]
  %v3532 = vld [vmem:[%s3507 + $0xc0] sm:$0xff]
  %v3533 = vld [vmem:[%s3507 + $0xc8] sm:$0xff]
  %v3534 = vld [vmem:[%s3507 + $0xd0] sm:$0xff]
  %v3535 = vld [vmem:[%s3507 + $0xd8] sm:$0xff]
  %v3536 = vld [vmem:[%s3507 + $0xe0] sm:$0xff]
  %v3537 = vpack.c.bf16 %v3463, %v3461
  %v3538 = vpack.c.bf16 %v3491, %v3489
  %v3539 = vpack.c.bf16 %v3468, %v3466
  %v3540 = vpack.c.bf16 %v3496, %v3494
  %v3541 = vpack.c.bf16 %v3473, %v3471
  %v3542 = vpack.c.bf16 %v3501, %v3499
  %v3543 = vpack.c.bf16 %v3476, %v3476
  %v3544 = vpack.c.bf16 %v3504, %v3504
  %v3574 = vunpack.c.l.b16 %v3508
  %v3575 = vunpack.c.h.b16 %v3508
  %v3576 = vunpack.c.l.b16 %v3509
  %v3577 = vunpack.c.h.b16 %v3509
  %v3578 = vunpack.c.l.b16 %v3510
  %v3579 = vunpack.c.h.b16 %v3510
  %v3580 = vunpack.c.l.b16 %v3511
  %v3581 = vunpack.c.h.b16 %v3511
  %v3582 = vunpack.c.l.b16 %v3512
  %v3583 = vunpack.c.h.b16 %v3512
  %v3584 = vunpack.c.l.b16 %v3513
  %v3585 = vunpack.c.h.b16 %v3513
  %v3586 = vunpack.c.l.b16 %v3514
  %v3587 = vunpack.c.h.b16 %v3514
  %v3588 = vunpack.c.l.b16 %v3515
  %v3589 = vunpack.c.h.b16 %v3515
  %v3590 = vunpack.c.l.b16 %v3516
  %v3591 = vunpack.c.h.b16 %v3516
  %v3592 = vunpack.c.l.b16 %v3517
  %v3593 = vunpack.c.h.b16 %v3517
  %v3594 = vunpack.c.l.b16 %v3518
  %v3595 = vunpack.c.h.b16 %v3518
  %v3596 = vunpack.c.l.b16 %v3519
  %v3597 = vunpack.c.h.b16 %v3519
  %v3598 = vunpack.c.l.b16 %v3520
  %v3599 = vunpack.c.h.b16 %v3520
  %v3600 = vunpack.c.l.b16 %v3521
  %v3601 = vunpack.c.h.b16 %v3521
  %v3602 = vunpack.c.l.b16 %v3522
  %v3603 = vunpack.c.h.b16 %v3522
  %v3604 = vunpack.c.l.b16 %v3523
  %v3605 = vunpack.c.h.b16 %v3523
  %v3606 = vunpack.c.l.b16 %v3524
  %v3607 = vunpack.c.h.b16 %v3524
  %v3608 = vunpack.c.l.b16 %v3525
  %v3609 = vunpack.c.h.b16 %v3525
  %v3610 = vunpack.c.l.b16 %v3526
  %v3611 = vunpack.c.h.b16 %v3526
  %v3612 = vunpack.c.l.b16 %v3527
  %v3613 = vunpack.c.h.b16 %v3527
  %v3614 = vunpack.c.l.b16 %v3528
  %v3615 = vunpack.c.h.b16 %v3528
  %v3616 = vunpack.c.l.b16 %v3529
  %v3617 = vunpack.c.h.b16 %v3529
  %v3618 = vunpack.c.l.b16 %v3530
  %v3619 = vunpack.c.h.b16 %v3530
  %v3620 = vunpack.c.l.b16 %v3531
  %v3621 = vunpack.c.h.b16 %v3531
  %v3622 = vunpack.c.l.b16 %v3532
  %v3623 = vunpack.c.h.b16 %v3532
  %v3624 = vunpack.c.l.b16 %v3533
  %v3625 = vunpack.c.h.b16 %v3533
  %v3626 = vunpack.c.l.b16 %v3534
  %v3627 = vunpack.c.h.b16 %v3534
  %v3628 = vunpack.c.l.b16 %v3535
  %v3629 = vunpack.c.h.b16 %v3535
  %v3630 = vunpack.c.l.b16 %v3536
  %v3631 = vunpack.c.h.b16 %v3536
  %v3632 = vpack.c.b16 %v3576, %v3574
  %v3633 = vpack.c.b16 %v3577, %v3575
  %v3634 = vpack.c.b16 %v3580, %v3578
  %v3635 = vpack.c.b16 %v3581, %v3579
  %v3636 = vpack.c.b16 %v3584, %v3582
  %v3637 = vpack.c.b16 %v3585, %v3583
  %v3638 = vpack.c.b16 %v3588, %v3586
  %v3639 = vpack.c.b16 %v3589, %v3587
  %v3640 = vpack.c.b16 %v3592, %v3590
  %v3641 = vpack.c.b16 %v3593, %v3591
  %v3642 = vpack.c.b16 %v3596, %v3594
  %v3643 = vpack.c.b16 %v3597, %v3595
  %v3644 = vpack.c.b16 %v3600, %v3598
  %v3645 = vpack.c.b16 %v3601, %v3599
  %v3646 = vpack.c.b16 %v3604, %v3602
  %v3647 = vpack.c.b16 %v3605, %v3603
  %v3648 = vpack.c.b16 %v3608, %v3606
  %v3649 = vpack.c.b16 %v3609, %v3607
  %v3650 = vpack.c.b16 %v3612, %v3610
  %v3651 = vpack.c.b16 %v3613, %v3611
  %v3652 = vpack.c.b16 %v3616, %v3614
  %v3653 = vpack.c.b16 %v3617, %v3615
  %v3654 = vpack.c.b16 %v3620, %v3618
  %v3655 = vpack.c.b16 %v3621, %v3619
  %v3656 = vpack.c.b16 %v3624, %v3622
  %v3657 = vpack.c.b16 %v3625, %v3623
  %v3658 = vpack.c.b16 %v3628, %v3626
  %v3659 = vpack.c.b16 %v3629, %v3627
  %v3660 = vpack.c.b16 %v3630, %v3630
  %v3661 = vpack.c.b16 %v3631, %v3631
  %v3691 = vsel %vm3006, %v3538, 0
  %v3694 = vsel %vm3006, %v3540, 0
  %v3697 = vsel %vm3006, %v3542, 0
  %v3700 = vsel %vm3006, %v3544, 0
  %v3703 = vsel %vm3019, %v3660, 0
  %v3706 = vsel %vm3019, %v3661, 0
  %3708 = vmatpush.bf16.msra.mxu0 %v3646
  %3709 = vmatpush.bf16.msra.mxu0 %v3644
  %3710 = vmatpush.bf16.msra.mxu0 %v3642
  %3711 = vmatpush.bf16.msra.mxu0 %v3640
  %3712 = vmatpush.bf16.msra.mxu0 %v3638
  %3713 = vmatpush.bf16.msra.mxu0 %v3636
  %3714 = vmatpush.bf16.msra.mxu0 %v3634
  %3715 = vmatpush.bf16.msra.mxu0 %v3632
  %3716 = vmatmul.bf16.gmra.mxu0 %v3537
  %v3717 = vpop.f32.mrf.mxu0
  %v3718 = vadd.f32 0.0, %v3717
  %v3719 = vpop.f32.mrf.mxu0
  %v3720 = vadd.f32 0.0, %v3719
  %3721 = vmatmul.bf16.gmra.mxu0 %v3539
  %v3722 = vpop.f32.mrf.mxu0
  %v3723 = vadd.f32 0.0, %v3722
  %v3724 = vpop.f32.mrf.mxu0
  %v3725 = vadd.f32 0.0, %v3724
  %3726 = vmatmul.bf16.gmra.mxu0 %v3541
  %v3727 = vpop.f32.mrf.mxu0
  %v3728 = vadd.f32 0.0, %v3727
  %v3729 = vpop.f32.mrf.mxu0
  %v3730 = vadd.f32 0.0, %v3729
  %3731 = vmatmul.bf16.gmra.mxu0 %v3543
  %v3732 = vpop.f32.mrf.mxu0
  %v3733 = vadd.f32 0.0, %v3732
  %v3734 = vpop.f32.mrf.mxu0
  %3735 = vdwg.mxu0
  %3736 = vmatpush.bf16.msra.mxu0 0
  %3737 = vmatpush.bf16.msra.mxu0 %v3703
  %3738 = vmatpush.bf16.msra.mxu0 %v3658
  %3739 = vmatpush.bf16.msra.mxu0 %v3656
  %3740 = vmatpush.bf16.msra.mxu0 %v3654
  %3741 = vmatpush.bf16.msra.mxu0 %v3652
  %3742 = vmatpush.bf16.msra.mxu0 %v3650
  %3743 = vmatpush.bf16.msra.mxu0 %v3648
  %3744 = vmatmul.bf16.gmra.mxu0 %v3691
  %v3745 = vpop.f32.mrf.mxu0
  %v3746 = vadd.f32 %v3718, %v3745
  %v3747 = vpop.f32.mrf.mxu0
  %v3748 = vadd.f32 %v3720, %v3747
  %3749 = vmatmul.bf16.gmra.mxu0 %v3694
  %v3750 = vpop.f32.mrf.mxu0
  %v3751 = vadd.f32 %v3723, %v3750
  %v3752 = vpop.f32.mrf.mxu0
  %v3753 = vadd.f32 %v3725, %v3752
  %3754 = vmatmul.bf16.gmra.mxu0 %v3697
  %v3755 = vpop.f32.mrf.mxu0
  %v3756 = vadd.f32 %v3728, %v3755
  %v3757 = vpop.f32.mrf.mxu0
  %v3758 = vadd.f32 %v3730, %v3757
  %3759 = vmatmul.bf16.gmra.mxu0 %v3700
  %v3760 = vpop.f32.mrf.mxu0
  %v3761 = vadd.f32 %v3733, %v3760
  %v3762 = vpop.f32.mrf.mxu0
  %3763 = vdwg.mxu0
  %3764 = vmatpush.bf16.msra.mxu0 %v3647
  %3765 = vmatpush.bf16.msra.mxu0 %v3645
  %3766 = vmatpush.bf16.msra.mxu0 %v3643
  %3767 = vmatpush.bf16.msra.mxu0 %v3641
  %3768 = vmatpush.bf16.msra.mxu0 %v3639
  %3769 = vmatpush.bf16.msra.mxu0 %v3637
  %3770 = vmatpush.bf16.msra.mxu0 %v3635
  %3771 = vmatpush.bf16.msra.mxu0 %v3633
  %3772 = vmatmul.bf16.gmra.mxu0 %v3537
  %v3773 = vpop.f32.mrf.mxu0
  %v3774 = vadd.f32 0.0, %v3773
  %v3775 = vpop.f32.mrf.mxu0
  %v3776 = vadd.f32 0.0, %v3775
  %3777 = vmatmul.bf16.gmra.mxu0 %v3539
  %v3778 = vpop.f32.mrf.mxu0
  %v3779 = vadd.f32 0.0, %v3778
  %v3780 = vpop.f32.mrf.mxu0
  %v3781 = vadd.f32 0.0, %v3780
  %3782 = vmatmul.bf16.gmra.mxu0 %v3541
  %v3783 = vpop.f32.mrf.mxu0
  %v3784 = vadd.f32 0.0, %v3783
  %v3785 = vpop.f32.mrf.mxu0
  %v3786 = vadd.f32 0.0, %v3785
  %3787 = vmatmul.bf16.gmra.mxu0 %v3543
  %v3788 = vpop.f32.mrf.mxu0
  %v3789 = vadd.f32 0.0, %v3788
  %v3790 = vpop.f32.mrf.mxu0
  %3791 = vdwg.mxu0
  %3792 = vmatpush.bf16.msra.mxu0 0
  %3793 = vmatpush.bf16.msra.mxu0 %v3706
  %3794 = vmatpush.bf16.msra.mxu0 %v3659
  %3795 = vmatpush.bf16.msra.mxu0 %v3657
  %3796 = vmatpush.bf16.msra.mxu0 %v3655
  %3797 = vmatpush.bf16.msra.mxu0 %v3653
  %3798 = vmatpush.bf16.msra.mxu0 %v3651
  %3799 = vmatpush.bf16.msra.mxu0 %v3649
  %3800 = vmatmul.bf16.gmra.mxu0 %v3691
  %v3801 = vpop.f32.mrf.mxu0
  %v3802 = vadd.f32 %v3774, %v3801
  %v3803 = vpop.f32.mrf.mxu0
  %v3804 = vadd.f32 %v3776, %v3803
  %3805 = vmatmul.bf16.gmra.mxu0 %v3694
  %v3806 = vpop.f32.mrf.mxu0
  %v3807 = vadd.f32 %v3779, %v3806
  %v3808 = vpop.f32.mrf.mxu0
  %v3809 = vadd.f32 %v3781, %v3808
  %3810 = vmatmul.bf16.gmra.mxu0 %v3697
  %v3811 = vpop.f32.mrf.mxu0
  %v3812 = vadd.f32 %v3784, %v3811
  %v3813 = vpop.f32.mrf.mxu0
  %v3814 = vadd.f32 %v3786, %v3813
  %3815 = vmatmul.bf16.gmra.mxu0 %v3700
  %v3816 = vpop.f32.mrf.mxu0
  %v3817 = vadd.f32 %v3789, %v3816
  %v3818 = vpop.f32.mrf.mxu0
  %3819 = vdwg.mxu0
  %v3820 = vadd.f32 %v3339, %v3746
  %v3821 = vadd.f32 %v3395, %v3802
  %v3822 = vadd.f32 %v3341, %v3748
  %v3823 = vadd.f32 %v3397, %v3804
  %v3824 = vadd.f32 %v3344, %v3751
  %v3825 = vadd.f32 %v3400, %v3807
  %v3826 = vadd.f32 %v3346, %v3753
  %v3827 = vadd.f32 %v3402, %v3809
  %v3828 = vadd.f32 %v3349, %v3756
  %v3829 = vadd.f32 %v3405, %v3812
  %v3830 = vadd.f32 %v3351, %v3758
  %v3831 = vadd.f32 %v3407, %v3814
  %v3832 = vadd.f32 %v3354, %v3761
  %v3833 = vadd.f32 %v3410, %v3817
  %s3834 = scalar_lea.vmem %s11, 84
  %v3835 = vld [vmem:[%s3834] sm:$0xf]
  %v3836 = vld [vmem:[%s3834 + $0x4] sm:$0xf]
  %v3837 = vld [vmem:[%s3834 + $0x8] sm:$0xf]
  %v3838 = vld [vmem:[%s3834 + $0xc] sm:$0xf]
  %v3839 = vld [vmem:[%s3834 + $0x10] sm:$0xf]
  %v3840 = vld [vmem:[%s3834 + $0x14] sm:$0xf]
  %v3841 = vld [vmem:[%s3834 + $0x18] sm:$0x3]
  %v3849 = vunpack.c.l.b16 %v3835
  %v3850 = vunpack.c.l.b16 %v3836
  %v3851 = vunpack.c.l.b16 %v3837
  %v3852 = vunpack.c.l.b16 %v3838
  %v3853 = vunpack.c.l.b16 %v3839
  %v3854 = vunpack.c.l.b16 %v3840
  %v3855 = vunpack.c.l.b16 %v3841
  %v3856 = vpack.c.b16 %v3850, %v3849
  %v3857 = vpack.c.b16 %v3852, %v3851
  %v3858 = vpack.c.b16 %v3854, %v3853
  %v3859 = vpack.c.b16 %v3855, %v3855
  %v3861 = vsel %vm2616, %v3856, 0
  %v3864 = vsel %vm2616, %v3857, 0
  %v3867 = vsel %vm2616, %v3858, 0
  %v3870 = vsel %vm2616, %v3859, 0
  %3872 = vmatpush.bf16.msra.mxu0 %v2631
  %3873 = vmatpush.bf16.msra.mxu0 %v2587
  %3874 = vmatpush.bf16.msra.mxu0 %v2585
  %3875 = vmatpush.bf16.msra.mxu0 %v2583
  %3876 = vmatpush.bf16.msra.mxu0 %v2581
  %3877 = vmatpush.bf16.msra.mxu0 %v2579
  %3878 = vmatpush.bf16.msra.mxu0 %v2577
  %3879 = vmatpush.bf16.msra.mxu0 %v2575
  %3880 = vmatmul.bf16.gmra.mxu0 %v3861
  %v3881 = vpop.f32.mrf.mxu0
  %v3882 = vadd.f32 0.0, %v3881
  %v3883 = vpop.f32.mrf.mxu0
  %v3884 = vadd.f32 0.0, %v3883
  %3885 = vmatmul.bf16.gmra.mxu0 %v3864
  %v3886 = vpop.f32.mrf.mxu0
  %v3887 = vadd.f32 0.0, %v3886
  %v3888 = vpop.f32.mrf.mxu0
  %v3889 = vadd.f32 0.0, %v3888
  %3890 = vmatmul.bf16.gmra.mxu0 %v3867
  %v3891 = vpop.f32.mrf.mxu0
  %v3892 = vadd.f32 0.0, %v3891
  %v3893 = vpop.f32.mrf.mxu0
  %v3894 = vadd.f32 0.0, %v3893
  %3895 = vmatmul.bf16.gmra.mxu0 %v3870
  %v3896 = vpop.f32.mrf.mxu0
  %v3897 = vadd.f32 0.0, %v3896
  %v3898 = vpop.f32.mrf.mxu0
  %3899 = vdwg.mxu0
  %3900 = vmatpush.bf16.msra.mxu0 %v2634
  %3901 = vmatpush.bf16.msra.mxu0 %v2588
  %3902 = vmatpush.bf16.msra.mxu0 %v2586
  %3903 = vmatpush.bf16.msra.mxu0 %v2584
  %3904 = vmatpush.bf16.msra.mxu0 %v2582
  %3905 = vmatpush.bf16.msra.mxu0 %v2580
  %3906 = vmatpush.bf16.msra.mxu0 %v2578
  %3907 = vmatpush.bf16.msra.mxu0 %v2576
  %3908 = vmatmul.bf16.gmra.mxu0 %v3861
  %v3909 = vpop.f32.mrf.mxu0
  %v3910 = vadd.f32 0.0, %v3909
  %v3911 = vpop.f32.mrf.mxu0
  %v3912 = vadd.f32 0.0, %v3911
  %3913 = vmatmul.bf16.gmra.mxu0 %v3864
  %v3914 = vpop.f32.mrf.mxu0
  %v3915 = vadd.f32 0.0, %v3914
  %v3916 = vpop.f32.mrf.mxu0
  %v3917 = vadd.f32 0.0, %v3916
  %3918 = vmatmul.bf16.gmra.mxu0 %v3867
  %v3919 = vpop.f32.mrf.mxu0
  %v3920 = vadd.f32 0.0, %v3919
  %v3921 = vpop.f32.mrf.mxu0
  %v3922 = vadd.f32 0.0, %v3921
  %3923 = vmatmul.bf16.gmra.mxu0 %v3870
  %v3924 = vpop.f32.mrf.mxu0
  %v3925 = vadd.f32 0.0, %v3924
  %v3926 = vpop.f32.mrf.mxu0
  %3927 = vdwg.mxu0
  %s3928 = scalar_lea.vmem %s7, 696
  %v3929 = vld [vmem:[%s3928] sm:$0xff]
  %v3930 = vld [vmem:[%s3928 + $0x8] sm:$0xff]
  %v3931 = vld [vmem:[%s3928 + $0x10] sm:$0xff]
  %v3932 = vld [vmem:[%s3928 + $0x18] sm:$0xff]
  %v3933 = vld [vmem:[%s3928 + $0x20] sm:$0xff]
  %v3934 = vld [vmem:[%s3928 + $0x28] sm:$0xff]
  %v3935 = vld [vmem:[%s3928 + $0x30] sm:$0xff]
  %v3936 = vld [vmem:[%s3928 + $0x38] sm:$0xff]
  %v3937 = vld [vmem:[%s3928 + $0x40] sm:$0xff]
  %v3938 = vld [vmem:[%s3928 + $0x48] sm:$0xff]
  %v3939 = vld [vmem:[%s3928 + $0x50] sm:$0xff]
  %v3940 = vld [vmem:[%s3928 + $0x58] sm:$0xff]
  %v3941 = vld [vmem:[%s3928 + $0x60] sm:$0xff]
  %v3942 = vld [vmem:[%s3928 + $0x68] sm:$0xff]
  %v3943 = vld [vmem:[%s3928 + $0x70] sm:$0xff]
  %v3944 = vld [vmem:[%s3928 + $0x78] sm:$0xff]
  %v3945 = vld [vmem:[%s3928 + $0x80] sm:$0xff]
  %v3946 = vld [vmem:[%s3928 + $0x88] sm:$0xff]
  %v3947 = vld [vmem:[%s3928 + $0x90] sm:$0xff]
  %v3948 = vld [vmem:[%s3928 + $0x98] sm:$0xff]
  %v3949 = vld [vmem:[%s3928 + $0xa0] sm:$0xff]
  %v3950 = vld [vmem:[%s3928 + $0xa8] sm:$0xff]
  %v3951 = vld [vmem:[%s3928 + $0xb0] sm:$0xff]
  %v3952 = vld [vmem:[%s3928 + $0xb8] sm:$0xff]
  %v3953 = vld [vmem:[%s3928 + $0xc0] sm:$0xff]
  %v3954 = vld [vmem:[%s3928 + $0xc8] sm:$0xff]
  %v3955 = vld [vmem:[%s3928 + $0xd0] sm:$0xff]
  %v3956 = vld [vmem:[%s3928 + $0xd8] sm:$0xff]
  %v3957 = vld [vmem:[%s3928 + $0xe0] sm:$0xff]
  %v3958 = vpack.c.bf16 %v3884, %v3882
  %v3959 = vpack.c.bf16 %v3912, %v3910
  %v3960 = vpack.c.bf16 %v3889, %v3887
  %v3961 = vpack.c.bf16 %v3917, %v3915
  %v3962 = vpack.c.bf16 %v3894, %v3892
  %v3963 = vpack.c.bf16 %v3922, %v3920
  %v3964 = vpack.c.bf16 %v3897, %v3897
  %v3965 = vpack.c.bf16 %v3925, %v3925
  %v3995 = vunpack.c.l.b16 %v3929
  %v3996 = vunpack.c.h.b16 %v3929
  %v3997 = vunpack.c.l.b16 %v3930
  %v3998 = vunpack.c.h.b16 %v3930
  %v3999 = vunpack.c.l.b16 %v3931
  %v4000 = vunpack.c.h.b16 %v3931
  %v4001 = vunpack.c.l.b16 %v3932
  %v4002 = vunpack.c.h.b16 %v3932
  %v4003 = vunpack.c.l.b16 %v3933
  %v4004 = vunpack.c.h.b16 %v3933
  %v4005 = vunpack.c.l.b16 %v3934
  %v4006 = vunpack.c.h.b16 %v3934
  %v4007 = vunpack.c.l.b16 %v3935
  %v4008 = vunpack.c.h.b16 %v3935
  %v4009 = vunpack.c.l.b16 %v3936
  %v4010 = vunpack.c.h.b16 %v3936
  %v4011 = vunpack.c.l.b16 %v3937
  %v4012 = vunpack.c.h.b16 %v3937
  %v4013 = vunpack.c.l.b16 %v3938
  %v4014 = vunpack.c.h.b16 %v3938
  %v4015 = vunpack.c.l.b16 %v3939
  %v4016 = vunpack.c.h.b16 %v3939
  %v4017 = vunpack.c.l.b16 %v3940
  %v4018 = vunpack.c.h.b16 %v3940
  %v4019 = vunpack.c.l.b16 %v3941
  %v4020 = vunpack.c.h.b16 %v3941
  %v4021 = vunpack.c.l.b16 %v3942
  %v4022 = vunpack.c.h.b16 %v3942
  %v4023 = vunpack.c.l.b16 %v3943
  %v4024 = vunpack.c.h.b16 %v3943
  %v4025 = vunpack.c.l.b16 %v3944
  %v4026 = vunpack.c.h.b16 %v3944
  %v4027 = vunpack.c.l.b16 %v3945
  %v4028 = vunpack.c.h.b16 %v3945
  %v4029 = vunpack.c.l.b16 %v3946
  %v4030 = vunpack.c.h.b16 %v3946
  %v4031 = vunpack.c.l.b16 %v3947
  %v4032 = vunpack.c.h.b16 %v3947
  %v4033 = vunpack.c.l.b16 %v3948
  %v4034 = vunpack.c.h.b16 %v3948
  %v4035 = vunpack.c.l.b16 %v3949
  %v4036 = vunpack.c.h.b16 %v3949
  %v4037 = vunpack.c.l.b16 %v3950
  %v4038 = vunpack.c.h.b16 %v3950
  %v4039 = vunpack.c.l.b16 %v3951
  %v4040 = vunpack.c.h.b16 %v3951
  %v4041 = vunpack.c.l.b16 %v3952
  %v4042 = vunpack.c.h.b16 %v3952
  %v4043 = vunpack.c.l.b16 %v3953
  %v4044 = vunpack.c.h.b16 %v3953
  %v4045 = vunpack.c.l.b16 %v3954
  %v4046 = vunpack.c.h.b16 %v3954
  %v4047 = vunpack.c.l.b16 %v3955
  %v4048 = vunpack.c.h.b16 %v3955
  %v4049 = vunpack.c.l.b16 %v3956
  %v4050 = vunpack.c.h.b16 %v3956
  %v4051 = vunpack.c.l.b16 %v3957
  %v4052 = vunpack.c.h.b16 %v3957
  %v4053 = vpack.c.b16 %v3997, %v3995
  %v4054 = vpack.c.b16 %v3998, %v3996
  %v4055 = vpack.c.b16 %v4001, %v3999
  %v4056 = vpack.c.b16 %v4002, %v4000
  %v4057 = vpack.c.b16 %v4005, %v4003
  %v4058 = vpack.c.b16 %v4006, %v4004
  %v4059 = vpack.c.b16 %v4009, %v4007
  %v4060 = vpack.c.b16 %v4010, %v4008
  %v4061 = vpack.c.b16 %v4013, %v4011
  %v4062 = vpack.c.b16 %v4014, %v4012
  %v4063 = vpack.c.b16 %v4017, %v4015
  %v4064 = vpack.c.b16 %v4018, %v4016
  %v4065 = vpack.c.b16 %v4021, %v4019
  %v4066 = vpack.c.b16 %v4022, %v4020
  %v4067 = vpack.c.b16 %v4025, %v4023
  %v4068 = vpack.c.b16 %v4026, %v4024
  %v4069 = vpack.c.b16 %v4029, %v4027
  %v4070 = vpack.c.b16 %v4030, %v4028
  %v4071 = vpack.c.b16 %v4033, %v4031
  %v4072 = vpack.c.b16 %v4034, %v4032
  %v4073 = vpack.c.b16 %v4037, %v4035
  %v4074 = vpack.c.b16 %v4038, %v4036
  %v4075 = vpack.c.b16 %v4041, %v4039
  %v4076 = vpack.c.b16 %v4042, %v4040
  %v4077 = vpack.c.b16 %v4045, %v4043
  %v4078 = vpack.c.b16 %v4046, %v4044
  %v4079 = vpack.c.b16 %v4049, %v4047
  %v4080 = vpack.c.b16 %v4050, %v4048
  %v4081 = vpack.c.b16 %v4051, %v4051
  %v4082 = vpack.c.b16 %v4052, %v4052
  %v4112 = vsel %vm3006, %v3959, 0
  %v4115 = vsel %vm3006, %v3961, 0
  %v4118 = vsel %vm3006, %v3963, 0
  %v4121 = vsel %vm3006, %v3965, 0
  %v4124 = vsel %vm3019, %v4081, 0
  %v4127 = vsel %vm3019, %v4082, 0
  %4129 = vmatpush.bf16.msra.mxu0 %v4067
  %4130 = vmatpush.bf16.msra.mxu0 %v4065
  %4131 = vmatpush.bf16.msra.mxu0 %v4063
  %4132 = vmatpush.bf16.msra.mxu0 %v4061
  %4133 = vmatpush.bf16.msra.mxu0 %v4059
  %4134 = vmatpush.bf16.msra.mxu0 %v4057
  %4135 = vmatpush.bf16.msra.mxu0 %v4055
  %4136 = vmatpush.bf16.msra.mxu0 %v4053
  %4137 = vmatmul.bf16.gmra.mxu0 %v3958
  %v4138 = vpop.f32.mrf.mxu0
  %v4139 = vadd.f32 0.0, %v4138
  %v4140 = vpop.f32.mrf.mxu0
  %v4141 = vadd.f32 0.0, %v4140
  %4142 = vmatmul.bf16.gmra.mxu0 %v3960
  %v4143 = vpop.f32.mrf.mxu0
  %v4144 = vadd.f32 0.0, %v4143
  %v4145 = vpop.f32.mrf.mxu0
  %v4146 = vadd.f32 0.0, %v4145
  %4147 = vmatmul.bf16.gmra.mxu0 %v3962
  %v4148 = vpop.f32.mrf.mxu0
  %v4149 = vadd.f32 0.0, %v4148
  %v4150 = vpop.f32.mrf.mxu0
  %v4151 = vadd.f32 0.0, %v4150
  %4152 = vmatmul.bf16.gmra.mxu0 %v3964
  %v4153 = vpop.f32.mrf.mxu0
  %v4154 = vadd.f32 0.0, %v4153
  %v4155 = vpop.f32.mrf.mxu0
  %4156 = vdwg.mxu0
  %4157 = vmatpush.bf16.msra.mxu0 0
  %4158 = vmatpush.bf16.msra.mxu0 %v4124
  %4159 = vmatpush.bf16.msra.mxu0 %v4079
  %4160 = vmatpush.bf16.msra.mxu0 %v4077
  %4161 = vmatpush.bf16.msra.mxu0 %v4075
  %4162 = vmatpush.bf16.msra.mxu0 %v4073
  %4163 = vmatpush.bf16.msra.mxu0 %v4071
  %4164 = vmatpush.bf16.msra.mxu0 %v4069
  %4165 = vmatmul.bf16.gmra.mxu0 %v4112
  %v4166 = vpop.f32.mrf.mxu0
  %v4167 = vadd.f32 %v4139, %v4166
  %v4168 = vpop.f32.mrf.mxu0
  %v4169 = vadd.f32 %v4141, %v4168
  %4170 = vmatmul.bf16.gmra.mxu0 %v4115
  %v4171 = vpop.f32.mrf.mxu0
  %v4172 = vadd.f32 %v4144, %v4171
  %v4173 = vpop.f32.mrf.mxu0
  %v4174 = vadd.f32 %v4146, %v4173
  %4175 = vmatmul.bf16.gmra.mxu0 %v4118
  %v4176 = vpop.f32.mrf.mxu0
  %v4177 = vadd.f32 %v4149, %v4176
  %v4178 = vpop.f32.mrf.mxu0
  %v4179 = vadd.f32 %v4151, %v4178
  %4180 = vmatmul.bf16.gmra.mxu0 %v4121
  %v4181 = vpop.f32.mrf.mxu0
  %v4182 = vadd.f32 %v4154, %v4181
  %v4183 = vpop.f32.mrf.mxu0
  %4184 = vdwg.mxu0
  %4185 = vmatpush.bf16.msra.mxu0 %v4068
  %4186 = vmatpush.bf16.msra.mxu0 %v4066
  %4187 = vmatpush.bf16.msra.mxu0 %v4064
  %4188 = vmatpush.bf16.msra.mxu0 %v4062
  %4189 = vmatpush.bf16.msra.mxu0 %v4060
  %4190 = vmatpush.bf16.msra.mxu0 %v4058
  %4191 = vmatpush.bf16.msra.mxu0 %v4056
  %4192 = vmatpush.bf16.msra.mxu0 %v4054
  %4193 = vmatmul.bf16.gmra.mxu0 %v3958
  %v4194 = vpop.f32.mrf.mxu0
  %v4195 = vadd.f32 0.0, %v4194
  %v4196 = vpop.f32.mrf.mxu0
  %v4197 = vadd.f32 0.0, %v4196
  %4198 = vmatmul.bf16.gmra.mxu0 %v3960
  %v4199 = vpop.f32.mrf.mxu0
  %v4200 = vadd.f32 0.0, %v4199
  %v4201 = vpop.f32.mrf.mxu0
  %v4202 = vadd.f32 0.0, %v4201
  %4203 = vmatmul.bf16.gmra.mxu0 %v3962
  %v4204 = vpop.f32.mrf.mxu0
  %v4205 = vadd.f32 0.0, %v4204
  %v4206 = vpop.f32.mrf.mxu0
  %v4207 = vadd.f32 0.0, %v4206
  %4208 = vmatmul.bf16.gmra.mxu0 %v3964
  %v4209 = vpop.f32.mrf.mxu0
  %v4210 = vadd.f32 0.0, %v4209
  %v4211 = vpop.f32.mrf.mxu0
  %4212 = vdwg.mxu0
  %4213 = vmatpush.bf16.msra.mxu0 0
  %4214 = vmatpush.bf16.msra.mxu0 %v4127
  %4215 = vmatpush.bf16.msra.mxu0 %v4080
  %4216 = vmatpush.bf16.msra.mxu0 %v4078
  %4217 = vmatpush.bf16.msra.mxu0 %v4076
  %4218 = vmatpush.bf16.msra.mxu0 %v4074
  %4219 = vmatpush.bf16.msra.mxu0 %v4072
  %4220 = vmatpush.bf16.msra.mxu0 %v4070
  %4221 = vmatmul.bf16.gmra.mxu0 %v4112
  %v4222 = vpop.f32.mrf.mxu0
  %v4223 = vadd.f32 %v4195, %v4222
  %v4224 = vpop.f32.mrf.mxu0
  %v4225 = vadd.f32 %v4197, %v4224
  %4226 = vmatmul.bf16.gmra.mxu0 %v4115
  %v4227 = vpop.f32.mrf.mxu0
  %v4228 = vadd.f32 %v4200, %v4227
  %v4229 = vpop.f32.mrf.mxu0
  %v4230 = vadd.f32 %v4202, %v4229
  %4231 = vmatmul.bf16.gmra.mxu0 %v4118
  %v4232 = vpop.f32.mrf.mxu0
  %v4233 = vadd.f32 %v4205, %v4232
  %v4234 = vpop.f32.mrf.mxu0
  %v4235 = vadd.f32 %v4207, %v4234
  %4236 = vmatmul.bf16.gmra.mxu0 %v4121
  %v4237 = vpop.f32.mrf.mxu0
  %v4238 = vadd.f32 %v4210, %v4237
  %v4239 = vpop.f32.mrf.mxu0
  %4240 = vdwg.mxu0
  %v4241 = vadd.f32 %v3820, %v4167
  %v4242 = vadd.f32 %v3821, %v4223
  %v4243 = vadd.f32 %v3822, %v4169
  %v4244 = vadd.f32 %v3823, %v4225
  %v4245 = vadd.f32 %v3824, %v4172
  %v4246 = vadd.f32 %v3825, %v4228
  %v4247 = vadd.f32 %v3826, %v4174
  %v4248 = vadd.f32 %v3827, %v4230
  %v4249 = vadd.f32 %v3828, %v4177
  %v4250 = vadd.f32 %v3829, %v4233
  %v4251 = vadd.f32 %v3830, %v4179
  %v4252 = vadd.f32 %v3831, %v4235
  %v4253 = vadd.f32 %v3832, %v4182
  %v4254 = vadd.f32 %v3833, %v4238
  %s4255 = scalar_lea.vmem %s11, 112
  %v4256 = vld [vmem:[%s4255] sm:$0xf]
  %v4257 = vld [vmem:[%s4255 + $0x4] sm:$0xf]
  %v4258 = vld [vmem:[%s4255 + $0x8] sm:$0xf]
  %v4259 = vld [vmem:[%s4255 + $0xc] sm:$0xf]
  %v4260 = vld [vmem:[%s4255 + $0x10] sm:$0xf]
  %v4261 = vld [vmem:[%s4255 + $0x14] sm:$0xf]
  %v4262 = vld [vmem:[%s4255 + $0x18] sm:$0x3]
  %v4270 = vunpack.c.l.b16 %v4256
  %v4271 = vunpack.c.l.b16 %v4257
  %v4272 = vunpack.c.l.b16 %v4258
  %v4273 = vunpack.c.l.b16 %v4259
  %v4274 = vunpack.c.l.b16 %v4260
  %v4275 = vunpack.c.l.b16 %v4261
  %v4276 = vunpack.c.l.b16 %v4262
  %v4277 = vpack.c.b16 %v4271, %v4270
  %v4278 = vpack.c.b16 %v4273, %v4272
  %v4279 = vpack.c.b16 %v4275, %v4274
  %v4280 = vpack.c.b16 %v4276, %v4276
  %v4282 = vsel %vm2616, %v4277, 0
  %v4285 = vsel %vm2616, %v4278, 0
  %v4288 = vsel %vm2616, %v4279, 0
  %v4291 = vsel %vm2616, %v4280, 0
  %4293 = vmatpush.bf16.msra.mxu0 %v2631
  %4294 = vmatpush.bf16.msra.mxu0 %v2587
  %4295 = vmatpush.bf16.msra.mxu0 %v2585
  %4296 = vmatpush.bf16.msra.mxu0 %v2583
  %4297 = vmatpush.bf16.msra.mxu0 %v2581
  %4298 = vmatpush.bf16.msra.mxu0 %v2579
  %4299 = vmatpush.bf16.msra.mxu0 %v2577
  %4300 = vmatpush.bf16.msra.mxu0 %v2575
  %4301 = vmatmul.bf16.gmra.mxu0 %v4282
  %v4302 = vpop.f32.mrf.mxu0
  %v4303 = vadd.f32 0.0, %v4302
  %v4304 = vpop.f32.mrf.mxu0
  %v4305 = vadd.f32 0.0, %v4304
  %4306 = vmatmul.bf16.gmra.mxu0 %v4285
  %v4307 = vpop.f32.mrf.mxu0
  %v4308 = vadd.f32 0.0, %v4307
  %v4309 = vpop.f32.mrf.mxu0
  %v4310 = vadd.f32 0.0, %v4309
  %4311 = vmatmul.bf16.gmra.mxu0 %v4288
  %v4312 = vpop.f32.mrf.mxu0
  %v4313 = vadd.f32 0.0, %v4312
  %v4314 = vpop.f32.mrf.mxu0
  %v4315 = vadd.f32 0.0, %v4314
  %4316 = vmatmul.bf16.gmra.mxu0 %v4291
  %v4317 = vpop.f32.mrf.mxu0
  %v4318 = vadd.f32 0.0, %v4317
  %v4319 = vpop.f32.mrf.mxu0
  %4320 = vdwg.mxu0
  %4321 = vmatpush.bf16.msra.mxu0 %v2634
  %4322 = vmatpush.bf16.msra.mxu0 %v2588
  %4323 = vmatpush.bf16.msra.mxu0 %v2586
  %4324 = vmatpush.bf16.msra.mxu0 %v2584
  %4325 = vmatpush.bf16.msra.mxu0 %v2582
  %4326 = vmatpush.bf16.msra.mxu0 %v2580
  %4327 = vmatpush.bf16.msra.mxu0 %v2578
  %4328 = vmatpush.bf16.msra.mxu0 %v2576
  %4329 = vmatmul.bf16.gmra.mxu0 %v4282
  %v4330 = vpop.f32.mrf.mxu0
  %v4331 = vadd.f32 0.0, %v4330
  %v4332 = vpop.f32.mrf.mxu0
  %v4333 = vadd.f32 0.0, %v4332
  %4334 = vmatmul.bf16.gmra.mxu0 %v4285
  %v4335 = vpop.f32.mrf.mxu0
  %v4336 = vadd.f32 0.0, %v4335
  %v4337 = vpop.f32.mrf.mxu0
  %v4338 = vadd.f32 0.0, %v4337
  %4339 = vmatmul.bf16.gmra.mxu0 %v4288
  %v4340 = vpop.f32.mrf.mxu0
  %v4341 = vadd.f32 0.0, %v4340
  %v4342 = vpop.f32.mrf.mxu0
  %v4343 = vadd.f32 0.0, %v4342
  %4344 = vmatmul.bf16.gmra.mxu0 %v4291
  %v4345 = vpop.f32.mrf.mxu0
  %v4346 = vadd.f32 0.0, %v4345
  %v4347 = vpop.f32.mrf.mxu0
  %4348 = vdwg.mxu0
  %s4349 = scalar_lea.vmem %s7, 928
  %v4350 = vld [vmem:[%s4349] sm:$0xff]
  %v4351 = vld [vmem:[%s4349 + $0x8] sm:$0xff]
  %v4352 = vld [vmem:[%s4349 + $0x10] sm:$0xff]
  %v4353 = vld [vmem:[%s4349 + $0x18] sm:$0xff]
  %v4354 = vld [vmem:[%s4349 + $0x20] sm:$0xff]
  %v4355 = vld [vmem:[%s4349 + $0x28] sm:$0xff]
  %v4356 = vld [vmem:[%s4349 + $0x30] sm:$0xff]
  %v4357 = vld [vmem:[%s4349 + $0x38] sm:$0xff]
  %v4358 = vld [vmem:[%s4349 + $0x40] sm:$0xff]
  %v4359 = vld [vmem:[%s4349 + $0x48] sm:$0xff]
  %v4360 = vld [vmem:[%s4349 + $0x50] sm:$0xff]
  %v4361 = vld [vmem:[%s4349 + $0x58] sm:$0xff]
  %v4362 = vld [vmem:[%s4349 + $0x60] sm:$0xff]
  %v4363 = vld [vmem:[%s4349 + $0x68] sm:$0xff]
  %v4364 = vld [vmem:[%s4349 + $0x70] sm:$0xff]
  %v4365 = vld [vmem:[%s4349 + $0x78] sm:$0xff]
  %v4366 = vld [vmem:[%s4349 + $0x80] sm:$0xff]
  %v4367 = vld [vmem:[%s4349 + $0x88] sm:$0xff]
  %v4368 = vld [vmem:[%s4349 + $0x90] sm:$0xff]
  %v4369 = vld [vmem:[%s4349 + $0x98] sm:$0xff]
  %v4370 = vld [vmem:[%s4349 + $0xa0] sm:$0xff]
  %v4371 = vld [vmem:[%s4349 + $0xa8] sm:$0xff]
  %v4372 = vld [vmem:[%s4349 + $0xb0] sm:$0xff]
  %v4373 = vld [vmem:[%s4349 + $0xb8] sm:$0xff]
  %v4374 = vld [vmem:[%s4349 + $0xc0] sm:$0xff]
  %v4375 = vld [vmem:[%s4349 + $0xc8] sm:$0xff]
  %v4376 = vld [vmem:[%s4349 + $0xd0] sm:$0xff]
  %v4377 = vld [vmem:[%s4349 + $0xd8] sm:$0xff]
  %v4378 = vld [vmem:[%s4349 + $0xe0] sm:$0xff]
  %v4379 = vpack.c.bf16 %v4305, %v4303
  %v4380 = vpack.c.bf16 %v4333, %v4331
  %v4381 = vpack.c.bf16 %v4310, %v4308
  %v4382 = vpack.c.bf16 %v4338, %v4336
  %v4383 = vpack.c.bf16 %v4315, %v4313
  %v4384 = vpack.c.bf16 %v4343, %v4341
  %v4385 = vpack.c.bf16 %v4318, %v4318
  %v4386 = vpack.c.bf16 %v4346, %v4346
  %v4416 = vunpack.c.l.b16 %v4350
  %v4417 = vunpack.c.h.b16 %v4350
  %v4418 = vunpack.c.l.b16 %v4351
  %v4419 = vunpack.c.h.b16 %v4351
  %v4420 = vunpack.c.l.b16 %v4352
  %v4421 = vunpack.c.h.b16 %v4352
  %v4422 = vunpack.c.l.b16 %v4353
  %v4423 = vunpack.c.h.b16 %v4353
  %v4424 = vunpack.c.l.b16 %v4354
  %v4425 = vunpack.c.h.b16 %v4354
  %v4426 = vunpack.c.l.b16 %v4355
  %v4427 = vunpack.c.h.b16 %v4355
  %v4428 = vunpack.c.l.b16 %v4356
  %v4429 = vunpack.c.h.b16 %v4356
  %v4430 = vunpack.c.l.b16 %v4357
  %v4431 = vunpack.c.h.b16 %v4357
  %v4432 = vunpack.c.l.b16 %v4358
  %v4433 = vunpack.c.h.b16 %v4358
  %v4434 = vunpack.c.l.b16 %v4359
  %v4435 = vunpack.c.h.b16 %v4359
  %v4436 = vunpack.c.l.b16 %v4360
  %v4437 = vunpack.c.h.b16 %v4360
  %v4438 = vunpack.c.l.b16 %v4361
  %v4439 = vunpack.c.h.b16 %v4361
  %v4440 = vunpack.c.l.b16 %v4362
  %v4441 = vunpack.c.h.b16 %v4362
  %v4442 = vunpack.c.l.b16 %v4363
  %v4443 = vunpack.c.h.b16 %v4363
  %v4444 = vunpack.c.l.b16 %v4364
  %v4445 = vunpack.c.h.b16 %v4364
  %v4446 = vunpack.c.l.b16 %v4365
  %v4447 = vunpack.c.h.b16 %v4365
  %v4448 = vunpack.c.l.b16 %v4366
  %v4449 = vunpack.c.h.b16 %v4366
  %v4450 = vunpack.c.l.b16 %v4367
  %v4451 = vunpack.c.h.b16 %v4367
  %v4452 = vunpack.c.l.b16 %v4368
  %v4453 = vunpack.c.h.b16 %v4368
  %v4454 = vunpack.c.l.b16 %v4369
  %v4455 = vunpack.c.h.b16 %v4369
  %v4456 = vunpack.c.l.b16 %v4370
  %v4457 = vunpack.c.h.b16 %v4370
  %v4458 = vunpack.c.l.b16 %v4371
  %v4459 = vunpack.c.h.b16 %v4371
  %v4460 = vunpack.c.l.b16 %v4372
  %v4461 = vunpack.c.h.b16 %v4372
  %v4462 = vunpack.c.l.b16 %v4373
  %v4463 = vunpack.c.h.b16 %v4373
  %v4464 = vunpack.c.l.b16 %v4374
  %v4465 = vunpack.c.h.b16 %v4374
  %v4466 = vunpack.c.l.b16 %v4375
  %v4467 = vunpack.c.h.b16 %v4375
  %v4468 = vunpack.c.l.b16 %v4376
  %v4469 = vunpack.c.h.b16 %v4376
  %v4470 = vunpack.c.l.b16 %v4377
  %v4471 = vunpack.c.h.b16 %v4377
  %v4472 = vunpack.c.l.b16 %v4378
  %v4473 = vunpack.c.h.b16 %v4378
  %v4474 = vpack.c.b16 %v4418, %v4416
  %v4475 = vpack.c.b16 %v4419, %v4417
  %v4476 = vpack.c.b16 %v4422, %v4420
  %v4477 = vpack.c.b16 %v4423, %v4421
  %v4478 = vpack.c.b16 %v4426, %v4424
  %v4479 = vpack.c.b16 %v4427, %v4425
  %v4480 = vpack.c.b16 %v4430, %v4428
  %v4481 = vpack.c.b16 %v4431, %v4429
  %v4482 = vpack.c.b16 %v4434, %v4432
  %v4483 = vpack.c.b16 %v4435, %v4433
  %v4484 = vpack.c.b16 %v4438, %v4436
  %v4485 = vpack.c.b16 %v4439, %v4437
  %v4486 = vpack.c.b16 %v4442, %v4440
  %v4487 = vpack.c.b16 %v4443, %v4441
  %v4488 = vpack.c.b16 %v4446, %v4444
  %v4489 = vpack.c.b16 %v4447, %v4445
  %v4490 = vpack.c.b16 %v4450, %v4448
  %v4491 = vpack.c.b16 %v4451, %v4449
  %v4492 = vpack.c.b16 %v4454, %v4452
  %v4493 = vpack.c.b16 %v4455, %v4453
  %v4494 = vpack.c.b16 %v4458, %v4456
  %v4495 = vpack.c.b16 %v4459, %v4457
  %v4496 = vpack.c.b16 %v4462, %v4460
  %v4497 = vpack.c.b16 %v4463, %v4461
  %v4498 = vpack.c.b16 %v4466, %v4464
  %v4499 = vpack.c.b16 %v4467, %v4465
  %v4500 = vpack.c.b16 %v4470, %v4468
  %v4501 = vpack.c.b16 %v4471, %v4469
  %v4502 = vpack.c.b16 %v4472, %v4472
  %v4503 = vpack.c.b16 %v4473, %v4473
  %v4533 = vsel %vm3006, %v4380, 0
  %v4536 = vsel %vm3006, %v4382, 0
  %v4539 = vsel %vm3006, %v4384, 0
  %v4542 = vsel %vm3006, %v4386, 0
  %v4545 = vsel %vm3019, %v4502, 0
  %v4548 = vsel %vm3019, %v4503, 0
  %4550 = vmatpush.bf16.msra.mxu0 %v4488
  %4551 = vmatpush.bf16.msra.mxu0 %v4486
  %4552 = vmatpush.bf16.msra.mxu0 %v4484
  %4553 = vmatpush.bf16.msra.mxu0 %v4482
  %4554 = vmatpush.bf16.msra.mxu0 %v4480
  %4555 = vmatpush.bf16.msra.mxu0 %v4478
  %4556 = vmatpush.bf16.msra.mxu0 %v4476
  %4557 = vmatpush.bf16.msra.mxu0 %v4474
  %4558 = vmatmul.bf16.gmra.mxu0 %v4379
  %v4559 = vpop.f32.mrf.mxu0
  %v4560 = vadd.f32 0.0, %v4559
  %v4561 = vpop.f32.mrf.mxu0
  %v4562 = vadd.f32 0.0, %v4561
  %4563 = vmatmul.bf16.gmra.mxu0 %v4381
  %v4564 = vpop.f32.mrf.mxu0
  %v4565 = vadd.f32 0.0, %v4564
  %v4566 = vpop.f32.mrf.mxu0
  %v4567 = vadd.f32 0.0, %v4566
  %4568 = vmatmul.bf16.gmra.mxu0 %v4383
  %v4569 = vpop.f32.mrf.mxu0
  %v4570 = vadd.f32 0.0, %v4569
  %v4571 = vpop.f32.mrf.mxu0
  %v4572 = vadd.f32 0.0, %v4571
  %4573 = vmatmul.bf16.gmra.mxu0 %v4385
  %v4574 = vpop.f32.mrf.mxu0
  %v4575 = vadd.f32 0.0, %v4574
  %v4576 = vpop.f32.mrf.mxu0
  %4577 = vdwg.mxu0
  %4578 = vmatpush.bf16.msra.mxu0 0
  %4579 = vmatpush.bf16.msra.mxu0 %v4545
  %4580 = vmatpush.bf16.msra.mxu0 %v4500
  %4581 = vmatpush.bf16.msra.mxu0 %v4498
  %4582 = vmatpush.bf16.msra.mxu0 %v4496
  %4583 = vmatpush.bf16.msra.mxu0 %v4494
  %4584 = vmatpush.bf16.msra.mxu0 %v4492
  %4585 = vmatpush.bf16.msra.mxu0 %v4490
  %4586 = vmatmul.bf16.gmra.mxu0 %v4533
  %v4587 = vpop.f32.mrf.mxu0
  %v4588 = vadd.f32 %v4560, %v4587
  %v4589 = vpop.f32.mrf.mxu0
  %v4590 = vadd.f32 %v4562, %v4589
  %4591 = vmatmul.bf16.gmra.mxu0 %v4536
  %v4592 = vpop.f32.mrf.mxu0
  %v4593 = vadd.f32 %v4565, %v4592
  %v4594 = vpop.f32.mrf.mxu0
  %v4595 = vadd.f32 %v4567, %v4594
  %4596 = vmatmul.bf16.gmra.mxu0 %v4539
  %v4597 = vpop.f32.mrf.mxu0
  %v4598 = vadd.f32 %v4570, %v4597
  %v4599 = vpop.f32.mrf.mxu0
  %v4600 = vadd.f32 %v4572, %v4599
  %4601 = vmatmul.bf16.gmra.mxu0 %v4542
  %v4602 = vpop.f32.mrf.mxu0
  %v4603 = vadd.f32 %v4575, %v4602
  %v4604 = vpop.f32.mrf.mxu0
  %4605 = vdwg.mxu0
  %4606 = vmatpush.bf16.msra.mxu0 %v4489
  %4607 = vmatpush.bf16.msra.mxu0 %v4487
  %4608 = vmatpush.bf16.msra.mxu0 %v4485
  %4609 = vmatpush.bf16.msra.mxu0 %v4483
  %4610 = vmatpush.bf16.msra.mxu0 %v4481
  %4611 = vmatpush.bf16.msra.mxu0 %v4479
  %4612 = vmatpush.bf16.msra.mxu0 %v4477
  %4613 = vmatpush.bf16.msra.mxu0 %v4475
  %4614 = vmatmul.bf16.gmra.mxu0 %v4379
  %v4615 = vpop.f32.mrf.mxu0
  %v4616 = vadd.f32 0.0, %v4615
  %v4617 = vpop.f32.mrf.mxu0
  %v4618 = vadd.f32 0.0, %v4617
  %4619 = vmatmul.bf16.gmra.mxu0 %v4381
  %v4620 = vpop.f32.mrf.mxu0
  %v4621 = vadd.f32 0.0, %v4620
  %v4622 = vpop.f32.mrf.mxu0
  %v4623 = vadd.f32 0.0, %v4622
  %4624 = vmatmul.bf16.gmra.mxu0 %v4383
  %v4625 = vpop.f32.mrf.mxu0
  %v4626 = vadd.f32 0.0, %v4625
  %v4627 = vpop.f32.mrf.mxu0
  %v4628 = vadd.f32 0.0, %v4627
  %4629 = vmatmul.bf16.gmra.mxu0 %v4385
  %v4630 = vpop.f32.mrf.mxu0
  %v4631 = vadd.f32 0.0, %v4630
  %v4632 = vpop.f32.mrf.mxu0
  %4633 = vdwg.mxu0
  %4634 = vmatpush.bf16.msra.mxu0 0
  %4635 = vmatpush.bf16.msra.mxu0 %v4548
  %4636 = vmatpush.bf16.msra.mxu0 %v4501
  %4637 = vmatpush.bf16.msra.mxu0 %v4499
  %4638 = vmatpush.bf16.msra.mxu0 %v4497
  %4639 = vmatpush.bf16.msra.mxu0 %v4495
  %4640 = vmatpush.bf16.msra.mxu0 %v4493
  %4641 = vmatpush.bf16.msra.mxu0 %v4491
  %4642 = vmatmul.bf16.gmra.mxu0 %v4533
  %v4643 = vpop.f32.mrf.mxu0
  %v4644 = vadd.f32 %v4616, %v4643
  %v4645 = vpop.f32.mrf.mxu0
  %v4646 = vadd.f32 %v4618, %v4645
  %4647 = vmatmul.bf16.gmra.mxu0 %v4536
  %v4648 = vpop.f32.mrf.mxu0
  %v4649 = vadd.f32 %v4621, %v4648
  %v4650 = vpop.f32.mrf.mxu0
  %v4651 = vadd.f32 %v4623, %v4650
  %4652 = vmatmul.bf16.gmra.mxu0 %v4539
  %v4653 = vpop.f32.mrf.mxu0
  %v4654 = vadd.f32 %v4626, %v4653
  %v4655 = vpop.f32.mrf.mxu0
  %v4656 = vadd.f32 %v4628, %v4655
  %4657 = vmatmul.bf16.gmra.mxu0 %v4542
  %v4658 = vpop.f32.mrf.mxu0
  %v4659 = vadd.f32 %v4631, %v4658
  %v4660 = vpop.f32.mrf.mxu0
  %4661 = vdwg.mxu0
  %v4662 = vadd.f32 %v4241, %v4588
  %v4663 = vadd.f32 %v4242, %v4644
  %v4664 = vadd.f32 %v4243, %v4590
  %v4665 = vadd.f32 %v4244, %v4646
  %v4666 = vadd.f32 %v4245, %v4593
  %v4667 = vadd.f32 %v4246, %v4649
  %v4668 = vadd.f32 %v4247, %v4595
  %v4669 = vadd.f32 %v4248, %v4651
  %v4670 = vadd.f32 %v4249, %v4598
  %v4671 = vadd.f32 %v4250, %v4654
  %v4672 = vadd.f32 %v4251, %v4600
  %v4673 = vadd.f32 %v4252, %v4656
  %v4674 = vadd.f32 %v4253, %v4603
  %v4675 = vadd.f32 %v4254, %v4659
  %s4676 = scalar_lea.vmem %s11, 140
  %v4677 = vld [vmem:[%s4676] sm:$0xf]
  %v4678 = vld [vmem:[%s4676 + $0x4] sm:$0xf]
  %v4679 = vld [vmem:[%s4676 + $0x8] sm:$0xf]
  %v4680 = vld [vmem:[%s4676 + $0xc] sm:$0xf]
  %v4681 = vld [vmem:[%s4676 + $0x10] sm:$0xf]
  %v4682 = vld [vmem:[%s4676 + $0x14] sm:$0xf]
  %v4683 = vld [vmem:[%s4676 + $0x18] sm:$0x3]
  %v4691 = vunpack.c.l.b16 %v4677
  %v4692 = vunpack.c.l.b16 %v4678
  %v4693 = vunpack.c.l.b16 %v4679
  %v4694 = vunpack.c.l.b16 %v4680
  %v4695 = vunpack.c.l.b16 %v4681
  %v4696 = vunpack.c.l.b16 %v4682
  %v4697 = vunpack.c.l.b16 %v4683
  %v4698 = vpack.c.b16 %v4692, %v4691
  %v4699 = vpack.c.b16 %v4694, %v4693
  %v4700 = vpack.c.b16 %v4696, %v4695
  %v4701 = vpack.c.b16 %v4697, %v4697
  %v4703 = vsel %vm2616, %v4698, 0
  %v4706 = vsel %vm2616, %v4699, 0
  %v4709 = vsel %vm2616, %v4700, 0
  %v4712 = vsel %vm2616, %v4701, 0
  %4714 = vmatpush.bf16.msra.mxu0 %v2631
  %4715 = vmatpush.bf16.msra.mxu0 %v2587
  %4716 = vmatpush.bf16.msra.mxu0 %v2585
  %4717 = vmatpush.bf16.msra.mxu0 %v2583
  %4718 = vmatpush.bf16.msra.mxu0 %v2581
  %4719 = vmatpush.bf16.msra.mxu0 %v2579
  %4720 = vmatpush.bf16.msra.mxu0 %v2577
  %4721 = vmatpush.bf16.msra.mxu0 %v2575
  %4722 = vmatmul.bf16.gmra.mxu0 %v4703
  %v4723 = vpop.f32.mrf.mxu0
  %v4724 = vadd.f32 0.0, %v4723
  %v4725 = vpop.f32.mrf.mxu0
  %v4726 = vadd.f32 0.0, %v4725
  %4727 = vmatmul.bf16.gmra.mxu0 %v4706
  %v4728 = vpop.f32.mrf.mxu0
  %v4729 = vadd.f32 0.0, %v4728
  %v4730 = vpop.f32.mrf.mxu0
  %v4731 = vadd.f32 0.0, %v4730
  %4732 = vmatmul.bf16.gmra.mxu0 %v4709
  %v4733 = vpop.f32.mrf.mxu0
  %v4734 = vadd.f32 0.0, %v4733
  %v4735 = vpop.f32.mrf.mxu0
  %v4736 = vadd.f32 0.0, %v4735
  %4737 = vmatmul.bf16.gmra.mxu0 %v4712
  %v4738 = vpop.f32.mrf.mxu0
  %v4739 = vadd.f32 0.0, %v4738
  %v4740 = vpop.f32.mrf.mxu0
  %4741 = vdwg.mxu0
  %4742 = vmatpush.bf16.msra.mxu0 %v2634
  %4743 = vmatpush.bf16.msra.mxu0 %v2588
  %4744 = vmatpush.bf16.msra.mxu0 %v2586
  %4745 = vmatpush.bf16.msra.mxu0 %v2584
  %4746 = vmatpush.bf16.msra.mxu0 %v2582
  %4747 = vmatpush.bf16.msra.mxu0 %v2580
  %4748 = vmatpush.bf16.msra.mxu0 %v2578
  %4749 = vmatpush.bf16.msra.mxu0 %v2576
  %4750 = vmatmul.bf16.gmra.mxu0 %v4703
  %v4751 = vpop.f32.mrf.mxu0
  %v4752 = vadd.f32 0.0, %v4751
  %v4753 = vpop.f32.mrf.mxu0
  %v4754 = vadd.f32 0.0, %v4753
  %4755 = vmatmul.bf16.gmra.mxu0 %v4706
  %v4756 = vpop.f32.mrf.mxu0
  %v4757 = vadd.f32 0.0, %v4756
  %v4758 = vpop.f32.mrf.mxu0
  %v4759 = vadd.f32 0.0, %v4758
  %4760 = vmatmul.bf16.gmra.mxu0 %v4709
  %v4761 = vpop.f32.mrf.mxu0
  %v4762 = vadd.f32 0.0, %v4761
  %v4763 = vpop.f32.mrf.mxu0
  %v4764 = vadd.f32 0.0, %v4763
  %4765 = vmatmul.bf16.gmra.mxu0 %v4712
  %v4766 = vpop.f32.mrf.mxu0
  %v4767 = vadd.f32 0.0, %v4766
  %v4768 = vpop.f32.mrf.mxu0
  %4769 = vdwg.mxu0
  %s4770 = scalar_lea.vmem %s7, 1160
  %v4771 = vld [vmem:[%s4770] sm:$0xff]
  %v4772 = vld [vmem:[%s4770 + $0x8] sm:$0xff]
  %v4773 = vld [vmem:[%s4770 + $0x10] sm:$0xff]
  %v4774 = vld [vmem:[%s4770 + $0x18] sm:$0xff]
  %v4775 = vld [vmem:[%s4770 + $0x20] sm:$0xff]
  %v4776 = vld [vmem:[%s4770 + $0x28] sm:$0xff]
  %v4777 = vld [vmem:[%s4770 + $0x30] sm:$0xff]
  %v4778 = vld [vmem:[%s4770 + $0x38] sm:$0xff]
  %v4779 = vld [vmem:[%s4770 + $0x40] sm:$0xff]
  %v4780 = vld [vmem:[%s4770 + $0x48] sm:$0xff]
  %v4781 = vld [vmem:[%s4770 + $0x50] sm:$0xff]
  %v4782 = vld [vmem:[%s4770 + $0x58] sm:$0xff]
  %v4783 = vld [vmem:[%s4770 + $0x60] sm:$0xff]
  %v4784 = vld [vmem:[%s4770 + $0x68] sm:$0xff]
  %v4785 = vld [vmem:[%s4770 + $0x70] sm:$0xff]
  %v4786 = vld [vmem:[%s4770 + $0x78] sm:$0xff]
  %v4787 = vld [vmem:[%s4770 + $0x80] sm:$0xff]
  %v4788 = vld [vmem:[%s4770 + $0x88] sm:$0xff]
  %v4789 = vld [vmem:[%s4770 + $0x90] sm:$0xff]
  %v4790 = vld [vmem:[%s4770 + $0x98] sm:$0xff]
  %v4791 = vld [vmem:[%s4770 + $0xa0] sm:$0xff]
  %v4792 = vld [vmem:[%s4770 + $0xa8] sm:$0xff]
  %v4793 = vld [vmem:[%s4770 + $0xb0] sm:$0xff]
  %v4794 = vld [vmem:[%s4770 + $0xb8] sm:$0xff]
  %v4795 = vld [vmem:[%s4770 + $0xc0] sm:$0xff]
  %v4796 = vld [vmem:[%s4770 + $0xc8] sm:$0xff]
  %v4797 = vld [vmem:[%s4770 + $0xd0] sm:$0xff]
  %v4798 = vld [vmem:[%s4770 + $0xd8] sm:$0xff]
  %v4799 = vld [vmem:[%s4770 + $0xe0] sm:$0xff]
  %v4800 = vpack.c.bf16 %v4726, %v4724
  %v4801 = vpack.c.bf16 %v4754, %v4752
  %v4802 = vpack.c.bf16 %v4731, %v4729
  %v4803 = vpack.c.bf16 %v4759, %v4757
  %v4804 = vpack.c.bf16 %v4736, %v4734
  %v4805 = vpack.c.bf16 %v4764, %v4762
  %v4806 = vpack.c.bf16 %v4739, %v4739
  %v4807 = vpack.c.bf16 %v4767, %v4767
  %v4837 = vunpack.c.l.b16 %v4771
  %v4838 = vunpack.c.h.b16 %v4771
  %v4839 = vunpack.c.l.b16 %v4772
  %v4840 = vunpack.c.h.b16 %v4772
  %v4841 = vunpack.c.l.b16 %v4773
  %v4842 = vunpack.c.h.b16 %v4773
  %v4843 = vunpack.c.l.b16 %v4774
  %v4844 = vunpack.c.h.b16 %v4774
  %v4845 = vunpack.c.l.b16 %v4775
  %v4846 = vunpack.c.h.b16 %v4775
  %v4847 = vunpack.c.l.b16 %v4776
  %v4848 = vunpack.c.h.b16 %v4776
  %v4849 = vunpack.c.l.b16 %v4777
  %v4850 = vunpack.c.h.b16 %v4777
  %v4851 = vunpack.c.l.b16 %v4778
  %v4852 = vunpack.c.h.b16 %v4778
  %v4853 = vunpack.c.l.b16 %v4779
  %v4854 = vunpack.c.h.b16 %v4779
  %v4855 = vunpack.c.l.b16 %v4780
  %v4856 = vunpack.c.h.b16 %v4780
  %v4857 = vunpack.c.l.b16 %v4781
  %v4858 = vunpack.c.h.b16 %v4781
  %v4859 = vunpack.c.l.b16 %v4782
  %v4860 = vunpack.c.h.b16 %v4782
  %v4861 = vunpack.c.l.b16 %v4783
  %v4862 = vunpack.c.h.b16 %v4783
  %v4863 = vunpack.c.l.b16 %v4784
  %v4864 = vunpack.c.h.b16 %v4784
  %v4865 = vunpack.c.l.b16 %v4785
  %v4866 = vunpack.c.h.b16 %v4785
  %v4867 = vunpack.c.l.b16 %v4786
  %v4868 = vunpack.c.h.b16 %v4786
  %v4869 = vunpack.c.l.b16 %v4787
  %v4870 = vunpack.c.h.b16 %v4787
  %v4871 = vunpack.c.l.b16 %v4788
  %v4872 = vunpack.c.h.b16 %v4788
  %v4873 = vunpack.c.l.b16 %v4789
  %v4874 = vunpack.c.h.b16 %v4789
  %v4875 = vunpack.c.l.b16 %v4790
  %v4876 = vunpack.c.h.b16 %v4790
  %v4877 = vunpack.c.l.b16 %v4791
  %v4878 = vunpack.c.h.b16 %v4791
  %v4879 = vunpack.c.l.b16 %v4792
  %v4880 = vunpack.c.h.b16 %v4792
  %v4881 = vunpack.c.l.b16 %v4793
  %v4882 = vunpack.c.h.b16 %v4793
  %v4883 = vunpack.c.l.b16 %v4794
  %v4884 = vunpack.c.h.b16 %v4794
  %v4885 = vunpack.c.l.b16 %v4795
  %v4886 = vunpack.c.h.b16 %v4795
  %v4887 = vunpack.c.l.b16 %v4796
  %v4888 = vunpack.c.h.b16 %v4796
  %v4889 = vunpack.c.l.b16 %v4797
  %v4890 = vunpack.c.h.b16 %v4797
  %v4891 = vunpack.c.l.b16 %v4798
  %v4892 = vunpack.c.h.b16 %v4798
  %v4893 = vunpack.c.l.b16 %v4799
  %v4894 = vunpack.c.h.b16 %v4799
  %v4895 = vpack.c.b16 %v4839, %v4837
  %v4896 = vpack.c.b16 %v4840, %v4838
  %v4897 = vpack.c.b16 %v4843, %v4841
  %v4898 = vpack.c.b16 %v4844, %v4842
  %v4899 = vpack.c.b16 %v4847, %v4845
  %v4900 = vpack.c.b16 %v4848, %v4846
  %v4901 = vpack.c.b16 %v4851, %v4849
  %v4902 = vpack.c.b16 %v4852, %v4850
  %v4903 = vpack.c.b16 %v4855, %v4853
  %v4904 = vpack.c.b16 %v4856, %v4854
  %v4905 = vpack.c.b16 %v4859, %v4857
  %v4906 = vpack.c.b16 %v4860, %v4858
  %v4907 = vpack.c.b16 %v4863, %v4861
  %v4908 = vpack.c.b16 %v4864, %v4862
  %v4909 = vpack.c.b16 %v4867, %v4865
  %v4910 = vpack.c.b16 %v4868, %v4866
  %v4911 = vpack.c.b16 %v4871, %v4869
  %v4912 = vpack.c.b16 %v4872, %v4870
  %v4913 = vpack.c.b16 %v4875, %v4873
  %v4914 = vpack.c.b16 %v4876, %v4874
  %v4915 = vpack.c.b16 %v4879, %v4877
  %v4916 = vpack.c.b16 %v4880, %v4878
  %v4917 = vpack.c.b16 %v4883, %v4881
  %v4918 = vpack.c.b16 %v4884, %v4882
  %v4919 = vpack.c.b16 %v4887, %v4885
  %v4920 = vpack.c.b16 %v4888, %v4886
  %v4921 = vpack.c.b16 %v4891, %v4889
  %v4922 = vpack.c.b16 %v4892, %v4890
  %v4923 = vpack.c.b16 %v4893, %v4893
  %v4924 = vpack.c.b16 %v4894, %v4894
  %v4954 = vsel %vm3006, %v4801, 0
  %v4957 = vsel %vm3006, %v4803, 0
  %v4960 = vsel %vm3006, %v4805, 0
  %v4963 = vsel %vm3006, %v4807, 0
  %v4966 = vsel %vm3019, %v4923, 0
  %v4969 = vsel %vm3019, %v4924, 0
  %4971 = vmatpush.bf16.msra.mxu0 %v4909
  %4972 = vmatpush.bf16.msra.mxu0 %v4907
  %4973 = vmatpush.bf16.msra.mxu0 %v4905
  %4974 = vmatpush.bf16.msra.mxu0 %v4903
  %4975 = vmatpush.bf16.msra.mxu0 %v4901
  %4976 = vmatpush.bf16.msra.mxu0 %v4899
  %4977 = vmatpush.bf16.msra.mxu0 %v4897
  %4978 = vmatpush.bf16.msra.mxu0 %v4895
  %4979 = vmatmul.bf16.gmra.mxu0 %v4800
  %v4980 = vpop.f32.mrf.mxu0
  %v4981 = vadd.f32 0.0, %v4980
  %v4982 = vpop.f32.mrf.mxu0
  %v4983 = vadd.f32 0.0, %v4982
  %4984 = vmatmul.bf16.gmra.mxu0 %v4802
  %v4985 = vpop.f32.mrf.mxu0
  %v4986 = vadd.f32 0.0, %v4985
  %v4987 = vpop.f32.mrf.mxu0
  %v4988 = vadd.f32 0.0, %v4987
  %4989 = vmatmul.bf16.gmra.mxu0 %v4804
  %v4990 = vpop.f32.mrf.mxu0
  %v4991 = vadd.f32 0.0, %v4990
  %v4992 = vpop.f32.mrf.mxu0
  %v4993 = vadd.f32 0.0, %v4992
  %4994 = vmatmul.bf16.gmra.mxu0 %v4806
  %v4995 = vpop.f32.mrf.mxu0
  %v4996 = vadd.f32 0.0, %v4995
  %v4997 = vpop.f32.mrf.mxu0
  %4998 = vdwg.mxu0
  %4999 = vmatpush.bf16.msra.mxu0 0
  %5000 = vmatpush.bf16.msra.mxu0 %v4966
  %5001 = vmatpush.bf16.msra.mxu0 %v4921
  %5002 = vmatpush.bf16.msra.mxu0 %v4919
  %5003 = vmatpush.bf16.msra.mxu0 %v4917
  %5004 = vmatpush.bf16.msra.mxu0 %v4915
  %5005 = vmatpush.bf16.msra.mxu0 %v4913
  %5006 = vmatpush.bf16.msra.mxu0 %v4911
  %5007 = vmatmul.bf16.gmra.mxu0 %v4954
  %v5008 = vpop.f32.mrf.mxu0
  %v5009 = vadd.f32 %v4981, %v5008
  %v5010 = vpop.f32.mrf.mxu0
  %v5011 = vadd.f32 %v4983, %v5010
  %5012 = vmatmul.bf16.gmra.mxu0 %v4957
  %v5013 = vpop.f32.mrf.mxu0
  %v5014 = vadd.f32 %v4986, %v5013
  %v5015 = vpop.f32.mrf.mxu0
  %v5016 = vadd.f32 %v4988, %v5015
  %5017 = vmatmul.bf16.gmra.mxu0 %v4960
  %v5018 = vpop.f32.mrf.mxu0
  %v5019 = vadd.f32 %v4991, %v5018
  %v5020 = vpop.f32.mrf.mxu0
  %v5021 = vadd.f32 %v4993, %v5020
  %5022 = vmatmul.bf16.gmra.mxu0 %v4963
  %v5023 = vpop.f32.mrf.mxu0
  %v5024 = vadd.f32 %v4996, %v5023
  %v5025 = vpop.f32.mrf.mxu0
  %5026 = vdwg.mxu0
  %5027 = vmatpush.bf16.msra.mxu0 %v4910
  %5028 = vmatpush.bf16.msra.mxu0 %v4908
  %5029 = vmatpush.bf16.msra.mxu0 %v4906
  %5030 = vmatpush.bf16.msra.mxu0 %v4904
  %5031 = vmatpush.bf16.msra.mxu0 %v4902
  %5032 = vmatpush.bf16.msra.mxu0 %v4900
  %5033 = vmatpush.bf16.msra.mxu0 %v4898
  %5034 = vmatpush.bf16.msra.mxu0 %v4896
  %5035 = vmatmul.bf16.gmra.mxu0 %v4800
  %v5036 = vpop.f32.mrf.mxu0
  %v5037 = vadd.f32 0.0, %v5036
  %v5038 = vpop.f32.mrf.mxu0
  %v5039 = vadd.f32 0.0, %v5038
  %5040 = vmatmul.bf16.gmra.mxu0 %v4802
  %v5041 = vpop.f32.mrf.mxu0
  %v5042 = vadd.f32 0.0, %v5041
  %v5043 = vpop.f32.mrf.mxu0
  %v5044 = vadd.f32 0.0, %v5043
  %5045 = vmatmul.bf16.gmra.mxu0 %v4804
  %v5046 = vpop.f32.mrf.mxu0
  %v5047 = vadd.f32 0.0, %v5046
  %v5048 = vpop.f32.mrf.mxu0
  %v5049 = vadd.f32 0.0, %v5048
  %5050 = vmatmul.bf16.gmra.mxu0 %v4806
  %v5051 = vpop.f32.mrf.mxu0
  %v5052 = vadd.f32 0.0, %v5051
  %v5053 = vpop.f32.mrf.mxu0
  %5054 = vdwg.mxu0
  %5055 = vmatpush.bf16.msra.mxu0 0
  %5056 = vmatpush.bf16.msra.mxu0 %v4969
  %5057 = vmatpush.bf16.msra.mxu0 %v4922
  %5058 = vmatpush.bf16.msra.mxu0 %v4920
  %5059 = vmatpush.bf16.msra.mxu0 %v4918
  %5060 = vmatpush.bf16.msra.mxu0 %v4916
  %5061 = vmatpush.bf16.msra.mxu0 %v4914
  %5062 = vmatpush.bf16.msra.mxu0 %v4912
  %5063 = vmatmul.bf16.gmra.mxu0 %v4954
  %v5064 = vpop.f32.mrf.mxu0
  %v5065 = vadd.f32 %v5037, %v5064
  %v5066 = vpop.f32.mrf.mxu0
  %v5067 = vadd.f32 %v5039, %v5066
  %5068 = vmatmul.bf16.gmra.mxu0 %v4957
  %v5069 = vpop.f32.mrf.mxu0
  %v5070 = vadd.f32 %v5042, %v5069
  %v5071 = vpop.f32.mrf.mxu0
  %v5072 = vadd.f32 %v5044, %v5071
  %5073 = vmatmul.bf16.gmra.mxu0 %v4960
  %v5074 = vpop.f32.mrf.mxu0
  %v5075 = vadd.f32 %v5047, %v5074
  %v5076 = vpop.f32.mrf.mxu0
  %v5077 = vadd.f32 %v5049, %v5076
  %5078 = vmatmul.bf16.gmra.mxu0 %v4963
  %v5079 = vpop.f32.mrf.mxu0
  %v5080 = vadd.f32 %v5052, %v5079
  %v5081 = vpop.f32.mrf.mxu0
  %5082 = vdwg.mxu0
  %v5083 = vadd.f32 %v4662, %v5009
  %v5084 = vadd.f32 %v4663, %v5065
  %v5085 = vadd.f32 %v4664, %v5011
  %v5086 = vadd.f32 %v4665, %v5067
  %v5087 = vadd.f32 %v4666, %v5014
  %v5088 = vadd.f32 %v4667, %v5070
  %v5089 = vadd.f32 %v4668, %v5016
  %v5090 = vadd.f32 %v4669, %v5072
  %v5091 = vadd.f32 %v4670, %v5019
  %v5092 = vadd.f32 %v4671, %v5075
  %v5093 = vadd.f32 %v4672, %v5021
  %v5094 = vadd.f32 %v4673, %v5077
  %v5095 = vadd.f32 %v4674, %v5024
  %v5096 = vadd.f32 %v4675, %v5080
  %s5097 = scalar_lea.vmem %s11, 168
  %v5098 = vld [vmem:[%s5097] sm:$0xf]
  %v5099 = vld [vmem:[%s5097 + $0x4] sm:$0xf]
  %v5100 = vld [vmem:[%s5097 + $0x8] sm:$0xf]
  %v5101 = vld [vmem:[%s5097 + $0xc] sm:$0xf]
  %v5102 = vld [vmem:[%s5097 + $0x10] sm:$0xf]
  %v5103 = vld [vmem:[%s5097 + $0x14] sm:$0xf]
  %v5104 = vld [vmem:[%s5097 + $0x18] sm:$0x3]
  %v5112 = vunpack.c.l.b16 %v5098
  %v5113 = vunpack.c.l.b16 %v5099
  %v5114 = vunpack.c.l.b16 %v5100
  %v5115 = vunpack.c.l.b16 %v5101
  %v5116 = vunpack.c.l.b16 %v5102
  %v5117 = vunpack.c.l.b16 %v5103
  %v5118 = vunpack.c.l.b16 %v5104
  %v5119 = vpack.c.b16 %v5113, %v5112
  %v5120 = vpack.c.b16 %v5115, %v5114
  %v5121 = vpack.c.b16 %v5117, %v5116
  %v5122 = vpack.c.b16 %v5118, %v5118
  %v5124 = vsel %vm2616, %v5119, 0
  %v5127 = vsel %vm2616, %v5120, 0
  %v5130 = vsel %vm2616, %v5121, 0
  %v5133 = vsel %vm2616, %v5122, 0
  %5135 = vmatpush.bf16.msra.mxu0 %v2631
  %5136 = vmatpush.bf16.msra.mxu0 %v2587
  %5137 = vmatpush.bf16.msra.mxu0 %v2585
  %5138 = vmatpush.bf16.msra.mxu0 %v2583
  %5139 = vmatpush.bf16.msra.mxu0 %v2581
  %5140 = vmatpush.bf16.msra.mxu0 %v2579
  %5141 = vmatpush.bf16.msra.mxu0 %v2577
  %5142 = vmatpush.bf16.msra.mxu0 %v2575
  %5143 = vmatmul.bf16.gmra.mxu0 %v5124
  %v5144 = vpop.f32.mrf.mxu0
  %v5145 = vadd.f32 0.0, %v5144
  %v5146 = vpop.f32.mrf.mxu0
  %v5147 = vadd.f32 0.0, %v5146
  %5148 = vmatmul.bf16.gmra.mxu0 %v5127
  %v5149 = vpop.f32.mrf.mxu0
  %v5150 = vadd.f32 0.0, %v5149
  %v5151 = vpop.f32.mrf.mxu0
  %v5152 = vadd.f32 0.0, %v5151
  %5153 = vmatmul.bf16.gmra.mxu0 %v5130
  %v5154 = vpop.f32.mrf.mxu0
  %v5155 = vadd.f32 0.0, %v5154
  %v5156 = vpop.f32.mrf.mxu0
  %v5157 = vadd.f32 0.0, %v5156
  %5158 = vmatmul.bf16.gmra.mxu0 %v5133
  %v5159 = vpop.f32.mrf.mxu0
  %v5160 = vadd.f32 0.0, %v5159
  %v5161 = vpop.f32.mrf.mxu0
  %5162 = vdwg.mxu0
  %5163 = vmatpush.bf16.msra.mxu0 %v2634
  %5164 = vmatpush.bf16.msra.mxu0 %v2588
  %5165 = vmatpush.bf16.msra.mxu0 %v2586
  %5166 = vmatpush.bf16.msra.mxu0 %v2584
  %5167 = vmatpush.bf16.msra.mxu0 %v2582
  %5168 = vmatpush.bf16.msra.mxu0 %v2580
  %5169 = vmatpush.bf16.msra.mxu0 %v2578
  %5170 = vmatpush.bf16.msra.mxu0 %v2576
  %5171 = vmatmul.bf16.gmra.mxu0 %v5124
  %v5172 = vpop.f32.mrf.mxu0
  %v5173 = vadd.f32 0.0, %v5172
  %v5174 = vpop.f32.mrf.mxu0
  %v5175 = vadd.f32 0.0, %v5174
  %5176 = vmatmul.bf16.gmra.mxu0 %v5127
  %v5177 = vpop.f32.mrf.mxu0
  %v5178 = vadd.f32 0.0, %v5177
  %v5179 = vpop.f32.mrf.mxu0
  %v5180 = vadd.f32 0.0, %v5179
  %5181 = vmatmul.bf16.gmra.mxu0 %v5130
  %v5182 = vpop.f32.mrf.mxu0
  %v5183 = vadd.f32 0.0, %v5182
  %v5184 = vpop.f32.mrf.mxu0
  %v5185 = vadd.f32 0.0, %v5184
  %5186 = vmatmul.bf16.gmra.mxu0 %v5133
  %v5187 = vpop.f32.mrf.mxu0
  %v5188 = vadd.f32 0.0, %v5187
  %v5189 = vpop.f32.mrf.mxu0
  %5190 = vdwg.mxu0
  %s5191 = scalar_lea.vmem %s7, 1392
  %v5192 = vld [vmem:[%s5191] sm:$0xff]
  %v5193 = vld [vmem:[%s5191 + $0x8] sm:$0xff]
  %v5194 = vld [vmem:[%s5191 + $0x10] sm:$0xff]
  %v5195 = vld [vmem:[%s5191 + $0x18] sm:$0xff]
  %v5196 = vld [vmem:[%s5191 + $0x20] sm:$0xff]
  %v5197 = vld [vmem:[%s5191 + $0x28] sm:$0xff]
  %v5198 = vld [vmem:[%s5191 + $0x30] sm:$0xff]
  %v5199 = vld [vmem:[%s5191 + $0x38] sm:$0xff]
  %v5200 = vld [vmem:[%s5191 + $0x40] sm:$0xff]
  %v5201 = vld [vmem:[%s5191 + $0x48] sm:$0xff]
  %v5202 = vld [vmem:[%s5191 + $0x50] sm:$0xff]
  %v5203 = vld [vmem:[%s5191 + $0x58] sm:$0xff]
  %v5204 = vld [vmem:[%s5191 + $0x60] sm:$0xff]
  %v5205 = vld [vmem:[%s5191 + $0x68] sm:$0xff]
  %v5206 = vld [vmem:[%s5191 + $0x70] sm:$0xff]
  %v5207 = vld [vmem:[%s5191 + $0x78] sm:$0xff]
  %v5208 = vld [vmem:[%s5191 + $0x80] sm:$0xff]
  %v5209 = vld [vmem:[%s5191 + $0x88] sm:$0xff]
  %v5210 = vld [vmem:[%s5191 + $0x90] sm:$0xff]
  %v5211 = vld [vmem:[%s5191 + $0x98] sm:$0xff]
  %v5212 = vld [vmem:[%s5191 + $0xa0] sm:$0xff]
  %v5213 = vld [vmem:[%s5191 + $0xa8] sm:$0xff]
  %v5214 = vld [vmem:[%s5191 + $0xb0] sm:$0xff]
  %v5215 = vld [vmem:[%s5191 + $0xb8] sm:$0xff]
  %v5216 = vld [vmem:[%s5191 + $0xc0] sm:$0xff]
  %v5217 = vld [vmem:[%s5191 + $0xc8] sm:$0xff]
  %v5218 = vld [vmem:[%s5191 + $0xd0] sm:$0xff]
  %v5219 = vld [vmem:[%s5191 + $0xd8] sm:$0xff]
  %v5220 = vld [vmem:[%s5191 + $0xe0] sm:$0xff]
  %v5221 = vpack.c.bf16 %v5147, %v5145
  %v5222 = vpack.c.bf16 %v5175, %v5173
  %v5223 = vpack.c.bf16 %v5152, %v5150
  %v5224 = vpack.c.bf16 %v5180, %v5178
  %v5225 = vpack.c.bf16 %v5157, %v5155
  %v5226 = vpack.c.bf16 %v5185, %v5183
  %v5227 = vpack.c.bf16 %v5160, %v5160
  %v5228 = vpack.c.bf16 %v5188, %v5188
  %v5258 = vunpack.c.l.b16 %v5192
  %v5259 = vunpack.c.h.b16 %v5192
  %v5260 = vunpack.c.l.b16 %v5193
  %v5261 = vunpack.c.h.b16 %v5193
  %v5262 = vunpack.c.l.b16 %v5194
  %v5263 = vunpack.c.h.b16 %v5194
  %v5264 = vunpack.c.l.b16 %v5195
  %v5265 = vunpack.c.h.b16 %v5195
  %v5266 = vunpack.c.l.b16 %v5196
  %v5267 = vunpack.c.h.b16 %v5196
  %v5268 = vunpack.c.l.b16 %v5197
  %v5269 = vunpack.c.h.b16 %v5197
  %v5270 = vunpack.c.l.b16 %v5198
  %v5271 = vunpack.c.h.b16 %v5198
  %v5272 = vunpack.c.l.b16 %v5199
  %v5273 = vunpack.c.h.b16 %v5199
  %v5274 = vunpack.c.l.b16 %v5200
  %v5275 = vunpack.c.h.b16 %v5200
  %v5276 = vunpack.c.l.b16 %v5201
  %v5277 = vunpack.c.h.b16 %v5201
  %v5278 = vunpack.c.l.b16 %v5202
  %v5279 = vunpack.c.h.b16 %v5202
  %v5280 = vunpack.c.l.b16 %v5203
  %v5281 = vunpack.c.h.b16 %v5203
  %v5282 = vunpack.c.l.b16 %v5204
  %v5283 = vunpack.c.h.b16 %v5204
  %v5284 = vunpack.c.l.b16 %v5205
  %v5285 = vunpack.c.h.b16 %v5205
  %v5286 = vunpack.c.l.b16 %v5206
  %v5287 = vunpack.c.h.b16 %v5206
  %v5288 = vunpack.c.l.b16 %v5207
  %v5289 = vunpack.c.h.b16 %v5207
  %v5290 = vunpack.c.l.b16 %v5208
  %v5291 = vunpack.c.h.b16 %v5208
  %v5292 = vunpack.c.l.b16 %v5209
  %v5293 = vunpack.c.h.b16 %v5209
  %v5294 = vunpack.c.l.b16 %v5210
  %v5295 = vunpack.c.h.b16 %v5210
  %v5296 = vunpack.c.l.b16 %v5211
  %v5297 = vunpack.c.h.b16 %v5211
  %v5298 = vunpack.c.l.b16 %v5212
  %v5299 = vunpack.c.h.b16 %v5212
  %v5300 = vunpack.c.l.b16 %v5213
  %v5301 = vunpack.c.h.b16 %v5213
  %v5302 = vunpack.c.l.b16 %v5214
  %v5303 = vunpack.c.h.b16 %v5214
  %v5304 = vunpack.c.l.b16 %v5215
  %v5305 = vunpack.c.h.b16 %v5215
  %v5306 = vunpack.c.l.b16 %v5216
  %v5307 = vunpack.c.h.b16 %v5216
  %v5308 = vunpack.c.l.b16 %v5217
  %v5309 = vunpack.c.h.b16 %v5217
  %v5310 = vunpack.c.l.b16 %v5218
  %v5311 = vunpack.c.h.b16 %v5218
  %v5312 = vunpack.c.l.b16 %v5219
  %v5313 = vunpack.c.h.b16 %v5219
  %v5314 = vunpack.c.l.b16 %v5220
  %v5315 = vunpack.c.h.b16 %v5220
  %v5316 = vpack.c.b16 %v5260, %v5258
  %v5317 = vpack.c.b16 %v5261, %v5259
  %v5318 = vpack.c.b16 %v5264, %v5262
  %v5319 = vpack.c.b16 %v5265, %v5263
  %v5320 = vpack.c.b16 %v5268, %v5266
  %v5321 = vpack.c.b16 %v5269, %v5267
  %v5322 = vpack.c.b16 %v5272, %v5270
  %v5323 = vpack.c.b16 %v5273, %v5271
  %v5324 = vpack.c.b16 %v5276, %v5274
  %v5325 = vpack.c.b16 %v5277, %v5275
  %v5326 = vpack.c.b16 %v5280, %v5278
  %v5327 = vpack.c.b16 %v5281, %v5279
  %v5328 = vpack.c.b16 %v5284, %v5282
  %v5329 = vpack.c.b16 %v5285, %v5283
  %v5330 = vpack.c.b16 %v5288, %v5286
  %v5331 = vpack.c.b16 %v5289, %v5287
  %v5332 = vpack.c.b16 %v5292, %v5290
  %v5333 = vpack.c.b16 %v5293, %v5291
  %v5334 = vpack.c.b16 %v5296, %v5294
  %v5335 = vpack.c.b16 %v5297, %v5295
  %v5336 = vpack.c.b16 %v5300, %v5298
  %v5337 = vpack.c.b16 %v5301, %v5299
  %v5338 = vpack.c.b16 %v5304, %v5302
  %v5339 = vpack.c.b16 %v5305, %v5303
  %v5340 = vpack.c.b16 %v5308, %v5306
  %v5341 = vpack.c.b16 %v5309, %v5307
  %v5342 = vpack.c.b16 %v5312, %v5310
  %v5343 = vpack.c.b16 %v5313, %v5311
  %v5344 = vpack.c.b16 %v5314, %v5314
  %v5345 = vpack.c.b16 %v5315, %v5315
  %v5375 = vsel %vm3006, %v5222, 0
  %v5378 = vsel %vm3006, %v5224, 0
  %v5381 = vsel %vm3006, %v5226, 0
  %v5384 = vsel %vm3006, %v5228, 0
  %v5387 = vsel %vm3019, %v5344, 0
  %v5390 = vsel %vm3019, %v5345, 0
  %5392 = vmatpush.bf16.msra.mxu0 %v5330
  %5393 = vmatpush.bf16.msra.mxu0 %v5328
  %5394 = vmatpush.bf16.msra.mxu0 %v5326
  %5395 = vmatpush.bf16.msra.mxu0 %v5324
  %5396 = vmatpush.bf16.msra.mxu0 %v5322
  %5397 = vmatpush.bf16.msra.mxu0 %v5320
  %5398 = vmatpush.bf16.msra.mxu0 %v5318
  %5399 = vmatpush.bf16.msra.mxu0 %v5316
  %5400 = vmatmul.bf16.gmra.mxu0 %v5221
  %v5401 = vpop.f32.mrf.mxu0
  %v5402 = vadd.f32 0.0, %v5401
  %v5403 = vpop.f32.mrf.mxu0
  %v5404 = vadd.f32 0.0, %v5403
  %5405 = vmatmul.bf16.gmra.mxu0 %v5223
  %v5406 = vpop.f32.mrf.mxu0
  %v5407 = vadd.f32 0.0, %v5406
  %v5408 = vpop.f32.mrf.mxu0
  %v5409 = vadd.f32 0.0, %v5408
  %5410 = vmatmul.bf16.gmra.mxu0 %v5225
  %v5411 = vpop.f32.mrf.mxu0
  %v5412 = vadd.f32 0.0, %v5411
  %v5413 = vpop.f32.mrf.mxu0
  %v5414 = vadd.f32 0.0, %v5413
  %5415 = vmatmul.bf16.gmra.mxu0 %v5227
  %v5416 = vpop.f32.mrf.mxu0
  %v5417 = vadd.f32 0.0, %v5416
  %v5418 = vpop.f32.mrf.mxu0
  %5419 = vdwg.mxu0
  %5420 = vmatpush.bf16.msra.mxu0 0
  %5421 = vmatpush.bf16.msra.mxu0 %v5387
  %5422 = vmatpush.bf16.msra.mxu0 %v5342
  %5423 = vmatpush.bf16.msra.mxu0 %v5340
  %5424 = vmatpush.bf16.msra.mxu0 %v5338
  %5425 = vmatpush.bf16.msra.mxu0 %v5336
  %5426 = vmatpush.bf16.msra.mxu0 %v5334
  %5427 = vmatpush.bf16.msra.mxu0 %v5332
  %5428 = vmatmul.bf16.gmra.mxu0 %v5375
  %v5429 = vpop.f32.mrf.mxu0
  %v5430 = vadd.f32 %v5402, %v5429
  %v5431 = vpop.f32.mrf.mxu0
  %v5432 = vadd.f32 %v5404, %v5431
  %5433 = vmatmul.bf16.gmra.mxu0 %v5378
  %v5434 = vpop.f32.mrf.mxu0
  %v5435 = vadd.f32 %v5407, %v5434
  %v5436 = vpop.f32.mrf.mxu0
  %v5437 = vadd.f32 %v5409, %v5436
  %5438 = vmatmul.bf16.gmra.mxu0 %v5381
  %v5439 = vpop.f32.mrf.mxu0
  %v5440 = vadd.f32 %v5412, %v5439
  %v5441 = vpop.f32.mrf.mxu0
  %v5442 = vadd.f32 %v5414, %v5441
  %5443 = vmatmul.bf16.gmra.mxu0 %v5384
  %v5444 = vpop.f32.mrf.mxu0
  %v5445 = vadd.f32 %v5417, %v5444
  %v5446 = vpop.f32.mrf.mxu0
  %5447 = vdwg.mxu0
  %5448 = vmatpush.bf16.msra.mxu0 %v5331
  %5449 = vmatpush.bf16.msra.mxu0 %v5329
  %5450 = vmatpush.bf16.msra.mxu0 %v5327
  %5451 = vmatpush.bf16.msra.mxu0 %v5325
  %5452 = vmatpush.bf16.msra.mxu0 %v5323
  %5453 = vmatpush.bf16.msra.mxu0 %v5321
  %5454 = vmatpush.bf16.msra.mxu0 %v5319
  %5455 = vmatpush.bf16.msra.mxu0 %v5317
  %5456 = vmatmul.bf16.gmra.mxu0 %v5221
  %v5457 = vpop.f32.mrf.mxu0
  %v5458 = vadd.f32 0.0, %v5457
  %v5459 = vpop.f32.mrf.mxu0
  %v5460 = vadd.f32 0.0, %v5459
  %5461 = vmatmul.bf16.gmra.mxu0 %v5223
  %v5462 = vpop.f32.mrf.mxu0
  %v5463 = vadd.f32 0.0, %v5462
  %v5464 = vpop.f32.mrf.mxu0
  %v5465 = vadd.f32 0.0, %v5464
  %5466 = vmatmul.bf16.gmra.mxu0 %v5225
  %v5467 = vpop.f32.mrf.mxu0
  %v5468 = vadd.f32 0.0, %v5467
  %v5469 = vpop.f32.mrf.mxu0
  %v5470 = vadd.f32 0.0, %v5469
  %5471 = vmatmul.bf16.gmra.mxu0 %v5227
  %v5472 = vpop.f32.mrf.mxu0
  %v5473 = vadd.f32 0.0, %v5472
  %v5474 = vpop.f32.mrf.mxu0
  %5475 = vdwg.mxu0
  %5476 = vmatpush.bf16.msra.mxu0 0
  %5477 = vmatpush.bf16.msra.mxu0 %v5390
  %5478 = vmatpush.bf16.msra.mxu0 %v5343
  %5479 = vmatpush.bf16.msra.mxu0 %v5341
  %5480 = vmatpush.bf16.msra.mxu0 %v5339
  %5481 = vmatpush.bf16.msra.mxu0 %v5337
  %5482 = vmatpush.bf16.msra.mxu0 %v5335
  %5483 = vmatpush.bf16.msra.mxu0 %v5333
  %5484 = vmatmul.bf16.gmra.mxu0 %v5375
  %v5485 = vpop.f32.mrf.mxu0
  %v5486 = vadd.f32 %v5458, %v5485
  %v5487 = vpop.f32.mrf.mxu0
  %v5488 = vadd.f32 %v5460, %v5487
  %5489 = vmatmul.bf16.gmra.mxu0 %v5378
  %v5490 = vpop.f32.mrf.mxu0
  %v5491 = vadd.f32 %v5463, %v5490
  %v5492 = vpop.f32.mrf.mxu0
  %v5493 = vadd.f32 %v5465, %v5492
  %5494 = vmatmul.bf16.gmra.mxu0 %v5381
  %v5495 = vpop.f32.mrf.mxu0
  %v5496 = vadd.f32 %v5468, %v5495
  %v5497 = vpop.f32.mrf.mxu0
  %v5498 = vadd.f32 %v5470, %v5497
  %5499 = vmatmul.bf16.gmra.mxu0 %v5384
  %v5500 = vpop.f32.mrf.mxu0
  %v5501 = vadd.f32 %v5473, %v5500
  %v5502 = vpop.f32.mrf.mxu0
  %5503 = vdwg.mxu0
  %v5504 = vadd.f32 %v5083, %v5430
  %v5505 = vadd.f32 %v5084, %v5486
  %v5506 = vadd.f32 %v5085, %v5432
  %v5507 = vadd.f32 %v5086, %v5488
  %v5508 = vadd.f32 %v5087, %v5435
  %v5509 = vadd.f32 %v5088, %v5491
  %v5510 = vadd.f32 %v5089, %v5437
  %v5511 = vadd.f32 %v5090, %v5493
  %v5512 = vadd.f32 %v5091, %v5440
  %v5513 = vadd.f32 %v5092, %v5496
  %v5514 = vadd.f32 %v5093, %v5442
  %v5515 = vadd.f32 %v5094, %v5498
  %v5516 = vadd.f32 %v5095, %v5445
  %v5517 = vadd.f32 %v5096, %v5501
  %s5518 = scalar_lea.vmem %s11, 196
  %v5519 = vld [vmem:[%s5518] sm:$0xf]
  %v5520 = vld [vmem:[%s5518 + $0x4] sm:$0xf]
  %v5521 = vld [vmem:[%s5518 + $0x8] sm:$0xf]
  %v5522 = vld [vmem:[%s5518 + $0xc] sm:$0xf]
  %v5523 = vld [vmem:[%s5518 + $0x10] sm:$0xf]
  %v5524 = vld [vmem:[%s5518 + $0x14] sm:$0xf]
  %v5525 = vld [vmem:[%s5518 + $0x18] sm:$0x3]
  %v5533 = vunpack.c.l.b16 %v5519
  %v5534 = vunpack.c.l.b16 %v5520
  %v5535 = vunpack.c.l.b16 %v5521
  %v5536 = vunpack.c.l.b16 %v5522
  %v5537 = vunpack.c.l.b16 %v5523
  %v5538 = vunpack.c.l.b16 %v5524
  %v5539 = vunpack.c.l.b16 %v5525
  %v5540 = vpack.c.b16 %v5534, %v5533
  %v5541 = vpack.c.b16 %v5536, %v5535
  %v5542 = vpack.c.b16 %v5538, %v5537
  %v5543 = vpack.c.b16 %v5539, %v5539
  %v5545 = vsel %vm2616, %v5540, 0
  %v5548 = vsel %vm2616, %v5541, 0
  %v5551 = vsel %vm2616, %v5542, 0
  %v5554 = vsel %vm2616, %v5543, 0
  %5556 = vmatpush.bf16.msra.mxu0 %v2631
  %5557 = vmatpush.bf16.msra.mxu0 %v2587
  %5558 = vmatpush.bf16.msra.mxu0 %v2585
  %5559 = vmatpush.bf16.msra.mxu0 %v2583
  %5560 = vmatpush.bf16.msra.mxu0 %v2581
  %5561 = vmatpush.bf16.msra.mxu0 %v2579
  %5562 = vmatpush.bf16.msra.mxu0 %v2577
  %5563 = vmatpush.bf16.msra.mxu0 %v2575
  %5564 = vmatmul.bf16.gmra.mxu0 %v5545
  %v5565 = vpop.f32.mrf.mxu0
  %v5566 = vadd.f32 0.0, %v5565
  %v5567 = vpop.f32.mrf.mxu0
  %v5568 = vadd.f32 0.0, %v5567
  %5569 = vmatmul.bf16.gmra.mxu0 %v5548
  %v5570 = vpop.f32.mrf.mxu0
  %v5571 = vadd.f32 0.0, %v5570
  %v5572 = vpop.f32.mrf.mxu0
  %v5573 = vadd.f32 0.0, %v5572
  %5574 = vmatmul.bf16.gmra.mxu0 %v5551
  %v5575 = vpop.f32.mrf.mxu0
  %v5576 = vadd.f32 0.0, %v5575
  %v5577 = vpop.f32.mrf.mxu0
  %v5578 = vadd.f32 0.0, %v5577
  %5579 = vmatmul.bf16.gmra.mxu0 %v5554
  %v5580 = vpop.f32.mrf.mxu0
  %v5581 = vadd.f32 0.0, %v5580
  %v5582 = vpop.f32.mrf.mxu0
  %5583 = vdwg.mxu0
  %5584 = vmatpush.bf16.msra.mxu0 %v2634
  %5585 = vmatpush.bf16.msra.mxu0 %v2588
  %5586 = vmatpush.bf16.msra.mxu0 %v2586
  %5587 = vmatpush.bf16.msra.mxu0 %v2584
  %5588 = vmatpush.bf16.msra.mxu0 %v2582
  %5589 = vmatpush.bf16.msra.mxu0 %v2580
  %5590 = vmatpush.bf16.msra.mxu0 %v2578
  %5591 = vmatpush.bf16.msra.mxu0 %v2576
  %5592 = vmatmul.bf16.gmra.mxu0 %v5545
  %v5593 = vpop.f32.mrf.mxu0
  %v5594 = vadd.f32 0.0, %v5593
  %v5595 = vpop.f32.mrf.mxu0
  %v5596 = vadd.f32 0.0, %v5595
  %5597 = vmatmul.bf16.gmra.mxu0 %v5548
  %v5598 = vpop.f32.mrf.mxu0
  %v5599 = vadd.f32 0.0, %v5598
  %v5600 = vpop.f32.mrf.mxu0
  %v5601 = vadd.f32 0.0, %v5600
  %5602 = vmatmul.bf16.gmra.mxu0 %v5551
  %v5603 = vpop.f32.mrf.mxu0
  %v5604 = vadd.f32 0.0, %v5603
  %v5605 = vpop.f32.mrf.mxu0
  %v5606 = vadd.f32 0.0, %v5605
  %5607 = vmatmul.bf16.gmra.mxu0 %v5554
  %v5608 = vpop.f32.mrf.mxu0
  %v5609 = vadd.f32 0.0, %v5608
  %v5610 = vpop.f32.mrf.mxu0
  %5611 = vdwg.mxu0
  %s5612 = scalar_lea.vmem %s7, 1624
  %v5613 = vld [vmem:[%s5612] sm:$0xff]
  %v5614 = vld [vmem:[%s5612 + $0x8] sm:$0xff]
  %v5615 = vld [vmem:[%s5612 + $0x10] sm:$0xff]
  %v5616 = vld [vmem:[%s5612 + $0x18] sm:$0xff]
  %v5617 = vld [vmem:[%s5612 + $0x20] sm:$0xff]
  %v5618 = vld [vmem:[%s5612 + $0x28] sm:$0xff]
  %v5619 = vld [vmem:[%s5612 + $0x30] sm:$0xff]
  %v5620 = vld [vmem:[%s5612 + $0x38] sm:$0xff]
  %v5621 = vld [vmem:[%s5612 + $0x40] sm:$0xff]
  %v5622 = vld [vmem:[%s5612 + $0x48] sm:$0xff]
  %v5623 = vld [vmem:[%s5612 + $0x50] sm:$0xff]
  %v5624 = vld [vmem:[%s5612 + $0x58] sm:$0xff]
  %v5625 = vld [vmem:[%s5612 + $0x60] sm:$0xff]
  %v5626 = vld [vmem:[%s5612 + $0x68] sm:$0xff]
  %v5627 = vld [vmem:[%s5612 + $0x70] sm:$0xff]
  %v5628 = vld [vmem:[%s5612 + $0x78] sm:$0xff]
  %v5629 = vld [vmem:[%s5612 + $0x80] sm:$0xff]
  %v5630 = vld [vmem:[%s5612 + $0x88] sm:$0xff]
  %v5631 = vld [vmem:[%s5612 + $0x90] sm:$0xff]
  %v5632 = vld [vmem:[%s5612 + $0x98] sm:$0xff]
  %v5633 = vld [vmem:[%s5612 + $0xa0] sm:$0xff]
  %v5634 = vld [vmem:[%s5612 + $0xa8] sm:$0xff]
  %v5635 = vld [vmem:[%s5612 + $0xb0] sm:$0xff]
  %v5636 = vld [vmem:[%s5612 + $0xb8] sm:$0xff]
  %v5637 = vld [vmem:[%s5612 + $0xc0] sm:$0xff]
  %v5638 = vld [vmem:[%s5612 + $0xc8] sm:$0xff]
  %v5639 = vld [vmem:[%s5612 + $0xd0] sm:$0xff]
  %v5640 = vld [vmem:[%s5612 + $0xd8] sm:$0xff]
  %v5641 = vld [vmem:[%s5612 + $0xe0] sm:$0xff]
  %v5642 = vpack.c.bf16 %v5568, %v5566
  %v5643 = vpack.c.bf16 %v5596, %v5594
  %v5644 = vpack.c.bf16 %v5573, %v5571
  %v5645 = vpack.c.bf16 %v5601, %v5599
  %v5646 = vpack.c.bf16 %v5578, %v5576
  %v5647 = vpack.c.bf16 %v5606, %v5604
  %v5648 = vpack.c.bf16 %v5581, %v5581
  %v5649 = vpack.c.bf16 %v5609, %v5609
  %v5679 = vunpack.c.l.b16 %v5613
  %v5680 = vunpack.c.h.b16 %v5613
  %v5681 = vunpack.c.l.b16 %v5614
  %v5682 = vunpack.c.h.b16 %v5614
  %v5683 = vunpack.c.l.b16 %v5615
  %v5684 = vunpack.c.h.b16 %v5615
  %v5685 = vunpack.c.l.b16 %v5616
  %v5686 = vunpack.c.h.b16 %v5616
  %v5687 = vunpack.c.l.b16 %v5617
  %v5688 = vunpack.c.h.b16 %v5617
  %v5689 = vunpack.c.l.b16 %v5618
  %v5690 = vunpack.c.h.b16 %v5618
  %v5691 = vunpack.c.l.b16 %v5619
  %v5692 = vunpack.c.h.b16 %v5619
  %v5693 = vunpack.c.l.b16 %v5620
  %v5694 = vunpack.c.h.b16 %v5620
  %v5695 = vunpack.c.l.b16 %v5621
  %v5696 = vunpack.c.h.b16 %v5621
  %v5697 = vunpack.c.l.b16 %v5622
  %v5698 = vunpack.c.h.b16 %v5622
  %v5699 = vunpack.c.l.b16 %v5623
  %v5700 = vunpack.c.h.b16 %v5623
  %v5701 = vunpack.c.l.b16 %v5624
  %v5702 = vunpack.c.h.b16 %v5624
  %v5703 = vunpack.c.l.b16 %v5625
  %v5704 = vunpack.c.h.b16 %v5625
  %v5705 = vunpack.c.l.b16 %v5626
  %v5706 = vunpack.c.h.b16 %v5626
  %v5707 = vunpack.c.l.b16 %v5627
  %v5708 = vunpack.c.h.b16 %v5627
  %v5709 = vunpack.c.l.b16 %v5628
  %v5710 = vunpack.c.h.b16 %v5628
  %v5711 = vunpack.c.l.b16 %v5629
  %v5712 = vunpack.c.h.b16 %v5629
  %v5713 = vunpack.c.l.b16 %v5630
  %v5714 = vunpack.c.h.b16 %v5630
  %v5715 = vunpack.c.l.b16 %v5631
  %v5716 = vunpack.c.h.b16 %v5631
  %v5717 = vunpack.c.l.b16 %v5632
  %v5718 = vunpack.c.h.b16 %v5632
  %v5719 = vunpack.c.l.b16 %v5633
  %v5720 = vunpack.c.h.b16 %v5633
  %v5721 = vunpack.c.l.b16 %v5634
  %v5722 = vunpack.c.h.b16 %v5634
  %v5723 = vunpack.c.l.b16 %v5635
  %v5724 = vunpack.c.h.b16 %v5635
  %v5725 = vunpack.c.l.b16 %v5636
  %v5726 = vunpack.c.h.b16 %v5636
  %v5727 = vunpack.c.l.b16 %v5637
  %v5728 = vunpack.c.h.b16 %v5637
  %v5729 = vunpack.c.l.b16 %v5638
  %v5730 = vunpack.c.h.b16 %v5638
  %v5731 = vunpack.c.l.b16 %v5639
  %v5732 = vunpack.c.h.b16 %v5639
  %v5733 = vunpack.c.l.b16 %v5640
  %v5734 = vunpack.c.h.b16 %v5640
  %v5735 = vunpack.c.l.b16 %v5641
  %v5736 = vunpack.c.h.b16 %v5641
  %v5737 = vpack.c.b16 %v5681, %v5679
  %v5738 = vpack.c.b16 %v5682, %v5680
  %v5739 = vpack.c.b16 %v5685, %v5683
  %v5740 = vpack.c.b16 %v5686, %v5684
  %v5741 = vpack.c.b16 %v5689, %v5687
  %v5742 = vpack.c.b16 %v5690, %v5688
  %v5743 = vpack.c.b16 %v5693, %v5691
  %v5744 = vpack.c.b16 %v5694, %v5692
  %v5745 = vpack.c.b16 %v5697, %v5695
  %v5746 = vpack.c.b16 %v5698, %v5696
  %v5747 = vpack.c.b16 %v5701, %v5699
  %v5748 = vpack.c.b16 %v5702, %v5700
  %v5749 = vpack.c.b16 %v5705, %v5703
  %v5750 = vpack.c.b16 %v5706, %v5704
  %v5751 = vpack.c.b16 %v5709, %v5707
  %v5752 = vpack.c.b16 %v5710, %v5708
  %v5753 = vpack.c.b16 %v5713, %v5711
  %v5754 = vpack.c.b16 %v5714, %v5712
  %v5755 = vpack.c.b16 %v5717, %v5715
  %v5756 = vpack.c.b16 %v5718, %v5716
  %v5757 = vpack.c.b16 %v5721, %v5719
  %v5758 = vpack.c.b16 %v5722, %v5720
  %v5759 = vpack.c.b16 %v5725, %v5723
  %v5760 = vpack.c.b16 %v5726, %v5724
  %v5761 = vpack.c.b16 %v5729, %v5727
  %v5762 = vpack.c.b16 %v5730, %v5728
  %v5763 = vpack.c.b16 %v5733, %v5731
  %v5764 = vpack.c.b16 %v5734, %v5732
  %v5765 = vpack.c.b16 %v5735, %v5735
  %v5766 = vpack.c.b16 %v5736, %v5736
  %v5796 = vsel %vm3006, %v5643, 0
  %v5799 = vsel %vm3006, %v5645, 0
  %v5802 = vsel %vm3006, %v5647, 0
  %v5805 = vsel %vm3006, %v5649, 0
  %v5808 = vsel %vm3019, %v5765, 0
  %v5811 = vsel %vm3019, %v5766, 0
  %5813 = vmatpush.bf16.msra.mxu0 %v5751
  %5814 = vmatpush.bf16.msra.mxu0 %v5749
  %5815 = vmatpush.bf16.msra.mxu0 %v5747
  %5816 = vmatpush.bf16.msra.mxu0 %v5745
  %5817 = vmatpush.bf16.msra.mxu0 %v5743
  %5818 = vmatpush.bf16.msra.mxu0 %v5741
  %5819 = vmatpush.bf16.msra.mxu0 %v5739
  %5820 = vmatpush.bf16.msra.mxu0 %v5737
  %5821 = vmatmul.bf16.gmra.mxu0 %v5642
  %v5822 = vpop.f32.mrf.mxu0
  %v5823 = vadd.f32 0.0, %v5822
  %v5824 = vpop.f32.mrf.mxu0
  %v5825 = vadd.f32 0.0, %v5824
  %5826 = vmatmul.bf16.gmra.mxu0 %v5644
  %v5827 = vpop.f32.mrf.mxu0
  %v5828 = vadd.f32 0.0, %v5827
  %v5829 = vpop.f32.mrf.mxu0
  %v5830 = vadd.f32 0.0, %v5829
  %5831 = vmatmul.bf16.gmra.mxu0 %v5646
  %v5832 = vpop.f32.mrf.mxu0
  %v5833 = vadd.f32 0.0, %v5832
  %v5834 = vpop.f32.mrf.mxu0
  %v5835 = vadd.f32 0.0, %v5834
  %5836 = vmatmul.bf16.gmra.mxu0 %v5648
  %v5837 = vpop.f32.mrf.mxu0
  %v5838 = vadd.f32 0.0, %v5837
  %v5839 = vpop.f32.mrf.mxu0
  %5840 = vdwg.mxu0
  %5841 = vmatpush.bf16.msra.mxu0 0
  %5842 = vmatpush.bf16.msra.mxu0 %v5808
  %5843 = vmatpush.bf16.msra.mxu0 %v5763
  %5844 = vmatpush.bf16.msra.mxu0 %v5761
  %5845 = vmatpush.bf16.msra.mxu0 %v5759
  %5846 = vmatpush.bf16.msra.mxu0 %v5757
  %5847 = vmatpush.bf16.msra.mxu0 %v5755
  %5848 = vmatpush.bf16.msra.mxu0 %v5753
  %5849 = vmatmul.bf16.gmra.mxu0 %v5796
  %v5850 = vpop.f32.mrf.mxu0
  %v5851 = vadd.f32 %v5823, %v5850
  %v5852 = vpop.f32.mrf.mxu0
  %v5853 = vadd.f32 %v5825, %v5852
  %5854 = vmatmul.bf16.gmra.mxu0 %v5799
  %v5855 = vpop.f32.mrf.mxu0
  %v5856 = vadd.f32 %v5828, %v5855
  %v5857 = vpop.f32.mrf.mxu0
  %v5858 = vadd.f32 %v5830, %v5857
  %5859 = vmatmul.bf16.gmra.mxu0 %v5802
  %v5860 = vpop.f32.mrf.mxu0
  %v5861 = vadd.f32 %v5833, %v5860
  %v5862 = vpop.f32.mrf.mxu0
  %v5863 = vadd.f32 %v5835, %v5862
  %5864 = vmatmul.bf16.gmra.mxu0 %v5805
  %v5865 = vpop.f32.mrf.mxu0
  %v5866 = vadd.f32 %v5838, %v5865
  %v5867 = vpop.f32.mrf.mxu0
  %5868 = vdwg.mxu0
  %5869 = vmatpush.bf16.msra.mxu0 %v5752
  %5870 = vmatpush.bf16.msra.mxu0 %v5750
  %5871 = vmatpush.bf16.msra.mxu0 %v5748
  %5872 = vmatpush.bf16.msra.mxu0 %v5746
  %5873 = vmatpush.bf16.msra.mxu0 %v5744
  %5874 = vmatpush.bf16.msra.mxu0 %v5742
  %5875 = vmatpush.bf16.msra.mxu0 %v5740
  %5876 = vmatpush.bf16.msra.mxu0 %v5738
  %5877 = vmatmul.bf16.gmra.mxu0 %v5642
  %v5878 = vpop.f32.mrf.mxu0
  %v5879 = vadd.f32 0.0, %v5878
  %v5880 = vpop.f32.mrf.mxu0
  %v5881 = vadd.f32 0.0, %v5880
  %5882 = vmatmul.bf16.gmra.mxu0 %v5644
  %v5883 = vpop.f32.mrf.mxu0
  %v5884 = vadd.f32 0.0, %v5883
  %v5885 = vpop.f32.mrf.mxu0
  %v5886 = vadd.f32 0.0, %v5885
  %5887 = vmatmul.bf16.gmra.mxu0 %v5646
  %v5888 = vpop.f32.mrf.mxu0
  %v5889 = vadd.f32 0.0, %v5888
  %v5890 = vpop.f32.mrf.mxu0
  %v5891 = vadd.f32 0.0, %v5890
  %5892 = vmatmul.bf16.gmra.mxu0 %v5648
  %v5893 = vpop.f32.mrf.mxu0
  %v5894 = vadd.f32 0.0, %v5893
  %v5895 = vpop.f32.mrf.mxu0
  %5896 = vdwg.mxu0
  %5897 = vmatpush.bf16.msra.mxu0 0
  %5898 = vmatpush.bf16.msra.mxu0 %v5811
  %5899 = vmatpush.bf16.msra.mxu0 %v5764
  %5900 = vmatpush.bf16.msra.mxu0 %v5762
  %5901 = vmatpush.bf16.msra.mxu0 %v5760
  %5902 = vmatpush.bf16.msra.mxu0 %v5758
  %5903 = vmatpush.bf16.msra.mxu0 %v5756
  %5904 = vmatpush.bf16.msra.mxu0 %v5754
  %5905 = vmatmul.bf16.gmra.mxu0 %v5796
  %v5906 = vpop.f32.mrf.mxu0
  %v5907 = vadd.f32 %v5879, %v5906
  %v5908 = vpop.f32.mrf.mxu0
  %v5909 = vadd.f32 %v5881, %v5908
  %5910 = vmatmul.bf16.gmra.mxu0 %v5799
  %v5911 = vpop.f32.mrf.mxu0
  %v5912 = vadd.f32 %v5884, %v5911
  %v5913 = vpop.f32.mrf.mxu0
  %v5914 = vadd.f32 %v5886, %v5913
  %5915 = vmatmul.bf16.gmra.mxu0 %v5802
  %v5916 = vpop.f32.mrf.mxu0
  %v5917 = vadd.f32 %v5889, %v5916
  %v5918 = vpop.f32.mrf.mxu0
  %v5919 = vadd.f32 %v5891, %v5918
  %5920 = vmatmul.bf16.gmra.mxu0 %v5805
  %v5921 = vpop.f32.mrf.mxu0
  %v5922 = vadd.f32 %v5894, %v5921
  %v5923 = vpop.f32.mrf.mxu0
  %5924 = vdwg.mxu0
  %v5925 = vadd.f32 %v5504, %v5851
  %v5926 = vadd.f32 %v5505, %v5907
  %v5927 = vadd.f32 %v5506, %v5853
  %v5928 = vadd.f32 %v5507, %v5909
  %v5929 = vadd.f32 %v5508, %v5856
  %v5930 = vadd.f32 %v5509, %v5912
  %v5931 = vadd.f32 %v5510, %v5858
  %v5932 = vadd.f32 %v5511, %v5914
  %v5933 = vadd.f32 %v5512, %v5861
  %v5934 = vadd.f32 %v5513, %v5917
  %v5935 = vadd.f32 %v5514, %v5863
  %v5936 = vadd.f32 %v5515, %v5919
  %v5937 = vadd.f32 %v5516, %v5866
  %v5938 = vadd.f32 %v5517, %v5922
  %v5939 = vld [vmem:[%s9] sm:$0x3]
  %v5941 = vperm.slane %v5939, 0
  %v5942 = vperm.slane %v5939, 1
  %v5945 = vadd.f32 %v5925, %v5941
  %v5946 = vadd.f32 %v5926, %v5942
  %v5947 = vadd.f32 %v5927, %v5941
  %v5948 = vadd.f32 %v5928, %v5942
  %v5949 = vadd.f32 %v5929, %v5941
  %v5950 = vadd.f32 %v5930, %v5942
  %v5951 = vadd.f32 %v5931, %v5941
  %v5952 = vadd.f32 %v5932, %v5942
  %v5953 = vadd.f32 %v5933, %v5941
  %v5954 = vadd.f32 %v5934, %v5942
  %v5955 = vadd.f32 %v5935, %v5941
  %v5956 = vadd.f32 %v5936, %v5942
  %v5957 = vadd.f32 %v5937, %v5941
  %v5958 = vadd.f32 %v5938, %v5942
  %vm5959 = vcmp.ge.f32.partialorder %v5945, 0.0
  %vm5960 = vcmp.ge.f32.partialorder %v5946, 0.0
  %vm5961 = vcmp.ge.f32.partialorder %v5947, 0.0
  %vm5962 = vcmp.ge.f32.partialorder %v5948, 0.0
  %vm5963 = vcmp.ge.f32.partialorder %v5949, 0.0
  %vm5964 = vcmp.ge.f32.partialorder %v5950, 0.0
  %vm5965 = vcmp.ge.f32.partialorder %v5951, 0.0
  %vm5966 = vcmp.ge.f32.partialorder %v5952, 0.0
  %vm5967 = vcmp.ge.f32.partialorder %v5953, 0.0
  %vm5968 = vcmp.ge.f32.partialorder %v5954, 0.0
  %vm5969 = vcmp.ge.f32.partialorder %v5955, 0.0
  %vm5970 = vcmp.ge.f32.partialorder %v5956, 0.0
  %vm5971 = vcmp.ge.f32.partialorder %v5957, 0.0
  %vm5972 = vcmp.ge.f32.partialorder %v5958, 0.0
  %v5973 = vmul.f32 %v5945, 0.01
  %v5974 = vmul.f32 %v5946, 0.01
  %v5975 = vmul.f32 %v5947, 0.01
  %v5976 = vmul.f32 %v5948, 0.01
  %v5977 = vmul.f32 %v5949, 0.01
  %v5978 = vmul.f32 %v5950, 0.01
  %v5979 = vmul.f32 %v5951, 0.01
  %v5980 = vmul.f32 %v5952, 0.01
  %v5981 = vmul.f32 %v5953, 0.01
  %v5982 = vmul.f32 %v5954, 0.01
  %v5983 = vmul.f32 %v5955, 0.01
  %v5984 = vmul.f32 %v5956, 0.01
  %v5985 = vmul.f32 %v5957, 0.01
  %v5986 = vmul.f32 %v5958, 0.01
  %v5987 = vsel %vm5959, %v5945, %v5973
  %v5988 = vsel %vm5960, %v5946, %v5974
  %v5989 = vsel %vm5961, %v5947, %v5975
  %v5990 = vsel %vm5962, %v5948, %v5976
  %v5991 = vsel %vm5963, %v5949, %v5977
  %v5992 = vsel %vm5964, %v5950, %v5978
  %v5993 = vsel %vm5965, %v5951, %v5979
  %v5994 = vsel %vm5966, %v5952, %v5980
  %v5995 = vsel %vm5967, %v5953, %v5981
  %v5996 = vsel %vm5968, %v5954, %v5982
  %v5997 = vsel %vm5969, %v5955, %v5983
  %v5998 = vsel %vm5970, %v5956, %v5984
  %v5999 = vsel %vm5971, %v5957, %v5985
  %v6000 = vsel %vm5972, %v5958, %v5986
  %v6001 = vpack.c.bf16 %v5989, %v5987
  %v6002 = vpack.c.bf16 %v5990, %v5988
  %v6003 = vpack.c.bf16 %v5993, %v5991
  %v6004 = vpack.c.bf16 %v5994, %v5992
  %v6005 = vpack.c.bf16 %v5997, %v5995
  %v6006 = vpack.c.bf16 %v5998, %v5996
  %v6007 = vpack.c.bf16 %v5999, %v5999
  %v6008 = vpack.c.bf16 %v6000, %v6000
  %v6009 = vld [vmem:[%s17] sm:$0xf]
  %v6010 = vld [vmem:[%s17 + $0x4] sm:$0xf]
  %v6011 = vld [vmem:[%s17 + $0x8] sm:$0x3]
  %v6015 = vunpack.c.l.b16 %v6009
  %v6016 = vunpack.c.l.b16 %v6010
  %v6017 = vunpack.c.l.b16 %v6011
  %v6018 = vpack.c.b16 %v6016, %v6015
  %v6019 = vpack.c.b16 %v6017, %v6017
  %vm6020 = vcmask 424960
  %v6022 = vsel %vm6020, %v6018, 0
  %v6025 = vsel %vm6020, %v6019, 0
  %v6028 = vsel %vm2629, %v6007, 0
  %v6031 = vsel %vm2629, %v6008, 0
  %6033 = vmatpush.bf16.msra.mxu0 0
  %6034 = vmatpush.bf16.msra.mxu0 0
  %6035 = vmatpush.bf16.msra.mxu0 0
  %6036 = vmatpush.bf16.msra.mxu0 0
  %6037 = vmatpush.bf16.msra.mxu0 %v6028
  %6038 = vmatpush.bf16.msra.mxu0 %v6005
  %6039 = vmatpush.bf16.msra.mxu0 %v6003
  %6040 = vmatpush.bf16.msra.mxu0 %v6001
  %6041 = vmatmul.bf16.gmra.mxu0 %v6022
  %v6042 = vpop.f32.mrf.mxu0
  %v6043 = vadd.f32 0.0, %v6042
  %v6044 = vpop.f32.mrf.mxu0
  %v6045 = vadd.f32 0.0, %v6044
  %6046 = vmatmul.bf16.gmra.mxu0 %v6025
  %v6047 = vpop.f32.mrf.mxu0
  %v6048 = vadd.f32 0.0, %v6047
  %v6049 = vpop.f32.mrf.mxu0
  %6050 = vdwg.mxu0
  %6051 = vmatpush.bf16.msra.mxu0 0
  %6052 = vmatpush.bf16.msra.mxu0 0
  %6053 = vmatpush.bf16.msra.mxu0 0
  %6054 = vmatpush.bf16.msra.mxu0 0
  %6055 = vmatpush.bf16.msra.mxu0 %v6031
  %6056 = vmatpush.bf16.msra.mxu0 %v6006
  %6057 = vmatpush.bf16.msra.mxu0 %v6004
  %6058 = vmatpush.bf16.msra.mxu0 %v6002
  %6059 = vmatmul.bf16.gmra.mxu0 %v6022
  %v6060 = vpop.f32.mrf.mxu0
  %v6061 = vadd.f32 0.0, %v6060
  %v6062 = vpop.f32.mrf.mxu0
  %v6063 = vadd.f32 0.0, %v6062
  %6064 = vmatmul.bf16.gmra.mxu0 %v6025
  %v6065 = vpop.f32.mrf.mxu0
  %v6066 = vadd.f32 0.0, %v6065
  %v6067 = vpop.f32.mrf.mxu0
  %6068 = vdwg.mxu0
  %v6069 = vld [vmem:[%s13] sm:$0xff]
  %v6070 = vld [vmem:[%s13 + $0x8] sm:$0xff]
  %v6071 = vld [vmem:[%s13 + $0x10] sm:$0xff]
  %v6072 = vld [vmem:[%s13 + $0x18] sm:$0xff]
  %v6073 = vld [vmem:[%s13 + $0x20] sm:$0xff]
  %v6074 = vld [vmem:[%s13 + $0x28] sm:$0xff]
  %v6075 = vld [vmem:[%s13 + $0x30] sm:$0xff]
  %v6076 = vld [vmem:[%s13 + $0x38] sm:$0xff]
  %v6077 = vld [vmem:[%s13 + $0x40] sm:$0xff]
  %v6078 = vld [vmem:[%s13 + $0x48] sm:$0xff]
  %v6079 = vld [vmem:[%s13 + $0x50] sm:$0xff]
  %v6080 = vld [vmem:[%s13 + $0x58] sm:$0xff]
  %v6081 = vld [vmem:[%s13 + $0x60] sm:$0xff]
  %v6082 = vld [vmem:[%s13 + $0x68] sm:$0xff]
  %v6083 = vld [vmem:[%s13 + $0x70] sm:$0xff]
  %v6084 = vld [vmem:[%s13 + $0x78] sm:$0xff]
  %v6085 = vld [vmem:[%s13 + $0x80] sm:$0xff]
  %v6086 = vld [vmem:[%s13 + $0x88] sm:$0xff]
  %v6087 = vld [vmem:[%s13 + $0x90] sm:$0xff]
  %v6088 = vld [vmem:[%s13 + $0x98] sm:$0xff]
  %v6089 = vld [vmem:[%s13 + $0xa0] sm:$0xff]
  %v6090 = vld [vmem:[%s13 + $0xa8] sm:$0xff]
  %v6091 = vld [vmem:[%s13 + $0xb0] sm:$0xff]
  %v6092 = vld [vmem:[%s13 + $0xb8] sm:$0xff]
  %v6093 = vld [vmem:[%s13 + $0xc0] sm:$0xff]
  %v6094 = vld [vmem:[%s13 + $0xc8] sm:$0xff]
  %v6095 = vpack.c.bf16 %v6045, %v6043
  %v6096 = vpack.c.bf16 %v6063, %v6061
  %v6097 = vpack.c.bf16 %v6048, %v6048
  %v6098 = vpack.c.bf16 %v6066, %v6066
  %s6099 = scalar_lea.vmem %s17, 12
  %v6100 = vld [vmem:[%s6099] sm:$0xf]
  %v6101 = vld [vmem:[%s6099 + $0x4] sm:$0xf]
  %v6102 = vld [vmem:[%s6099 + $0x8] sm:$0x3]
  %v6106 = vunpack.c.l.b16 %v6100
  %v6107 = vunpack.c.l.b16 %v6101
  %v6108 = vunpack.c.l.b16 %v6102
  %v6109 = vpack.c.b16 %v6107, %v6106
  %v6110 = vpack.c.b16 %v6108, %v6108
  %v6112 = vsel %vm6020, %v6109, 0
  %v6115 = vsel %vm6020, %v6110, 0
  %6117 = vmatpush.bf16.msra.mxu0 0
  %6118 = vmatpush.bf16.msra.mxu0 0
  %6119 = vmatpush.bf16.msra.mxu0 0
  %6120 = vmatpush.bf16.msra.mxu0 0
  %6121 = vmatpush.bf16.msra.mxu0 %v6028
  %6122 = vmatpush.bf16.msra.mxu0 %v6005
  %6123 = vmatpush.bf16.msra.mxu0 %v6003
  %6124 = vmatpush.bf16.msra.mxu0 %v6001
  %6125 = vmatmul.bf16.gmra.mxu0 %v6112
  %v6126 = vpop.f32.mrf.mxu0
  %v6127 = vadd.f32 0.0, %v6126
  %v6128 = vpop.f32.mrf.mxu0
  %v6129 = vadd.f32 0.0, %v6128
  %6130 = vmatmul.bf16.gmra.mxu0 %v6115
  %v6131 = vpop.f32.mrf.mxu0
  %v6132 = vadd.f32 0.0, %v6131
  %v6133 = vpop.f32.mrf.mxu0
  %6134 = vdwg.mxu0
  %6135 = vmatpush.bf16.msra.mxu0 0
  %6136 = vmatpush.bf16.msra.mxu0 0
  %6137 = vmatpush.bf16.msra.mxu0 0
  %6138 = vmatpush.bf16.msra.mxu0 0
  %6139 = vmatpush.bf16.msra.mxu0 %v6031
  %6140 = vmatpush.bf16.msra.mxu0 %v6006
  %6141 = vmatpush.bf16.msra.mxu0 %v6004
  %6142 = vmatpush.bf16.msra.mxu0 %v6002
  %6143 = vmatmul.bf16.gmra.mxu0 %v6112
  %v6144 = vpop.f32.mrf.mxu0
  %v6145 = vadd.f32 0.0, %v6144
  %v6146 = vpop.f32.mrf.mxu0
  %v6147 = vadd.f32 0.0, %v6146
  %6148 = vmatmul.bf16.gmra.mxu0 %v6115
  %v6149 = vpop.f32.mrf.mxu0
  %v6150 = vadd.f32 0.0, %v6149
  %v6151 = vpop.f32.mrf.mxu0
  %6152 = vdwg.mxu0
  %s6153 = scalar_lea.vmem %s13, 208
  %v6154 = vld [vmem:[%s6153] sm:$0xff]
  %v6155 = vld [vmem:[%s6153 + $0x8] sm:$0xff]
  %v6156 = vld [vmem:[%s6153 + $0x10] sm:$0xff]
  %v6157 = vld [vmem:[%s6153 + $0x18] sm:$0xff]
  %v6158 = vld [vmem:[%s6153 + $0x20] sm:$0xff]
  %v6159 = vld [vmem:[%s6153 + $0x28] sm:$0xff]
  %v6160 = vld [vmem:[%s6153 + $0x30] sm:$0xff]
  %v6161 = vld [vmem:[%s6153 + $0x38] sm:$0xff]
  %v6162 = vld [vmem:[%s6153 + $0x40] sm:$0xff]
  %v6163 = vld [vmem:[%s6153 + $0x48] sm:$0xff]
  %v6164 = vld [vmem:[%s6153 + $0x50] sm:$0xff]
  %v6165 = vld [vmem:[%s6153 + $0x58] sm:$0xff]
  %v6166 = vld [vmem:[%s6153 + $0x60] sm:$0xff]
  %v6167 = vld [vmem:[%s6153 + $0x68] sm:$0xff]
  %v6168 = vld [vmem:[%s6153 + $0x70] sm:$0xff]
  %v6169 = vld [vmem:[%s6153 + $0x78] sm:$0xff]
  %v6170 = vld [vmem:[%s6153 + $0x80] sm:$0xff]
  %v6171 = vld [vmem:[%s6153 + $0x88] sm:$0xff]
  %v6172 = vld [vmem:[%s6153 + $0x90] sm:$0xff]
  %v6173 = vld [vmem:[%s6153 + $0x98] sm:$0xff]
  %v6174 = vld [vmem:[%s6153 + $0xa0] sm:$0xff]
  %v6175 = vld [vmem:[%s6153 + $0xa8] sm:$0xff]
  %v6176 = vld [vmem:[%s6153 + $0xb0] sm:$0xff]
  %v6177 = vld [vmem:[%s6153 + $0xb8] sm:$0xff]
  %v6178 = vld [vmem:[%s6153 + $0xc0] sm:$0xff]
  %v6179 = vld [vmem:[%s6153 + $0xc8] sm:$0xff]
  %v6180 = vpack.c.bf16 %v6129, %v6127
  %v6181 = vpack.c.bf16 %v6147, %v6145
  %v6182 = vpack.c.bf16 %v6132, %v6132
  %v6183 = vpack.c.bf16 %v6150, %v6150
  %v6210 = vunpack.c.l.b16 %v6154
  %v6211 = vunpack.c.h.b16 %v6154
  %v6212 = vunpack.c.l.b16 %v6155
  %v6213 = vunpack.c.h.b16 %v6155
  %v6214 = vunpack.c.l.b16 %v6156
  %v6215 = vunpack.c.h.b16 %v6156
  %v6216 = vunpack.c.l.b16 %v6157
  %v6217 = vunpack.c.h.b16 %v6157
  %v6218 = vunpack.c.l.b16 %v6158
  %v6219 = vunpack.c.h.b16 %v6158
  %v6220 = vunpack.c.l.b16 %v6159
  %v6221 = vunpack.c.h.b16 %v6159
  %v6222 = vunpack.c.l.b16 %v6160
  %v6223 = vunpack.c.h.b16 %v6160
  %v6224 = vunpack.c.l.b16 %v6161
  %v6225 = vunpack.c.h.b16 %v6161
  %v6226 = vunpack.c.l.b16 %v6162
  %v6227 = vunpack.c.h.b16 %v6162
  %v6228 = vunpack.c.l.b16 %v6163
  %v6229 = vunpack.c.h.b16 %v6163
  %v6230 = vunpack.c.l.b16 %v6164
  %v6231 = vunpack.c.h.b16 %v6164
  %v6232 = vunpack.c.l.b16 %v6165
  %v6233 = vunpack.c.h.b16 %v6165
  %v6234 = vunpack.c.l.b16 %v6166
  %v6235 = vunpack.c.h.b16 %v6166
  %v6236 = vunpack.c.l.b16 %v6167
  %v6237 = vunpack.c.h.b16 %v6167
  %v6238 = vunpack.c.l.b16 %v6168
  %v6239 = vunpack.c.h.b16 %v6168
  %v6240 = vunpack.c.l.b16 %v6169
  %v6241 = vunpack.c.h.b16 %v6169
  %v6242 = vunpack.c.l.b16 %v6170
  %v6243 = vunpack.c.h.b16 %v6170
  %v6244 = vunpack.c.l.b16 %v6171
  %v6245 = vunpack.c.h.b16 %v6171
  %v6246 = vunpack.c.l.b16 %v6172
  %v6247 = vunpack.c.h.b16 %v6172
  %v6248 = vunpack.c.l.b16 %v6173
  %v6249 = vunpack.c.h.b16 %v6173
  %v6250 = vunpack.c.l.b16 %v6174
  %v6251 = vunpack.c.h.b16 %v6174
  %v6252 = vunpack.c.l.b16 %v6175
  %v6253 = vunpack.c.h.b16 %v6175
  %v6254 = vunpack.c.l.b16 %v6176
  %v6255 = vunpack.c.h.b16 %v6176
  %v6256 = vunpack.c.l.b16 %v6177
  %v6257 = vunpack.c.h.b16 %v6177
  %v6258 = vunpack.c.l.b16 %v6178
  %v6259 = vunpack.c.h.b16 %v6178
  %v6260 = vunpack.c.l.b16 %v6179
  %v6261 = vunpack.c.h.b16 %v6179
  %v6262 = vpack.c.b16 %v6212, %v6210
  %v6263 = vpack.c.b16 %v6213, %v6211
  %v6264 = vpack.c.b16 %v6216, %v6214
  %v6265 = vpack.c.b16 %v6217, %v6215
  %v6266 = vpack.c.b16 %v6220, %v6218
  %v6267 = vpack.c.b16 %v6221, %v6219
  %v6268 = vpack.c.b16 %v6224, %v6222
  %v6269 = vpack.c.b16 %v6225, %v6223
  %v6270 = vpack.c.b16 %v6228, %v6226
  %v6271 = vpack.c.b16 %v6229, %v6227
  %v6272 = vpack.c.b16 %v6232, %v6230
  %v6273 = vpack.c.b16 %v6233, %v6231
  %v6274 = vpack.c.b16 %v6236, %v6234
  %v6275 = vpack.c.b16 %v6237, %v6235
  %v6276 = vpack.c.b16 %v6240, %v6238
  %v6277 = vpack.c.b16 %v6241, %v6239
  %v6278 = vpack.c.b16 %v6244, %v6242
  %v6279 = vpack.c.b16 %v6245, %v6243
  %v6280 = vpack.c.b16 %v6248, %v6246
  %v6281 = vpack.c.b16 %v6249, %v6247
  %v6282 = vpack.c.b16 %v6252, %v6250
  %v6283 = vpack.c.b16 %v6253, %v6251
  %v6284 = vpack.c.b16 %v6256, %v6254
  %v6285 = vpack.c.b16 %v6257, %v6255
  %v6286 = vpack.c.b16 %v6260, %v6258
  %v6287 = vpack.c.b16 %v6261, %v6259
  %v6315 = vsel %vm394, %v6181, 0
  %v6318 = vsel %vm394, %v6183, 0
  %6320 = vmatpush.bf16.msra.mxu0 %v6276
  %6321 = vmatpush.bf16.msra.mxu0 %v6274
  %6322 = vmatpush.bf16.msra.mxu0 %v6272
  %6323 = vmatpush.bf16.msra.mxu0 %v6270
  %6324 = vmatpush.bf16.msra.mxu0 %v6268
  %6325 = vmatpush.bf16.msra.mxu0 %v6266
  %6326 = vmatpush.bf16.msra.mxu0 %v6264
  %6327 = vmatpush.bf16.msra.mxu0 %v6262
  %6328 = vmatmul.bf16.gmra.mxu0 %v6180
  %v6329 = vpop.f32.mrf.mxu0
  %v6330 = vadd.f32 0.0, %v6329
  %v6331 = vpop.f32.mrf.mxu0
  %v6332 = vadd.f32 0.0, %v6331
  %6333 = vmatmul.bf16.gmra.mxu0 %v6182
  %v6334 = vpop.f32.mrf.mxu0
  %v6335 = vadd.f32 0.0, %v6334
  %v6336 = vpop.f32.mrf.mxu0
  %6337 = vdwg.mxu0
  %6338 = vmatpush.bf16.msra.mxu0 0
  %6339 = vmatpush.bf16.msra.mxu0 0
  %6340 = vmatpush.bf16.msra.mxu0 0
  %6341 = vmatpush.bf16.msra.mxu0 %v6286
  %6342 = vmatpush.bf16.msra.mxu0 %v6284
  %6343 = vmatpush.bf16.msra.mxu0 %v6282
  %6344 = vmatpush.bf16.msra.mxu0 %v6280
  %6345 = vmatpush.bf16.msra.mxu0 %v6278
  %6346 = vmatmul.bf16.gmra.mxu0 %v6315
  %v6347 = vpop.f32.mrf.mxu0
  %v6348 = vadd.f32 %v6330, %v6347
  %v6349 = vpop.f32.mrf.mxu0
  %v6350 = vadd.f32 %v6332, %v6349
  %6351 = vmatmul.bf16.gmra.mxu0 %v6318
  %v6352 = vpop.f32.mrf.mxu0
  %v6353 = vadd.f32 %v6335, %v6352
  %v6354 = vpop.f32.mrf.mxu0
  %6355 = vdwg.mxu0
  %6356 = vmatpush.bf16.msra.mxu0 %v6277
  %6357 = vmatpush.bf16.msra.mxu0 %v6275
  %6358 = vmatpush.bf16.msra.mxu0 %v6273
  %6359 = vmatpush.bf16.msra.mxu0 %v6271
  %6360 = vmatpush.bf16.msra.mxu0 %v6269
  %6361 = vmatpush.bf16.msra.mxu0 %v6267
  %6362 = vmatpush.bf16.msra.mxu0 %v6265
  %6363 = vmatpush.bf16.msra.mxu0 %v6263
  %6364 = vmatmul.bf16.gmra.mxu0 %v6180
  %v6365 = vpop.f32.mrf.mxu0
  %v6366 = vadd.f32 0.0, %v6365
  %v6367 = vpop.f32.mrf.mxu0
  %v6368 = vadd.f32 0.0, %v6367
  %6369 = vmatmul.bf16.gmra.mxu0 %v6182
  %v6370 = vpop.f32.mrf.mxu0
  %v6371 = vadd.f32 0.0, %v6370
  %v6372 = vpop.f32.mrf.mxu0
  %6373 = vdwg.mxu0
  %6374 = vmatpush.bf16.msra.mxu0 0
  %6375 = vmatpush.bf16.msra.mxu0 0
  %6376 = vmatpush.bf16.msra.mxu0 0
  %6377 = vmatpush.bf16.msra.mxu0 %v6287
  %6378 = vmatpush.bf16.msra.mxu0 %v6285
  %6379 = vmatpush.bf16.msra.mxu0 %v6283
  %6380 = vmatpush.bf16.msra.mxu0 %v6281
  %6381 = vmatpush.bf16.msra.mxu0 %v6279
  %6382 = vmatmul.bf16.gmra.mxu0 %v6315
  %v6383 = vpop.f32.mrf.mxu0
  %v6384 = vadd.f32 %v6366, %v6383
  %v6385 = vpop.f32.mrf.mxu0
  %v6386 = vadd.f32 %v6368, %v6385
  %6387 = vmatmul.bf16.gmra.mxu0 %v6318
  %v6388 = vpop.f32.mrf.mxu0
  %v6389 = vadd.f32 %v6371, %v6388
  %v6390 = vpop.f32.mrf.mxu0
  %6391 = vdwg.mxu0
  %v6418 = vunpack.c.l.b16 %v6069
  %v6419 = vunpack.c.h.b16 %v6069
  %v6420 = vunpack.c.l.b16 %v6070
  %v6421 = vunpack.c.h.b16 %v6070
  %v6422 = vunpack.c.l.b16 %v6071
  %v6423 = vunpack.c.h.b16 %v6071
  %v6424 = vunpack.c.l.b16 %v6072
  %v6425 = vunpack.c.h.b16 %v6072
  %v6426 = vunpack.c.l.b16 %v6073
  %v6427 = vunpack.c.h.b16 %v6073
  %v6428 = vunpack.c.l.b16 %v6074
  %v6429 = vunpack.c.h.b16 %v6074
  %v6430 = vunpack.c.l.b16 %v6075
  %v6431 = vunpack.c.h.b16 %v6075
  %v6432 = vunpack.c.l.b16 %v6076
  %v6433 = vunpack.c.h.b16 %v6076
  %v6434 = vunpack.c.l.b16 %v6077
  %v6435 = vunpack.c.h.b16 %v6077
  %v6436 = vunpack.c.l.b16 %v6078
  %v6437 = vunpack.c.h.b16 %v6078
  %v6438 = vunpack.c.l.b16 %v6079
  %v6439 = vunpack.c.h.b16 %v6079
  %v6440 = vunpack.c.l.b16 %v6080
  %v6441 = vunpack.c.h.b16 %v6080
  %v6442 = vunpack.c.l.b16 %v6081
  %v6443 = vunpack.c.h.b16 %v6081
  %v6444 = vunpack.c.l.b16 %v6082
  %v6445 = vunpack.c.h.b16 %v6082
  %v6446 = vunpack.c.l.b16 %v6083
  %v6447 = vunpack.c.h.b16 %v6083
  %v6448 = vunpack.c.l.b16 %v6084
  %v6449 = vunpack.c.h.b16 %v6084
  %v6450 = vunpack.c.l.b16 %v6085
  %v6451 = vunpack.c.h.b16 %v6085
  %v6452 = vunpack.c.l.b16 %v6086
  %v6453 = vunpack.c.h.b16 %v6086
  %v6454 = vunpack.c.l.b16 %v6087
  %v6455 = vunpack.c.h.b16 %v6087
  %v6456 = vunpack.c.l.b16 %v6088
  %v6457 = vunpack.c.h.b16 %v6088
  %v6458 = vunpack.c.l.b16 %v6089
  %v6459 = vunpack.c.h.b16 %v6089
  %v6460 = vunpack.c.l.b16 %v6090
  %v6461 = vunpack.c.h.b16 %v6090
  %v6462 = vunpack.c.l.b16 %v6091
  %v6463 = vunpack.c.h.b16 %v6091
  %v6464 = vunpack.c.l.b16 %v6092
  %v6465 = vunpack.c.h.b16 %v6092
  %v6466 = vunpack.c.l.b16 %v6093
  %v6467 = vunpack.c.h.b16 %v6093
  %v6468 = vunpack.c.l.b16 %v6094
  %v6469 = vunpack.c.h.b16 %v6094
  %v6470 = vpack.c.b16 %v6420, %v6418
  %v6471 = vpack.c.b16 %v6421, %v6419
  %v6472 = vpack.c.b16 %v6424, %v6422
  %v6473 = vpack.c.b16 %v6425, %v6423
  %v6474 = vpack.c.b16 %v6428, %v6426
  %v6475 = vpack.c.b16 %v6429, %v6427
  %v6476 = vpack.c.b16 %v6432, %v6430
  %v6477 = vpack.c.b16 %v6433, %v6431
  %v6478 = vpack.c.b16 %v6436, %v6434
  %v6479 = vpack.c.b16 %v6437, %v6435
  %v6480 = vpack.c.b16 %v6440, %v6438
  %v6481 = vpack.c.b16 %v6441, %v6439
  %v6482 = vpack.c.b16 %v6444, %v6442
  %v6483 = vpack.c.b16 %v6445, %v6443
  %v6484 = vpack.c.b16 %v6448, %v6446
  %v6485 = vpack.c.b16 %v6449, %v6447
  %v6486 = vpack.c.b16 %v6452, %v6450
  %v6487 = vpack.c.b16 %v6453, %v6451
  %v6488 = vpack.c.b16 %v6456, %v6454
  %v6489 = vpack.c.b16 %v6457, %v6455
  %v6490 = vpack.c.b16 %v6460, %v6458
  %v6491 = vpack.c.b16 %v6461, %v6459
  %v6492 = vpack.c.b16 %v6464, %v6462
  %v6493 = vpack.c.b16 %v6465, %v6463
  %v6494 = vpack.c.b16 %v6468, %v6466
  %v6495 = vpack.c.b16 %v6469, %v6467
  %v6523 = vsel %vm394, %v6096, 0
  %v6526 = vsel %vm394, %v6098, 0
  %6528 = vmatpush.bf16.msra.mxu0 %v6484
  %6529 = vmatpush.bf16.msra.mxu0 %v6482
  %6530 = vmatpush.bf16.msra.mxu0 %v6480
  %6531 = vmatpush.bf16.msra.mxu0 %v6478
  %6532 = vmatpush.bf16.msra.mxu0 %v6476
  %6533 = vmatpush.bf16.msra.mxu0 %v6474
  %6534 = vmatpush.bf16.msra.mxu0 %v6472
  %6535 = vmatpush.bf16.msra.mxu0 %v6470
  %6536 = vmatmul.bf16.gmra.mxu0 %v6095
  %v6537 = vpop.f32.mrf.mxu0
  %v6538 = vadd.f32 %v6348, %v6537
  %v6539 = vpop.f32.mrf.mxu0
  %v6540 = vadd.f32 %v6350, %v6539
  %6541 = vmatmul.bf16.gmra.mxu0 %v6097
  %v6542 = vpop.f32.mrf.mxu0
  %v6543 = vadd.f32 %v6353, %v6542
  %v6544 = vpop.f32.mrf.mxu0
  %6545 = vdwg.mxu0
  %6546 = vmatpush.bf16.msra.mxu0 0
  %6547 = vmatpush.bf16.msra.mxu0 0
  %6548 = vmatpush.bf16.msra.mxu0 0
  %6549 = vmatpush.bf16.msra.mxu0 %v6494
  %6550 = vmatpush.bf16.msra.mxu0 %v6492
  %6551 = vmatpush.bf16.msra.mxu0 %v6490
  %6552 = vmatpush.bf16.msra.mxu0 %v6488
  %6553 = vmatpush.bf16.msra.mxu0 %v6486
  %6554 = vmatmul.bf16.gmra.mxu0 %v6523
  %v6555 = vpop.f32.mrf.mxu0
  %v6556 = vadd.f32 %v6538, %v6555
  %v6557 = vpop.f32.mrf.mxu0
  %v6558 = vadd.f32 %v6540, %v6557
  %6559 = vmatmul.bf16.gmra.mxu0 %v6526
  %v6560 = vpop.f32.mrf.mxu0
  %v6561 = vadd.f32 %v6543, %v6560
  %v6562 = vpop.f32.mrf.mxu0
  %6563 = vdwg.mxu0
  %6564 = vmatpush.bf16.msra.mxu0 %v6485
  %6565 = vmatpush.bf16.msra.mxu0 %v6483
  %6566 = vmatpush.bf16.msra.mxu0 %v6481
  %6567 = vmatpush.bf16.msra.mxu0 %v6479
  %6568 = vmatpush.bf16.msra.mxu0 %v6477
  %6569 = vmatpush.bf16.msra.mxu0 %v6475
  %6570 = vmatpush.bf16.msra.mxu0 %v6473
  %6571 = vmatpush.bf16.msra.mxu0 %v6471
  %6572 = vmatmul.bf16.gmra.mxu0 %v6095
  %v6573 = vpop.f32.mrf.mxu0
  %v6574 = vadd.f32 %v6384, %v6573
  %v6575 = vpop.f32.mrf.mxu0
  %v6576 = vadd.f32 %v6386, %v6575
  %6577 = vmatmul.bf16.gmra.mxu0 %v6097
  %v6578 = vpop.f32.mrf.mxu0
  %v6579 = vadd.f32 %v6389, %v6578
  %v6580 = vpop.f32.mrf.mxu0
  %6581 = vdwg.mxu0
  %6582 = vmatpush.bf16.msra.mxu0 0
  %6583 = vmatpush.bf16.msra.mxu0 0
  %6584 = vmatpush.bf16.msra.mxu0 0
  %6585 = vmatpush.bf16.msra.mxu0 %v6495
  %6586 = vmatpush.bf16.msra.mxu0 %v6493
  %6587 = vmatpush.bf16.msra.mxu0 %v6491
  %6588 = vmatpush.bf16.msra.mxu0 %v6489
  %6589 = vmatpush.bf16.msra.mxu0 %v6487
  %6590 = vmatmul.bf16.gmra.mxu0 %v6523
  %v6591 = vpop.f32.mrf.mxu0
  %v6592 = vadd.f32 %v6574, %v6591
  %v6593 = vpop.f32.mrf.mxu0
  %v6594 = vadd.f32 %v6576, %v6593
  %6595 = vmatmul.bf16.gmra.mxu0 %v6526
  %v6596 = vpop.f32.mrf.mxu0
  %v6597 = vadd.f32 %v6579, %v6596
  %v6598 = vpop.f32.mrf.mxu0
  %6599 = vdwg.mxu0
  %s6600 = scalar_lea.vmem %s17, 24
  %v6601 = vld [vmem:[%s6600] sm:$0xf]
  %v6602 = vld [vmem:[%s6600 + $0x4] sm:$0xf]
  %v6603 = vld [vmem:[%s6600 + $0x8] sm:$0x3]
  %v6607 = vunpack.c.l.b16 %v6601
  %v6608 = vunpack.c.l.b16 %v6602
  %v6609 = vunpack.c.l.b16 %v6603
  %v6610 = vpack.c.b16 %v6608, %v6607
  %v6611 = vpack.c.b16 %v6609, %v6609
  %v6613 = vsel %vm6020, %v6610, 0
  %v6616 = vsel %vm6020, %v6611, 0
  %6618 = vmatpush.bf16.msra.mxu0 0
  %6619 = vmatpush.bf16.msra.mxu0 0
  %6620 = vmatpush.bf16.msra.mxu0 0
  %6621 = vmatpush.bf16.msra.mxu0 0
  %6622 = vmatpush.bf16.msra.mxu0 %v6028
  %6623 = vmatpush.bf16.msra.mxu0 %v6005
  %6624 = vmatpush.bf16.msra.mxu0 %v6003
  %6625 = vmatpush.bf16.msra.mxu0 %v6001
  %6626 = vmatmul.bf16.gmra.mxu0 %v6613
  %v6627 = vpop.f32.mrf.mxu0
  %v6628 = vadd.f32 0.0, %v6627
  %v6629 = vpop.f32.mrf.mxu0
  %v6630 = vadd.f32 0.0, %v6629
  %6631 = vmatmul.bf16.gmra.mxu0 %v6616
  %v6632 = vpop.f32.mrf.mxu0
  %v6633 = vadd.f32 0.0, %v6632
  %v6634 = vpop.f32.mrf.mxu0
  %6635 = vdwg.mxu0
  %6636 = vmatpush.bf16.msra.mxu0 0
  %6637 = vmatpush.bf16.msra.mxu0 0
  %6638 = vmatpush.bf16.msra.mxu0 0
  %6639 = vmatpush.bf16.msra.mxu0 0
  %6640 = vmatpush.bf16.msra.mxu0 %v6031
  %6641 = vmatpush.bf16.msra.mxu0 %v6006
  %6642 = vmatpush.bf16.msra.mxu0 %v6004
  %6643 = vmatpush.bf16.msra.mxu0 %v6002
  %6644 = vmatmul.bf16.gmra.mxu0 %v6613
  %v6645 = vpop.f32.mrf.mxu0
  %v6646 = vadd.f32 0.0, %v6645
  %v6647 = vpop.f32.mrf.mxu0
  %v6648 = vadd.f32 0.0, %v6647
  %6649 = vmatmul.bf16.gmra.mxu0 %v6616
  %v6650 = vpop.f32.mrf.mxu0
  %v6651 = vadd.f32 0.0, %v6650
  %v6652 = vpop.f32.mrf.mxu0
  %6653 = vdwg.mxu0
  %s6654 = scalar_lea.vmem %s13, 416
  %v6655 = vld [vmem:[%s6654] sm:$0xff]
  %v6656 = vld [vmem:[%s6654 + $0x8] sm:$0xff]
  %v6657 = vld [vmem:[%s6654 + $0x10] sm:$0xff]
  %v6658 = vld [vmem:[%s6654 + $0x18] sm:$0xff]
  %v6659 = vld [vmem:[%s6654 + $0x20] sm:$0xff]
  %v6660 = vld [vmem:[%s6654 + $0x28] sm:$0xff]
  %v6661 = vld [vmem:[%s6654 + $0x30] sm:$0xff]
  %v6662 = vld [vmem:[%s6654 + $0x38] sm:$0xff]
  %v6663 = vld [vmem:[%s6654 + $0x40] sm:$0xff]
  %v6664 = vld [vmem:[%s6654 + $0x48] sm:$0xff]
  %v6665 = vld [vmem:[%s6654 + $0x50] sm:$0xff]
  %v6666 = vld [vmem:[%s6654 + $0x58] sm:$0xff]
  %v6667 = vld [vmem:[%s6654 + $0x60] sm:$0xff]
  %v6668 = vld [vmem:[%s6654 + $0x68] sm:$0xff]
  %v6669 = vld [vmem:[%s6654 + $0x70] sm:$0xff]
  %v6670 = vld [vmem:[%s6654 + $0x78] sm:$0xff]
  %v6671 = vld [vmem:[%s6654 + $0x80] sm:$0xff]
  %v6672 = vld [vmem:[%s6654 + $0x88] sm:$0xff]
  %v6673 = vld [vmem:[%s6654 + $0x90] sm:$0xff]
  %v6674 = vld [vmem:[%s6654 + $0x98] sm:$0xff]
  %v6675 = vld [vmem:[%s6654 + $0xa0] sm:$0xff]
  %v6676 = vld [vmem:[%s6654 + $0xa8] sm:$0xff]
  %v6677 = vld [vmem:[%s6654 + $0xb0] sm:$0xff]
  %v6678 = vld [vmem:[%s6654 + $0xb8] sm:$0xff]
  %v6679 = vld [vmem:[%s6654 + $0xc0] sm:$0xff]
  %v6680 = vld [vmem:[%s6654 + $0xc8] sm:$0xff]
  %v6681 = vpack.c.bf16 %v6630, %v6628
  %v6682 = vpack.c.bf16 %v6648, %v6646
  %v6683 = vpack.c.bf16 %v6633, %v6633
  %v6684 = vpack.c.bf16 %v6651, %v6651
  %v6711 = vunpack.c.l.b16 %v6655
  %v6712 = vunpack.c.h.b16 %v6655
  %v6713 = vunpack.c.l.b16 %v6656
  %v6714 = vunpack.c.h.b16 %v6656
  %v6715 = vunpack.c.l.b16 %v6657
  %v6716 = vunpack.c.h.b16 %v6657
  %v6717 = vunpack.c.l.b16 %v6658
  %v6718 = vunpack.c.h.b16 %v6658
  %v6719 = vunpack.c.l.b16 %v6659
  %v6720 = vunpack.c.h.b16 %v6659
  %v6721 = vunpack.c.l.b16 %v6660
  %v6722 = vunpack.c.h.b16 %v6660
  %v6723 = vunpack.c.l.b16 %v6661
  %v6724 = vunpack.c.h.b16 %v6661
  %v6725 = vunpack.c.l.b16 %v6662
  %v6726 = vunpack.c.h.b16 %v6662
  %v6727 = vunpack.c.l.b16 %v6663
  %v6728 = vunpack.c.h.b16 %v6663
  %v6729 = vunpack.c.l.b16 %v6664
  %v6730 = vunpack.c.h.b16 %v6664
  %v6731 = vunpack.c.l.b16 %v6665
  %v6732 = vunpack.c.h.b16 %v6665
  %v6733 = vunpack.c.l.b16 %v6666
  %v6734 = vunpack.c.h.b16 %v6666
  %v6735 = vunpack.c.l.b16 %v6667
  %v6736 = vunpack.c.h.b16 %v6667
  %v6737 = vunpack.c.l.b16 %v6668
  %v6738 = vunpack.c.h.b16 %v6668
  %v6739 = vunpack.c.l.b16 %v6669
  %v6740 = vunpack.c.h.b16 %v6669
  %v6741 = vunpack.c.l.b16 %v6670
  %v6742 = vunpack.c.h.b16 %v6670
  %v6743 = vunpack.c.l.b16 %v6671
  %v6744 = vunpack.c.h.b16 %v6671
  %v6745 = vunpack.c.l.b16 %v6672
  %v6746 = vunpack.c.h.b16 %v6672
  %v6747 = vunpack.c.l.b16 %v6673
  %v6748 = vunpack.c.h.b16 %v6673
  %v6749 = vunpack.c.l.b16 %v6674
  %v6750 = vunpack.c.h.b16 %v6674
  %v6751 = vunpack.c.l.b16 %v6675
  %v6752 = vunpack.c.h.b16 %v6675
  %v6753 = vunpack.c.l.b16 %v6676
  %v6754 = vunpack.c.h.b16 %v6676
  %v6755 = vunpack.c.l.b16 %v6677
  %v6756 = vunpack.c.h.b16 %v6677
  %v6757 = vunpack.c.l.b16 %v6678
  %v6758 = vunpack.c.h.b16 %v6678
  %v6759 = vunpack.c.l.b16 %v6679
  %v6760 = vunpack.c.h.b16 %v6679
  %v6761 = vunpack.c.l.b16 %v6680
  %v6762 = vunpack.c.h.b16 %v6680
  %v6763 = vpack.c.b16 %v6713, %v6711
  %v6764 = vpack.c.b16 %v6714, %v6712
  %v6765 = vpack.c.b16 %v6717, %v6715
  %v6766 = vpack.c.b16 %v6718, %v6716
  %v6767 = vpack.c.b16 %v6721, %v6719
  %v6768 = vpack.c.b16 %v6722, %v6720
  %v6769 = vpack.c.b16 %v6725, %v6723
  %v6770 = vpack.c.b16 %v6726, %v6724
  %v6771 = vpack.c.b16 %v6729, %v6727
  %v6772 = vpack.c.b16 %v6730, %v6728
  %v6773 = vpack.c.b16 %v6733, %v6731
  %v6774 = vpack.c.b16 %v6734, %v6732
  %v6775 = vpack.c.b16 %v6737, %v6735
  %v6776 = vpack.c.b16 %v6738, %v6736
  %v6777 = vpack.c.b16 %v6741, %v6739
  %v6778 = vpack.c.b16 %v6742, %v6740
  %v6779 = vpack.c.b16 %v6745, %v6743
  %v6780 = vpack.c.b16 %v6746, %v6744
  %v6781 = vpack.c.b16 %v6749, %v6747
  %v6782 = vpack.c.b16 %v6750, %v6748
  %v6783 = vpack.c.b16 %v6753, %v6751
  %v6784 = vpack.c.b16 %v6754, %v6752
  %v6785 = vpack.c.b16 %v6757, %v6755
  %v6786 = vpack.c.b16 %v6758, %v6756
  %v6787 = vpack.c.b16 %v6761, %v6759
  %v6788 = vpack.c.b16 %v6762, %v6760
  %v6816 = vsel %vm394, %v6682, 0
  %v6819 = vsel %vm394, %v6684, 0
  %6821 = vmatpush.bf16.msra.mxu0 %v6777
  %6822 = vmatpush.bf16.msra.mxu0 %v6775
  %6823 = vmatpush.bf16.msra.mxu0 %v6773
  %6824 = vmatpush.bf16.msra.mxu0 %v6771
  %6825 = vmatpush.bf16.msra.mxu0 %v6769
  %6826 = vmatpush.bf16.msra.mxu0 %v6767
  %6827 = vmatpush.bf16.msra.mxu0 %v6765
  %6828 = vmatpush.bf16.msra.mxu0 %v6763
  %6829 = vmatmul.bf16.gmra.mxu0 %v6681
  %v6830 = vpop.f32.mrf.mxu0
  %v6831 = vadd.f32 0.0, %v6830
  %v6832 = vpop.f32.mrf.mxu0
  %v6833 = vadd.f32 0.0, %v6832
  %6834 = vmatmul.bf16.gmra.mxu0 %v6683
  %v6835 = vpop.f32.mrf.mxu0
  %v6836 = vadd.f32 0.0, %v6835
  %v6837 = vpop.f32.mrf.mxu0
  %6838 = vdwg.mxu0
  %6839 = vmatpush.bf16.msra.mxu0 0
  %6840 = vmatpush.bf16.msra.mxu0 0
  %6841 = vmatpush.bf16.msra.mxu0 0
  %6842 = vmatpush.bf16.msra.mxu0 %v6787
  %6843 = vmatpush.bf16.msra.mxu0 %v6785
  %6844 = vmatpush.bf16.msra.mxu0 %v6783
  %6845 = vmatpush.bf16.msra.mxu0 %v6781
  %6846 = vmatpush.bf16.msra.mxu0 %v6779
  %6847 = vmatmul.bf16.gmra.mxu0 %v6816
  %v6848 = vpop.f32.mrf.mxu0
  %v6849 = vadd.f32 %v6831, %v6848
  %v6850 = vpop.f32.mrf.mxu0
  %v6851 = vadd.f32 %v6833, %v6850
  %6852 = vmatmul.bf16.gmra.mxu0 %v6819
  %v6853 = vpop.f32.mrf.mxu0
  %v6854 = vadd.f32 %v6836, %v6853
  %v6855 = vpop.f32.mrf.mxu0
  %6856 = vdwg.mxu0
  %6857 = vmatpush.bf16.msra.mxu0 %v6778
  %6858 = vmatpush.bf16.msra.mxu0 %v6776
  %6859 = vmatpush.bf16.msra.mxu0 %v6774
  %6860 = vmatpush.bf16.msra.mxu0 %v6772
  %6861 = vmatpush.bf16.msra.mxu0 %v6770
  %6862 = vmatpush.bf16.msra.mxu0 %v6768
  %6863 = vmatpush.bf16.msra.mxu0 %v6766
  %6864 = vmatpush.bf16.msra.mxu0 %v6764
  %6865 = vmatmul.bf16.gmra.mxu0 %v6681
  %v6866 = vpop.f32.mrf.mxu0
  %v6867 = vadd.f32 0.0, %v6866
  %v6868 = vpop.f32.mrf.mxu0
  %v6869 = vadd.f32 0.0, %v6868
  %6870 = vmatmul.bf16.gmra.mxu0 %v6683
  %v6871 = vpop.f32.mrf.mxu0
  %v6872 = vadd.f32 0.0, %v6871
  %v6873 = vpop.f32.mrf.mxu0
  %6874 = vdwg.mxu0
  %6875 = vmatpush.bf16.msra.mxu0 0
  %6876 = vmatpush.bf16.msra.mxu0 0
  %6877 = vmatpush.bf16.msra.mxu0 0
  %6878 = vmatpush.bf16.msra.mxu0 %v6788
  %6879 = vmatpush.bf16.msra.mxu0 %v6786
  %6880 = vmatpush.bf16.msra.mxu0 %v6784
  %6881 = vmatpush.bf16.msra.mxu0 %v6782
  %6882 = vmatpush.bf16.msra.mxu0 %v6780
  %6883 = vmatmul.bf16.gmra.mxu0 %v6816
  %v6884 = vpop.f32.mrf.mxu0
  %v6885 = vadd.f32 %v6867, %v6884
  %v6886 = vpop.f32.mrf.mxu0
  %v6887 = vadd.f32 %v6869, %v6886
  %6888 = vmatmul.bf16.gmra.mxu0 %v6819
  %v6889 = vpop.f32.mrf.mxu0
  %v6890 = vadd.f32 %v6872, %v6889
  %v6891 = vpop.f32.mrf.mxu0
  %6892 = vdwg.mxu0
  %v6893 = vadd.f32 %v6556, %v6849
  %v6894 = vadd.f32 %v6592, %v6885
  %v6895 = vadd.f32 %v6558, %v6851
  %v6896 = vadd.f32 %v6594, %v6887
  %v6897 = vadd.f32 %v6561, %v6854
  %v6898 = vadd.f32 %v6597, %v6890
  %s6899 = scalar_lea.vmem %s17, 36
  %v6900 = vld [vmem:[%s6899] sm:$0xf]
  %v6901 = vld [vmem:[%s6899 + $0x4] sm:$0xf]
  %v6902 = vld [vmem:[%s6899 + $0x8] sm:$0x3]
  %v6906 = vunpack.c.l.b16 %v6900
  %v6907 = vunpack.c.l.b16 %v6901
  %v6908 = vunpack.c.l.b16 %v6902
  %v6909 = vpack.c.b16 %v6907, %v6906
  %v6910 = vpack.c.b16 %v6908, %v6908
  %v6912 = vsel %vm6020, %v6909, 0
  %v6915 = vsel %vm6020, %v6910, 0
  %6917 = vmatpush.bf16.msra.mxu0 0
  %6918 = vmatpush.bf16.msra.mxu0 0
  %6919 = vmatpush.bf16.msra.mxu0 0
  %6920 = vmatpush.bf16.msra.mxu0 0
  %6921 = vmatpush.bf16.msra.mxu0 %v6028
  %6922 = vmatpush.bf16.msra.mxu0 %v6005
  %6923 = vmatpush.bf16.msra.mxu0 %v6003
  %6924 = vmatpush.bf16.msra.mxu0 %v6001
  %6925 = vmatmul.bf16.gmra.mxu0 %v6912
  %v6926 = vpop.f32.mrf.mxu0
  %v6927 = vadd.f32 0.0, %v6926
  %v6928 = vpop.f32.mrf.mxu0
  %v6929 = vadd.f32 0.0, %v6928
  %6930 = vmatmul.bf16.gmra.mxu0 %v6915
  %v6931 = vpop.f32.mrf.mxu0
  %v6932 = vadd.f32 0.0, %v6931
  %v6933 = vpop.f32.mrf.mxu0
  %6934 = vdwg.mxu0
  %6935 = vmatpush.bf16.msra.mxu0 0
  %6936 = vmatpush.bf16.msra.mxu0 0
  %6937 = vmatpush.bf16.msra.mxu0 0
  %6938 = vmatpush.bf16.msra.mxu0 0
  %6939 = vmatpush.bf16.msra.mxu0 %v6031
  %6940 = vmatpush.bf16.msra.mxu0 %v6006
  %6941 = vmatpush.bf16.msra.mxu0 %v6004
  %6942 = vmatpush.bf16.msra.mxu0 %v6002
  %6943 = vmatmul.bf16.gmra.mxu0 %v6912
  %v6944 = vpop.f32.mrf.mxu0
  %v6945 = vadd.f32 0.0, %v6944
  %v6946 = vpop.f32.mrf.mxu0
  %v6947 = vadd.f32 0.0, %v6946
  %6948 = vmatmul.bf16.gmra.mxu0 %v6915
  %v6949 = vpop.f32.mrf.mxu0
  %v6950 = vadd.f32 0.0, %v6949
  %v6951 = vpop.f32.mrf.mxu0
  %6952 = vdwg.mxu0
  %s6953 = scalar_lea.vmem %s13, 624
  %v6954 = vld [vmem:[%s6953] sm:$0xff]
  %v6955 = vld [vmem:[%s6953 + $0x8] sm:$0xff]
  %v6956 = vld [vmem:[%s6953 + $0x10] sm:$0xff]
  %v6957 = vld [vmem:[%s6953 + $0x18] sm:$0xff]
  %v6958 = vld [vmem:[%s6953 + $0x20] sm:$0xff]
  %v6959 = vld [vmem:[%s6953 + $0x28] sm:$0xff]
  %v6960 = vld [vmem:[%s6953 + $0x30] sm:$0xff]
  %v6961 = vld [vmem:[%s6953 + $0x38] sm:$0xff]
  %v6962 = vld [vmem:[%s6953 + $0x40] sm:$0xff]
  %v6963 = vld [vmem:[%s6953 + $0x48] sm:$0xff]
  %v6964 = vld [vmem:[%s6953 + $0x50] sm:$0xff]
  %v6965 = vld [vmem:[%s6953 + $0x58] sm:$0xff]
  %v6966 = vld [vmem:[%s6953 + $0x60] sm:$0xff]
  %v6967 = vld [vmem:[%s6953 + $0x68] sm:$0xff]
  %v6968 = vld [vmem:[%s6953 + $0x70] sm:$0xff]
  %v6969 = vld [vmem:[%s6953 + $0x78] sm:$0xff]
  %v6970 = vld [vmem:[%s6953 + $0x80] sm:$0xff]
  %v6971 = vld [vmem:[%s6953 + $0x88] sm:$0xff]
  %v6972 = vld [vmem:[%s6953 + $0x90] sm:$0xff]
  %v6973 = vld [vmem:[%s6953 + $0x98] sm:$0xff]
  %v6974 = vld [vmem:[%s6953 + $0xa0] sm:$0xff]
  %v6975 = vld [vmem:[%s6953 + $0xa8] sm:$0xff]
  %v6976 = vld [vmem:[%s6953 + $0xb0] sm:$0xff]
  %v6977 = vld [vmem:[%s6953 + $0xb8] sm:$0xff]
  %v6978 = vld [vmem:[%s6953 + $0xc0] sm:$0xff]
  %v6979 = vld [vmem:[%s6953 + $0xc8] sm:$0xff]
  %v6980 = vpack.c.bf16 %v6929, %v6927
  %v6981 = vpack.c.bf16 %v6947, %v6945
  %v6982 = vpack.c.bf16 %v6932, %v6932
  %v6983 = vpack.c.bf16 %v6950, %v6950
  %v7010 = vunpack.c.l.b16 %v6954
  %v7011 = vunpack.c.h.b16 %v6954
  %v7012 = vunpack.c.l.b16 %v6955
  %v7013 = vunpack.c.h.b16 %v6955
  %v7014 = vunpack.c.l.b16 %v6956
  %v7015 = vunpack.c.h.b16 %v6956
  %v7016 = vunpack.c.l.b16 %v6957
  %v7017 = vunpack.c.h.b16 %v6957
  %v7018 = vunpack.c.l.b16 %v6958
  %v7019 = vunpack.c.h.b16 %v6958
  %v7020 = vunpack.c.l.b16 %v6959
  %v7021 = vunpack.c.h.b16 %v6959
  %v7022 = vunpack.c.l.b16 %v6960
  %v7023 = vunpack.c.h.b16 %v6960
  %v7024 = vunpack.c.l.b16 %v6961
  %v7025 = vunpack.c.h.b16 %v6961
  %v7026 = vunpack.c.l.b16 %v6962
  %v7027 = vunpack.c.h.b16 %v6962
  %v7028 = vunpack.c.l.b16 %v6963
  %v7029 = vunpack.c.h.b16 %v6963
  %v7030 = vunpack.c.l.b16 %v6964
  %v7031 = vunpack.c.h.b16 %v6964
  %v7032 = vunpack.c.l.b16 %v6965
  %v7033 = vunpack.c.h.b16 %v6965
  %v7034 = vunpack.c.l.b16 %v6966
  %v7035 = vunpack.c.h.b16 %v6966
  %v7036 = vunpack.c.l.b16 %v6967
  %v7037 = vunpack.c.h.b16 %v6967
  %v7038 = vunpack.c.l.b16 %v6968
  %v7039 = vunpack.c.h.b16 %v6968
  %v7040 = vunpack.c.l.b16 %v6969
  %v7041 = vunpack.c.h.b16 %v6969
  %v7042 = vunpack.c.l.b16 %v6970
  %v7043 = vunpack.c.h.b16 %v6970
  %v7044 = vunpack.c.l.b16 %v6971
  %v7045 = vunpack.c.h.b16 %v6971
  %v7046 = vunpack.c.l.b16 %v6972
  %v7047 = vunpack.c.h.b16 %v6972
  %v7048 = vunpack.c.l.b16 %v6973
  %v7049 = vunpack.c.h.b16 %v6973
  %v7050 = vunpack.c.l.b16 %v6974
  %v7051 = vunpack.c.h.b16 %v6974
  %v7052 = vunpack.c.l.b16 %v6975
  %v7053 = vunpack.c.h.b16 %v6975
  %v7054 = vunpack.c.l.b16 %v6976
  %v7055 = vunpack.c.h.b16 %v6976
  %v7056 = vunpack.c.l.b16 %v6977
  %v7057 = vunpack.c.h.b16 %v6977
  %v7058 = vunpack.c.l.b16 %v6978
  %v7059 = vunpack.c.h.b16 %v6978
  %v7060 = vunpack.c.l.b16 %v6979
  %v7061 = vunpack.c.h.b16 %v6979
  %v7062 = vpack.c.b16 %v7012, %v7010
  %v7063 = vpack.c.b16 %v7013, %v7011
  %v7064 = vpack.c.b16 %v7016, %v7014
  %v7065 = vpack.c.b16 %v7017, %v7015
  %v7066 = vpack.c.b16 %v7020, %v7018
  %v7067 = vpack.c.b16 %v7021, %v7019
  %v7068 = vpack.c.b16 %v7024, %v7022
  %v7069 = vpack.c.b16 %v7025, %v7023
  %v7070 = vpack.c.b16 %v7028, %v7026
  %v7071 = vpack.c.b16 %v7029, %v7027
  %v7072 = vpack.c.b16 %v7032, %v7030
  %v7073 = vpack.c.b16 %v7033, %v7031
  %v7074 = vpack.c.b16 %v7036, %v7034
  %v7075 = vpack.c.b16 %v7037, %v7035
  %v7076 = vpack.c.b16 %v7040, %v7038
  %v7077 = vpack.c.b16 %v7041, %v7039
  %v7078 = vpack.c.b16 %v7044, %v7042
  %v7079 = vpack.c.b16 %v7045, %v7043
  %v7080 = vpack.c.b16 %v7048, %v7046
  %v7081 = vpack.c.b16 %v7049, %v7047
  %v7082 = vpack.c.b16 %v7052, %v7050
  %v7083 = vpack.c.b16 %v7053, %v7051
  %v7084 = vpack.c.b16 %v7056, %v7054
  %v7085 = vpack.c.b16 %v7057, %v7055
  %v7086 = vpack.c.b16 %v7060, %v7058
  %v7087 = vpack.c.b16 %v7061, %v7059
  %v7115 = vsel %vm394, %v6981, 0
  %v7118 = vsel %vm394, %v6983, 0
  %7120 = vmatpush.bf16.msra.mxu0 %v7076
  %7121 = vmatpush.bf16.msra.mxu0 %v7074
  %7122 = vmatpush.bf16.msra.mxu0 %v7072
  %7123 = vmatpush.bf16.msra.mxu0 %v7070
  %7124 = vmatpush.bf16.msra.mxu0 %v7068
  %7125 = vmatpush.bf16.msra.mxu0 %v7066
  %7126 = vmatpush.bf16.msra.mxu0 %v7064
  %7127 = vmatpush.bf16.msra.mxu0 %v7062
  %7128 = vmatmul.bf16.gmra.mxu0 %v6980
  %v7129 = vpop.f32.mrf.mxu0
  %v7130 = vadd.f32 0.0, %v7129
  %v7131 = vpop.f32.mrf.mxu0
  %v7132 = vadd.f32 0.0, %v7131
  %7133 = vmatmul.bf16.gmra.mxu0 %v6982
  %v7134 = vpop.f32.mrf.mxu0
  %v7135 = vadd.f32 0.0, %v7134
  %v7136 = vpop.f32.mrf.mxu0
  %7137 = vdwg.mxu0
  %7138 = vmatpush.bf16.msra.mxu0 0
  %7139 = vmatpush.bf16.msra.mxu0 0
  %7140 = vmatpush.bf16.msra.mxu0 0
  %7141 = vmatpush.bf16.msra.mxu0 %v7086
  %7142 = vmatpush.bf16.msra.mxu0 %v7084
  %7143 = vmatpush.bf16.msra.mxu0 %v7082
  %7144 = vmatpush.bf16.msra.mxu0 %v7080
  %7145 = vmatpush.bf16.msra.mxu0 %v7078
  %7146 = vmatmul.bf16.gmra.mxu0 %v7115
  %v7147 = vpop.f32.mrf.mxu0
  %v7148 = vadd.f32 %v7130, %v7147
  %v7149 = vpop.f32.mrf.mxu0
  %v7150 = vadd.f32 %v7132, %v7149
  %7151 = vmatmul.bf16.gmra.mxu0 %v7118
  %v7152 = vpop.f32.mrf.mxu0
  %v7153 = vadd.f32 %v7135, %v7152
  %v7154 = vpop.f32.mrf.mxu0
  %7155 = vdwg.mxu0
  %7156 = vmatpush.bf16.msra.mxu0 %v7077
  %7157 = vmatpush.bf16.msra.mxu0 %v7075
  %7158 = vmatpush.bf16.msra.mxu0 %v7073
  %7159 = vmatpush.bf16.msra.mxu0 %v7071
  %7160 = vmatpush.bf16.msra.mxu0 %v7069
  %7161 = vmatpush.bf16.msra.mxu0 %v7067
  %7162 = vmatpush.bf16.msra.mxu0 %v7065
  %7163 = vmatpush.bf16.msra.mxu0 %v7063
  %7164 = vmatmul.bf16.gmra.mxu0 %v6980
  %v7165 = vpop.f32.mrf.mxu0
  %v7166 = vadd.f32 0.0, %v7165
  %v7167 = vpop.f32.mrf.mxu0
  %v7168 = vadd.f32 0.0, %v7167
  %7169 = vmatmul.bf16.gmra.mxu0 %v6982
  %v7170 = vpop.f32.mrf.mxu0
  %v7171 = vadd.f32 0.0, %v7170
  %v7172 = vpop.f32.mrf.mxu0
  %7173 = vdwg.mxu0
  %7174 = vmatpush.bf16.msra.mxu0 0
  %7175 = vmatpush.bf16.msra.mxu0 0
  %7176 = vmatpush.bf16.msra.mxu0 0
  %7177 = vmatpush.bf16.msra.mxu0 %v7087
  %7178 = vmatpush.bf16.msra.mxu0 %v7085
  %7179 = vmatpush.bf16.msra.mxu0 %v7083
  %7180 = vmatpush.bf16.msra.mxu0 %v7081
  %7181 = vmatpush.bf16.msra.mxu0 %v7079
  %7182 = vmatmul.bf16.gmra.mxu0 %v7115
  %v7183 = vpop.f32.mrf.mxu0
  %v7184 = vadd.f32 %v7166, %v7183
  %v7185 = vpop.f32.mrf.mxu0
  %v7186 = vadd.f32 %v7168, %v7185
  %7187 = vmatmul.bf16.gmra.mxu0 %v7118
  %v7188 = vpop.f32.mrf.mxu0
  %v7189 = vadd.f32 %v7171, %v7188
  %v7190 = vpop.f32.mrf.mxu0
  %7191 = vdwg.mxu0
  %v7192 = vadd.f32 %v6893, %v7148
  %v7193 = vadd.f32 %v6894, %v7184
  %v7194 = vadd.f32 %v6895, %v7150
  %v7195 = vadd.f32 %v6896, %v7186
  %v7196 = vadd.f32 %v6897, %v7153
  %v7197 = vadd.f32 %v6898, %v7189
  %s7198 = scalar_lea.vmem %s17, 48
  %v7199 = vld [vmem:[%s7198] sm:$0xf]
  %v7200 = vld [vmem:[%s7198 + $0x4] sm:$0xf]
  %v7201 = vld [vmem:[%s7198 + $0x8] sm:$0x3]
  %v7205 = vunpack.c.l.b16 %v7199
  %v7206 = vunpack.c.l.b16 %v7200
  %v7207 = vunpack.c.l.b16 %v7201
  %v7208 = vpack.c.b16 %v7206, %v7205
  %v7209 = vpack.c.b16 %v7207, %v7207
  %v7211 = vsel %vm6020, %v7208, 0
  %v7214 = vsel %vm6020, %v7209, 0
  %7216 = vmatpush.bf16.msra.mxu0 0
  %7217 = vmatpush.bf16.msra.mxu0 0
  %7218 = vmatpush.bf16.msra.mxu0 0
  %7219 = vmatpush.bf16.msra.mxu0 0
  %7220 = vmatpush.bf16.msra.mxu0 %v6028
  %7221 = vmatpush.bf16.msra.mxu0 %v6005
  %7222 = vmatpush.bf16.msra.mxu0 %v6003
  %7223 = vmatpush.bf16.msra.mxu0 %v6001
  %7224 = vmatmul.bf16.gmra.mxu0 %v7211
  %v7225 = vpop.f32.mrf.mxu0
  %v7226 = vadd.f32 0.0, %v7225
  %v7227 = vpop.f32.mrf.mxu0
  %v7228 = vadd.f32 0.0, %v7227
  %7229 = vmatmul.bf16.gmra.mxu0 %v7214
  %v7230 = vpop.f32.mrf.mxu0
  %v7231 = vadd.f32 0.0, %v7230
  %v7232 = vpop.f32.mrf.mxu0
  %7233 = vdwg.mxu0
  %7234 = vmatpush.bf16.msra.mxu0 0
  %7235 = vmatpush.bf16.msra.mxu0 0
  %7236 = vmatpush.bf16.msra.mxu0 0
  %7237 = vmatpush.bf16.msra.mxu0 0
  %7238 = vmatpush.bf16.msra.mxu0 %v6031
  %7239 = vmatpush.bf16.msra.mxu0 %v6006
  %7240 = vmatpush.bf16.msra.mxu0 %v6004
  %7241 = vmatpush.bf16.msra.mxu0 %v6002
  %7242 = vmatmul.bf16.gmra.mxu0 %v7211
  %v7243 = vpop.f32.mrf.mxu0
  %v7244 = vadd.f32 0.0, %v7243
  %v7245 = vpop.f32.mrf.mxu0
  %v7246 = vadd.f32 0.0, %v7245
  %7247 = vmatmul.bf16.gmra.mxu0 %v7214
  %v7248 = vpop.f32.mrf.mxu0
  %v7249 = vadd.f32 0.0, %v7248
  %v7250 = vpop.f32.mrf.mxu0
  %7251 = vdwg.mxu0
  %s7252 = scalar_lea.vmem %s13, 832
  %v7253 = vld [vmem:[%s7252] sm:$0xff]
  %v7254 = vld [vmem:[%s7252 + $0x8] sm:$0xff]
  %v7255 = vld [vmem:[%s7252 + $0x10] sm:$0xff]
  %v7256 = vld [vmem:[%s7252 + $0x18] sm:$0xff]
  %v7257 = vld [vmem:[%s7252 + $0x20] sm:$0xff]
  %v7258 = vld [vmem:[%s7252 + $0x28] sm:$0xff]
  %v7259 = vld [vmem:[%s7252 + $0x30] sm:$0xff]
  %v7260 = vld [vmem:[%s7252 + $0x38] sm:$0xff]
  %v7261 = vld [vmem:[%s7252 + $0x40] sm:$0xff]
  %v7262 = vld [vmem:[%s7252 + $0x48] sm:$0xff]
  %v7263 = vld [vmem:[%s7252 + $0x50] sm:$0xff]
  %v7264 = vld [vmem:[%s7252 + $0x58] sm:$0xff]
  %v7265 = vld [vmem:[%s7252 + $0x60] sm:$0xff]
  %v7266 = vld [vmem:[%s7252 + $0x68] sm:$0xff]
  %v7267 = vld [vmem:[%s7252 + $0x70] sm:$0xff]
  %v7268 = vld [vmem:[%s7252 + $0x78] sm:$0xff]
  %v7269 = vld [vmem:[%s7252 + $0x80] sm:$0xff]
  %v7270 = vld [vmem:[%s7252 + $0x88] sm:$0xff]
  %v7271 = vld [vmem:[%s7252 + $0x90] sm:$0xff]
  %v7272 = vld [vmem:[%s7252 + $0x98] sm:$0xff]
  %v7273 = vld [vmem:[%s7252 + $0xa0] sm:$0xff]
  %v7274 = vld [vmem:[%s7252 + $0xa8] sm:$0xff]
  %v7275 = vld [vmem:[%s7252 + $0xb0] sm:$0xff]
  %v7276 = vld [vmem:[%s7252 + $0xb8] sm:$0xff]
  %v7277 = vld [vmem:[%s7252 + $0xc0] sm:$0xff]
  %v7278 = vld [vmem:[%s7252 + $0xc8] sm:$0xff]
  %v7279 = vpack.c.bf16 %v7228, %v7226
  %v7280 = vpack.c.bf16 %v7246, %v7244
  %v7281 = vpack.c.bf16 %v7231, %v7231
  %v7282 = vpack.c.bf16 %v7249, %v7249
  %v7309 = vunpack.c.l.b16 %v7253
  %v7310 = vunpack.c.h.b16 %v7253
  %v7311 = vunpack.c.l.b16 %v7254
  %v7312 = vunpack.c.h.b16 %v7254
  %v7313 = vunpack.c.l.b16 %v7255
  %v7314 = vunpack.c.h.b16 %v7255
  %v7315 = vunpack.c.l.b16 %v7256
  %v7316 = vunpack.c.h.b16 %v7256
  %v7317 = vunpack.c.l.b16 %v7257
  %v7318 = vunpack.c.h.b16 %v7257
  %v7319 = vunpack.c.l.b16 %v7258
  %v7320 = vunpack.c.h.b16 %v7258
  %v7321 = vunpack.c.l.b16 %v7259
  %v7322 = vunpack.c.h.b16 %v7259
  %v7323 = vunpack.c.l.b16 %v7260
  %v7324 = vunpack.c.h.b16 %v7260
  %v7325 = vunpack.c.l.b16 %v7261
  %v7326 = vunpack.c.h.b16 %v7261
  %v7327 = vunpack.c.l.b16 %v7262
  %v7328 = vunpack.c.h.b16 %v7262
  %v7329 = vunpack.c.l.b16 %v7263
  %v7330 = vunpack.c.h.b16 %v7263
  %v7331 = vunpack.c.l.b16 %v7264
  %v7332 = vunpack.c.h.b16 %v7264
  %v7333 = vunpack.c.l.b16 %v7265
  %v7334 = vunpack.c.h.b16 %v7265
  %v7335 = vunpack.c.l.b16 %v7266
  %v7336 = vunpack.c.h.b16 %v7266
  %v7337 = vunpack.c.l.b16 %v7267
  %v7338 = vunpack.c.h.b16 %v7267
  %v7339 = vunpack.c.l.b16 %v7268
  %v7340 = vunpack.c.h.b16 %v7268
  %v7341 = vunpack.c.l.b16 %v7269
  %v7342 = vunpack.c.h.b16 %v7269
  %v7343 = vunpack.c.l.b16 %v7270
  %v7344 = vunpack.c.h.b16 %v7270
  %v7345 = vunpack.c.l.b16 %v7271
  %v7346 = vunpack.c.h.b16 %v7271
  %v7347 = vunpack.c.l.b16 %v7272
  %v7348 = vunpack.c.h.b16 %v7272
  %v7349 = vunpack.c.l.b16 %v7273
  %v7350 = vunpack.c.h.b16 %v7273
  %v7351 = vunpack.c.l.b16 %v7274
  %v7352 = vunpack.c.h.b16 %v7274
  %v7353 = vunpack.c.l.b16 %v7275
  %v7354 = vunpack.c.h.b16 %v7275
  %v7355 = vunpack.c.l.b16 %v7276
  %v7356 = vunpack.c.h.b16 %v7276
  %v7357 = vunpack.c.l.b16 %v7277
  %v7358 = vunpack.c.h.b16 %v7277
  %v7359 = vunpack.c.l.b16 %v7278
  %v7360 = vunpack.c.h.b16 %v7278
  %v7361 = vpack.c.b16 %v7311, %v7309
  %v7362 = vpack.c.b16 %v7312, %v7310
  %v7363 = vpack.c.b16 %v7315, %v7313
  %v7364 = vpack.c.b16 %v7316, %v7314
  %v7365 = vpack.c.b16 %v7319, %v7317
  %v7366 = vpack.c.b16 %v7320, %v7318
  %v7367 = vpack.c.b16 %v7323, %v7321
  %v7368 = vpack.c.b16 %v7324, %v7322
  %v7369 = vpack.c.b16 %v7327, %v7325
  %v7370 = vpack.c.b16 %v7328, %v7326
  %v7371 = vpack.c.b16 %v7331, %v7329
  %v7372 = vpack.c.b16 %v7332, %v7330
  %v7373 = vpack.c.b16 %v7335, %v7333
  %v7374 = vpack.c.b16 %v7336, %v7334
  %v7375 = vpack.c.b16 %v7339, %v7337
  %v7376 = vpack.c.b16 %v7340, %v7338
  %v7377 = vpack.c.b16 %v7343, %v7341
  %v7378 = vpack.c.b16 %v7344, %v7342
  %v7379 = vpack.c.b16 %v7347, %v7345
  %v7380 = vpack.c.b16 %v7348, %v7346
  %v7381 = vpack.c.b16 %v7351, %v7349
  %v7382 = vpack.c.b16 %v7352, %v7350
  %v7383 = vpack.c.b16 %v7355, %v7353
  %v7384 = vpack.c.b16 %v7356, %v7354
  %v7385 = vpack.c.b16 %v7359, %v7357
  %v7386 = vpack.c.b16 %v7360, %v7358
  %v7414 = vsel %vm394, %v7280, 0
  %v7417 = vsel %vm394, %v7282, 0
  %7419 = vmatpush.bf16.msra.mxu0 %v7375
  %7420 = vmatpush.bf16.msra.mxu0 %v7373
  %7421 = vmatpush.bf16.msra.mxu0 %v7371
  %7422 = vmatpush.bf16.msra.mxu0 %v7369
  %7423 = vmatpush.bf16.msra.mxu0 %v7367
  %7424 = vmatpush.bf16.msra.mxu0 %v7365
  %7425 = vmatpush.bf16.msra.mxu0 %v7363
  %7426 = vmatpush.bf16.msra.mxu0 %v7361
  %7427 = vmatmul.bf16.gmra.mxu0 %v7279
  %v7428 = vpop.f32.mrf.mxu0
  %v7429 = vadd.f32 0.0, %v7428
  %v7430 = vpop.f32.mrf.mxu0
  %v7431 = vadd.f32 0.0, %v7430
  %7432 = vmatmul.bf16.gmra.mxu0 %v7281
  %v7433 = vpop.f32.mrf.mxu0
  %v7434 = vadd.f32 0.0, %v7433
  %v7435 = vpop.f32.mrf.mxu0
  %7436 = vdwg.mxu0
  %7437 = vmatpush.bf16.msra.mxu0 0
  %7438 = vmatpush.bf16.msra.mxu0 0
  %7439 = vmatpush.bf16.msra.mxu0 0
  %7440 = vmatpush.bf16.msra.mxu0 %v7385
  %7441 = vmatpush.bf16.msra.mxu0 %v7383
  %7442 = vmatpush.bf16.msra.mxu0 %v7381
  %7443 = vmatpush.bf16.msra.mxu0 %v7379
  %7444 = vmatpush.bf16.msra.mxu0 %v7377
  %7445 = vmatmul.bf16.gmra.mxu0 %v7414
  %v7446 = vpop.f32.mrf.mxu0
  %v7447 = vadd.f32 %v7429, %v7446
  %v7448 = vpop.f32.mrf.mxu0
  %v7449 = vadd.f32 %v7431, %v7448
  %7450 = vmatmul.bf16.gmra.mxu0 %v7417
  %v7451 = vpop.f32.mrf.mxu0
  %v7452 = vadd.f32 %v7434, %v7451
  %v7453 = vpop.f32.mrf.mxu0
  %7454 = vdwg.mxu0
  %7455 = vmatpush.bf16.msra.mxu0 %v7376
  %7456 = vmatpush.bf16.msra.mxu0 %v7374
  %7457 = vmatpush.bf16.msra.mxu0 %v7372
  %7458 = vmatpush.bf16.msra.mxu0 %v7370
  %7459 = vmatpush.bf16.msra.mxu0 %v7368
  %7460 = vmatpush.bf16.msra.mxu0 %v7366
  %7461 = vmatpush.bf16.msra.mxu0 %v7364
  %7462 = vmatpush.bf16.msra.mxu0 %v7362
  %7463 = vmatmul.bf16.gmra.mxu0 %v7279
  %v7464 = vpop.f32.mrf.mxu0
  %v7465 = vadd.f32 0.0, %v7464
  %v7466 = vpop.f32.mrf.mxu0
  %v7467 = vadd.f32 0.0, %v7466
  %7468 = vmatmul.bf16.gmra.mxu0 %v7281
  %v7469 = vpop.f32.mrf.mxu0
  %v7470 = vadd.f32 0.0, %v7469
  %v7471 = vpop.f32.mrf.mxu0
  %7472 = vdwg.mxu0
  %7473 = vmatpush.bf16.msra.mxu0 0
  %7474 = vmatpush.bf16.msra.mxu0 0
  %7475 = vmatpush.bf16.msra.mxu0 0
  %7476 = vmatpush.bf16.msra.mxu0 %v7386
  %7477 = vmatpush.bf16.msra.mxu0 %v7384
  %7478 = vmatpush.bf16.msra.mxu0 %v7382
  %7479 = vmatpush.bf16.msra.mxu0 %v7380
  %7480 = vmatpush.bf16.msra.mxu0 %v7378
  %7481 = vmatmul.bf16.gmra.mxu0 %v7414
  %v7482 = vpop.f32.mrf.mxu0
  %v7483 = vadd.f32 %v7465, %v7482
  %v7484 = vpop.f32.mrf.mxu0
  %v7485 = vadd.f32 %v7467, %v7484
  %7486 = vmatmul.bf16.gmra.mxu0 %v7417
  %v7487 = vpop.f32.mrf.mxu0
  %v7488 = vadd.f32 %v7470, %v7487
  %v7489 = vpop.f32.mrf.mxu0
  %7490 = vdwg.mxu0
  %v7491 = vadd.f32 %v7192, %v7447
  %v7492 = vadd.f32 %v7193, %v7483
  %v7493 = vadd.f32 %v7194, %v7449
  %v7494 = vadd.f32 %v7195, %v7485
  %v7495 = vadd.f32 %v7196, %v7452
  %v7496 = vadd.f32 %v7197, %v7488
  %s7497 = scalar_lea.vmem %s17, 60
  %v7498 = vld [vmem:[%s7497] sm:$0xf]
  %v7499 = vld [vmem:[%s7497 + $0x4] sm:$0xf]
  %v7500 = vld [vmem:[%s7497 + $0x8] sm:$0x3]
  %v7504 = vunpack.c.l.b16 %v7498
  %v7505 = vunpack.c.l.b16 %v7499
  %v7506 = vunpack.c.l.b16 %v7500
  %v7507 = vpack.c.b16 %v7505, %v7504
  %v7508 = vpack.c.b16 %v7506, %v7506
  %v7510 = vsel %vm6020, %v7507, 0
  %v7513 = vsel %vm6020, %v7508, 0
  %7515 = vmatpush.bf16.msra.mxu0 0
  %7516 = vmatpush.bf16.msra.mxu0 0
  %7517 = vmatpush.bf16.msra.mxu0 0
  %7518 = vmatpush.bf16.msra.mxu0 0
  %7519 = vmatpush.bf16.msra.mxu0 %v6028
  %7520 = vmatpush.bf16.msra.mxu0 %v6005
  %7521 = vmatpush.bf16.msra.mxu0 %v6003
  %7522 = vmatpush.bf16.msra.mxu0 %v6001
  %7523 = vmatmul.bf16.gmra.mxu0 %v7510
  %v7524 = vpop.f32.mrf.mxu0
  %v7525 = vadd.f32 0.0, %v7524
  %v7526 = vpop.f32.mrf.mxu0
  %v7527 = vadd.f32 0.0, %v7526
  %7528 = vmatmul.bf16.gmra.mxu0 %v7513
  %v7529 = vpop.f32.mrf.mxu0
  %v7530 = vadd.f32 0.0, %v7529
  %v7531 = vpop.f32.mrf.mxu0
  %7532 = vdwg.mxu0
  %7533 = vmatpush.bf16.msra.mxu0 0
  %7534 = vmatpush.bf16.msra.mxu0 0
  %7535 = vmatpush.bf16.msra.mxu0 0
  %7536 = vmatpush.bf16.msra.mxu0 0
  %7537 = vmatpush.bf16.msra.mxu0 %v6031
  %7538 = vmatpush.bf16.msra.mxu0 %v6006
  %7539 = vmatpush.bf16.msra.mxu0 %v6004
  %7540 = vmatpush.bf16.msra.mxu0 %v6002
  %7541 = vmatmul.bf16.gmra.mxu0 %v7510
  %v7542 = vpop.f32.mrf.mxu0
  %v7543 = vadd.f32 0.0, %v7542
  %v7544 = vpop.f32.mrf.mxu0
  %v7545 = vadd.f32 0.0, %v7544
  %7546 = vmatmul.bf16.gmra.mxu0 %v7513
  %v7547 = vpop.f32.mrf.mxu0
  %v7548 = vadd.f32 0.0, %v7547
  %v7549 = vpop.f32.mrf.mxu0
  %7550 = vdwg.mxu0
  %s7551 = scalar_lea.vmem %s13, 1040
  %v7552 = vld [vmem:[%s7551] sm:$0xff]
  %v7553 = vld [vmem:[%s7551 + $0x8] sm:$0xff]
  %v7554 = vld [vmem:[%s7551 + $0x10] sm:$0xff]
  %v7555 = vld [vmem:[%s7551 + $0x18] sm:$0xff]
  %v7556 = vld [vmem:[%s7551 + $0x20] sm:$0xff]
  %v7557 = vld [vmem:[%s7551 + $0x28] sm:$0xff]
  %v7558 = vld [vmem:[%s7551 + $0x30] sm:$0xff]
  %v7559 = vld [vmem:[%s7551 + $0x38] sm:$0xff]
  %v7560 = vld [vmem:[%s7551 + $0x40] sm:$0xff]
  %v7561 = vld [vmem:[%s7551 + $0x48] sm:$0xff]
  %v7562 = vld [vmem:[%s7551 + $0x50] sm:$0xff]
  %v7563 = vld [vmem:[%s7551 + $0x58] sm:$0xff]
  %v7564 = vld [vmem:[%s7551 + $0x60] sm:$0xff]
  %v7565 = vld [vmem:[%s7551 + $0x68] sm:$0xff]
  %v7566 = vld [vmem:[%s7551 + $0x70] sm:$0xff]
  %v7567 = vld [vmem:[%s7551 + $0x78] sm:$0xff]
  %v7568 = vld [vmem:[%s7551 + $0x80] sm:$0xff]
  %v7569 = vld [vmem:[%s7551 + $0x88] sm:$0xff]
  %v7570 = vld [vmem:[%s7551 + $0x90] sm:$0xff]
  %v7571 = vld [vmem:[%s7551 + $0x98] sm:$0xff]
  %v7572 = vld [vmem:[%s7551 + $0xa0] sm:$0xff]
  %v7573 = vld [vmem:[%s7551 + $0xa8] sm:$0xff]
  %v7574 = vld [vmem:[%s7551 + $0xb0] sm:$0xff]
  %v7575 = vld [vmem:[%s7551 + $0xb8] sm:$0xff]
  %v7576 = vld [vmem:[%s7551 + $0xc0] sm:$0xff]
  %v7577 = vld [vmem:[%s7551 + $0xc8] sm:$0xff]
  %v7578 = vpack.c.bf16 %v7527, %v7525
  %v7579 = vpack.c.bf16 %v7545, %v7543
  %v7580 = vpack.c.bf16 %v7530, %v7530
  %v7581 = vpack.c.bf16 %v7548, %v7548
  %v7608 = vunpack.c.l.b16 %v7552
  %v7609 = vunpack.c.h.b16 %v7552
  %v7610 = vunpack.c.l.b16 %v7553
  %v7611 = vunpack.c.h.b16 %v7553
  %v7612 = vunpack.c.l.b16 %v7554
  %v7613 = vunpack.c.h.b16 %v7554
  %v7614 = vunpack.c.l.b16 %v7555
  %v7615 = vunpack.c.h.b16 %v7555
  %v7616 = vunpack.c.l.b16 %v7556
  %v7617 = vunpack.c.h.b16 %v7556
  %v7618 = vunpack.c.l.b16 %v7557
  %v7619 = vunpack.c.h.b16 %v7557
  %v7620 = vunpack.c.l.b16 %v7558
  %v7621 = vunpack.c.h.b16 %v7558
  %v7622 = vunpack.c.l.b16 %v7559
  %v7623 = vunpack.c.h.b16 %v7559
  %v7624 = vunpack.c.l.b16 %v7560
  %v7625 = vunpack.c.h.b16 %v7560
  %v7626 = vunpack.c.l.b16 %v7561
  %v7627 = vunpack.c.h.b16 %v7561
  %v7628 = vunpack.c.l.b16 %v7562
  %v7629 = vunpack.c.h.b16 %v7562
  %v7630 = vunpack.c.l.b16 %v7563
  %v7631 = vunpack.c.h.b16 %v7563
  %v7632 = vunpack.c.l.b16 %v7564
  %v7633 = vunpack.c.h.b16 %v7564
  %v7634 = vunpack.c.l.b16 %v7565
  %v7635 = vunpack.c.h.b16 %v7565
  %v7636 = vunpack.c.l.b16 %v7566
  %v7637 = vunpack.c.h.b16 %v7566
  %v7638 = vunpack.c.l.b16 %v7567
  %v7639 = vunpack.c.h.b16 %v7567
  %v7640 = vunpack.c.l.b16 %v7568
  %v7641 = vunpack.c.h.b16 %v7568
  %v7642 = vunpack.c.l.b16 %v7569
  %v7643 = vunpack.c.h.b16 %v7569
  %v7644 = vunpack.c.l.b16 %v7570
  %v7645 = vunpack.c.h.b16 %v7570
  %v7646 = vunpack.c.l.b16 %v7571
  %v7647 = vunpack.c.h.b16 %v7571
  %v7648 = vunpack.c.l.b16 %v7572
  %v7649 = vunpack.c.h.b16 %v7572
  %v7650 = vunpack.c.l.b16 %v7573
  %v7651 = vunpack.c.h.b16 %v7573
  %v7652 = vunpack.c.l.b16 %v7574
  %v7653 = vunpack.c.h.b16 %v7574
  %v7654 = vunpack.c.l.b16 %v7575
  %v7655 = vunpack.c.h.b16 %v7575
  %v7656 = vunpack.c.l.b16 %v7576
  %v7657 = vunpack.c.h.b16 %v7576
  %v7658 = vunpack.c.l.b16 %v7577
  %v7659 = vunpack.c.h.b16 %v7577
  %v7660 = vpack.c.b16 %v7610, %v7608
  %v7661 = vpack.c.b16 %v7611, %v7609
  %v7662 = vpack.c.b16 %v7614, %v7612
  %v7663 = vpack.c.b16 %v7615, %v7613
  %v7664 = vpack.c.b16 %v7618, %v7616
  %v7665 = vpack.c.b16 %v7619, %v7617
  %v7666 = vpack.c.b16 %v7622, %v7620
  %v7667 = vpack.c.b16 %v7623, %v7621
  %v7668 = vpack.c.b16 %v7626, %v7624
  %v7669 = vpack.c.b16 %v7627, %v7625
  %v7670 = vpack.c.b16 %v7630, %v7628
  %v7671 = vpack.c.b16 %v7631, %v7629
  %v7672 = vpack.c.b16 %v7634, %v7632
  %v7673 = vpack.c.b16 %v7635, %v7633
  %v7674 = vpack.c.b16 %v7638, %v7636
  %v7675 = vpack.c.b16 %v7639, %v7637
  %v7676 = vpack.c.b16 %v7642, %v7640
  %v7677 = vpack.c.b16 %v7643, %v7641
  %v7678 = vpack.c.b16 %v7646, %v7644
  %v7679 = vpack.c.b16 %v7647, %v7645
  %v7680 = vpack.c.b16 %v7650, %v7648
  %v7681 = vpack.c.b16 %v7651, %v7649
  %v7682 = vpack.c.b16 %v7654, %v7652
  %v7683 = vpack.c.b16 %v7655, %v7653
  %v7684 = vpack.c.b16 %v7658, %v7656
  %v7685 = vpack.c.b16 %v7659, %v7657
  %v7713 = vsel %vm394, %v7579, 0
  %v7716 = vsel %vm394, %v7581, 0
  %7718 = vmatpush.bf16.msra.mxu0 %v7674
  %7719 = vmatpush.bf16.msra.mxu0 %v7672
  %7720 = vmatpush.bf16.msra.mxu0 %v7670
  %7721 = vmatpush.bf16.msra.mxu0 %v7668
  %7722 = vmatpush.bf16.msra.mxu0 %v7666
  %7723 = vmatpush.bf16.msra.mxu0 %v7664
  %7724 = vmatpush.bf16.msra.mxu0 %v7662
  %7725 = vmatpush.bf16.msra.mxu0 %v7660
  %7726 = vmatmul.bf16.gmra.mxu0 %v7578
  %v7727 = vpop.f32.mrf.mxu0
  %v7728 = vadd.f32 0.0, %v7727
  %v7729 = vpop.f32.mrf.mxu0
  %v7730 = vadd.f32 0.0, %v7729
  %7731 = vmatmul.bf16.gmra.mxu0 %v7580
  %v7732 = vpop.f32.mrf.mxu0
  %v7733 = vadd.f32 0.0, %v7732
  %v7734 = vpop.f32.mrf.mxu0
  %7735 = vdwg.mxu0
  %7736 = vmatpush.bf16.msra.mxu0 0
  %7737 = vmatpush.bf16.msra.mxu0 0
  %7738 = vmatpush.bf16.msra.mxu0 0
  %7739 = vmatpush.bf16.msra.mxu0 %v7684
  %7740 = vmatpush.bf16.msra.mxu0 %v7682
  %7741 = vmatpush.bf16.msra.mxu0 %v7680
  %7742 = vmatpush.bf16.msra.mxu0 %v7678
  %7743 = vmatpush.bf16.msra.mxu0 %v7676
  %7744 = vmatmul.bf16.gmra.mxu0 %v7713
  %v7745 = vpop.f32.mrf.mxu0
  %v7746 = vadd.f32 %v7728, %v7745
  %v7747 = vpop.f32.mrf.mxu0
  %v7748 = vadd.f32 %v7730, %v7747
  %7749 = vmatmul.bf16.gmra.mxu0 %v7716
  %v7750 = vpop.f32.mrf.mxu0
  %v7751 = vadd.f32 %v7733, %v7750
  %v7752 = vpop.f32.mrf.mxu0
  %7753 = vdwg.mxu0
  %7754 = vmatpush.bf16.msra.mxu0 %v7675
  %7755 = vmatpush.bf16.msra.mxu0 %v7673
  %7756 = vmatpush.bf16.msra.mxu0 %v7671
  %7757 = vmatpush.bf16.msra.mxu0 %v7669
  %7758 = vmatpush.bf16.msra.mxu0 %v7667
  %7759 = vmatpush.bf16.msra.mxu0 %v7665
  %7760 = vmatpush.bf16.msra.mxu0 %v7663
  %7761 = vmatpush.bf16.msra.mxu0 %v7661
  %7762 = vmatmul.bf16.gmra.mxu0 %v7578
  %v7763 = vpop.f32.mrf.mxu0
  %v7764 = vadd.f32 0.0, %v7763
  %v7765 = vpop.f32.mrf.mxu0
  %v7766 = vadd.f32 0.0, %v7765
  %7767 = vmatmul.bf16.gmra.mxu0 %v7580
  %v7768 = vpop.f32.mrf.mxu0
  %v7769 = vadd.f32 0.0, %v7768
  %v7770 = vpop.f32.mrf.mxu0
  %7771 = vdwg.mxu0
  %7772 = vmatpush.bf16.msra.mxu0 0
  %7773 = vmatpush.bf16.msra.mxu0 0
  %7774 = vmatpush.bf16.msra.mxu0 0
  %7775 = vmatpush.bf16.msra.mxu0 %v7685
  %7776 = vmatpush.bf16.msra.mxu0 %v7683
  %7777 = vmatpush.bf16.msra.mxu0 %v7681
  %7778 = vmatpush.bf16.msra.mxu0 %v7679
  %7779 = vmatpush.bf16.msra.mxu0 %v7677
  %7780 = vmatmul.bf16.gmra.mxu0 %v7713
  %v7781 = vpop.f32.mrf.mxu0
  %v7782 = vadd.f32 %v7764, %v7781
  %v7783 = vpop.f32.mrf.mxu0
  %v7784 = vadd.f32 %v7766, %v7783
  %7785 = vmatmul.bf16.gmra.mxu0 %v7716
  %v7786 = vpop.f32.mrf.mxu0
  %v7787 = vadd.f32 %v7769, %v7786
  %v7788 = vpop.f32.mrf.mxu0
  %7789 = vdwg.mxu0
  %v7790 = vadd.f32 %v7491, %v7746
  %v7791 = vadd.f32 %v7492, %v7782
  %v7792 = vadd.f32 %v7493, %v7748
  %v7793 = vadd.f32 %v7494, %v7784
  %v7794 = vadd.f32 %v7495, %v7751
  %v7795 = vadd.f32 %v7496, %v7787
  %s7796 = scalar_lea.vmem %s17, 72
  %v7797 = vld [vmem:[%s7796] sm:$0xf]
  %v7798 = vld [vmem:[%s7796 + $0x4] sm:$0xf]
  %v7799 = vld [vmem:[%s7796 + $0x8] sm:$0x3]
  %v7803 = vunpack.c.l.b16 %v7797
  %v7804 = vunpack.c.l.b16 %v7798
  %v7805 = vunpack.c.l.b16 %v7799
  %v7806 = vpack.c.b16 %v7804, %v7803
  %v7807 = vpack.c.b16 %v7805, %v7805
  %v7809 = vsel %vm6020, %v7806, 0
  %v7812 = vsel %vm6020, %v7807, 0
  %7814 = vmatpush.bf16.msra.mxu0 0
  %7815 = vmatpush.bf16.msra.mxu0 0
  %7816 = vmatpush.bf16.msra.mxu0 0
  %7817 = vmatpush.bf16.msra.mxu0 0
  %7818 = vmatpush.bf16.msra.mxu0 %v6028
  %7819 = vmatpush.bf16.msra.mxu0 %v6005
  %7820 = vmatpush.bf16.msra.mxu0 %v6003
  %7821 = vmatpush.bf16.msra.mxu0 %v6001
  %7822 = vmatmul.bf16.gmra.mxu0 %v7809
  %v7823 = vpop.f32.mrf.mxu0
  %v7824 = vadd.f32 0.0, %v7823
  %v7825 = vpop.f32.mrf.mxu0
  %v7826 = vadd.f32 0.0, %v7825
  %7827 = vmatmul.bf16.gmra.mxu0 %v7812
  %v7828 = vpop.f32.mrf.mxu0
  %v7829 = vadd.f32 0.0, %v7828
  %v7830 = vpop.f32.mrf.mxu0
  %7831 = vdwg.mxu0
  %7832 = vmatpush.bf16.msra.mxu0 0
  %7833 = vmatpush.bf16.msra.mxu0 0
  %7834 = vmatpush.bf16.msra.mxu0 0
  %7835 = vmatpush.bf16.msra.mxu0 0
  %7836 = vmatpush.bf16.msra.mxu0 %v6031
  %7837 = vmatpush.bf16.msra.mxu0 %v6006
  %7838 = vmatpush.bf16.msra.mxu0 %v6004
  %7839 = vmatpush.bf16.msra.mxu0 %v6002
  %7840 = vmatmul.bf16.gmra.mxu0 %v7809
  %v7841 = vpop.f32.mrf.mxu0
  %v7842 = vadd.f32 0.0, %v7841
  %v7843 = vpop.f32.mrf.mxu0
  %v7844 = vadd.f32 0.0, %v7843
  %7845 = vmatmul.bf16.gmra.mxu0 %v7812
  %v7846 = vpop.f32.mrf.mxu0
  %v7847 = vadd.f32 0.0, %v7846
  %v7848 = vpop.f32.mrf.mxu0
  %7849 = vdwg.mxu0
  %s7850 = scalar_lea.vmem %s13, 1248
  %v7851 = vld [vmem:[%s7850] sm:$0xff]
  %v7852 = vld [vmem:[%s7850 + $0x8] sm:$0xff]
  %v7853 = vld [vmem:[%s7850 + $0x10] sm:$0xff]
  %v7854 = vld [vmem:[%s7850 + $0x18] sm:$0xff]
  %v7855 = vld [vmem:[%s7850 + $0x20] sm:$0xff]
  %v7856 = vld [vmem:[%s7850 + $0x28] sm:$0xff]
  %v7857 = vld [vmem:[%s7850 + $0x30] sm:$0xff]
  %v7858 = vld [vmem:[%s7850 + $0x38] sm:$0xff]
  %v7859 = vld [vmem:[%s7850 + $0x40] sm:$0xff]
  %v7860 = vld [vmem:[%s7850 + $0x48] sm:$0xff]
  %v7861 = vld [vmem:[%s7850 + $0x50] sm:$0xff]
  %v7862 = vld [vmem:[%s7850 + $0x58] sm:$0xff]
  %v7863 = vld [vmem:[%s7850 + $0x60] sm:$0xff]
  %v7864 = vld [vmem:[%s7850 + $0x68] sm:$0xff]
  %v7865 = vld [vmem:[%s7850 + $0x70] sm:$0xff]
  %v7866 = vld [vmem:[%s7850 + $0x78] sm:$0xff]
  %v7867 = vld [vmem:[%s7850 + $0x80] sm:$0xff]
  %v7868 = vld [vmem:[%s7850 + $0x88] sm:$0xff]
  %v7869 = vld [vmem:[%s7850 + $0x90] sm:$0xff]
  %v7870 = vld [vmem:[%s7850 + $0x98] sm:$0xff]
  %v7871 = vld [vmem:[%s7850 + $0xa0] sm:$0xff]
  %v7872 = vld [vmem:[%s7850 + $0xa8] sm:$0xff]
  %v7873 = vld [vmem:[%s7850 + $0xb0] sm:$0xff]
  %v7874 = vld [vmem:[%s7850 + $0xb8] sm:$0xff]
  %v7875 = vld [vmem:[%s7850 + $0xc0] sm:$0xff]
  %v7876 = vld [vmem:[%s7850 + $0xc8] sm:$0xff]
  %v7877 = vpack.c.bf16 %v7826, %v7824
  %v7878 = vpack.c.bf16 %v7844, %v7842
  %v7879 = vpack.c.bf16 %v7829, %v7829
  %v7880 = vpack.c.bf16 %v7847, %v7847
  %v7907 = vunpack.c.l.b16 %v7851
  %v7908 = vunpack.c.h.b16 %v7851
  %v7909 = vunpack.c.l.b16 %v7852
  %v7910 = vunpack.c.h.b16 %v7852
  %v7911 = vunpack.c.l.b16 %v7853
  %v7912 = vunpack.c.h.b16 %v7853
  %v7913 = vunpack.c.l.b16 %v7854
  %v7914 = vunpack.c.h.b16 %v7854
  %v7915 = vunpack.c.l.b16 %v7855
  %v7916 = vunpack.c.h.b16 %v7855
  %v7917 = vunpack.c.l.b16 %v7856
  %v7918 = vunpack.c.h.b16 %v7856
  %v7919 = vunpack.c.l.b16 %v7857
  %v7920 = vunpack.c.h.b16 %v7857
  %v7921 = vunpack.c.l.b16 %v7858
  %v7922 = vunpack.c.h.b16 %v7858
  %v7923 = vunpack.c.l.b16 %v7859
  %v7924 = vunpack.c.h.b16 %v7859
  %v7925 = vunpack.c.l.b16 %v7860
  %v7926 = vunpack.c.h.b16 %v7860
  %v7927 = vunpack.c.l.b16 %v7861
  %v7928 = vunpack.c.h.b16 %v7861
  %v7929 = vunpack.c.l.b16 %v7862
  %v7930 = vunpack.c.h.b16 %v7862
  %v7931 = vunpack.c.l.b16 %v7863
  %v7932 = vunpack.c.h.b16 %v7863
  %v7933 = vunpack.c.l.b16 %v7864
  %v7934 = vunpack.c.h.b16 %v7864
  %v7935 = vunpack.c.l.b16 %v7865
  %v7936 = vunpack.c.h.b16 %v7865
  %v7937 = vunpack.c.l.b16 %v7866
  %v7938 = vunpack.c.h.b16 %v7866
  %v7939 = vunpack.c.l.b16 %v7867
  %v7940 = vunpack.c.h.b16 %v7867
  %v7941 = vunpack.c.l.b16 %v7868
  %v7942 = vunpack.c.h.b16 %v7868
  %v7943 = vunpack.c.l.b16 %v7869
  %v7944 = vunpack.c.h.b16 %v7869
  %v7945 = vunpack.c.l.b16 %v7870
  %v7946 = vunpack.c.h.b16 %v7870
  %v7947 = vunpack.c.l.b16 %v7871
  %v7948 = vunpack.c.h.b16 %v7871
  %v7949 = vunpack.c.l.b16 %v7872
  %v7950 = vunpack.c.h.b16 %v7872
  %v7951 = vunpack.c.l.b16 %v7873
  %v7952 = vunpack.c.h.b16 %v7873
  %v7953 = vunpack.c.l.b16 %v7874
  %v7954 = vunpack.c.h.b16 %v7874
  %v7955 = vunpack.c.l.b16 %v7875
  %v7956 = vunpack.c.h.b16 %v7875
  %v7957 = vunpack.c.l.b16 %v7876
  %v7958 = vunpack.c.h.b16 %v7876
  %v7959 = vpack.c.b16 %v7909, %v7907
  %v7960 = vpack.c.b16 %v7910, %v7908
  %v7961 = vpack.c.b16 %v7913, %v7911
  %v7962 = vpack.c.b16 %v7914, %v7912
  %v7963 = vpack.c.b16 %v7917, %v7915
  %v7964 = vpack.c.b16 %v7918, %v7916
  %v7965 = vpack.c.b16 %v7921, %v7919
  %v7966 = vpack.c.b16 %v7922, %v7920
  %v7967 = vpack.c.b16 %v7925, %v7923
  %v7968 = vpack.c.b16 %v7926, %v7924
  %v7969 = vpack.c.b16 %v7929, %v7927
  %v7970 = vpack.c.b16 %v7930, %v7928
  %v7971 = vpack.c.b16 %v7933, %v7931
  %v7972 = vpack.c.b16 %v7934, %v7932
  %v7973 = vpack.c.b16 %v7937, %v7935
  %v7974 = vpack.c.b16 %v7938, %v7936
  %v7975 = vpack.c.b16 %v7941, %v7939
  %v7976 = vpack.c.b16 %v7942, %v7940
  %v7977 = vpack.c.b16 %v7945, %v7943
  %v7978 = vpack.c.b16 %v7946, %v7944
  %v7979 = vpack.c.b16 %v7949, %v7947
  %v7980 = vpack.c.b16 %v7950, %v7948
  %v7981 = vpack.c.b16 %v7953, %v7951
  %v7982 = vpack.c.b16 %v7954, %v7952
  %v7983 = vpack.c.b16 %v7957, %v7955
  %v7984 = vpack.c.b16 %v7958, %v7956
  %v8012 = vsel %vm394, %v7878, 0
  %v8015 = vsel %vm394, %v7880, 0
  %8017 = vmatpush.bf16.msra.mxu0 %v7973
  %8018 = vmatpush.bf16.msra.mxu0 %v7971
  %8019 = vmatpush.bf16.msra.mxu0 %v7969
  %8020 = vmatpush.bf16.msra.mxu0 %v7967
  %8021 = vmatpush.bf16.msra.mxu0 %v7965
  %8022 = vmatpush.bf16.msra.mxu0 %v7963
  %8023 = vmatpush.bf16.msra.mxu0 %v7961
  %8024 = vmatpush.bf16.msra.mxu0 %v7959
  %8025 = vmatmul.bf16.gmra.mxu0 %v7877
  %v8026 = vpop.f32.mrf.mxu0
  %v8027 = vadd.f32 0.0, %v8026
  %v8028 = vpop.f32.mrf.mxu0
  %v8029 = vadd.f32 0.0, %v8028
  %8030 = vmatmul.bf16.gmra.mxu0 %v7879
  %v8031 = vpop.f32.mrf.mxu0
  %v8032 = vadd.f32 0.0, %v8031
  %v8033 = vpop.f32.mrf.mxu0
  %8034 = vdwg.mxu0
  %8035 = vmatpush.bf16.msra.mxu0 0
  %8036 = vmatpush.bf16.msra.mxu0 0
  %8037 = vmatpush.bf16.msra.mxu0 0
  %8038 = vmatpush.bf16.msra.mxu0 %v7983
  %8039 = vmatpush.bf16.msra.mxu0 %v7981
  %8040 = vmatpush.bf16.msra.mxu0 %v7979
  %8041 = vmatpush.bf16.msra.mxu0 %v7977
  %8042 = vmatpush.bf16.msra.mxu0 %v7975
  %8043 = vmatmul.bf16.gmra.mxu0 %v8012
  %v8044 = vpop.f32.mrf.mxu0
  %v8045 = vadd.f32 %v8027, %v8044
  %v8046 = vpop.f32.mrf.mxu0
  %v8047 = vadd.f32 %v8029, %v8046
  %8048 = vmatmul.bf16.gmra.mxu0 %v8015
  %v8049 = vpop.f32.mrf.mxu0
  %v8050 = vadd.f32 %v8032, %v8049
  %v8051 = vpop.f32.mrf.mxu0
  %8052 = vdwg.mxu0
  %8053 = vmatpush.bf16.msra.mxu0 %v7974
  %8054 = vmatpush.bf16.msra.mxu0 %v7972
  %8055 = vmatpush.bf16.msra.mxu0 %v7970
  %8056 = vmatpush.bf16.msra.mxu0 %v7968
  %8057 = vmatpush.bf16.msra.mxu0 %v7966
  %8058 = vmatpush.bf16.msra.mxu0 %v7964
  %8059 = vmatpush.bf16.msra.mxu0 %v7962
  %8060 = vmatpush.bf16.msra.mxu0 %v7960
  %8061 = vmatmul.bf16.gmra.mxu0 %v7877
  %v8062 = vpop.f32.mrf.mxu0
  %v8063 = vadd.f32 0.0, %v8062
  %v8064 = vpop.f32.mrf.mxu0
  %v8065 = vadd.f32 0.0, %v8064
  %8066 = vmatmul.bf16.gmra.mxu0 %v7879
  %v8067 = vpop.f32.mrf.mxu0
  %v8068 = vadd.f32 0.0, %v8067
  %v8069 = vpop.f32.mrf.mxu0
  %8070 = vdwg.mxu0
  %8071 = vmatpush.bf16.msra.mxu0 0
  %8072 = vmatpush.bf16.msra.mxu0 0
  %8073 = vmatpush.bf16.msra.mxu0 0
  %8074 = vmatpush.bf16.msra.mxu0 %v7984
  %8075 = vmatpush.bf16.msra.mxu0 %v7982
  %8076 = vmatpush.bf16.msra.mxu0 %v7980
  %8077 = vmatpush.bf16.msra.mxu0 %v7978
  %8078 = vmatpush.bf16.msra.mxu0 %v7976
  %8079 = vmatmul.bf16.gmra.mxu0 %v8012
  %v8080 = vpop.f32.mrf.mxu0
  %v8081 = vadd.f32 %v8063, %v8080
  %v8082 = vpop.f32.mrf.mxu0
  %v8083 = vadd.f32 %v8065, %v8082
  %8084 = vmatmul.bf16.gmra.mxu0 %v8015
  %v8085 = vpop.f32.mrf.mxu0
  %v8086 = vadd.f32 %v8068, %v8085
  %v8087 = vpop.f32.mrf.mxu0
  %8088 = vdwg.mxu0
  %v8089 = vadd.f32 %v7790, %v8045
  %v8090 = vadd.f32 %v7791, %v8081
  %v8091 = vadd.f32 %v7792, %v8047
  %v8092 = vadd.f32 %v7793, %v8083
  %v8093 = vadd.f32 %v7794, %v8050
  %v8094 = vadd.f32 %v7795, %v8086
  %s8095 = scalar_lea.vmem %s17, 84
  %v8096 = vld [vmem:[%s8095] sm:$0xf]
  %v8097 = vld [vmem:[%s8095 + $0x4] sm:$0xf]
  %v8098 = vld [vmem:[%s8095 + $0x8] sm:$0x3]
  %v8102 = vunpack.c.l.b16 %v8096
  %v8103 = vunpack.c.l.b16 %v8097
  %v8104 = vunpack.c.l.b16 %v8098
  %v8105 = vpack.c.b16 %v8103, %v8102
  %v8106 = vpack.c.b16 %v8104, %v8104
  %v8108 = vsel %vm6020, %v8105, 0
  %v8111 = vsel %vm6020, %v8106, 0
  %8113 = vmatpush.bf16.msra.mxu0 0
  %8114 = vmatpush.bf16.msra.mxu0 0
  %8115 = vmatpush.bf16.msra.mxu0 0
  %8116 = vmatpush.bf16.msra.mxu0 0
  %8117 = vmatpush.bf16.msra.mxu0 %v6028
  %8118 = vmatpush.bf16.msra.mxu0 %v6005
  %8119 = vmatpush.bf16.msra.mxu0 %v6003
  %8120 = vmatpush.bf16.msra.mxu0 %v6001
  %8121 = vmatmul.bf16.gmra.mxu0 %v8108
  %v8122 = vpop.f32.mrf.mxu0
  %v8123 = vadd.f32 0.0, %v8122
  %v8124 = vpop.f32.mrf.mxu0
  %v8125 = vadd.f32 0.0, %v8124
  %8126 = vmatmul.bf16.gmra.mxu0 %v8111
  %v8127 = vpop.f32.mrf.mxu0
  %v8128 = vadd.f32 0.0, %v8127
  %v8129 = vpop.f32.mrf.mxu0
  %8130 = vdwg.mxu0
  %8131 = vmatpush.bf16.msra.mxu0 0
  %8132 = vmatpush.bf16.msra.mxu0 0
  %8133 = vmatpush.bf16.msra.mxu0 0
  %8134 = vmatpush.bf16.msra.mxu0 0
  %8135 = vmatpush.bf16.msra.mxu0 %v6031
  %8136 = vmatpush.bf16.msra.mxu0 %v6006
  %8137 = vmatpush.bf16.msra.mxu0 %v6004
  %8138 = vmatpush.bf16.msra.mxu0 %v6002
  %8139 = vmatmul.bf16.gmra.mxu0 %v8108
  %v8140 = vpop.f32.mrf.mxu0
  %v8141 = vadd.f32 0.0, %v8140
  %v8142 = vpop.f32.mrf.mxu0
  %v8143 = vadd.f32 0.0, %v8142
  %8144 = vmatmul.bf16.gmra.mxu0 %v8111
  %v8145 = vpop.f32.mrf.mxu0
  %v8146 = vadd.f32 0.0, %v8145
  %v8147 = vpop.f32.mrf.mxu0
  %8148 = vdwg.mxu0
  %s8149 = scalar_lea.vmem %s13, 1456
  %v8150 = vld [vmem:[%s8149] sm:$0xff]
  %v8151 = vld [vmem:[%s8149 + $0x8] sm:$0xff]
  %v8152 = vld [vmem:[%s8149 + $0x10] sm:$0xff]
  %v8153 = vld [vmem:[%s8149 + $0x18] sm:$0xff]
  %v8154 = vld [vmem:[%s8149 + $0x20] sm:$0xff]
  %v8155 = vld [vmem:[%s8149 + $0x28] sm:$0xff]
  %v8156 = vld [vmem:[%s8149 + $0x30] sm:$0xff]
  %v8157 = vld [vmem:[%s8149 + $0x38] sm:$0xff]
  %v8158 = vld [vmem:[%s8149 + $0x40] sm:$0xff]
  %v8159 = vld [vmem:[%s8149 + $0x48] sm:$0xff]
  %v8160 = vld [vmem:[%s8149 + $0x50] sm:$0xff]
  %v8161 = vld [vmem:[%s8149 + $0x58] sm:$0xff]
  %v8162 = vld [vmem:[%s8149 + $0x60] sm:$0xff]
  %v8163 = vld [vmem:[%s8149 + $0x68] sm:$0xff]
  %v8164 = vld [vmem:[%s8149 + $0x70] sm:$0xff]
  %v8165 = vld [vmem:[%s8149 + $0x78] sm:$0xff]
  %v8166 = vld [vmem:[%s8149 + $0x80] sm:$0xff]
  %v8167 = vld [vmem:[%s8149 + $0x88] sm:$0xff]
  %v8168 = vld [vmem:[%s8149 + $0x90] sm:$0xff]
  %v8169 = vld [vmem:[%s8149 + $0x98] sm:$0xff]
  %v8170 = vld [vmem:[%s8149 + $0xa0] sm:$0xff]
  %v8171 = vld [vmem:[%s8149 + $0xa8] sm:$0xff]
  %v8172 = vld [vmem:[%s8149 + $0xb0] sm:$0xff]
  %v8173 = vld [vmem:[%s8149 + $0xb8] sm:$0xff]
  %v8174 = vld [vmem:[%s8149 + $0xc0] sm:$0xff]
  %v8175 = vld [vmem:[%s8149 + $0xc8] sm:$0xff]
  %v8176 = vpack.c.bf16 %v8125, %v8123
  %v8177 = vpack.c.bf16 %v8143, %v8141
  %v8178 = vpack.c.bf16 %v8128, %v8128
  %v8179 = vpack.c.bf16 %v8146, %v8146
  %v8206 = vunpack.c.l.b16 %v8150
  %v8207 = vunpack.c.h.b16 %v8150
  %v8208 = vunpack.c.l.b16 %v8151
  %v8209 = vunpack.c.h.b16 %v8151
  %v8210 = vunpack.c.l.b16 %v8152
  %v8211 = vunpack.c.h.b16 %v8152
  %v8212 = vunpack.c.l.b16 %v8153
  %v8213 = vunpack.c.h.b16 %v8153
  %v8214 = vunpack.c.l.b16 %v8154
  %v8215 = vunpack.c.h.b16 %v8154
  %v8216 = vunpack.c.l.b16 %v8155
  %v8217 = vunpack.c.h.b16 %v8155
  %v8218 = vunpack.c.l.b16 %v8156
  %v8219 = vunpack.c.h.b16 %v8156
  %v8220 = vunpack.c.l.b16 %v8157
  %v8221 = vunpack.c.h.b16 %v8157
  %v8222 = vunpack.c.l.b16 %v8158
  %v8223 = vunpack.c.h.b16 %v8158
  %v8224 = vunpack.c.l.b16 %v8159
  %v8225 = vunpack.c.h.b16 %v8159
  %v8226 = vunpack.c.l.b16 %v8160
  %v8227 = vunpack.c.h.b16 %v8160
  %v8228 = vunpack.c.l.b16 %v8161
  %v8229 = vunpack.c.h.b16 %v8161
  %v8230 = vunpack.c.l.b16 %v8162
  %v8231 = vunpack.c.h.b16 %v8162
  %v8232 = vunpack.c.l.b16 %v8163
  %v8233 = vunpack.c.h.b16 %v8163
  %v8234 = vunpack.c.l.b16 %v8164
  %v8235 = vunpack.c.h.b16 %v8164
  %v8236 = vunpack.c.l.b16 %v8165
  %v8237 = vunpack.c.h.b16 %v8165
  %v8238 = vunpack.c.l.b16 %v8166
  %v8239 = vunpack.c.h.b16 %v8166
  %v8240 = vunpack.c.l.b16 %v8167
  %v8241 = vunpack.c.h.b16 %v8167
  %v8242 = vunpack.c.l.b16 %v8168
  %v8243 = vunpack.c.h.b16 %v8168
  %v8244 = vunpack.c.l.b16 %v8169
  %v8245 = vunpack.c.h.b16 %v8169
  %v8246 = vunpack.c.l.b16 %v8170
  %v8247 = vunpack.c.h.b16 %v8170
  %v8248 = vunpack.c.l.b16 %v8171
  %v8249 = vunpack.c.h.b16 %v8171
  %v8250 = vunpack.c.l.b16 %v8172
  %v8251 = vunpack.c.h.b16 %v8172
  %v8252 = vunpack.c.l.b16 %v8173
  %v8253 = vunpack.c.h.b16 %v8173
  %v8254 = vunpack.c.l.b16 %v8174
  %v8255 = vunpack.c.h.b16 %v8174
  %v8256 = vunpack.c.l.b16 %v8175
  %v8257 = vunpack.c.h.b16 %v8175
  %v8258 = vpack.c.b16 %v8208, %v8206
  %v8259 = vpack.c.b16 %v8209, %v8207
  %v8260 = vpack.c.b16 %v8212, %v8210
  %v8261 = vpack.c.b16 %v8213, %v8211
  %v8262 = vpack.c.b16 %v8216, %v8214
  %v8263 = vpack.c.b16 %v8217, %v8215
  %v8264 = vpack.c.b16 %v8220, %v8218
  %v8265 = vpack.c.b16 %v8221, %v8219
  %v8266 = vpack.c.b16 %v8224, %v8222
  %v8267 = vpack.c.b16 %v8225, %v8223
  %v8268 = vpack.c.b16 %v8228, %v8226
  %v8269 = vpack.c.b16 %v8229, %v8227
  %v8270 = vpack.c.b16 %v8232, %v8230
  %v8271 = vpack.c.b16 %v8233, %v8231
  %v8272 = vpack.c.b16 %v8236, %v8234
  %v8273 = vpack.c.b16 %v8237, %v8235
  %v8274 = vpack.c.b16 %v8240, %v8238
  %v8275 = vpack.c.b16 %v8241, %v8239
  %v8276 = vpack.c.b16 %v8244, %v8242
  %v8277 = vpack.c.b16 %v8245, %v8243
  %v8278 = vpack.c.b16 %v8248, %v8246
  %v8279 = vpack.c.b16 %v8249, %v8247
  %v8280 = vpack.c.b16 %v8252, %v8250
  %v8281 = vpack.c.b16 %v8253, %v8251
  %v8282 = vpack.c.b16 %v8256, %v8254
  %v8283 = vpack.c.b16 %v8257, %v8255
  %v8311 = vsel %vm394, %v8177, 0
  %v8314 = vsel %vm394, %v8179, 0
  %8316 = vmatpush.bf16.msra.mxu0 %v8272
  %8317 = vmatpush.bf16.msra.mxu0 %v8270
  %8318 = vmatpush.bf16.msra.mxu0 %v8268
  %8319 = vmatpush.bf16.msra.mxu0 %v8266
  %8320 = vmatpush.bf16.msra.mxu0 %v8264
  %8321 = vmatpush.bf16.msra.mxu0 %v8262
  %8322 = vmatpush.bf16.msra.mxu0 %v8260
  %8323 = vmatpush.bf16.msra.mxu0 %v8258
  %8324 = vmatmul.bf16.gmra.mxu0 %v8176
  %v8325 = vpop.f32.mrf.mxu0
  %v8326 = vadd.f32 0.0, %v8325
  %v8327 = vpop.f32.mrf.mxu0
  %v8328 = vadd.f32 0.0, %v8327
  %8329 = vmatmul.bf16.gmra.mxu0 %v8178
  %v8330 = vpop.f32.mrf.mxu0
  %v8331 = vadd.f32 0.0, %v8330
  %v8332 = vpop.f32.mrf.mxu0
  %8333 = vdwg.mxu0
  %8334 = vmatpush.bf16.msra.mxu0 0
  %8335 = vmatpush.bf16.msra.mxu0 0
  %8336 = vmatpush.bf16.msra.mxu0 0
  %8337 = vmatpush.bf16.msra.mxu0 %v8282
  %8338 = vmatpush.bf16.msra.mxu0 %v8280
  %8339 = vmatpush.bf16.msra.mxu0 %v8278
  %8340 = vmatpush.bf16.msra.mxu0 %v8276
  %8341 = vmatpush.bf16.msra.mxu0 %v8274
  %8342 = vmatmul.bf16.gmra.mxu0 %v8311
  %v8343 = vpop.f32.mrf.mxu0
  %v8344 = vadd.f32 %v8326, %v8343
  %v8345 = vpop.f32.mrf.mxu0
  %v8346 = vadd.f32 %v8328, %v8345
  %8347 = vmatmul.bf16.gmra.mxu0 %v8314
  %v8348 = vpop.f32.mrf.mxu0
  %v8349 = vadd.f32 %v8331, %v8348
  %v8350 = vpop.f32.mrf.mxu0
  %8351 = vdwg.mxu0
  %8352 = vmatpush.bf16.msra.mxu0 %v8273
  %8353 = vmatpush.bf16.msra.mxu0 %v8271
  %8354 = vmatpush.bf16.msra.mxu0 %v8269
  %8355 = vmatpush.bf16.msra.mxu0 %v8267
  %8356 = vmatpush.bf16.msra.mxu0 %v8265
  %8357 = vmatpush.bf16.msra.mxu0 %v8263
  %8358 = vmatpush.bf16.msra.mxu0 %v8261
  %8359 = vmatpush.bf16.msra.mxu0 %v8259
  %8360 = vmatmul.bf16.gmra.mxu0 %v8176
  %v8361 = vpop.f32.mrf.mxu0
  %v8362 = vadd.f32 0.0, %v8361
  %v8363 = vpop.f32.mrf.mxu0
  %v8364 = vadd.f32 0.0, %v8363
  %8365 = vmatmul.bf16.gmra.mxu0 %v8178
  %v8366 = vpop.f32.mrf.mxu0
  %v8367 = vadd.f32 0.0, %v8366
  %v8368 = vpop.f32.mrf.mxu0
  %8369 = vdwg.mxu0
  %8370 = vmatpush.bf16.msra.mxu0 0
  %8371 = vmatpush.bf16.msra.mxu0 0
  %8372 = vmatpush.bf16.msra.mxu0 0
  %8373 = vmatpush.bf16.msra.mxu0 %v8283
  %8374 = vmatpush.bf16.msra.mxu0 %v8281
  %8375 = vmatpush.bf16.msra.mxu0 %v8279
  %8376 = vmatpush.bf16.msra.mxu0 %v8277
  %8377 = vmatpush.bf16.msra.mxu0 %v8275
  %8378 = vmatmul.bf16.gmra.mxu0 %v8311
  %v8379 = vpop.f32.mrf.mxu0
  %v8380 = vadd.f32 %v8362, %v8379
  %v8381 = vpop.f32.mrf.mxu0
  %v8382 = vadd.f32 %v8364, %v8381
  %8383 = vmatmul.bf16.gmra.mxu0 %v8314
  %v8384 = vpop.f32.mrf.mxu0
  %v8385 = vadd.f32 %v8367, %v8384
  %v8386 = vpop.f32.mrf.mxu0
  %8387 = vdwg.mxu0
  %v8388 = vadd.f32 %v8089, %v8344
  %v8389 = vadd.f32 %v8090, %v8380
  %v8390 = vadd.f32 %v8091, %v8346
  %v8391 = vadd.f32 %v8092, %v8382
  %v8392 = vadd.f32 %v8093, %v8349
  %v8393 = vadd.f32 %v8094, %v8385
  %v8394 = vld [vmem:[%s15] sm:$0x3]
  %v8396 = vperm.slane %v8394, 0
  %v8397 = vperm.slane %v8394, 1
  %v8400 = vadd.f32 %v8388, %v8396
  %v8401 = vadd.f32 %v8389, %v8397
  %v8402 = vadd.f32 %v8390, %v8396
  %v8403 = vadd.f32 %v8391, %v8397
  %v8404 = vadd.f32 %v8392, %v8396
  %v8405 = vadd.f32 %v8393, %v8397
  %vm8406 = vcmp.ge.f32.partialorder %v8400, 0.0
  %vm8407 = vcmp.ge.f32.partialorder %v8401, 0.0
  %vm8408 = vcmp.ge.f32.partialorder %v8402, 0.0
  %vm8409 = vcmp.ge.f32.partialorder %v8403, 0.0
  %vm8410 = vcmp.ge.f32.partialorder %v8404, 0.0
  %vm8411 = vcmp.ge.f32.partialorder %v8405, 0.0
  %v8412 = vmul.f32 %v8400, 0.01
  %v8413 = vmul.f32 %v8401, 0.01
  %v8414 = vmul.f32 %v8402, 0.01
  %v8415 = vmul.f32 %v8403, 0.01
  %v8416 = vmul.f32 %v8404, 0.01
  %v8417 = vmul.f32 %v8405, 0.01
  %v8418 = vsel %vm8406, %v8400, %v8412
  %v8419 = vsel %vm8407, %v8401, %v8413
  %v8420 = vsel %vm8408, %v8402, %v8414
  %v8421 = vsel %vm8409, %v8403, %v8415
  %v8422 = vsel %vm8410, %v8404, %v8416
  %v8423 = vsel %vm8411, %v8405, %v8417
  %v8424 = vpack.c.bf16 %v8420, %v8418
  %v8425 = vpack.c.bf16 %v8421, %v8419
  %v8426 = vpack.c.bf16 %v8422, %v8422
  %v8427 = vpack.c.bf16 %v8423, %v8423
  %v8428 = vld [vmem:[%s23] sm:$0xf]
  %vm8429 = vcmask 162816
  %v8431 = vsel %vm8429, %v8428, 0
  %v8434 = vsel %vm2629, %v8426, 0
  %v8437 = vsel %vm2629, %v8427, 0
  %8439 = vmatpush.bf16.msra.mxu0 0
  %8440 = vmatpush.bf16.msra.mxu0 0
  %8441 = vmatpush.bf16.msra.mxu0 0
  %8442 = vmatpush.bf16.msra.mxu0 0
  %8443 = vmatpush.bf16.msra.mxu0 0
  %8444 = vmatpush.bf16.msra.mxu0 0
  %8445 = vmatpush.bf16.msra.mxu0 %v8434
  %8446 = vmatpush.bf16.msra.mxu0 %v8424
  %8447 = vmatmul.bf16.gmra.mxu0 %v8431
  %v8448 = vpop.f32.mrf.mxu0
  %v8449 = vadd.f32 0.0, %v8448
  %v8450 = vpop.f32.mrf.mxu0
  %8451 = vdwg.mxu0
  %8452 = vmatpush.bf16.msra.mxu0 0
  %8453 = vmatpush.bf16.msra.mxu0 0
  %8454 = vmatpush.bf16.msra.mxu0 0
  %8455 = vmatpush.bf16.msra.mxu0 0
  %8456 = vmatpush.bf16.msra.mxu0 0
  %8457 = vmatpush.bf16.msra.mxu0 0
  %8458 = vmatpush.bf16.msra.mxu0 %v8437
  %8459 = vmatpush.bf16.msra.mxu0 %v8425
  %8460 = vmatmul.bf16.gmra.mxu0 %v8431
  %v8461 = vpop.f32.mrf.mxu0
  %v8462 = vadd.f32 0.0, %v8461
  %v8463 = vpop.f32.mrf.mxu0
  %8464 = vdwg.mxu0
  %v8465 = vld [vmem:[%s19] sm:$0xf]
  %v8466 = vld [vmem:[%s19 + $0x4] sm:$0xf]
  %v8467 = vld [vmem:[%s19 + $0x8] sm:$0xf]
  %v8468 = vld [vmem:[%s19 + $0xc] sm:$0xf]
  %v8469 = vld [vmem:[%s19 + $0x10] sm:$0xf]
  %v8470 = vld [vmem:[%s19 + $0x14] sm:$0xf]
  %v8471 = vld [vmem:[%s19 + $0x18] sm:$0xf]
  %v8472 = vld [vmem:[%s19 + $0x1c] sm:$0xf]
  %v8473 = vld [vmem:[%s19 + $0x20] sm:$0xf]
  %v8474 = vld [vmem:[%s19 + $0x24] sm:$0xf]
  %v8475 = vld [vmem:[%s19 + $0x28] sm:$0xf]
  %v8476 = vld [vmem:[%s19 + $0x2c] sm:$0xf]
  %v8477 = vld [vmem:[%s19 + $0x30] sm:$0xf]
  %v8478 = vld [vmem:[%s19 + $0x34] sm:$0xf]
  %v8479 = vld [vmem:[%s19 + $0x38] sm:$0xf]
  %v8480 = vld [vmem:[%s19 + $0x3c] sm:$0xf]
  %v8481 = vld [vmem:[%s19 + $0x40] sm:$0xf]
  %v8482 = vld [vmem:[%s19 + $0x44] sm:$0xf]
  %v8483 = vld [vmem:[%s19 + $0x48] sm:$0xf]
  %v8484 = vld [vmem:[%s19 + $0x4c] sm:$0xf]
  %v8485 = vpack.c.bf16 %v8449, %v8449
  %v8486 = vpack.c.bf16 %v8462, %v8462
  %s8487 = scalar_lea.vmem %s23, 4
  %v8488 = vld [vmem:[%s8487] sm:$0xf]
  %v8490 = vsel %vm8429, %v8488, 0
  %8492 = vmatpush.bf16.msra.mxu0 0
  %8493 = vmatpush.bf16.msra.mxu0 0
  %8494 = vmatpush.bf16.msra.mxu0 0
  %8495 = vmatpush.bf16.msra.mxu0 0
  %8496 = vmatpush.bf16.msra.mxu0 0
  %8497 = vmatpush.bf16.msra.mxu0 0
  %8498 = vmatpush.bf16.msra.mxu0 %v8434
  %8499 = vmatpush.bf16.msra.mxu0 %v8424
  %8500 = vmatmul.bf16.gmra.mxu0 %v8490
  %v8501 = vpop.f32.mrf.mxu0
  %v8502 = vadd.f32 0.0, %v8501
  %v8503 = vpop.f32.mrf.mxu0
  %8504 = vdwg.mxu0
  %8505 = vmatpush.bf16.msra.mxu0 0
  %8506 = vmatpush.bf16.msra.mxu0 0
  %8507 = vmatpush.bf16.msra.mxu0 0
  %8508 = vmatpush.bf16.msra.mxu0 0
  %8509 = vmatpush.bf16.msra.mxu0 0
  %8510 = vmatpush.bf16.msra.mxu0 0
  %8511 = vmatpush.bf16.msra.mxu0 %v8437
  %8512 = vmatpush.bf16.msra.mxu0 %v8425
  %8513 = vmatmul.bf16.gmra.mxu0 %v8490
  %v8514 = vpop.f32.mrf.mxu0
  %v8515 = vadd.f32 0.0, %v8514
  %v8516 = vpop.f32.mrf.mxu0
  %8517 = vdwg.mxu0
  %s8518 = scalar_lea.vmem %s19, 80
  %v8519 = vld [vmem:[%s8518] sm:$0xf]
  %v8520 = vld [vmem:[%s8518 + $0x4] sm:$0xf]
  %v8521 = vld [vmem:[%s8518 + $0x8] sm:$0xf]
  %v8522 = vld [vmem:[%s8518 + $0xc] sm:$0xf]
  %v8523 = vld [vmem:[%s8518 + $0x10] sm:$0xf]
  %v8524 = vld [vmem:[%s8518 + $0x14] sm:$0xf]
  %v8525 = vld [vmem:[%s8518 + $0x18] sm:$0xf]
  %v8526 = vld [vmem:[%s8518 + $0x1c] sm:$0xf]
  %v8527 = vld [vmem:[%s8518 + $0x20] sm:$0xf]
  %v8528 = vld [vmem:[%s8518 + $0x24] sm:$0xf]
  %v8529 = vld [vmem:[%s8518 + $0x28] sm:$0xf]
  %v8530 = vld [vmem:[%s8518 + $0x2c] sm:$0xf]
  %v8531 = vld [vmem:[%s8518 + $0x30] sm:$0xf]
  %v8532 = vld [vmem:[%s8518 + $0x34] sm:$0xf]
  %v8533 = vld [vmem:[%s8518 + $0x38] sm:$0xf]
  %v8534 = vld [vmem:[%s8518 + $0x3c] sm:$0xf]
  %v8535 = vld [vmem:[%s8518 + $0x40] sm:$0xf]
  %v8536 = vld [vmem:[%s8518 + $0x44] sm:$0xf]
  %v8537 = vld [vmem:[%s8518 + $0x48] sm:$0xf]
  %v8538 = vld [vmem:[%s8518 + $0x4c] sm:$0xf]
  %v8539 = vpack.c.bf16 %v8502, %v8502
  %v8540 = vpack.c.bf16 %v8515, %v8515
  %v8561 = vunpack.c.l.b16 %v8519
  %v8562 = vunpack.c.l.b16 %v8520
  %v8563 = vunpack.c.l.b16 %v8521
  %v8564 = vunpack.c.l.b16 %v8522
  %v8565 = vunpack.c.l.b16 %v8523
  %v8566 = vunpack.c.l.b16 %v8524
  %v8567 = vunpack.c.l.b16 %v8525
  %v8568 = vunpack.c.l.b16 %v8526
  %v8569 = vunpack.c.l.b16 %v8527
  %v8570 = vunpack.c.l.b16 %v8528
  %v8571 = vunpack.c.l.b16 %v8529
  %v8572 = vunpack.c.l.b16 %v8530
  %v8573 = vunpack.c.l.b16 %v8531
  %v8574 = vunpack.c.l.b16 %v8532
  %v8575 = vunpack.c.l.b16 %v8533
  %v8576 = vunpack.c.l.b16 %v8534
  %v8577 = vunpack.c.l.b16 %v8535
  %v8578 = vunpack.c.l.b16 %v8536
  %v8579 = vunpack.c.l.b16 %v8537
  %v8580 = vunpack.c.l.b16 %v8538
  %v8581 = vpack.c.b16 %v8562, %v8561
  %v8582 = vpack.c.b16 %v8564, %v8563
  %v8583 = vpack.c.b16 %v8566, %v8565
  %v8584 = vpack.c.b16 %v8568, %v8567
  %v8585 = vpack.c.b16 %v8570, %v8569
  %v8586 = vpack.c.b16 %v8572, %v8571
  %v8587 = vpack.c.b16 %v8574, %v8573
  %v8588 = vpack.c.b16 %v8576, %v8575
  %v8589 = vpack.c.b16 %v8578, %v8577
  %v8590 = vpack.c.b16 %v8580, %v8579
  %vm8601 = vcmask 261120
  %v8603 = vsel %vm8601, %v8540, 0
  %8605 = vmatpush.bf16.msra.mxu0 %v8588
  %8606 = vmatpush.bf16.msra.mxu0 %v8587
  %8607 = vmatpush.bf16.msra.mxu0 %v8586
  %8608 = vmatpush.bf16.msra.mxu0 %v8585
  %8609 = vmatpush.bf16.msra.mxu0 %v8584
  %8610 = vmatpush.bf16.msra.mxu0 %v8583
  %8611 = vmatpush.bf16.msra.mxu0 %v8582
  %8612 = vmatpush.bf16.msra.mxu0 %v8581
  %8613 = vmatmul.bf16.gmra.mxu0 %v8539
  %v8614 = vpop.f32.mrf.mxu0
  %v8615 = vadd.f32 0.0, %v8614
  %v8616 = vpop.f32.mrf.mxu0
  %8617 = vdwg.mxu0
  %8618 = vmatpush.bf16.msra.mxu0 0
  %8619 = vmatpush.bf16.msra.mxu0 0
  %8620 = vmatpush.bf16.msra.mxu0 0
  %8621 = vmatpush.bf16.msra.mxu0 0
  %8622 = vmatpush.bf16.msra.mxu0 0
  %8623 = vmatpush.bf16.msra.mxu0 0
  %8624 = vmatpush.bf16.msra.mxu0 %v8590
  %8625 = vmatpush.bf16.msra.mxu0 %v8589
  %8626 = vmatmul.bf16.gmra.mxu0 %v8603
  %v8627 = vpop.f32.mrf.mxu0
  %v8628 = vadd.f32 %v8615, %v8627
  %v8629 = vpop.f32.mrf.mxu0
  %8630 = vdwg.mxu0
  %v8651 = vunpack.c.l.b16 %v8465
  %v8652 = vunpack.c.l.b16 %v8466
  %v8653 = vunpack.c.l.b16 %v8467
  %v8654 = vunpack.c.l.b16 %v8468
  %v8655 = vunpack.c.l.b16 %v8469
  %v8656 = vunpack.c.l.b16 %v8470
  %v8657 = vunpack.c.l.b16 %v8471
  %v8658 = vunpack.c.l.b16 %v8472
  %v8659 = vunpack.c.l.b16 %v8473
  %v8660 = vunpack.c.l.b16 %v8474
  %v8661 = vunpack.c.l.b16 %v8475
  %v8662 = vunpack.c.l.b16 %v8476
  %v8663 = vunpack.c.l.b16 %v8477
  %v8664 = vunpack.c.l.b16 %v8478
  %v8665 = vunpack.c.l.b16 %v8479
  %v8666 = vunpack.c.l.b16 %v8480
  %v8667 = vunpack.c.l.b16 %v8481
  %v8668 = vunpack.c.l.b16 %v8482
  %v8669 = vunpack.c.l.b16 %v8483
  %v8670 = vunpack.c.l.b16 %v8484
  %v8671 = vpack.c.b16 %v8652, %v8651
  %v8672 = vpack.c.b16 %v8654, %v8653
  %v8673 = vpack.c.b16 %v8656, %v8655
  %v8674 = vpack.c.b16 %v8658, %v8657
  %v8675 = vpack.c.b16 %v8660, %v8659
  %v8676 = vpack.c.b16 %v8662, %v8661
  %v8677 = vpack.c.b16 %v8664, %v8663
  %v8678 = vpack.c.b16 %v8666, %v8665
  %v8679 = vpack.c.b16 %v8668, %v8667
  %v8680 = vpack.c.b16 %v8670, %v8669
  %v8692 = vsel %vm8601, %v8486, 0
  %8694 = vmatpush.bf16.msra.mxu0 %v8678
  %8695 = vmatpush.bf16.msra.mxu0 %v8677
  %8696 = vmatpush.bf16.msra.mxu0 %v8676
  %8697 = vmatpush.bf16.msra.mxu0 %v8675
  %8698 = vmatpush.bf16.msra.mxu0 %v8674
  %8699 = vmatpush.bf16.msra.mxu0 %v8673
  %8700 = vmatpush.bf16.msra.mxu0 %v8672
  %8701 = vmatpush.bf16.msra.mxu0 %v8671
  %8702 = vmatmul.bf16.gmra.mxu0 %v8485
  %v8703 = vpop.f32.mrf.mxu0
  %v8704 = vadd.f32 %v8628, %v8703
  %v8705 = vpop.f32.mrf.mxu0
  %8706 = vdwg.mxu0
  %8707 = vmatpush.bf16.msra.mxu0 0
  %8708 = vmatpush.bf16.msra.mxu0 0
  %8709 = vmatpush.bf16.msra.mxu0 0
  %8710 = vmatpush.bf16.msra.mxu0 0
  %8711 = vmatpush.bf16.msra.mxu0 0
  %8712 = vmatpush.bf16.msra.mxu0 0
  %8713 = vmatpush.bf16.msra.mxu0 %v8680
  %8714 = vmatpush.bf16.msra.mxu0 %v8679
  %8715 = vmatmul.bf16.gmra.mxu0 %v8692
  %v8716 = vpop.f32.mrf.mxu0
  %v8717 = vadd.f32 %v8704, %v8716
  %v8718 = vpop.f32.mrf.mxu0
  %8719 = vdwg.mxu0
  %s8720 = scalar_lea.vmem %s23, 8
  %v8721 = vld [vmem:[%s8720] sm:$0xf]
  %v8723 = vsel %vm8429, %v8721, 0
  %8725 = vmatpush.bf16.msra.mxu0 0
  %8726 = vmatpush.bf16.msra.mxu0 0
  %8727 = vmatpush.bf16.msra.mxu0 0
  %8728 = vmatpush.bf16.msra.mxu0 0
  %8729 = vmatpush.bf16.msra.mxu0 0
  %8730 = vmatpush.bf16.msra.mxu0 0
  %8731 = vmatpush.bf16.msra.mxu0 %v8434
  %8732 = vmatpush.bf16.msra.mxu0 %v8424
  %8733 = vmatmul.bf16.gmra.mxu0 %v8723
  %v8734 = vpop.f32.mrf.mxu0
  %v8735 = vadd.f32 0.0, %v8734
  %v8736 = vpop.f32.mrf.mxu0
  %8737 = vdwg.mxu0
  %8738 = vmatpush.bf16.msra.mxu0 0
  %8739 = vmatpush.bf16.msra.mxu0 0
  %8740 = vmatpush.bf16.msra.mxu0 0
  %8741 = vmatpush.bf16.msra.mxu0 0
  %8742 = vmatpush.bf16.msra.mxu0 0
  %8743 = vmatpush.bf16.msra.mxu0 0
  %8744 = vmatpush.bf16.msra.mxu0 %v8437
  %8745 = vmatpush.bf16.msra.mxu0 %v8425
  %8746 = vmatmul.bf16.gmra.mxu0 %v8723
  %v8747 = vpop.f32.mrf.mxu0
  %v8748 = vadd.f32 0.0, %v8747
  %v8749 = vpop.f32.mrf.mxu0
  %8750 = vdwg.mxu0
  %s8751 = scalar_lea.vmem %s19, 160
  %v8752 = vld [vmem:[%s8751] sm:$0xf]
  %v8753 = vld [vmem:[%s8751 + $0x4] sm:$0xf]
  %v8754 = vld [vmem:[%s8751 + $0x8] sm:$0xf]
  %v8755 = vld [vmem:[%s8751 + $0xc] sm:$0xf]
  %v8756 = vld [vmem:[%s8751 + $0x10] sm:$0xf]
  %v8757 = vld [vmem:[%s8751 + $0x14] sm:$0xf]
  %v8758 = vld [vmem:[%s8751 + $0x18] sm:$0xf]
  %v8759 = vld [vmem:[%s8751 + $0x1c] sm:$0xf]
  %v8760 = vld [vmem:[%s8751 + $0x20] sm:$0xf]
  %v8761 = vld [vmem:[%s8751 + $0x24] sm:$0xf]
  %v8762 = vld [vmem:[%s8751 + $0x28] sm:$0xf]
  %v8763 = vld [vmem:[%s8751 + $0x2c] sm:$0xf]
  %v8764 = vld [vmem:[%s8751 + $0x30] sm:$0xf]
  %v8765 = vld [vmem:[%s8751 + $0x34] sm:$0xf]
  %v8766 = vld [vmem:[%s8751 + $0x38] sm:$0xf]
  %v8767 = vld [vmem:[%s8751 + $0x3c] sm:$0xf]
  %v8768 = vld [vmem:[%s8751 + $0x40] sm:$0xf]
  %v8769 = vld [vmem:[%s8751 + $0x44] sm:$0xf]
  %v8770 = vld [vmem:[%s8751 + $0x48] sm:$0xf]
  %v8771 = vld [vmem:[%s8751 + $0x4c] sm:$0xf]
  %v8772 = vpack.c.bf16 %v8735, %v8735
  %v8773 = vpack.c.bf16 %v8748, %v8748
  %v8794 = vunpack.c.l.b16 %v8752
  %v8795 = vunpack.c.l.b16 %v8753
  %v8796 = vunpack.c.l.b16 %v8754
  %v8797 = vunpack.c.l.b16 %v8755
  %v8798 = vunpack.c.l.b16 %v8756
  %v8799 = vunpack.c.l.b16 %v8757
  %v8800 = vunpack.c.l.b16 %v8758
  %v8801 = vunpack.c.l.b16 %v8759
  %v8802 = vunpack.c.l.b16 %v8760
  %v8803 = vunpack.c.l.b16 %v8761
  %v8804 = vunpack.c.l.b16 %v8762
  %v8805 = vunpack.c.l.b16 %v8763
  %v8806 = vunpack.c.l.b16 %v8764
  %v8807 = vunpack.c.l.b16 %v8765
  %v8808 = vunpack.c.l.b16 %v8766
  %v8809 = vunpack.c.l.b16 %v8767
  %v8810 = vunpack.c.l.b16 %v8768
  %v8811 = vunpack.c.l.b16 %v8769
  %v8812 = vunpack.c.l.b16 %v8770
  %v8813 = vunpack.c.l.b16 %v8771
  %v8814 = vpack.c.b16 %v8795, %v8794
  %v8815 = vpack.c.b16 %v8797, %v8796
  %v8816 = vpack.c.b16 %v8799, %v8798
  %v8817 = vpack.c.b16 %v8801, %v8800
  %v8818 = vpack.c.b16 %v8803, %v8802
  %v8819 = vpack.c.b16 %v8805, %v8804
  %v8820 = vpack.c.b16 %v8807, %v8806
  %v8821 = vpack.c.b16 %v8809, %v8808
  %v8822 = vpack.c.b16 %v8811, %v8810
  %v8823 = vpack.c.b16 %v8813, %v8812
  %v8835 = vsel %vm8601, %v8773, 0
  %8837 = vmatpush.bf16.msra.mxu0 %v8821
  %8838 = vmatpush.bf16.msra.mxu0 %v8820
  %8839 = vmatpush.bf16.msra.mxu0 %v8819
  %8840 = vmatpush.bf16.msra.mxu0 %v8818
  %8841 = vmatpush.bf16.msra.mxu0 %v8817
  %8842 = vmatpush.bf16.msra.mxu0 %v8816
  %8843 = vmatpush.bf16.msra.mxu0 %v8815
  %8844 = vmatpush.bf16.msra.mxu0 %v8814
  %8845 = vmatmul.bf16.gmra.mxu0 %v8772
  %v8846 = vpop.f32.mrf.mxu0
  %v8847 = vadd.f32 0.0, %v8846
  %v8848 = vpop.f32.mrf.mxu0
  %8849 = vdwg.mxu0
  %8850 = vmatpush.bf16.msra.mxu0 0
  %8851 = vmatpush.bf16.msra.mxu0 0
  %8852 = vmatpush.bf16.msra.mxu0 0
  %8853 = vmatpush.bf16.msra.mxu0 0
  %8854 = vmatpush.bf16.msra.mxu0 0
  %8855 = vmatpush.bf16.msra.mxu0 0
  %8856 = vmatpush.bf16.msra.mxu0 %v8823
  %8857 = vmatpush.bf16.msra.mxu0 %v8822
  %8858 = vmatmul.bf16.gmra.mxu0 %v8835
  %v8859 = vpop.f32.mrf.mxu0
  %v8860 = vadd.f32 %v8847, %v8859
  %v8861 = vpop.f32.mrf.mxu0
  %8862 = vdwg.mxu0
  %v8863 = vadd.f32 %v8717, %v8860
  %s8864 = scalar_lea.vmem %s23, 12
  %v8865 = vld [vmem:[%s8864] sm:$0xf]
  %v8867 = vsel %vm8429, %v8865, 0
  %8869 = vmatpush.bf16.msra.mxu0 0
  %8870 = vmatpush.bf16.msra.mxu0 0
  %8871 = vmatpush.bf16.msra.mxu0 0
  %8872 = vmatpush.bf16.msra.mxu0 0
  %8873 = vmatpush.bf16.msra.mxu0 0
  %8874 = vmatpush.bf16.msra.mxu0 0
  %8875 = vmatpush.bf16.msra.mxu0 %v8434
  %8876 = vmatpush.bf16.msra.mxu0 %v8424
  %8877 = vmatmul.bf16.gmra.mxu0 %v8867
  %v8878 = vpop.f32.mrf.mxu0
  %v8879 = vadd.f32 0.0, %v8878
  %v8880 = vpop.f32.mrf.mxu0
  %8881 = vdwg.mxu0
  %8882 = vmatpush.bf16.msra.mxu0 0
  %8883 = vmatpush.bf16.msra.mxu0 0
  %8884 = vmatpush.bf16.msra.mxu0 0
  %8885 = vmatpush.bf16.msra.mxu0 0
  %8886 = vmatpush.bf16.msra.mxu0 0
  %8887 = vmatpush.bf16.msra.mxu0 0
  %8888 = vmatpush.bf16.msra.mxu0 %v8437
  %8889 = vmatpush.bf16.msra.mxu0 %v8425
  %8890 = vmatmul.bf16.gmra.mxu0 %v8867
  %v8891 = vpop.f32.mrf.mxu0
  %v8892 = vadd.f32 0.0, %v8891
  %v8893 = vpop.f32.mrf.mxu0
  %8894 = vdwg.mxu0
  %s8895 = scalar_lea.vmem %s19, 240
  %v8896 = vld [vmem:[%s8895] sm:$0xf]
  %v8897 = vld [vmem:[%s8895 + $0x4] sm:$0xf]
  %v8898 = vld [vmem:[%s8895 + $0x8] sm:$0xf]
  %v8899 = vld [vmem:[%s8895 + $0xc] sm:$0xf]
  %v8900 = vld [vmem:[%s8895 + $0x10] sm:$0xf]
  %v8901 = vld [vmem:[%s8895 + $0x14] sm:$0xf]
  %v8902 = vld [vmem:[%s8895 + $0x18] sm:$0xf]
  %v8903 = vld [vmem:[%s8895 + $0x1c] sm:$0xf]
  %v8904 = vld [vmem:[%s8895 + $0x20] sm:$0xf]
  %v8905 = vld [vmem:[%s8895 + $0x24] sm:$0xf]
  %v8906 = vld [vmem:[%s8895 + $0x28] sm:$0xf]
  %v8907 = vld [vmem:[%s8895 + $0x2c] sm:$0xf]
  %v8908 = vld [vmem:[%s8895 + $0x30] sm:$0xf]
  %v8909 = vld [vmem:[%s8895 + $0x34] sm:$0xf]
  %v8910 = vld [vmem:[%s8895 + $0x38] sm:$0xf]
  %v8911 = vld [vmem:[%s8895 + $0x3c] sm:$0xf]
  %v8912 = vld [vmem:[%s8895 + $0x40] sm:$0xf]
  %v8913 = vld [vmem:[%s8895 + $0x44] sm:$0xf]
  %v8914 = vld [vmem:[%s8895 + $0x48] sm:$0xf]
  %v8915 = vld [vmem:[%s8895 + $0x4c] sm:$0xf]
  %v8916 = vpack.c.bf16 %v8879, %v8879
  %v8917 = vpack.c.bf16 %v8892, %v8892
  %v8938 = vunpack.c.l.b16 %v8896
  %v8939 = vunpack.c.l.b16 %v8897
  %v8940 = vunpack.c.l.b16 %v8898
  %v8941 = vunpack.c.l.b16 %v8899
  %v8942 = vunpack.c.l.b16 %v8900
  %v8943 = vunpack.c.l.b16 %v8901
  %v8944 = vunpack.c.l.b16 %v8902
  %v8945 = vunpack.c.l.b16 %v8903
  %v8946 = vunpack.c.l.b16 %v8904
  %v8947 = vunpack.c.l.b16 %v8905
  %v8948 = vunpack.c.l.b16 %v8906
  %v8949 = vunpack.c.l.b16 %v8907
  %v8950 = vunpack.c.l.b16 %v8908
  %v8951 = vunpack.c.l.b16 %v8909
  %v8952 = vunpack.c.l.b16 %v8910
  %v8953 = vunpack.c.l.b16 %v8911
  %v8954 = vunpack.c.l.b16 %v8912
  %v8955 = vunpack.c.l.b16 %v8913
  %v8956 = vunpack.c.l.b16 %v8914
  %v8957 = vunpack.c.l.b16 %v8915
  %v8958 = vpack.c.b16 %v8939, %v8938
  %v8959 = vpack.c.b16 %v8941, %v8940
  %v8960 = vpack.c.b16 %v8943, %v8942
  %v8961 = vpack.c.b16 %v8945, %v8944
  %v8962 = vpack.c.b16 %v8947, %v8946
  %v8963 = vpack.c.b16 %v8949, %v8948
  %v8964 = vpack.c.b16 %v8951, %v8950
  %v8965 = vpack.c.b16 %v8953, %v8952
  %v8966 = vpack.c.b16 %v8955, %v8954
  %v8967 = vpack.c.b16 %v8957, %v8956
  %v8979 = vsel %vm8601, %v8917, 0
  %8981 = vmatpush.bf16.msra.mxu0 %v8965
  %8982 = vmatpush.bf16.msra.mxu0 %v8964
  %8983 = vmatpush.bf16.msra.mxu0 %v8963
  %8984 = vmatpush.bf16.msra.mxu0 %v8962
  %8985 = vmatpush.bf16.msra.mxu0 %v8961
  %8986 = vmatpush.bf16.msra.mxu0 %v8960
  %8987 = vmatpush.bf16.msra.mxu0 %v8959
  %8988 = vmatpush.bf16.msra.mxu0 %v8958
  %8989 = vmatmul.bf16.gmra.mxu0 %v8916
  %v8990 = vpop.f32.mrf.mxu0
  %v8991 = vadd.f32 0.0, %v8990
  %v8992 = vpop.f32.mrf.mxu0
  %8993 = vdwg.mxu0
  %8994 = vmatpush.bf16.msra.mxu0 0
  %8995 = vmatpush.bf16.msra.mxu0 0
  %8996 = vmatpush.bf16.msra.mxu0 0
  %8997 = vmatpush.bf16.msra.mxu0 0
  %8998 = vmatpush.bf16.msra.mxu0 0
  %8999 = vmatpush.bf16.msra.mxu0 0
  %9000 = vmatpush.bf16.msra.mxu0 %v8967
  %9001 = vmatpush.bf16.msra.mxu0 %v8966
  %9002 = vmatmul.bf16.gmra.mxu0 %v8979
  %v9003 = vpop.f32.mrf.mxu0
  %v9004 = vadd.f32 %v8991, %v9003
  %v9005 = vpop.f32.mrf.mxu0
  %9006 = vdwg.mxu0
  %v9007 = vadd.f32 %v8863, %v9004
  %v9008 = vld [vmem:[%s21] sm:$0x1]
  %v9010 = vperm.slane %v9008, 0
  %v9012 = vadd.f32 %v9007, %v9010
  %vm9013 = vcmp.ge.f32.partialorder %v9012, 0.0
  %v9014 = vmul.f32 %v9012, 0.01
  %v9015 = vsel %vm9013, %v9012, %v9014
  %v9016 = vpack.c.bf16 %v9015, %v9015
  %v9017 = vld [vmem:[%s29] sm:$0x3]
  %vm9018 = vcmask 64512
  %v9020 = vsel %vm9018, %v9017, 0
  %v9023 = vsel %vm3019, %v9016, 0
  %9025 = vmatpush.bf16.msra.mxu0 0
  %9026 = vmatpush.bf16.msra.mxu0 0
  %9027 = vmatpush.bf16.msra.mxu0 0
  %9028 = vmatpush.bf16.msra.mxu0 0
  %9029 = vmatpush.bf16.msra.mxu0 0
  %9030 = vmatpush.bf16.msra.mxu0 0
  %9031 = vmatpush.bf16.msra.mxu0 0
  %9032 = vmatpush.bf16.msra.mxu0 %v9023
  %9033 = vmatmul.bf16.gmra.mxu0 %v9020
  %v9034 = vpop.f32.mrf.mxu0
  %v9035 = vadd.f32 0.0, %v9034
  %v9036 = vpop.f32.mrf.mxu0
  %9037 = vdwg.mxu0
  %v9038 = vld [vmem:[%s25] sm:$0xf]
  %v9039 = vld [vmem:[%s25 + $0x4] sm:$0xf]
  %v9040 = vld [vmem:[%s25 + $0x8] sm:$0xf]
  %v9041 = vld [vmem:[%s25 + $0xc] sm:$0xf]
  %v9042 = vld [vmem:[%s25 + $0x10] sm:$0xf]
  %v9043 = vld [vmem:[%s25 + $0x14] sm:$0xf]
  %v9044 = vld [vmem:[%s25 + $0x18] sm:$0xf]
  %v9045 = vld [vmem:[%s25 + $0x1c] sm:$0xf]
  %v9046 = vld [vmem:[%s25 + $0x20] sm:$0xf]
  %v9047 = vld [vmem:[%s25 + $0x24] sm:$0xf]
  %v9048 = vld [vmem:[%s25 + $0x28] sm:$0xf]
  %v9049 = vld [vmem:[%s25 + $0x2c] sm:$0xf]
  %v9050 = vld [vmem:[%s25 + $0x30] sm:$0xf]
  %v9051 = vld [vmem:[%s25 + $0x34] sm:$0xf]
  %v9052 = vld [vmem:[%s25 + $0x38] sm:$0xf]
  %v9053 = vld [vmem:[%s25 + $0x3c] sm:$0xf]
  %v9054 = vpack.c.bf16 %v9035, %v9035
  %s9055 = scalar_lea.vmem %s29, 2
  %v9056 = vld [vmem:[%s9055] sm:$0x3]
  %v9058 = vsel %vm9018, %v9056, 0
  %9060 = vmatpush.bf16.msra.mxu0 0
  %9061 = vmatpush.bf16.msra.mxu0 0
  %9062 = vmatpush.bf16.msra.mxu0 0
  %9063 = vmatpush.bf16.msra.mxu0 0
  %9064 = vmatpush.bf16.msra.mxu0 0
  %9065 = vmatpush.bf16.msra.mxu0 0
  %9066 = vmatpush.bf16.msra.mxu0 0
  %9067 = vmatpush.bf16.msra.mxu0 %v9023
  %9068 = vmatmul.bf16.gmra.mxu0 %v9058
  %v9069 = vpop.f32.mrf.mxu0
  %v9070 = vadd.f32 0.0, %v9069
  %v9071 = vpop.f32.mrf.mxu0
  %9072 = vdwg.mxu0
  %s9073 = scalar_lea.vmem %s25, 64
  %v9074 = vld [vmem:[%s9073] sm:$0xf]
  %v9075 = vld [vmem:[%s9073 + $0x4] sm:$0xf]
  %v9076 = vld [vmem:[%s9073 + $0x8] sm:$0xf]
  %v9077 = vld [vmem:[%s9073 + $0xc] sm:$0xf]
  %v9078 = vld [vmem:[%s9073 + $0x10] sm:$0xf]
  %v9079 = vld [vmem:[%s9073 + $0x14] sm:$0xf]
  %v9080 = vld [vmem:[%s9073 + $0x18] sm:$0xf]
  %v9081 = vld [vmem:[%s9073 + $0x1c] sm:$0xf]
  %v9082 = vld [vmem:[%s9073 + $0x20] sm:$0xf]
  %v9083 = vld [vmem:[%s9073 + $0x24] sm:$0xf]
  %v9084 = vld [vmem:[%s9073 + $0x28] sm:$0xf]
  %v9085 = vld [vmem:[%s9073 + $0x2c] sm:$0xf]
  %v9086 = vld [vmem:[%s9073 + $0x30] sm:$0xf]
  %v9087 = vld [vmem:[%s9073 + $0x34] sm:$0xf]
  %v9088 = vld [vmem:[%s9073 + $0x38] sm:$0xf]
  %v9089 = vld [vmem:[%s9073 + $0x3c] sm:$0xf]
  %v9090 = vpack.c.bf16 %v9070, %v9070
  %v9107 = vunpack.c.l.b16 %v9074
  %v9108 = vunpack.c.l.b16 %v9075
  %v9109 = vunpack.c.l.b16 %v9076
  %v9110 = vunpack.c.l.b16 %v9077
  %v9111 = vunpack.c.l.b16 %v9078
  %v9112 = vunpack.c.l.b16 %v9079
  %v9113 = vunpack.c.l.b16 %v9080
  %v9114 = vunpack.c.l.b16 %v9081
  %v9115 = vunpack.c.l.b16 %v9082
  %v9116 = vunpack.c.l.b16 %v9083
  %v9117 = vunpack.c.l.b16 %v9084
  %v9118 = vunpack.c.l.b16 %v9085
  %v9119 = vunpack.c.l.b16 %v9086
  %v9120 = vunpack.c.l.b16 %v9087
  %v9121 = vunpack.c.l.b16 %v9088
  %v9122 = vunpack.c.l.b16 %v9089
  %v9123 = vpack.c.b16 %v9108, %v9107
  %v9124 = vpack.c.b16 %v9110, %v9109
  %v9125 = vpack.c.b16 %v9112, %v9111
  %v9126 = vpack.c.b16 %v9114, %v9113
  %v9127 = vpack.c.b16 %v9116, %v9115
  %v9128 = vpack.c.b16 %v9118, %v9117
  %v9129 = vpack.c.b16 %v9120, %v9119
  %v9130 = vpack.c.b16 %v9122, %v9121
  %9139 = vmatpush.bf16.msra.mxu0 %v9130
  %9140 = vmatpush.bf16.msra.mxu0 %v9129
  %9141 = vmatpush.bf16.msra.mxu0 %v9128
  %9142 = vmatpush.bf16.msra.mxu0 %v9127
  %9143 = vmatpush.bf16.msra.mxu0 %v9126
  %9144 = vmatpush.bf16.msra.mxu0 %v9125
  %9145 = vmatpush.bf16.msra.mxu0 %v9124
  %9146 = vmatpush.bf16.msra.mxu0 %v9123
  %9147 = vmatmul.bf16.gmra.mxu0 %v9090
  %v9148 = vpop.f32.mrf.mxu0
  %v9149 = vadd.f32 0.0, %v9148
  %v9150 = vpop.f32.mrf.mxu0
  %9151 = vdwg.mxu0
  %v9168 = vunpack.c.l.b16 %v9038
  %v9169 = vunpack.c.l.b16 %v9039
  %v9170 = vunpack.c.l.b16 %v9040
  %v9171 = vunpack.c.l.b16 %v9041
  %v9172 = vunpack.c.l.b16 %v9042
  %v9173 = vunpack.c.l.b16 %v9043
  %v9174 = vunpack.c.l.b16 %v9044
  %v9175 = vunpack.c.l.b16 %v9045
  %v9176 = vunpack.c.l.b16 %v9046
  %v9177 = vunpack.c.l.b16 %v9047
  %v9178 = vunpack.c.l.b16 %v9048
  %v9179 = vunpack.c.l.b16 %v9049
  %v9180 = vunpack.c.l.b16 %v9050
  %v9181 = vunpack.c.l.b16 %v9051
  %v9182 = vunpack.c.l.b16 %v9052
  %v9183 = vunpack.c.l.b16 %v9053
  %v9184 = vpack.c.b16 %v9169, %v9168
  %v9185 = vpack.c.b16 %v9171, %v9170
  %v9186 = vpack.c.b16 %v9173, %v9172
  %v9187 = vpack.c.b16 %v9175, %v9174
  %v9188 = vpack.c.b16 %v9177, %v9176
  %v9189 = vpack.c.b16 %v9179, %v9178
  %v9190 = vpack.c.b16 %v9181, %v9180
  %v9191 = vpack.c.b16 %v9183, %v9182
  %9200 = vmatpush.bf16.msra.mxu0 %v9191
  %9201 = vmatpush.bf16.msra.mxu0 %v9190
  %9202 = vmatpush.bf16.msra.mxu0 %v9189
  %9203 = vmatpush.bf16.msra.mxu0 %v9188
  %9204 = vmatpush.bf16.msra.mxu0 %v9187
  %9205 = vmatpush.bf16.msra.mxu0 %v9186
  %9206 = vmatpush.bf16.msra.mxu0 %v9185
  %9207 = vmatpush.bf16.msra.mxu0 %v9184
  %9208 = vmatmul.bf16.gmra.mxu0 %v9054
  %v9209 = vpop.f32.mrf.mxu0
  %v9210 = vadd.f32 %v9149, %v9209
  %v9211 = vpop.f32.mrf.mxu0
  %9212 = vdwg.mxu0
  %v9213 = vld [vmem:[%s27] sm:$0x1]
  %v9215 = vperm.slane %v9213, 0
  %v9217 = vadd.f32 %v9210, %v9215
  %vm9218 = vcmp.ge.f32.partialorder %v9217, 0.0
  %v9219 = vmul.f32 %v9217, 0.01
  %v9220 = vsel %vm9218, %v9217, %v9219
  %v9221 = vpack.c.bf16 %v9220, %v9220
  %v9222 = vld [vmem:[%s35] sm:$0x1]
  %vm9223 = vcmask 31744
  %v9225 = vsel %vm9223, %v9222, 0
  %v9228 = vsel %vm2629, %v9221, 0
  %9230 = vmatpush.bf16.msra.mxu0 0
  %9231 = vmatpush.bf16.msra.mxu0 0
  %9232 = vmatpush.bf16.msra.mxu0 0
  %9233 = vmatpush.bf16.msra.mxu0 0
  %9234 = vmatpush.bf16.msra.mxu0 0
  %9235 = vmatpush.bf16.msra.mxu0 0
  %9236 = vmatpush.bf16.msra.mxu0 0
  %9237 = vmatpush.bf16.msra.mxu0 %v9228
  %9238 = vmatmul.bf16.gmra.mxu0 %v9225
  %v9239 = vpop.f32.mrf.mxu0
  %v9240 = vadd.f32 0.0, %v9239
  %v9241 = vpop.f32.mrf.mxu0
  %9242 = vdwg.mxu0
  %v9243 = vld [vmem:[%s31] sm:$0xf]
  %v9244 = vld [vmem:[%s31 + $0x4] sm:$0xf]
  %v9245 = vld [vmem:[%s31 + $0x8] sm:$0xf]
  %v9246 = vld [vmem:[%s31 + $0xc] sm:$0xf]
  %v9247 = vld [vmem:[%s31 + $0x10] sm:$0xf]
  %v9248 = vld [vmem:[%s31 + $0x14] sm:$0xf]
  %v9249 = vld [vmem:[%s31 + $0x18] sm:$0xf]
  %v9250 = vld [vmem:[%s31 + $0x1c] sm:$0xf]
  %v9251 = vld [vmem:[%s31 + $0x20] sm:$0xf]
  %v9252 = vld [vmem:[%s31 + $0x24] sm:$0xf]
  %v9253 = vld [vmem:[%s31 + $0x28] sm:$0xf]
  %v9254 = vld [vmem:[%s31 + $0x2c] sm:$0xf]
  %v9255 = vld [vmem:[%s31 + $0x30] sm:$0xf]
  %v9256 = vld [vmem:[%s31 + $0x34] sm:$0xf]
  %v9257 = vld [vmem:[%s31 + $0x38] sm:$0xf]
  %v9258 = vld [vmem:[%s31 + $0x3c] sm:$0xf]
  %v9259 = vpack.c.bf16 %v9240, %v9240
  %s9260 = scalar_lea.vmem %s35, 1
  %v9261 = vld [vmem:[%s9260] sm:$0x1]
  %v9263 = vsel %vm9223, %v9261, 0
  %9265 = vmatpush.bf16.msra.mxu0 0
  %9266 = vmatpush.bf16.msra.mxu0 0
  %9267 = vmatpush.bf16.msra.mxu0 0
  %9268 = vmatpush.bf16.msra.mxu0 0
  %9269 = vmatpush.bf16.msra.mxu0 0
  %9270 = vmatpush.bf16.msra.mxu0 0
  %9271 = vmatpush.bf16.msra.mxu0 0
  %9272 = vmatpush.bf16.msra.mxu0 %v9228
  %9273 = vmatmul.bf16.gmra.mxu0 %v9263
  %v9274 = vpop.f32.mrf.mxu0
  %v9275 = vadd.f32 0.0, %v9274
  %v9276 = vpop.f32.mrf.mxu0
  %9277 = vdwg.mxu0
  %s9278 = scalar_lea.vmem %s31, 64
  %v9279 = vld [vmem:[%s9278] sm:$0xf]
  %v9280 = vld [vmem:[%s9278 + $0x4] sm:$0xf]
  %v9281 = vld [vmem:[%s9278 + $0x8] sm:$0xf]
  %v9282 = vld [vmem:[%s9278 + $0xc] sm:$0xf]
  %v9283 = vld [vmem:[%s9278 + $0x10] sm:$0xf]
  %v9284 = vld [vmem:[%s9278 + $0x14] sm:$0xf]
  %v9285 = vld [vmem:[%s9278 + $0x18] sm:$0xf]
  %v9286 = vld [vmem:[%s9278 + $0x1c] sm:$0xf]
  %v9287 = vld [vmem:[%s9278 + $0x20] sm:$0xf]
  %v9288 = vld [vmem:[%s9278 + $0x24] sm:$0xf]
  %v9289 = vld [vmem:[%s9278 + $0x28] sm:$0xf]
  %v9290 = vld [vmem:[%s9278 + $0x2c] sm:$0xf]
  %v9291 = vld [vmem:[%s9278 + $0x30] sm:$0xf]
  %v9292 = vld [vmem:[%s9278 + $0x34] sm:$0xf]
  %v9293 = vld [vmem:[%s9278 + $0x38] sm:$0xf]
  %v9294 = vld [vmem:[%s9278 + $0x3c] sm:$0xf]
  %v9295 = vpack.c.bf16 %v9275, %v9275
  %v9312 = vunpack.c.l.b16 %v9279
  %v9313 = vunpack.c.l.b16 %v9280
  %v9314 = vunpack.c.l.b16 %v9281
  %v9315 = vunpack.c.l.b16 %v9282
  %v9316 = vunpack.c.l.b16 %v9283
  %v9317 = vunpack.c.l.b16 %v9284
  %v9318 = vunpack.c.l.b16 %v9285
  %v9319 = vunpack.c.l.b16 %v9286
  %v9320 = vunpack.c.l.b16 %v9287
  %v9321 = vunpack.c.l.b16 %v9288
  %v9322 = vunpack.c.l.b16 %v9289
  %v9323 = vunpack.c.l.b16 %v9290
  %v9324 = vunpack.c.l.b16 %v9291
  %v9325 = vunpack.c.l.b16 %v9292
  %v9326 = vunpack.c.l.b16 %v9293
  %v9327 = vunpack.c.l.b16 %v9294
  %v9328 = vpack.c.b16 %v9313, %v9312
  %v9329 = vpack.c.b16 %v9315, %v9314
  %v9330 = vpack.c.b16 %v9317, %v9316
  %v9331 = vpack.c.b16 %v9319, %v9318
  %v9332 = vpack.c.b16 %v9321, %v9320
  %v9333 = vpack.c.b16 %v9323, %v9322
  %v9334 = vpack.c.b16 %v9325, %v9324
  %v9335 = vpack.c.b16 %v9327, %v9326
  %9344 = vmatpush.bf16.msra.mxu0 %v9335
  %9345 = vmatpush.bf16.msra.mxu0 %v9334
  %9346 = vmatpush.bf16.msra.mxu0 %v9333
  %9347 = vmatpush.bf16.msra.mxu0 %v9332
  %9348 = vmatpush.bf16.msra.mxu0 %v9331
  %9349 = vmatpush.bf16.msra.mxu0 %v9330
  %9350 = vmatpush.bf16.msra.mxu0 %v9329
  %9351 = vmatpush.bf16.msra.mxu0 %v9328
  %9352 = vmatmul.bf16.gmra.mxu0 %v9295
  %v9353 = vpop.f32.mrf.mxu0
  %v9354 = vadd.f32 0.0, %v9353
  %v9355 = vpop.f32.mrf.mxu0
  %9356 = vdwg.mxu0
  %v9373 = vunpack.c.l.b16 %v9243
  %v9374 = vunpack.c.l.b16 %v9244
  %v9375 = vunpack.c.l.b16 %v9245
  %v9376 = vunpack.c.l.b16 %v9246
  %v9377 = vunpack.c.l.b16 %v9247
  %v9378 = vunpack.c.l.b16 %v9248
  %v9379 = vunpack.c.l.b16 %v9249
  %v9380 = vunpack.c.l.b16 %v9250
  %v9381 = vunpack.c.l.b16 %v9251
  %v9382 = vunpack.c.l.b16 %v9252
  %v9383 = vunpack.c.l.b16 %v9253
  %v9384 = vunpack.c.l.b16 %v9254
  %v9385 = vunpack.c.l.b16 %v9255
  %v9386 = vunpack.c.l.b16 %v9256
  %v9387 = vunpack.c.l.b16 %v9257
  %v9388 = vunpack.c.l.b16 %v9258
  %v9389 = vpack.c.b16 %v9374, %v9373
  %v9390 = vpack.c.b16 %v9376, %v9375
  %v9391 = vpack.c.b16 %v9378, %v9377
  %v9392 = vpack.c.b16 %v9380, %v9379
  %v9393 = vpack.c.b16 %v9382, %v9381
  %v9394 = vpack.c.b16 %v9384, %v9383
  %v9395 = vpack.c.b16 %v9386, %v9385
  %v9396 = vpack.c.b16 %v9388, %v9387
  %9405 = vmatpush.bf16.msra.mxu0 %v9396
  %9406 = vmatpush.bf16.msra.mxu0 %v9395
  %9407 = vmatpush.bf16.msra.mxu0 %v9394
  %9408 = vmatpush.bf16.msra.mxu0 %v9393
  %9409 = vmatpush.bf16.msra.mxu0 %v9392
  %9410 = vmatpush.bf16.msra.mxu0 %v9391
  %9411 = vmatpush.bf16.msra.mxu0 %v9390
  %9412 = vmatpush.bf16.msra.mxu0 %v9389
  %9413 = vmatmul.bf16.gmra.mxu0 %v9259
  %v9414 = vpop.f32.mrf.mxu0
  %v9415 = vadd.f32 %v9354, %v9414
  %v9416 = vpop.f32.mrf.mxu0
  %9417 = vdwg.mxu0
  %v9418 = vld [vmem:[%s33] sm:$0x1]
  %v9420 = vperm.slane %v9418, 0
  %v9422 = vadd.f32 %v9415, %v9420
  %v9423 = vpack.c.bf16 %v9422, %v9422
  %v9424 = vld [vmem:[%s37] sm:$0xff]
  %v9425 = vld [vmem:[%s37 + $0x8] sm:$0xff]
  %v9426 = vld [vmem:[%s37 + $0x10] sm:$0xff]
  %v9427 = vld [vmem:[%s37 + $0x18] sm:$0xff]
  %v9428 = vld [vmem:[%s37 + $0x20] sm:$0xff]
  %v9429 = vld [vmem:[%s37 + $0x28] sm:$0xff]
  %v9430 = vld [vmem:[%s37 + $0x30] sm:$0xff]
  %v9431 = vld [vmem:[%s37 + $0x38] sm:$0xff]
  %v9432 = vld [vmem:[%s37 + $0x40] sm:$0xff]
  %v9433 = vld [vmem:[%s37 + $0x48] sm:$0xff]
  %v9434 = vld [vmem:[%s37 + $0x50] sm:$0xff]
  %v9435 = vld [vmem:[%s37 + $0x58] sm:$0xff]
  %v9436 = vld [vmem:[%s37 + $0x60] sm:$0xff]
  %v9437 = vld [vmem:[%s37 + $0x68] sm:$0xff]
  %v9438 = vld [vmem:[%s37 + $0x70] sm:$0xff]
  %v9439 = vld [vmem:[%s37 + $0x78] sm:$0xff]
  %v9440 = vld [vmem:[%s39] sm:$0x3]
  %v9442 = vperm.slane %v9440, 0
  %v9443 = vperm.slane %v9440, 1
  %v9462 = vunpack.c.l.b16 %v9424
  %v9463 = vunpack.c.h.b16 %v9424
  %v9464 = vunpack.c.l.b16 %v9425
  %v9465 = vunpack.c.h.b16 %v9425
  %v9466 = vunpack.c.l.b16 %v9426
  %v9467 = vunpack.c.h.b16 %v9426
  %v9468 = vunpack.c.l.b16 %v9427
  %v9469 = vunpack.c.h.b16 %v9427
  %v9470 = vunpack.c.l.b16 %v9428
  %v9471 = vunpack.c.h.b16 %v9428
  %v9472 = vunpack.c.l.b16 %v9429
  %v9473 = vunpack.c.h.b16 %v9429
  %v9474 = vunpack.c.l.b16 %v9430
  %v9475 = vunpack.c.h.b16 %v9430
  %v9476 = vunpack.c.l.b16 %v9431
  %v9477 = vunpack.c.h.b16 %v9431
  %v9478 = vunpack.c.l.b16 %v9432
  %v9479 = vunpack.c.h.b16 %v9432
  %v9480 = vunpack.c.l.b16 %v9433
  %v9481 = vunpack.c.h.b16 %v9433
  %v9482 = vunpack.c.l.b16 %v9434
  %v9483 = vunpack.c.h.b16 %v9434
  %v9484 = vunpack.c.l.b16 %v9435
  %v9485 = vunpack.c.h.b16 %v9435
  %v9486 = vunpack.c.l.b16 %v9436
  %v9487 = vunpack.c.h.b16 %v9436
  %v9488 = vunpack.c.l.b16 %v9437
  %v9489 = vunpack.c.h.b16 %v9437
  %v9490 = vunpack.c.l.b16 %v9438
  %v9491 = vunpack.c.h.b16 %v9438
  %v9492 = vunpack.c.l.b16 %v9439
  %v9493 = vunpack.c.h.b16 %v9439
  %v9494 = vpack.c.b16 %v9464, %v9462
  %v9495 = vpack.c.b16 %v9465, %v9463
  %v9496 = vpack.c.b16 %v9468, %v9466
  %v9497 = vpack.c.b16 %v9469, %v9467
  %v9498 = vpack.c.b16 %v9472, %v9470
  %v9499 = vpack.c.b16 %v9473, %v9471
  %v9500 = vpack.c.b16 %v9476, %v9474
  %v9501 = vpack.c.b16 %v9477, %v9475
  %v9502 = vpack.c.b16 %v9480, %v9478
  %v9503 = vpack.c.b16 %v9481, %v9479
  %v9504 = vpack.c.b16 %v9484, %v9482
  %v9505 = vpack.c.b16 %v9485, %v9483
  %v9506 = vpack.c.b16 %v9488, %v9486
  %v9507 = vpack.c.b16 %v9489, %v9487
  %v9508 = vpack.c.b16 %v9492, %v9490
  %v9509 = vpack.c.b16 %v9493, %v9491
  %9526 = vmatpush.bf16.msra.mxu0 %v9508
  %9527 = vmatpush.bf16.msra.mxu0 %v9506
  %9528 = vmatpush.bf16.msra.mxu0 %v9504
  %9529 = vmatpush.bf16.msra.mxu0 %v9502
  %9530 = vmatpush.bf16.msra.mxu0 %v9500
  %9531 = vmatpush.bf16.msra.mxu0 %v9498
  %9532 = vmatpush.bf16.msra.mxu0 %v9496
  %9533 = vmatpush.bf16.msra.mxu0 %v9494
  %9534 = vmatmul.bf16.gmra.mxu0 %v9423
  %v9535 = vpop.f32.mrf.mxu0
  %v9536 = vadd.f32 %v9442, %v9535
  %v9537 = vpop.f32.mrf.mxu0
  %9538 = vdwg.mxu0
  %9539 = vmatpush.bf16.msra.mxu0 %v9509
  %9540 = vmatpush.bf16.msra.mxu0 %v9507
  %9541 = vmatpush.bf16.msra.mxu0 %v9505
  %9542 = vmatpush.bf16.msra.mxu0 %v9503
  %9543 = vmatpush.bf16.msra.mxu0 %v9501
  %9544 = vmatpush.bf16.msra.mxu0 %v9499
  %9545 = vmatpush.bf16.msra.mxu0 %v9497
  %9546 = vmatpush.bf16.msra.mxu0 %v9495
  %9547 = vmatmul.bf16.gmra.mxu0 %v9423
  %v9548 = vpop.f32.mrf.mxu0
  %v9549 = vadd.f32 %v9443, %v9548
  %v9550 = vpop.f32.mrf.mxu0
  %9551 = vdwg.mxu0
  %vm9552 = vcmp.ge.f32.partialorder %v9536, 0.0
  %vm9553 = vcmp.ge.f32.partialorder %v9549, 0.0
  %v9554 = vmul.f32 %v9536, 0.01
  %v9555 = vmul.f32 %v9549, 0.01
  %v9556 = vsel %vm9552, %v9536, %v9554
  %v9557 = vsel %vm9553, %v9549, %v9555
  %v9558 = vld [vmem:[%s41] sm:$0xf]
  %v9559 = vld [vmem:[%s41 + $0x4] sm:$0xf]
  %v9560 = vld [vmem:[%s41 + $0x8] sm:$0xf]
  %v9561 = vld [vmem:[%s41 + $0xc] sm:$0xf]
  %v9562 = vld [vmem:[%s41 + $0x10] sm:$0xf]
  %v9563 = vld [vmem:[%s41 + $0x14] sm:$0xf]
  %v9564 = vld [vmem:[%s41 + $0x18] sm:$0xf]
  %v9565 = vld [vmem:[%s41 + $0x1c] sm:$0xf]
  %v9566 = vld [vmem:[%s41 + $0x20] sm:$0xf]
  %v9567 = vld [vmem:[%s41 + $0x24] sm:$0xf]
  %v9568 = vld [vmem:[%s41 + $0x28] sm:$0xf]
  %v9569 = vld [vmem:[%s41 + $0x2c] sm:$0xf]
  %v9570 = vld [vmem:[%s41 + $0x30] sm:$0xf]
  %v9571 = vld [vmem:[%s41 + $0x34] sm:$0xf]
  %v9572 = vld [vmem:[%s41 + $0x38] sm:$0xf]
  %v9573 = vld [vmem:[%s41 + $0x3c] sm:$0xf]
  %v9574 = vld [vmem:[%s41 + $0x40] sm:$0xf]
  %v9575 = vld [vmem:[%s41 + $0x44] sm:$0xf]
  %v9576 = vld [vmem:[%s41 + $0x48] sm:$0xf]
  %v9577 = vld [vmem:[%s41 + $0x4c] sm:$0xf]
  %v9578 = vld [vmem:[%s41 + $0x50] sm:$0xf]
  %v9579 = vld [vmem:[%s41 + $0x54] sm:$0xf]
  %v9580 = vld [vmem:[%s41 + $0x58] sm:$0xf]
  %v9581 = vld [vmem:[%s41 + $0x5c] sm:$0xf]
  %v9582 = vld [vmem:[%s41 + $0x60] sm:$0xf]
  %v9583 = vld [vmem:[%s41 + $0x64] sm:$0xf]
  %v9584 = vld [vmem:[%s41 + $0x68] sm:$0xf]
  %v9585 = vld [vmem:[%s41 + $0x6c] sm:$0xf]
  %v9586 = vld [vmem:[%s41 + $0x70] sm:$0xf]
  %v9587 = vld [vmem:[%s41 + $0x74] sm:$0xf]
  %v9588 = vld [vmem:[%s41 + $0x78] sm:$0xf]
  %v9589 = vld [vmem:[%s41 + $0x7c] sm:$0xf]
  %v9590 = vpack.c.bf16 %v9556, %v9556
  %v9591 = vpack.c.bf16 %v9557, %v9557
  %v9592 = vld [vmem:[%s43] sm:$0x1]
  %v9594 = vperm.slane %v9592, 0
  %v9628 = vunpack.c.l.b16 %v9558
  %v9629 = vunpack.c.l.b16 %v9559
  %v9630 = vunpack.c.l.b16 %v9560
  %v9631 = vunpack.c.l.b16 %v9561
  %v9632 = vunpack.c.l.b16 %v9562
  %v9633 = vunpack.c.l.b16 %v9563
  %v9634 = vunpack.c.l.b16 %v9564
  %v9635 = vunpack.c.l.b16 %v9565
  %v9636 = vunpack.c.l.b16 %v9566
  %v9637 = vunpack.c.l.b16 %v9567
  %v9638 = vunpack.c.l.b16 %v9568
  %v9639 = vunpack.c.l.b16 %v9569
  %v9640 = vunpack.c.l.b16 %v9570
  %v9641 = vunpack.c.l.b16 %v9571
  %v9642 = vunpack.c.l.b16 %v9572
  %v9643 = vunpack.c.l.b16 %v9573
  %v9644 = vunpack.c.l.b16 %v9574
  %v9645 = vunpack.c.l.b16 %v9575
  %v9646 = vunpack.c.l.b16 %v9576
  %v9647 = vunpack.c.l.b16 %v9577
  %v9648 = vunpack.c.l.b16 %v9578
  %v9649 = vunpack.c.l.b16 %v9579
  %v9650 = vunpack.c.l.b16 %v9580
  %v9651 = vunpack.c.l.b16 %v9581
  %v9652 = vunpack.c.l.b16 %v9582
  %v9653 = vunpack.c.l.b16 %v9583
  %v9654 = vunpack.c.l.b16 %v9584
  %v9655 = vunpack.c.l.b16 %v9585
  %v9656 = vunpack.c.l.b16 %v9586
  %v9657 = vunpack.c.l.b16 %v9587
  %v9658 = vunpack.c.l.b16 %v9588
  %v9659 = vunpack.c.l.b16 %v9589
  %v9660 = vpack.c.b16 %v9629, %v9628
  %v9661 = vpack.c.b16 %v9631, %v9630
  %v9662 = vpack.c.b16 %v9633, %v9632
  %v9663 = vpack.c.b16 %v9635, %v9634
  %v9664 = vpack.c.b16 %v9637, %v9636
  %v9665 = vpack.c.b16 %v9639, %v9638
  %v9666 = vpack.c.b16 %v9641, %v9640
  %v9667 = vpack.c.b16 %v9643, %v9642
  %v9668 = vpack.c.b16 %v9645, %v9644
  %v9669 = vpack.c.b16 %v9647, %v9646
  %v9670 = vpack.c.b16 %v9649, %v9648
  %v9671 = vpack.c.b16 %v9651, %v9650
  %v9672 = vpack.c.b16 %v9653, %v9652
  %v9673 = vpack.c.b16 %v9655, %v9654
  %v9674 = vpack.c.b16 %v9657, %v9656
  %v9675 = vpack.c.b16 %v9659, %v9658
  %9692 = vmatpush.bf16.msra.mxu0 %v9667
  %9693 = vmatpush.bf16.msra.mxu0 %v9666
  %9694 = vmatpush.bf16.msra.mxu0 %v9665
  %9695 = vmatpush.bf16.msra.mxu0 %v9664
  %9696 = vmatpush.bf16.msra.mxu0 %v9663
  %9697 = vmatpush.bf16.msra.mxu0 %v9662
  %9698 = vmatpush.bf16.msra.mxu0 %v9661
  %9699 = vmatpush.bf16.msra.mxu0 %v9660
  %9700 = vmatmul.bf16.gmra.mxu0 %v9590
  %v9701 = vpop.f32.mrf.mxu0
  %v9702 = vadd.f32 %v9594, %v9701
  %v9703 = vpop.f32.mrf.mxu0
  %9704 = vdwg.mxu0
  %9705 = vmatpush.bf16.msra.mxu0 %v9675
  %9706 = vmatpush.bf16.msra.mxu0 %v9674
  %9707 = vmatpush.bf16.msra.mxu0 %v9673
  %9708 = vmatpush.bf16.msra.mxu0 %v9672
  %9709 = vmatpush.bf16.msra.mxu0 %v9671
  %9710 = vmatpush.bf16.msra.mxu0 %v9670
  %9711 = vmatpush.bf16.msra.mxu0 %v9669
  %9712 = vmatpush.bf16.msra.mxu0 %v9668
  %9713 = vmatmul.bf16.gmra.mxu0 %v9591
  %v9714 = vpop.f32.mrf.mxu0
  %v9715 = vadd.f32 %v9702, %v9714
  %v9716 = vpop.f32.mrf.mxu0
  %9717 = vdwg.mxu0
  %vm9718 = vcmp.ge.f32.partialorder %v9715, 0.0
  %v9719 = vmul.f32 %v9715, 0.01
  %v9720 = vsel %vm9718, %v9715, %v9719
  %v9721 = vld [vmem:[%s45] sm:$0xf]
  %v9722 = vld [vmem:[%s45 + $0x4] sm:$0xf]
  %v9723 = vld [vmem:[%s45 + $0x8] sm:$0xf]
  %v9724 = vld [vmem:[%s45 + $0xc] sm:$0xf]
  %v9725 = vld [vmem:[%s45 + $0x10] sm:$0xf]
  %v9726 = vld [vmem:[%s45 + $0x14] sm:$0xf]
  %v9727 = vld [vmem:[%s45 + $0x18] sm:$0xf]
  %v9728 = vld [vmem:[%s45 + $0x1c] sm:$0xf]
  %v9729 = vld [vmem:[%s45 + $0x20] sm:$0xf]
  %v9730 = vld [vmem:[%s45 + $0x24] sm:$0xf]
  %v9731 = vld [vmem:[%s45 + $0x28] sm:$0xf]
  %v9732 = vld [vmem:[%s45 + $0x2c] sm:$0xf]
  %v9733 = vld [vmem:[%s45 + $0x30] sm:$0xf]
  %v9734 = vld [vmem:[%s45 + $0x34] sm:$0xf]
  %v9735 = vld [vmem:[%s45 + $0x38] sm:$0xf]
  %v9736 = vld [vmem:[%s45 + $0x3c] sm:$0xf]
  %v9737 = vpack.c.bf16 %v9720, %v9720
  %v9738 = vld [vmem:[%s47] sm:$0x1]
  %v9740 = vperm.slane %v9738, 0
  %v9758 = vunpack.c.l.b16 %v9721
  %v9759 = vunpack.c.l.b16 %v9722
  %v9760 = vunpack.c.l.b16 %v9723
  %v9761 = vunpack.c.l.b16 %v9724
  %v9762 = vunpack.c.l.b16 %v9725
  %v9763 = vunpack.c.l.b16 %v9726
  %v9764 = vunpack.c.l.b16 %v9727
  %v9765 = vunpack.c.l.b16 %v9728
  %v9766 = vunpack.c.l.b16 %v9729
  %v9767 = vunpack.c.l.b16 %v9730
  %v9768 = vunpack.c.l.b16 %v9731
  %v9769 = vunpack.c.l.b16 %v9732
  %v9770 = vunpack.c.l.b16 %v9733
  %v9771 = vunpack.c.l.b16 %v9734
  %v9772 = vunpack.c.l.b16 %v9735
  %v9773 = vunpack.c.l.b16 %v9736
  %v9774 = vpack.c.b16 %v9759, %v9758
  %v9775 = vpack.c.b16 %v9761, %v9760
  %v9776 = vpack.c.b16 %v9763, %v9762
  %v9777 = vpack.c.b16 %v9765, %v9764
  %v9778 = vpack.c.b16 %v9767, %v9766
  %v9779 = vpack.c.b16 %v9769, %v9768
  %v9780 = vpack.c.b16 %v9771, %v9770
  %v9781 = vpack.c.b16 %v9773, %v9772
  %9790 = vmatpush.bf16.msra.mxu0 %v9781
  %9791 = vmatpush.bf16.msra.mxu0 %v9780
  %9792 = vmatpush.bf16.msra.mxu0 %v9779
  %9793 = vmatpush.bf16.msra.mxu0 %v9778
  %9794 = vmatpush.bf16.msra.mxu0 %v9777
  %9795 = vmatpush.bf16.msra.mxu0 %v9776
  %9796 = vmatpush.bf16.msra.mxu0 %v9775
  %9797 = vmatpush.bf16.msra.mxu0 %v9774
  %9798 = vmatmul.bf16.gmra.mxu0 %v9737
  %v9799 = vpop.f32.mrf.mxu0
  %v9800 = vadd.f32 %v9740, %v9799
  %v9801 = vpop.f32.mrf.mxu0
  %9802 = vdwg.mxu0
  %vm9803 = vcmp.ge.f32.partialorder %v9800, 0.0
  %v9804 = vmul.f32 %v9800, 0.01
  %v9805 = vsel %vm9803, %v9800, %v9804
  %v9806 = vld [vmem:[%s49] sm:$0xf]
  %v9807 = vld [vmem:[%s49 + $0x4] sm:$0xf]
  %v9808 = vld [vmem:[%s49 + $0x8] sm:$0xf]
  %v9809 = vld [vmem:[%s49 + $0xc] sm:$0xf]
  %v9810 = vld [vmem:[%s49 + $0x10] sm:$0xf]
  %v9811 = vld [vmem:[%s49 + $0x14] sm:$0xf]
  %v9812 = vld [vmem:[%s49 + $0x18] sm:$0xf]
  %v9813 = vld [vmem:[%s49 + $0x1c] sm:$0xf]
  %v9814 = vpack.c.bf16 %v9805, %v9805
  %v9815 = vld [vmem:[%s51] sm:$0x1]
  %v9817 = vperm.slane %v9815, 0
  %v9827 = vunpack.c.l.b16 %v9806
  %v9828 = vunpack.c.l.b16 %v9807
  %v9829 = vunpack.c.l.b16 %v9808
  %v9830 = vunpack.c.l.b16 %v9809
  %v9831 = vunpack.c.l.b16 %v9810
  %v9832 = vunpack.c.l.b16 %v9811
  %v9833 = vunpack.c.l.b16 %v9812
  %v9834 = vunpack.c.l.b16 %v9813
  %v9835 = vpack.c.b16 %v9828, %v9827
  %v9836 = vpack.c.b16 %v9830, %v9829
  %v9837 = vpack.c.b16 %v9832, %v9831
  %v9838 = vpack.c.b16 %v9834, %v9833
  %vm9843 = vcmask 523264
  %v9845 = vsel %vm9843, %v9814, 0
  %9847 = vmatpush.bf16.msra.mxu0 0
  %9848 = vmatpush.bf16.msra.mxu0 0
  %9849 = vmatpush.bf16.msra.mxu0 0
  %9850 = vmatpush.bf16.msra.mxu0 0
  %9851 = vmatpush.bf16.msra.mxu0 %v9838
  %9852 = vmatpush.bf16.msra.mxu0 %v9837
  %9853 = vmatpush.bf16.msra.mxu0 %v9836
  %9854 = vmatpush.bf16.msra.mxu0 %v9835
  %9855 = vmatmul.bf16.gmra.mxu0 %v9845
  %v9856 = vpop.f32.mrf.mxu0
  %v9857 = vadd.f32 %v9817, %v9856
  %v9858 = vpop.f32.mrf.mxu0
  %9859 = vdwg.mxu0
  %v9860 = vtanh.pop %v9857
  %v9861 = vld [vmem:[%s53] sm:$0xf]
  %v9862 = vld [vmem:[%s53 + $0x4] sm:$0xf]
  %v9863 = vld [vmem:[%s53 + $0x8] sm:$0xf]
  %v9864 = vld [vmem:[%s53 + $0xc] sm:$0xf]
  %v9865 = vld [vmem:[%s53 + $0x10] sm:$0xf]
  %v9866 = vld [vmem:[%s53 + $0x14] sm:$0xf]
  %v9867 = vld [vmem:[%s53 + $0x18] sm:$0xf]
  %v9868 = vld [vmem:[%s53 + $0x1c] sm:$0xf]
  %v9869 = vpack.c.bf16 %v9860, %v9860
  %v9870 = vld [vmem:[%s55] sm:$0x1]
  %v9872 = vperm.slane %v9870, 0
  %v9882 = vunpack.c.l.b16 %v9861
  %v9883 = vunpack.c.l.b16 %v9862
  %v9884 = vunpack.c.l.b16 %v9863
  %v9885 = vunpack.c.l.b16 %v9864
  %v9886 = vunpack.c.l.b16 %v9865
  %v9887 = vunpack.c.l.b16 %v9866
  %v9888 = vunpack.c.l.b16 %v9867
  %v9889 = vunpack.c.l.b16 %v9868
  %v9890 = vpack.c.b16 %v9883, %v9882
  %v9891 = vpack.c.b16 %v9885, %v9884
  %v9892 = vpack.c.b16 %v9887, %v9886
  %v9893 = vpack.c.b16 %v9889, %v9888
  %v9899 = vsel %vm9843, %v9869, 0
  %9901 = vmatpush.bf16.msra.mxu0 0
  %9902 = vmatpush.bf16.msra.mxu0 0
  %9903 = vmatpush.bf16.msra.mxu0 0
  %9904 = vmatpush.bf16.msra.mxu0 0
  %9905 = vmatpush.bf16.msra.mxu0 %v9893
  %9906 = vmatpush.bf16.msra.mxu0 %v9892
  %9907 = vmatpush.bf16.msra.mxu0 %v9891
  %9908 = vmatpush.bf16.msra.mxu0 %v9890
  %9909 = vmatmul.bf16.gmra.mxu0 %v9899
  %v9910 = vpop.f32.mrf.mxu0
  %v9911 = vadd.f32 %v9872, %v9910
  %v9912 = vpop.f32.mrf.mxu0
  %9913 = vdwg.mxu0
  %v9914 = vtanh.pop %v9911
  %v9915 = vld [vmem:[%s57] sm:$0xf]
  %v9916 = vld [vmem:[%s57 + $0x4] sm:$0xf]
  %v9917 = vld [vmem:[%s57 + $0x8] sm:$0xf]
  %v9918 = vld [vmem:[%s57 + $0xc] sm:$0xf]
  %v9919 = vld [vmem:[%s57 + $0x10] sm:$0xf]
  %v9920 = vld [vmem:[%s57 + $0x14] sm:$0xf]
  %v9921 = vld [vmem:[%s57 + $0x18] sm:$0xf]
  %v9922 = vld [vmem:[%s57 + $0x1c] sm:$0xf]
  %v9923 = vld [vmem:[%s59] sm:$0xf]
  %v9924 = vld [vmem:[%s59 + $0x4] sm:$0xf]
  %v9925 = vld [vmem:[%s59 + $0x8] sm:$0xf]
  %v9926 = vld [vmem:[%s59 + $0xc] sm:$0xf]
  %v9927 = vpack.c.bf16 %v9914, %v9914
  %v9932 = vunpack.c.l.b16 %v9923
  %v9933 = vunpack.c.l.b16 %v9924
  %v9934 = vunpack.c.l.b16 %v9925
  %v9935 = vunpack.c.l.b16 %v9926
  %v9936 = vpack.c.b16 %v9933, %v9932
  %v9937 = vpack.c.b16 %v9935, %v9934
  %v9941 = vsel %vm8601, %v9927, 0
  %9943 = vmatpush.bf16.msra.mxu0 0
  %9944 = vmatpush.bf16.msra.mxu0 0
  %9945 = vmatpush.bf16.msra.mxu0 0
  %9946 = vmatpush.bf16.msra.mxu0 0
  %9947 = vmatpush.bf16.msra.mxu0 0
  %9948 = vmatpush.bf16.msra.mxu0 0
  %9949 = vmatpush.bf16.msra.mxu0 %v9937
  %9950 = vmatpush.bf16.msra.mxu0 %v9936
  %9951 = vmatmul.bf16.gmra.mxu0 %v9941
  %v9952 = vpop.f32.mrf.mxu0
  %v9953 = vadd.f32 0.0, %v9952
  %v9954 = vpop.f32.mrf.mxu0
  %9955 = vdwg.mxu0
  %v9964 = vunpack.c.l.b16 %v9915
  %v9965 = vunpack.c.l.b16 %v9916
  %v9966 = vunpack.c.l.b16 %v9917
  %v9967 = vunpack.c.l.b16 %v9918
  %v9968 = vunpack.c.l.b16 %v9919
  %v9969 = vunpack.c.l.b16 %v9920
  %v9970 = vunpack.c.l.b16 %v9921
  %v9971 = vunpack.c.l.b16 %v9922
  %v9972 = vpack.c.b16 %v9965, %v9964
  %v9973 = vpack.c.b16 %v9967, %v9966
  %v9974 = vpack.c.b16 %v9969, %v9968
  %v9975 = vpack.c.b16 %v9971, %v9970
  %9980 = vmatpush.bf16.msra.mxu0 0
  %9981 = vmatpush.bf16.msra.mxu0 0
  %9982 = vmatpush.bf16.msra.mxu0 0
  %9983 = vmatpush.bf16.msra.mxu0 0
  %9984 = vmatpush.bf16.msra.mxu0 %v9975
  %9985 = vmatpush.bf16.msra.mxu0 %v9974
  %9986 = vmatpush.bf16.msra.mxu0 %v9973
  %9987 = vmatpush.bf16.msra.mxu0 %v9972
  %9988 = vmatmul.bf16.gmra.mxu0 %v9899
  %v9989 = vpop.f32.mrf.mxu0
  %v9990 = vadd.f32 %v9953, %v9989
  %v9991 = vpop.f32.mrf.mxu0
  %9992 = vdwg.mxu0
  %v9993 = vld [vmem:[%s61] sm:$0x1]
  %v9995 = vperm.slane %v9993, 0
  %v9997 = vadd.f32 %v9990, %v9995
  %9998 = vst [vmem:[%s63] sm:$0x3] %v9997
  // Predicated region
  $region126: #{agent_forward.1} parent=0 // pred_check
    _
  $region127: #{agent_forward.1} parent=0 // pred_check_branch
    %10000 = sbr.rel (0) target = $region129
  $region128: #{agent_forward.1} parent=0 // pred_region
    _
  $region129: #{agent_forward.1} parent=0 // pred_fallthru
    _
  // Predicated region
  $region130: #{agent_forward.1} parent=0 // pred_check
    _
  $region131: #{agent_forward.1} parent=0 // pred_check_branch
    %10002 = sbr.rel (0) target = $region133
  $region132: #{agent_forward.1} parent=0 // pred_region
    _
  $region133: #{agent_forward.1} parent=0 // pred_fallthru
    _

</llo_original>
